<compile_context>
chip_gen: v7x
topology: tpu7x:2x2x1
jax: 0.10.0
libtpu: 0.0.40
codegen_flags: <defaults>
</compile_context>

<pallas_src>
import functools

import jax
import jax.numpy as jnp
from jax.experimental import pallas as pl
from jax.experimental.pallas import tpu as pltpu

VMEM_LIMIT = 32 * 1024 * 1024   # scoped-VMEM cap safe on v5e / v6e / v7x
EW_ROW_TILE = 2048              # row tile for the final BN+PReLU pass
EPS = 1e-5                      # PyTorch BatchNorm default


def _row_tile(m, cap):
    """Pick a row tile (full array if it fits, else `cap`) and padded size."""
    if m <= cap:
        return m, m
    mp = ((m + cap - 1) // cap) * cap
    return cap, mp


# ----------------------------- Pallas kernels ------------------------------

def _up_kernel(x_ref, w_ref, b_ref, y_ref, s_ref, q_ref, *, H, W, cout):
    """ConvTranspose3d(k=2, s=2) + bias for one (n, d) input slab.

    The 8 (a,b,c) taps are produced as 4 MXU matmuls (one per (a,b), columns
    ordered (c, Cout)) and written straight into the depth-to-space output
    layout [1, 2, H, 2, W, 2*Cout] (bf16).  Per-slab BN partial sums / sums of
    squares are emitted from the f32 accumulator."""
    cin = x_ref.shape[-1]
    xm = x_ref[0, 0].reshape(H * W, cin)
    s = jnp.zeros((1, cout), jnp.float32)
    q = jnp.zeros((1, cout), jnp.float32)
    for ka in range(2):
        for kb in range(2):
            y = jnp.dot(xm, w_ref[ka, kb], preferred_element_type=jnp.float32)
            y = y + b_ref[...]
            ys = jnp.sum(y, axis=0, keepdims=True)        # [1, 2*cout]
            qs = jnp.sum(y * y, axis=0, keepdims=True)
            s = s + ys[:, :cout] + ys[:, cout:]
            q = q + qs[:, :cout] + qs[:, cout:]
            y_ref[0, ka, :, kb, :, :] = y.reshape(H, W, 2 * cout).astype(y_ref.dtype)
    s_ref[0] = s
    q_ref[0] = q


def _conv3x3_kernel(x_ref, w_ref, b_ref, sc_ref, sh_ref, al_ref,
                    y_ref, s_ref, q_ref, win_ref, *, D, H, W):
    """Conv3d(3x3x3, pad=1) + bias for one (n, d_out) output slab.

    The input is the *raw* previous-layer output (bf16); its BN affine + PReLU
    are applied in-VMEM, the zero halo is realized in a scratch window (depth
    taps outside the volume are masked to exact zero AFTER the affine), the 27
    taps accumulate into a local f32 value, and the per-slab BN partial sums
    of this layer's output are emitted."""
    d = pl.program_id(1)
    c = x_ref.shape[-1]
    cout = w_ref.shape[-1]

    sc = sc_ref[...]          # [1, C]
    sh = sh_ref[...]
    al = al_ref[...]

    # Build the activated, zero-haloed 3-deep window in VMEM.
    win_ref[...] = jnp.zeros_like(win_ref)
    for kd in range(3):
        dd = d + (kd - 1)
        valid = jnp.logical_and(dd >= 0, dd < D)
        dcl = jnp.clip(dd, 0, D - 1)
        slab = x_ref[0, pl.ds(dcl, 1)].reshape(H, W, c).astype(jnp.float32)
        z = slab * sc + sh
        act = jnp.where(z >= 0.0, z, al * z)
        act = jnp.where(valid, act, 0.0)                  # exact-zero halo slab
        win_ref[kd, 1:H + 1, 1:W + 1, :] = act.astype(win_ref.dtype)

    # 27-tap reduction, accumulated in a local f32 value (single store).
    # TODO(synk): fold the taps into a single K=27*Cin MXU matmul once the
    # kernel is compute-bound (matters on the 256-deep MXUs of v6e/v7x).
    acc = jnp.zeros((H * W, cout), jnp.float32)
    for kd in range(3):
        for kh in range(3):
            for kw in range(3):
                patch = win_ref[kd, kh:kh + H, kw:kw + W, :].reshape(H * W, c)
                acc = acc + jnp.dot(patch, w_ref[kd, kh, kw],
                                    preferred_element_type=jnp.float32)
    y = acc + b_ref[...]
    y_ref[0, 0] = y.reshape(H, W, cout).astype(y_ref.dtype)
    s_ref[0] = jnp.sum(y, axis=0, keepdims=True)
    q_ref[0] = jnp.sum(y * y, axis=0, keepdims=True)


def _bn_prelu_kernel(x_ref, sc_ref, sh_ref, al_ref, o_ref):
    y = x_ref[...].astype(jnp.float32) * sc_ref[...] + sh_ref[...]
    o_ref[...] = jnp.where(y >= 0.0, y, al_ref[...] * y).astype(o_ref.dtype)


# ------------------------------ op wrappers ---------------------------------

def conv_transpose_up(x, w, b):
    """x: [N,D,H,W,Cin] bf16; w: [Cin,Cout,2,2,2] (torch layout); b: [Cout].
    Returns y0: [N*D, 2, H, 2, W, 2*Cout] bf16 (a free reshape away from the
    upsampled [N,2D,2H,2W,Cout]) plus per-slab BN partial sums / sumsq."""
    n, d, h, wd, cin = x.shape
    cout = w.shape[1]
    # (i, o, a, b, c) -> (a, b, i, c, o) -> [2, 2, Cin, 2*Cout] (c-major cols).
    wr = jnp.transpose(w, (2, 3, 0, 4, 1)).reshape(2, 2, cin, 2 * cout)
    wr = wr.astype(jnp.bfloat16)
    b2 = jnp.tile(b, 2).reshape(1, 2 * cout).astype(jnp.float32)
    g = n * d

    kernel = functools.partial(_up_kernel, H=h, W=wd, cout=cout)
    y, s, q = pl.pallas_call(
        kernel,
        out_shape=(jax.ShapeDtypeStruct((g, 2, h, 2, wd, 2 * cout), jnp.bfloat16),
                   jax.ShapeDtypeStruct((g, 1, cout), jnp.float32),
                   jax.ShapeDtypeStruct((g, 1, cout), jnp.float32)),
        grid=(n, d),
        in_specs=[
            pl.BlockSpec((1, 1, h, wd, cin), lambda i, j: (i, j, 0, 0, 0)),
            pl.BlockSpec((2, 2, cin, 2 * cout), lambda i, j: (0, 0, 0, 0)),
            pl.BlockSpec((1, 2 * cout), lambda i, j: (0, 0)),
        ],
        out_specs=(
            pl.BlockSpec((1, 2, h, 2, wd, 2 * cout),
                         lambda i, j: (i * d + j, 0, 0, 0, 0, 0)),
            pl.BlockSpec((1, 1, cout), lambda i, j: (i * d + j, 0, 0)),
            pl.BlockSpec((1, 1, cout), lambda i, j: (i * d + j, 0, 0)),
        ),
        compiler_params=pltpu.CompilerParams(
            dimension_semantics=("parallel", "parallel"),
            vmem_limit_bytes=VMEM_LIMIT),
    )(x, wr, b2)
    return y, s, q


def conv3x3_layer(z, w, b, in_scale, in_shift, in_alpha):
    """z: [N,D,H,W,C] bf16, *raw* previous-layer output (pre-BN).  The previous
    layer's BN affine + PReLU are applied inside the kernel.  Returns the raw
    conv output (bf16) plus per-slab BN partial sums / sumsq."""
    n, d, h, wd, c = z.shape
    cout = w.shape[0]
    wt = jnp.transpose(w, (2, 3, 4, 1, 0)).astype(jnp.bfloat16)   # [3,3,3,Cin,Cout]
    b2 = b.reshape(1, cout).astype(jnp.float32)
    g = n * d

    kernel = functools.partial(_conv3x3_kernel, D=d, H=h, W=wd)
    # TODO(synk): for volumes too large to hold one sample in VMEM, tile the
    # depth window with manual make_async_copy double-buffering instead of the
    # whole-volume revolving block.
    y, s, q = pl.pallas_call(
        kernel,
        out_shape=(jax.ShapeDtypeStruct((n, d, h, wd, cout), jnp.bfloat16),
                   jax.ShapeDtypeStruct((g, 1, cout), jnp.float32),
                   jax.ShapeDtypeStruct((g, 1, cout), jnp.float32)),
        grid=(n, d),
        in_specs=[
            pl.BlockSpec((1, d, h, wd, c), lambda i, j: (i, 0, 0, 0, 0)),
            pl.BlockSpec((3, 3, 3, c, cout), lambda i, j: (0, 0, 0, 0, 0)),
            pl.BlockSpec((1, cout), lambda i, j: (0, 0)),
            pl.BlockSpec((1, c), lambda i, j: (0, 0)),
            pl.BlockSpec((1, c), lambda i, j: (0, 0)),
            pl.BlockSpec((1, c), lambda i, j: (0, 0)),
        ],
        out_specs=(
            pl.BlockSpec((1, 1, h, wd, cout), lambda i, j: (i, j, 0, 0, 0)),
            pl.BlockSpec((1, 1, cout), lambda i, j: (i * d + j, 0, 0)),
            pl.BlockSpec((1, 1, cout), lambda i, j: (i * d + j, 0, 0)),
        ),
        scratch_shapes=[pltpu.VMEM((3, h + 2, wd + 2, c), jnp.bfloat16)],
        compiler_params=pltpu.CompilerParams(
            dimension_semantics=("parallel", "arbitrary"),
            vmem_limit_bytes=VMEM_LIMIT),
    )(z, wt, b2,
      in_scale.reshape(1, c).astype(jnp.float32),
      in_shift.reshape(1, c).astype(jnp.float32),
      in_alpha.reshape(1, c).astype(jnp.float32))
    return y, s, q


def bn_prelu_apply(x, scale, shift, alpha, out_dtype):
    """Fused per-channel scale/shift + PReLU on an [M, C] slab."""
    m, c = x.shape
    tm, mp = _row_tile(m, EW_ROW_TILE)
    xp = x if mp == m else jnp.pad(x, ((0, mp - m), (0, 0)))
    out = pl.pallas_call(
        _bn_prelu_kernel,
        out_shape=jax.ShapeDtypeStruct((mp, c), out_dtype),
        grid=(mp // tm,),
        in_specs=[
            pl.BlockSpec((tm, c), lambda i: (i, 0)),
            pl.BlockSpec((1, c), lambda i: (0, 0)),
            pl.BlockSpec((1, c), lambda i: (0, 0)),
            pl.BlockSpec((1, c), lambda i: (0, 0)),
        ],
        out_specs=pl.BlockSpec((tm, c), lambda i: (i, 0)),
        compiler_params=pltpu.CompilerParams(
            dimension_semantics=("parallel",),
            vmem_limit_bytes=VMEM_LIMIT),
    )(xp, scale.reshape(1, c).astype(jnp.float32),
      shift.reshape(1, c).astype(jnp.float32),
      alpha.reshape(1, c).astype(jnp.float32))
    return out if mp == m else out[:m]


# ------------------------------ NetJustUpBlock -------------------------------

def net_just_up_block_forward(params, x_ncdhw):
    # NCDHW -> NDHWC; bf16 operands for every MXU matmul.
    x = jnp.transpose(x_ncdhw, (0, 2, 3, 4, 1)).astype(jnp.bfloat16)
    n, d, h, w, _ = x.shape
    cout = params["up_b"].shape[0]

    # ---- up = ConvTranspose3d(k=2,s=2) + bias, depth-to-space in-kernel -----
    y0, s0, q0 = conv_transpose_up(x, params["up_w"], params["up_b"])
    cnt0 = float(n * d * h * w * 8)
    mean = s0.sum(axis=(0, 1)) / cnt0
    var = q0.sum(axis=(0, 1)) / cnt0 - mean * mean
    scale = params["bn_g"] * jax.lax.rsqrt(var + EPS)
    shift = params["bn_b"] - mean * scale
    alpha = params["af_a"]

    # Free contiguous regroup into the upsampled NDHWC tensor (no data move).
    z = y0.reshape(n, 2 * d, 2 * h, 2 * w, cout)

    # ---- NetConvBlock: each conv folds the PREVIOUS BN+PReLU into its input -
    for layer in params["convb"]:
        nn_, dd, hh, ww, _ = z.shape
        z, s, q = conv3x3_layer(z, layer["w"], layer["b"], scale, shift, alpha)
        m = float(nn_ * dd * hh * ww)
        mean = s.sum(axis=(0, 1)) / m
        var = q.sum(axis=(0, 1)) / m - mean * mean
        scale = layer["g"] * jax.lax.rsqrt(var + EPS)
        shift = layer["beta"] - mean * scale
        alpha = layer["a"]

    # ---- final BN + PReLU of the last conv layer (lane-dense folded view) ---
    nn_, dd, hh, ww, cc = z.shape
    m = nn_ * dd * hh * ww
    fold = 8 if m % 8 == 0 else 1
    act = bn_prelu_apply(z.reshape(m // fold, fold * cc),
                         jnp.tile(scale, fold), jnp.tile(shift, fold),
                         jnp.tile(alpha, fold), out_dtype=jnp.float32)
    out = act.reshape(nn_, dd, hh, ww, cc)
    return jnp.transpose(out, (0, 4, 1, 2, 3))   # back to NCDHW, f32


def init_params(key, in_ch, out_ch, layers):
    keys = jax.random.split(key, 4 + 4 * layers)
    p = {
        "up_w": 0.1 * jax.random.normal(keys[0], (in_ch, out_ch, 2, 2, 2), jnp.float32),
        "up_b": 0.1 * jax.random.normal(keys[1], (out_ch,), jnp.float32),
        "bn_g": 1.0 + 0.1 * jax.random.normal(keys[2], (out_ch,), jnp.float32),
        "bn_b": 0.1 * jax.random.normal(keys[3], (out_ch,), jnp.float32),
        "af_a": jnp.full((out_ch,), 0.25, jnp.float32),   # PReLU default init
        "convb": [],
    }
    cin = out_ch
    for li in range(layers):
        k = keys[4 + 4 * li: 8 + 4 * li]
        p["convb"].append({
            "w": 0.1 * jax.random.normal(k[0], (out_ch, cin, 3, 3, 3), jnp.float32),
            "b": 0.1 * jax.random.normal(k[1], (out_ch,), jnp.float32),
            "g": 1.0 + 0.1 * jax.random.normal(k[2], (out_ch,), jnp.float32),
            "beta": 0.1 * jax.random.normal(k[3], (out_ch,), jnp.float32),
            "a": jnp.full((out_ch,), 0.25, jnp.float32),
        })
        cin = out_ch
    return p


# ------------------------------ pure-JAX reference ---------------------------

def reference_forward(params, x_ncdhw):
    """Same math in plain JAX (NCDHW), with matching bf16 matmul operand casts.
    (Intermediates stay f32 here; the Pallas path stores them as bf16, which is
    the expected source of the small numerical gap checked below.)"""
    f32, bf16 = jnp.float32, jnp.bfloat16

    def bn_prelu(y, g, b, a):
        mean = y.mean(axis=(0, 2, 3, 4), keepdims=True)
        var = y.var(axis=(0, 2, 3, 4), keepdims=True)
        yn = (y - mean) * jax.lax.rsqrt(var + EPS)
        yn = yn * g.reshape(1, -1, 1, 1, 1) + b.reshape(1, -1, 1, 1, 1)
        return jnp.where(yn >= 0, yn, a.reshape(1, -1, 1, 1, 1) * yn)

    x = x_ncdhw.astype(bf16)
    wt = params["up_w"].astype(bf16)
    up = jnp.einsum("nidhw,ioabc->nodahbwc", x, wt, preferred_element_type=f32)
    n = x.shape[0]
    co = wt.shape[1]
    d2, h2, w2 = 2 * x.shape[2], 2 * x.shape[3], 2 * x.shape[4]
    up = up.reshape(n, co, d2, h2, w2) + params["up_b"].reshape(1, -1, 1, 1, 1)
    out = bn_prelu(up, params["bn_g"], params["bn_b"], params["af_a"])

    for layer in params["convb"]:
        y = jax.lax.conv_general_dilated(
            out.astype(bf16), layer["w"].astype(bf16),
            window_strides=(1, 1, 1), padding=[(1, 1)] * 3,
            dimension_numbers=("NCDHW", "OIDHW", "NCDHW"),
            preferred_element_type=f32)
        y = y + layer["b"].reshape(1, -1, 1, 1, 1)
        out = bn_prelu(y, layer["g"], layer["beta"], layer["a"])
    return out


if __name__ == "__main__":
    key = jax.random.PRNGKey(0)
    k_x, k_p = jax.random.split(key, 2)

    in_channels, out_channels, layers = 16, 16, 2
    N, D, H, W = 2, 4, 4, 4
    x = jax.random.normal(k_x, (N, in_channels, D, H, W), jnp.float32)
    params = init_params(k_p, in_channels, out_channels, layers)

    fwd = jax.jit(net_just_up_block_forward)
    out = fwd(params, x)
    jax.block_until_ready(out)
    assert out.shape == (N, out_channels, 2 * D, 2 * H, 2 * W)
    assert bool(jnp.all(jnp.isfinite(out)))

    ref = jax.jit(reference_forward)(params, x)
    jax.block_until_ready(ref)
    diff = jnp.abs(out - ref)
    max_err = float(jnp.max(diff))
    mean_err = float(jnp.mean(diff))
    assert max_err < 1e-1, f"max abs err {max_err}"
    assert mean_err < 2e-2, f"mean abs err {mean_err}"

    print("KERNEL_OK")
</pallas_src>

<mosaic_0001>
module attributes {stable_mosaic.version = 11 : i64} {
  func.func @_up_kernel(%arg0: i32, %arg1: i32, %arg2: memref<1x1x4x4x16xbf16, #tpu.memory_space<vmem>>, %arg3: memref<2x2x16x32xbf16, #tpu.memory_space<vmem>>, %arg4: memref<1x32xf32, #tpu.memory_space<vmem>>, %arg5: memref<1x2x4x2x4x32xbf16, #tpu.memory_space<vmem>>, %arg6: memref<1x1x16xf32, #tpu.memory_space<vmem>>, %arg7: memref<1x1x16xf32, #tpu.memory_space<vmem>>) attributes {dimension_semantics = [#tpu.dimension_semantics<parallel>, #tpu.dimension_semantics<parallel>], iteration_bounds = array<i64: 2, 4>, scalar_prefetch = 0 : i64, scratch_operands = 0 : i64, tpu.core_type = #tpu.core_type<tc>, window_params = [{transform_indices = @transform_0, window_bounds = array<i64: 1, 1, 4, 4, 16>}, {pipeline_mode = #tpu.pipeline_mode<synchronous>, transform_indices = @transform_1, window_bounds = array<i64: 2, 2, 16, 32>}, {pipeline_mode = #tpu.pipeline_mode<synchronous>, transform_indices = @transform_2, window_bounds = array<i64: 1, 32>}, {transform_indices = @transform_3, window_bounds = array<i64: 1, 2, 4, 2, 4, 32>}, {transform_indices = @transform_4, window_bounds = array<i64: 1, 1, 16>}, {transform_indices = @transform_5, window_bounds = array<i64: 1, 1, 16>}]} {
    %c0 = arith.constant 0 : index
    %c0_0 = arith.constant 0 : index
    %c0_1 = arith.constant 0 : index
    %c0_2 = arith.constant 0 : index
    %c0_3 = arith.constant 0 : index
    %0 = vector.load %arg2[%c0, %c0_0, %c0_1, %c0_2, %c0_3] : memref<1x1x4x4x16xbf16, #tpu.memory_space<vmem>>, vector<1x1x4x4x16xbf16>
    %1 = vector.shape_cast %0 : vector<1x1x4x4x16xbf16> to vector<4x4x16xbf16>
    %2 = vector.shape_cast %1 : vector<4x4x16xbf16> to vector<16x16xbf16>
    %cst = arith.constant 0.000000e+00 : f32
    %3 = vector.broadcast %cst : f32 to vector<1x16xf32>
    %cst_4 = arith.constant 0.000000e+00 : f32
    %4 = vector.broadcast %cst_4 : f32 to vector<1x16xf32>
    %c0_5 = arith.constant 0 : index
    %c0_6 = arith.constant 0 : index
    %c0_7 = arith.constant 0 : index
    %c0_8 = arith.constant 0 : index
    %5 = vector.load %arg3[%c0_5, %c0_6, %c0_7, %c0_8] : memref<2x2x16x32xbf16, #tpu.memory_space<vmem>>, vector<1x1x16x32xbf16>
    %6 = vector.shape_cast %5 : vector<1x1x16x32xbf16> to vector<16x32xbf16>
    %cst_9 = arith.constant dense<0.000000e+00> : vector<16x32xf32>
    %7 = tpu.matmul %2, %6, %cst_9 {dimension_numbers = #tpu.dot_dimension_numbers<[1], [0], [0], [1], [0, 0, 1, 1], [], []>} : vector<16x16xbf16>, vector<16x32xbf16>, vector<16x32xf32> -> vector<16x32xf32>
    %c0_10 = arith.constant 0 : index
    %c0_11 = arith.constant 0 : index
    %8 = vector.load %arg4[%c0_10, %c0_11] : memref<1x32xf32, #tpu.memory_space<vmem>>, vector<1x32xf32>
    %9 = vector.broadcast %8 : vector<1x32xf32> to vector<16x32xf32>
    %10 = arith.addf %7, %9 : vector<16x32xf32>
    %cst_12 = arith.constant dense<0.000000e+00> : vector<32xf32>
    %11 = vector.multi_reduction <add>, %10, %cst_12 [0] : vector<16x32xf32> to vector<32xf32>
    %12 = vector.shape_cast %11 : vector<32xf32> to vector<1x32xf32>
    %13 = arith.mulf %10, %10 : vector<16x32xf32>
    %cst_13 = arith.constant dense<0.000000e+00> : vector<32xf32>
    %14 = vector.multi_reduction <add>, %13, %cst_13 [0] : vector<16x32xf32> to vector<32xf32>
    %15 = vector.shape_cast %14 : vector<32xf32> to vector<1x32xf32>
    %16 = vector.extract_strided_slice %12 {offsets = [0, 0], sizes = [1, 16], strides = [1, 1]} : vector<1x32xf32> to vector<1x16xf32>
    %17 = arith.addf %3, %16 : vector<1x16xf32>
    %18 = vector.extract_strided_slice %12 {offsets = [0, 16], sizes = [1, 16], strides = [1, 1]} : vector<1x32xf32> to vector<1x16xf32>
    %19 = arith.addf %17, %18 : vector<1x16xf32>
    %20 = vector.extract_strided_slice %15 {offsets = [0, 0], sizes = [1, 16], strides = [1, 1]} : vector<1x32xf32> to vector<1x16xf32>
    %21 = arith.addf %4, %20 : vector<1x16xf32>
    %22 = vector.extract_strided_slice %15 {offsets = [0, 16], sizes = [1, 16], strides = [1, 1]} : vector<1x32xf32> to vector<1x16xf32>
    %23 = arith.addf %21, %22 : vector<1x16xf32>
    %24 = vector.shape_cast %10 : vector<16x32xf32> to vector<4x4x32xf32>
    %25 = arith.truncf %24 : vector<4x4x32xf32> to vector<4x4x32xbf16>
    %c0_14 = arith.constant 0 : index
    %c0_15 = arith.constant 0 : index
    %c0_16 = arith.constant 0 : index
    %c0_17 = arith.constant 0 : index
    %c0_18 = arith.constant 0 : index
    %c0_19 = arith.constant 0 : index
    %26 = vector.load %arg5[%c0_14, %c0_15, %c0_16, %c0_17, %c0_18, %c0_19] : memref<1x2x4x2x4x32xbf16, #tpu.memory_space<vmem>>, vector<1x1x4x1x4x32xbf16>
    %27 = vector.shape_cast %26 : vector<1x1x4x1x4x32xbf16> to vector<4x4x32xbf16>
    %28 = vector.shape_cast %25 : vector<4x4x32xbf16> to vector<1x1x4x1x4x32xbf16>
    tpu.vector_store %arg5[%c0_14, %c0_15, %c0_16, %c0_17, %c0_18, %c0_19], %28 {strides = array<i32>} : memref<1x2x4x2x4x32xbf16, #tpu.memory_space<vmem>>, vector<1x1x4x1x4x32xbf16>,
    %c0_20 = arith.constant 0 : index
    %c1 = arith.constant 1 : index
    %c0_21 = arith.constant 0 : index
    %c0_22 = arith.constant 0 : index
    %29 = vector.load %arg3[%c0_20, %c1, %c0_21, %c0_22] : memref<2x2x16x32xbf16, #tpu.memory_space<vmem>>, vector<1x1x16x32xbf16>
    %30 = vector.shape_cast %29 : vector<1x1x16x32xbf16> to vector<16x32xbf16>
    %cst_23 = arith.constant dense<0.000000e+00> : vector<16x32xf32>
    %31 = tpu.matmul %2, %30, %cst_23 {dimension_numbers = #tpu.dot_dimension_numbers<[1], [0], [0], [1], [0, 0, 1, 1], [], []>} : vector<16x16xbf16>, vector<16x32xbf16>, vector<16x32xf32> -> vector<16x32xf32>
    %c0_24 = arith.constant 0 : index
    %c0_25 = arith.constant 0 : index
    %32 = vector.load %arg4[%c0_24, %c0_25] : memref<1x32xf32, #tpu.memory_space<vmem>>, vector<1x32xf32>
    %33 = vector.broadcast %32 : vector<1x32xf32> to vector<16x32xf32>
    %34 = arith.addf %31, %33 : vector<16x32xf32>
    %cst_26 = arith.constant dense<0.000000e+00> : vector<32xf32>
    %35 = vector.multi_reduction <add>, %34, %cst_26 [0] : vector<16x32xf32> to vector<32xf32>
    %36 = vector.shape_cast %35 : vector<32xf32> to vector<1x32xf32>
    %37 = arith.mulf %34, %34 : vector<16x32xf32>
    %cst_27 = arith.constant dense<0.000000e+00> : vector<32xf32>
    %38 = vector.multi_reduction <add>, %37, %cst_27 [0] : vector<16x32xf32> to vector<32xf32>
    %39 = vector.shape_cast %38 : vector<32xf32> to vector<1x32xf32>
    %40 = vector.extract_strided_slice %36 {offsets = [0, 0], sizes = [1, 16], strides = [1, 1]} : vector<1x32xf32> to vector<1x16xf32>
    %41 = arith.addf %19, %40 : vector<1x16xf32>
    %42 = vector.extract_strided_slice %36 {offsets = [0, 16], sizes = [1, 16], strides = [1, 1]} : vector<1x32xf32> to vector<1x16xf32>
    %43 = arith.addf %41, %42 : vector<1x16xf32>
    %44 = vector.extract_strided_slice %39 {offsets = [0, 0], sizes = [1, 16], strides = [1, 1]} : vector<1x32xf32> to vector<1x16xf32>
    %45 = arith.addf %23, %44 : vector<1x16xf32>
    %46 = vector.extract_strided_slice %39 {offsets = [0, 16], sizes = [1, 16], strides = [1, 1]} : vector<1x32xf32> to vector<1x16xf32>
    %47 = arith.addf %45, %46 : vector<1x16xf32>
    %48 = vector.shape_cast %34 : vector<16x32xf32> to vector<4x4x32xf32>
    %49 = arith.truncf %48 : vector<4x4x32xf32> to vector<4x4x32xbf16>
    %c0_28 = arith.constant 0 : index
    %c0_29 = arith.constant 0 : index
    %c0_30 = arith.constant 0 : index
    %c1_31 = arith.constant 1 : index
    %c0_32 = arith.constant 0 : index
    %c0_33 = arith.constant 0 : index
    %50 = vector.load %arg5[%c0_28, %c0_29, %c0_30, %c1_31, %c0_32, %c0_33] : memref<1x2x4x2x4x32xbf16, #tpu.memory_space<vmem>>, vector<1x1x4x1x4x32xbf16>
    %51 = vector.shape_cast %50 : vector<1x1x4x1x4x32xbf16> to vector<4x4x32xbf16>
    %52 = vector.shape_cast %49 : vector<4x4x32xbf16> to vector<1x1x4x1x4x32xbf16>
    tpu.vector_store %arg5[%c0_28, %c0_29, %c0_30, %c1_31, %c0_32, %c0_33], %52 {strides = array<i32>} : memref<1x2x4x2x4x32xbf16, #tpu.memory_space<vmem>>, vector<1x1x4x1x4x32xbf16>,
    %c1_34 = arith.constant 1 : index
    %c0_35 = arith.constant 0 : index
    %c0_36 = arith.constant 0 : index
    %c0_37 = arith.constant 0 : index
    %53 = vector.load %arg3[%c1_34, %c0_35, %c0_36, %c0_37] : memref<2x2x16x32xbf16, #tpu.memory_space<vmem>>, vector<1x1x16x32xbf16>
    %54 = vector.shape_cast %53 : vector<1x1x16x32xbf16> to vector<16x32xbf16>
    %cst_38 = arith.constant dense<0.000000e+00> : vector<16x32xf32>
    %55 = tpu.matmul %2, %54, %cst_38 {dimension_numbers = #tpu.dot_dimension_numbers<[1], [0], [0], [1], [0, 0, 1, 1], [], []>} : vector<16x16xbf16>, vector<16x32xbf16>, vector<16x32xf32> -> vector<16x32xf32>
    %c0_39 = arith.constant 0 : index
    %c0_40 = arith.constant 0 : index
    %56 = vector.load %arg4[%c0_39, %c0_40] : memref<1x32xf32, #tpu.memory_space<vmem>>, vector<1x32xf32>
    %57 = vector.broadcast %56 : vector<1x32xf32> to vector<16x32xf32>
    %58 = arith.addf %55, %57 : vector<16x32xf32>
    %cst_41 = arith.constant dense<0.000000e+00> : vector<32xf32>
    %59 = vector.multi_reduction <add>, %58, %cst_41 [0] : vector<16x32xf32> to vector<32xf32>
    %60 = vector.shape_cast %59 : vector<32xf32> to vector<1x32xf32>
    %61 = arith.mulf %58, %58 : vector<16x32xf32>
    %cst_42 = arith.constant dense<0.000000e+00> : vector<32xf32>
    %62 = vector.multi_reduction <add>, %61, %cst_42 [0] : vector<16x32xf32> to vector<32xf32>
    %63 = vector.shape_cast %62 : vector<32xf32> to vector<1x32xf32>
    %64 = vector.extract_strided_slice %60 {offsets = [0, 0], sizes = [1, 16], strides = [1, 1]} : vector<1x32xf32> to vector<1x16xf32>
    %65 = arith.addf %43, %64 : vector<1x16xf32>
    %66 = vector.extract_strided_slice %60 {offsets = [0, 16], sizes = [1, 16], strides = [1, 1]} : vector<1x32xf32> to vector<1x16xf32>
    %67 = arith.addf %65, %66 : vector<1x16xf32>
    %68 = vector.extract_strided_slice %63 {offsets = [0, 0], sizes = [1, 16], strides = [1, 1]} : vector<1x32xf32> to vector<1x16xf32>
    %69 = arith.addf %47, %68 : vector<1x16xf32>
    %70 = vector.extract_strided_slice %63 {offsets = [0, 16], sizes = [1, 16], strides = [1, 1]} : vector<1x32xf32> to vector<1x16xf32>
    %71 = arith.addf %69, %70 : vector<1x16xf32>
    %72 = vector.shape_cast %58 : vector<16x32xf32> to vector<4x4x32xf32>
    %73 = arith.truncf %72 : vector<4x4x32xf32> to vector<4x4x32xbf16>
    %c0_43 = arith.constant 0 : index
    %c1_44 = arith.constant 1 : index
    %c0_45 = arith.constant 0 : index
    %c0_46 = arith.constant 0 : index
    %c0_47 = arith.constant 0 : index
    %c0_48 = arith.constant 0 : index
    %74 = vector.load %arg5[%c0_43, %c1_44, %c0_45, %c0_46, %c0_47, %c0_48] : memref<1x2x4x2x4x32xbf16, #tpu.memory_space<vmem>>, vector<1x1x4x1x4x32xbf16>
    %75 = vector.shape_cast %74 : vector<1x1x4x1x4x32xbf16> to vector<4x4x32xbf16>
    %76 = vector.shape_cast %73 : vector<4x4x32xbf16> to vector<1x1x4x1x4x32xbf16>
    tpu.vector_store %arg5[%c0_43, %c1_44, %c0_45, %c0_46, %c0_47, %c0_48], %76 {strides = array<i32>} : memref<1x2x4x2x4x32xbf16, #tpu.memory_space<vmem>>, vector<1x1x4x1x4x32xbf16>,
    %c1_49 = arith.constant 1 : index
    %c1_50 = arith.constant 1 : index
    %c0_51 = arith.constant 0 : index
    %c0_52 = arith.constant 0 : index
    %77 = vector.load %arg3[%c1_49, %c1_50, %c0_51, %c0_52] : memref<2x2x16x32xbf16, #tpu.memory_space<vmem>>, vector<1x1x16x32xbf16>
    %78 = vector.shape_cast %77 : vector<1x1x16x32xbf16> to vector<16x32xbf16>
    %cst_53 = arith.constant dense<0.000000e+00> : vector<16x32xf32>
    %79 = tpu.matmul %2, %78, %cst_53 {dimension_numbers = #tpu.dot_dimension_numbers<[1], [0], [0], [1], [0, 0, 1, 1], [], []>} : vector<16x16xbf16>, vector<16x32xbf16>, vector<16x32xf32> -> vector<16x32xf32>
    %c0_54 = arith.constant 0 : index
    %c0_55 = arith.constant 0 : index
    %80 = vector.load %arg4[%c0_54, %c0_55] : memref<1x32xf32, #tpu.memory_space<vmem>>, vector<1x32xf32>
    %81 = vector.broadcast %80 : vector<1x32xf32> to vector<16x32xf32>
    %82 = arith.addf %79, %81 : vector<16x32xf32>
    %cst_56 = arith.constant dense<0.000000e+00> : vector<32xf32>
    %83 = vector.multi_reduction <add>, %82, %cst_56 [0] : vector<16x32xf32> to vector<32xf32>
    %84 = vector.shape_cast %83 : vector<32xf32> to vector<1x32xf32>
    %85 = arith.mulf %82, %82 : vector<16x32xf32>
    %cst_57 = arith.constant dense<0.000000e+00> : vector<32xf32>
    %86 = vector.multi_reduction <add>, %85, %cst_57 [0] : vector<16x32xf32> to vector<32xf32>
    %87 = vector.shape_cast %86 : vector<32xf32> to vector<1x32xf32>
    %88 = vector.extract_strided_slice %84 {offsets = [0, 0], sizes = [1, 16], strides = [1, 1]} : vector<1x32xf32> to vector<1x16xf32>
    %89 = arith.addf %67, %88 : vector<1x16xf32>
    %90 = vector.extract_strided_slice %84 {offsets = [0, 16], sizes = [1, 16], strides = [1, 1]} : vector<1x32xf32> to vector<1x16xf32>
    %91 = arith.addf %89, %90 : vector<1x16xf32>
    %92 = vector.extract_strided_slice %87 {offsets = [0, 0], sizes = [1, 16], strides = [1, 1]} : vector<1x32xf32> to vector<1x16xf32>
    %93 = arith.addf %71, %92 : vector<1x16xf32>
    %94 = vector.extract_strided_slice %87 {offsets = [0, 16], sizes = [1, 16], strides = [1, 1]} : vector<1x32xf32> to vector<1x16xf32>
    %95 = arith.addf %93, %94 : vector<1x16xf32>
    %96 = vector.shape_cast %82 : vector<16x32xf32> to vector<4x4x32xf32>
    %97 = arith.truncf %96 : vector<4x4x32xf32> to vector<4x4x32xbf16>
    %c0_58 = arith.constant 0 : index
    %c1_59 = arith.constant 1 : index
    %c0_60 = arith.constant 0 : index
    %c1_61 = arith.constant 1 : index
    %c0_62 = arith.constant 0 : index
    %c0_63 = arith.constant 0 : index
    %98 = vector.load %arg5[%c0_58, %c1_59, %c0_60, %c1_61, %c0_62, %c0_63] : memref<1x2x4x2x4x32xbf16, #tpu.memory_space<vmem>>, vector<1x1x4x1x4x32xbf16>
    %99 = vector.shape_cast %98 : vector<1x1x4x1x4x32xbf16> to vector<4x4x32xbf16>
    %100 = vector.shape_cast %97 : vector<4x4x32xbf16> to vector<1x1x4x1x4x32xbf16>
    tpu.vector_store %arg5[%c0_58, %c1_59, %c0_60, %c1_61, %c0_62, %c0_63], %100 {strides = array<i32>} : memref<1x2x4x2x4x32xbf16, #tpu.memory_space<vmem>>, vector<1x1x4x1x4x32xbf16>,
    %c0_64 = arith.constant 0 : index
    %c0_65 = arith.constant 0 : index
    %c0_66 = arith.constant 0 : index
    %101 = vector.load %arg6[%c0_64, %c0_65, %c0_66] : memref<1x1x16xf32, #tpu.memory_space<vmem>>, vector<1x1x16xf32>
    %102 = vector.shape_cast %101 : vector<1x1x16xf32> to vector<1x16xf32>
    %103 = vector.shape_cast %91 : vector<1x16xf32> to vector<1x1x16xf32>
    tpu.vector_store %arg6[%c0_64, %c0_65, %c0_66], %103 {strides = array<i32>} : memref<1x1x16xf32, #tpu.memory_space<vmem>>, vector<1x1x16xf32>,
    %c0_67 = arith.constant 0 : index
    %c0_68 = arith.constant 0 : index
    %c0_69 = arith.constant 0 : index
    %104 = vector.load %arg7[%c0_67, %c0_68, %c0_69] : memref<1x1x16xf32, #tpu.memory_space<vmem>>, vector<1x1x16xf32>
    %105 = vector.shape_cast %104 : vector<1x1x16xf32> to vector<1x16xf32>
    %106 = vector.shape_cast %95 : vector<1x16xf32> to vector<1x1x16xf32>
    tpu.vector_store %arg7[%c0_67, %c0_68, %c0_69], %106 {strides = array<i32>} : memref<1x1x16xf32, #tpu.memory_space<vmem>>, vector<1x1x16xf32>,
    return
  }
  func.func @transform_0(%arg0: i32, %arg1: i32) -> (i32, i32, i32, i32, i32) {
    %c0_i32 = arith.constant 0 : i32
    %c0_i32_0 = arith.constant 0 : i32
    %c0_i32_1 = arith.constant 0 : i32
    %c0_i32_2 = arith.constant 0 : i32
    return %arg0, %arg1, %c0_i32, %c0_i32_0, %c0_i32_1 : i32, i32, i32, i32, i32
  }
  func.func @transform_1(%arg0: i32, %arg1: i32) -> (i32, i32, i32, i32) {
    %c0_i32 = arith.constant 0 : i32
    %c0_i32_0 = arith.constant 0 : i32
    %c0_i32_1 = arith.constant 0 : i32
    %c0_i32_2 = arith.constant 0 : i32
    %c0_i32_3 = arith.constant 0 : i32
    return %c0_i32, %c0_i32_0, %c0_i32_1, %c0_i32_2 : i32, i32, i32, i32
  }
  func.func @transform_2(%arg0: i32, %arg1: i32) -> (i32, i32) {
    %c0_i32 = arith.constant 0 : i32
    %c0_i32_0 = arith.constant 0 : i32
    %c0_i32_1 = arith.constant 0 : i32
    return %c0_i32, %c0_i32_0 : i32, i32
  }
  func.func @transform_3(%arg0: i32, %arg1: i32) -> (i32, i32, i32, i32, i32, i32) {
    %c4_i32 = arith.constant 4 : i32
    %0 = arith.muli %arg0, %c4_i32 : i32
    %1 = arith.addi %0, %arg1 : i32
    %c0_i32 = arith.constant 0 : i32
    %c0_i32_0 = arith.constant 0 : i32
    %c0_i32_1 = arith.constant 0 : i32
    %c0_i32_2 = arith.constant 0 : i32
    %c0_i32_3 = arith.constant 0 : i32
    %c0_i32_4 = arith.constant 0 : i32
    return %1, %c0_i32, %c0_i32_0, %c0_i32_1, %c0_i32_2, %c0_i32_3 : i32, i32, i32, i32, i32, i32
  }
  func.func @transform_4(%arg0: i32, %arg1: i32) -> (i32, i32, i32) {
    %c4_i32 = arith.constant 4 : i32
    %0 = arith.muli %arg0, %c4_i32 : i32
    %1 = arith.addi %0, %arg1 : i32
    %c0_i32 = arith.constant 0 : i32
    %c0_i32_0 = arith.constant 0 : i32
    %c0_i32_1 = arith.constant 0 : i32
    return %1, %c0_i32, %c0_i32_0 : i32, i32, i32
  }
  func.func @transform_5(%arg0: i32, %arg1: i32) -> (i32, i32, i32) {
    %c4_i32 = arith.constant 4 : i32
    %0 = arith.muli %arg0, %c4_i32 : i32
    %1 = arith.addi %0, %arg1 : i32
    %c0_i32 = arith.constant 0 : i32
    %c0_i32_0 = arith.constant 0 : i32
    %c0_i32_1 = arith.constant 0 : i32
    return %1, %c0_i32, %c0_i32_0 : i32, i32, i32
  }
}

module attributes {stable_mosaic.version = 11 : i64} {
  func.func @_conv3x3_kernel(%arg0: i32, %arg1: i32, %arg2: memref<1x8x8x8x16xbf16, #tpu.memory_space<vmem>>, %arg3: memref<3x3x3x16x16xbf16, #tpu.memory_space<vmem>>, %arg4: memref<1x16xf32, #tpu.memory_space<vmem>>, %arg5: memref<1x16xf32, #tpu.memory_space<vmem>>, %arg6: memref<1x16xf32, #tpu.memory_space<vmem>>, %arg7: memref<1x16xf32, #tpu.memory_space<vmem>>, %arg8: memref<1x1x8x8x16xbf16, #tpu.memory_space<vmem>>, %arg9: memref<1x1x16xf32, #tpu.memory_space<vmem>>, %arg10: memref<1x1x16xf32, #tpu.memory_space<vmem>>, %arg11: memref<3x10x10x16xbf16, #tpu.memory_space<vmem>>) attributes {dimension_semantics = [#tpu.dimension_semantics<parallel>, #tpu.dimension_semantics<arbitrary>], iteration_bounds = array<i64: 2, 8>, scalar_prefetch = 0 : i64, scratch_operands = 1 : i64, tpu.core_type = #tpu.core_type<tc>, window_params = [{transform_indices = @transform_0, window_bounds = array<i64: 1, 8, 8, 8, 16>}, {pipeline_mode = #tpu.pipeline_mode<synchronous>, transform_indices = @transform_1, window_bounds = array<i64: 3, 3, 3, 16, 16>}, {pipeline_mode = #tpu.pipeline_mode<synchronous>, transform_indices = @transform_2, window_bounds = array<i64: 1, 16>}, {pipeline_mode = #tpu.pipeline_mode<synchronous>, transform_indices = @transform_3, window_bounds = array<i64: 1, 16>}, {pipeline_mode = #tpu.pipeline_mode<synchronous>, transform_indices = @transform_4, window_bounds = array<i64: 1, 16>}, {pipeline_mode = #tpu.pipeline_mode<synchronous>, transform_indices = @transform_5, window_bounds = array<i64: 1, 16>}, {transform_indices = @transform_6, window_bounds = array<i64: 1, 1, 8, 8, 16>}, {transform_indices = @transform_7, window_bounds = array<i64: 1, 1, 16>}, {transform_indices = @transform_8, window_bounds = array<i64: 1, 1, 16>}]} {
    %c0 = arith.constant 0 : index
    %c0_0 = arith.constant 0 : index
    %0 = vector.load %arg5[%c0, %c0_0] : memref<1x16xf32, #tpu.memory_space<vmem>>, vector<1x16xf32>
    %c0_1 = arith.constant 0 : index
    %c0_2 = arith.constant 0 : index
    %1 = vector.load %arg6[%c0_1, %c0_2] : memref<1x16xf32, #tpu.memory_space<vmem>>, vector<1x16xf32>
    %c0_3 = arith.constant 0 : index
    %c0_4 = arith.constant 0 : index
    %2 = vector.load %arg7[%c0_3, %c0_4] : memref<1x16xf32, #tpu.memory_space<vmem>>, vector<1x16xf32>
    %cst = arith.constant 0.000000e+00 : bf16
    %3 = vector.broadcast %cst : bf16 to vector<3x10x10x16xbf16>
    %c0_5 = arith.constant 0 : index
    %c0_6 = arith.constant 0 : index
    %c0_7 = arith.constant 0 : index
    %c0_8 = arith.constant 0 : index
    %4 = vector.load %arg11[%c0_5, %c0_6, %c0_7, %c0_8] : memref<3x10x10x16xbf16, #tpu.memory_space<vmem>>, vector<3x10x10x16xbf16>
    tpu.vector_store %arg11[%c0_5, %c0_6, %c0_7, %c0_8], %3 {strides = array<i32>} : memref<3x10x10x16xbf16, #tpu.memory_space<vmem>>, vector<3x10x10x16xbf16>,
    %c-1_i32 = arith.constant -1 : i32
    %5 = arith.addi %arg1, %c-1_i32 : i32
    %c0_i32 = arith.constant 0 : i32
    %6 = arith.cmpi sge, %5, %c0_i32 : i32
    %c8_i32 = arith.constant 8 : i32
    %7 = arith.cmpi slt, %5, %c8_i32 : i32
    %8 = arith.andi %6, %7 : i1
    %c0_i32_9 = arith.constant 0 : i32
    %c7_i32 = arith.constant 7 : i32
    %9 = arith.maxsi %c0_i32_9, %5 : i32
    %10 = arith.minsi %c7_i32, %9 : i32
    %c0_10 = arith.constant 0 : index
    %11 = arith.index_cast %10 : i32 to index
    %c0_11 = arith.constant 0 : index
    %c0_12 = arith.constant 0 : index
    %c0_13 = arith.constant 0 : index
    %12 = vector.load %arg2[%c0_10, %11, %c0_11, %c0_12, %c0_13] : memref<1x8x8x8x16xbf16, #tpu.memory_space<vmem>>, vector<1x1x8x8x16xbf16>
    %13 = vector.shape_cast %12 : vector<1x1x8x8x16xbf16> to vector<1x8x8x16xbf16>
    %14 = vector.shape_cast %13 : vector<1x8x8x16xbf16> to vector<8x8x16xbf16>
    %15 = arith.extf %14 : vector<8x8x16xbf16> to vector<8x8x16xf32>
    %16 = vector.shape_cast %0 : vector<1x16xf32> to vector<1x1x16xf32>
    %17 = vector.broadcast %16 : vector<1x1x16xf32> to vector<8x8x16xf32>
    %18 = arith.mulf %15, %17 : vector<8x8x16xf32>
    %19 = vector.shape_cast %1 : vector<1x16xf32> to vector<1x1x16xf32>
    %20 = vector.broadcast %19 : vector<1x1x16xf32> to vector<8x8x16xf32>
    %21 = arith.addf %18, %20 : vector<8x8x16xf32>
    %cst_14 = arith.constant 0.000000e+00 : f32
    %22 = vector.broadcast %cst_14 : f32 to vector<8x8x16xf32>
    %23 = arith.cmpf oge, %21, %22 : vector<8x8x16xf32>
    %24 = vector.shape_cast %2 : vector<1x16xf32> to vector<1x1x16xf32>
    %25 = vector.broadcast %24 : vector<1x1x16xf32> to vector<8x8x16xf32>
    %26 = arith.mulf %25, %21 : vector<8x8x16xf32>
    %27 = arith.select %23, %21, %26 : vector<8x8x16xi1>, vector<8x8x16xf32>
    %cst_15 = arith.constant 0.000000e+00 : f32
    %28 = vector.broadcast %cst_15 : f32 to vector<8x8x16xf32>
    %29 = arith.select %8, %27, %28 : vector<8x8x16xf32>
    %30 = arith.truncf %29 : vector<8x8x16xf32> to vector<8x8x16xbf16>
    %c0_16 = arith.constant 0 : index
    %c1 = arith.constant 1 : index
    %c1_17 = arith.constant 1 : index
    %c0_18 = arith.constant 0 : index
    %31 = vector.load %arg11[%c0_16, %c1, %c1_17, %c0_18] : memref<3x10x10x16xbf16, #tpu.memory_space<vmem>>, vector<1x8x8x16xbf16>
    %32 = vector.shape_cast %31 : vector<1x8x8x16xbf16> to vector<8x8x16xbf16>
    %33 = vector.shape_cast %30 : vector<8x8x16xbf16> to vector<1x8x8x16xbf16>
    tpu.vector_store %arg11[%c0_16, %c1, %c1_17, %c0_18], %33 {strides = array<i32>} : memref<3x10x10x16xbf16, #tpu.memory_space<vmem>>, vector<1x8x8x16xbf16>,
    %c0_i32_19 = arith.constant 0 : i32
    %34 = arith.addi %arg1, %c0_i32_19 : i32
    %c0_i32_20 = arith.constant 0 : i32
    %35 = arith.cmpi sge, %34, %c0_i32_20 : i32
    %c8_i32_21 = arith.constant 8 : i32
    %36 = arith.cmpi slt, %34, %c8_i32_21 : i32
    %37 = arith.andi %35, %36 : i1
    %c0_i32_22 = arith.constant 0 : i32
    %c7_i32_23 = arith.constant 7 : i32
    %38 = arith.maxsi %c0_i32_22, %34 : i32
    %39 = arith.minsi %c7_i32_23, %38 : i32
    %c0_24 = arith.constant 0 : index
    %40 = arith.index_cast %39 : i32 to index
    %c0_25 = arith.constant 0 : index
    %c0_26 = arith.constant 0 : index
    %c0_27 = arith.constant 0 : index
    %41 = vector.load %arg2[%c0_24, %40, %c0_25, %c0_26, %c0_27] : memref<1x8x8x8x16xbf16, #tpu.memory_space<vmem>>, vector<1x1x8x8x16xbf16>
    %42 = vector.shape_cast %41 : vector<1x1x8x8x16xbf16> to vector<1x8x8x16xbf16>
    %43 = vector.shape_cast %42 : vector<1x8x8x16xbf16> to vector<8x8x16xbf16>
    %44 = arith.extf %43 : vector<8x8x16xbf16> to vector<8x8x16xf32>
    %45 = vector.shape_cast %0 : vector<1x16xf32> to vector<1x1x16xf32>
    %46 = vector.broadcast %45 : vector<1x1x16xf32> to vector<8x8x16xf32>
    %47 = arith.mulf %44, %46 : vector<8x8x16xf32>
    %48 = vector.shape_cast %1 : vector<1x16xf32> to vector<1x1x16xf32>
    %49 = vector.broadcast %48 : vector<1x1x16xf32> to vector<8x8x16xf32>
    %50 = arith.addf %47, %49 : vector<8x8x16xf32>
    %cst_28 = arith.constant 0.000000e+00 : f32
    %51 = vector.broadcast %cst_28 : f32 to vector<8x8x16xf32>
    %52 = arith.cmpf oge, %50, %51 : vector<8x8x16xf32>
    %53 = vector.shape_cast %2 : vector<1x16xf32> to vector<1x1x16xf32>
    %54 = vector.broadcast %53 : vector<1x1x16xf32> to vector<8x8x16xf32>
    %55 = arith.mulf %54, %50 : vector<8x8x16xf32>
    %56 = arith.select %52, %50, %55 : vector<8x8x16xi1>, vector<8x8x16xf32>
    %cst_29 = arith.constant 0.000000e+00 : f32
    %57 = vector.broadcast %cst_29 : f32 to vector<8x8x16xf32>
    %58 = arith.select %37, %56, %57 : vector<8x8x16xf32>
    %59 = arith.truncf %58 : vector<8x8x16xf32> to vector<8x8x16xbf16>
    %c1_30 = arith.constant 1 : index
    %c1_31 = arith.constant 1 : index
    %c1_32 = arith.constant 1 : index
    %c0_33 = arith.constant 0 : index
    %60 = vector.load %arg11[%c1_30, %c1_31, %c1_32, %c0_33] : memref<3x10x10x16xbf16, #tpu.memory_space<vmem>>, vector<1x8x8x16xbf16>
    %61 = vector.shape_cast %60 : vector<1x8x8x16xbf16> to vector<8x8x16xbf16>
    %62 = vector.shape_cast %59 : vector<8x8x16xbf16> to vector<1x8x8x16xbf16>
    tpu.vector_store %arg11[%c1_30, %c1_31, %c1_32, %c0_33], %62 {strides = array<i32>} : memref<3x10x10x16xbf16, #tpu.memory_space<vmem>>, vector<1x8x8x16xbf16>,
    %c1_i32 = arith.constant 1 : i32
    %63 = arith.addi %arg1, %c1_i32 : i32
    %c0_i32_34 = arith.constant 0 : i32
    %64 = arith.cmpi sge, %63, %c0_i32_34 : i32
    %c8_i32_35 = arith.constant 8 : i32
    %65 = arith.cmpi slt, %63, %c8_i32_35 : i32
    %66 = arith.andi %64, %65 : i1
    %c0_i32_36 = arith.constant 0 : i32
    %c7_i32_37 = arith.constant 7 : i32
    %67 = arith.maxsi %c0_i32_36, %63 : i32
    %68 = arith.minsi %c7_i32_37, %67 : i32
    %c0_38 = arith.constant 0 : index
    %69 = arith.index_cast %68 : i32 to index
    %c0_39 = arith.constant 0 : index
    %c0_40 = arith.constant 0 : index
    %c0_41 = arith.constant 0 : index
    %70 = vector.load %arg2[%c0_38, %69, %c0_39, %c0_40, %c0_41] : memref<1x8x8x8x16xbf16, #tpu.memory_space<vmem>>, vector<1x1x8x8x16xbf16>
    %71 = vector.shape_cast %70 : vector<1x1x8x8x16xbf16> to vector<1x8x8x16xbf16>
    %72 = vector.shape_cast %71 : vector<1x8x8x16xbf16> to vector<8x8x16xbf16>
    %73 = arith.extf %72 : vector<8x8x16xbf16> to vector<8x8x16xf32>
    %74 = vector.shape_cast %0 : vector<1x16xf32> to vector<1x1x16xf32>
    %75 = vector.broadcast %74 : vector<1x1x16xf32> to vector<8x8x16xf32>
    %76 = arith.mulf %73, %75 : vector<8x8x16xf32>
    %77 = vector.shape_cast %1 : vector<1x16xf32> to vector<1x1x16xf32>
    %78 = vector.broadcast %77 : vector<1x1x16xf32> to vector<8x8x16xf32>
    %79 = arith.addf %76, %78 : vector<8x8x16xf32>
    %cst_42 = arith.constant 0.000000e+00 : f32
    %80 = vector.broadcast %cst_42 : f32 to vector<8x8x16xf32>
    %81 = arith.cmpf oge, %79, %80 : vector<8x8x16xf32>
    %82 = vector.shape_cast %2 : vector<1x16xf32> to vector<1x1x16xf32>
    %83 = vector.broadcast %82 : vector<1x1x16xf32> to vector<8x8x16xf32>
    %84 = arith.mulf %83, %79 : vector<8x8x16xf32>
    %85 = arith.select %81, %79, %84 : vector<8x8x16xi1>, vector<8x8x16xf32>
    %cst_43 = arith.constant 0.000000e+00 : f32
    %86 = vector.broadcast %cst_43 : f32 to vector<8x8x16xf32>
    %87 = arith.select %66, %85, %86 : vector<8x8x16xf32>
    %88 = arith.truncf %87 : vector<8x8x16xf32> to vector<8x8x16xbf16>
    %c2 = arith.constant 2 : index
    %c1_44 = arith.constant 1 : index
    %c1_45 = arith.constant 1 : index
    %c0_46 = arith.constant 0 : index
    %89 = vector.load %arg11[%c2, %c1_44, %c1_45, %c0_46] : memref<3x10x10x16xbf16, #tpu.memory_space<vmem>>, vector<1x8x8x16xbf16>
    %90 = vector.shape_cast %89 : vector<1x8x8x16xbf16> to vector<8x8x16xbf16>
    %91 = vector.shape_cast %88 : vector<8x8x16xbf16> to vector<1x8x8x16xbf16>
    tpu.vector_store %arg11[%c2, %c1_44, %c1_45, %c0_46], %91 {strides = array<i32>} : memref<3x10x10x16xbf16, #tpu.memory_space<vmem>>, vector<1x8x8x16xbf16>,
    %cst_47 = arith.constant 0.000000e+00 : f32
    %92 = vector.broadcast %cst_47 : f32 to vector<64x16xf32>
    %c0_48 = arith.constant 0 : index
    %c0_49 = arith.constant 0 : index
    %c0_50 = arith.constant 0 : index
    %c0_51 = arith.constant 0 : index
    %93 = vector.load %arg11[%c0_48, %c0_49, %c0_50, %c0_51] : memref<3x10x10x16xbf16, #tpu.memory_space<vmem>>, vector<1x8x8x16xbf16>
    %94 = vector.shape_cast %93 : vector<1x8x8x16xbf16> to vector<8x8x16xbf16>
    %95 = vector.shape_cast %94 : vector<8x8x16xbf16> to vector<64x16xbf16>
    %c0_52 = arith.constant 0 : index
    %c0_53 = arith.constant 0 : index
    %c0_54 = arith.constant 0 : index
    %c0_55 = arith.constant 0 : index
    %c0_56 = arith.constant 0 : index
    %96 = vector.load %arg3[%c0_52, %c0_53, %c0_54, %c0_55, %c0_56] : memref<3x3x3x16x16xbf16, #tpu.memory_space<vmem>>, vector<1x1x1x16x16xbf16>
    %97 = vector.shape_cast %96 : vector<1x1x1x16x16xbf16> to vector<16x16xbf16>
    %cst_57 = arith.constant dense<0.000000e+00> : vector<64x16xf32>
    %98 = tpu.matmul %95, %97, %cst_57 {dimension_numbers = #tpu.dot_dimension_numbers<[1], [0], [0], [1], [0, 0, 1, 1], [], []>} : vector<64x16xbf16>, vector<16x16xbf16>, vector<64x16xf32> -> vector<64x16xf32>
    %99 = arith.addf %92, %98 : vector<64x16xf32>
    %c0_58 = arith.constant 0 : index
    %c0_59 = arith.constant 0 : index
    %c1_60 = arith.constant 1 : index
    %c0_61 = arith.constant 0 : index
    %100 = vector.load %arg11[%c0_58, %c0_59, %c1_60, %c0_61] : memref<3x10x10x16xbf16, #tpu.memory_space<vmem>>, vector<1x8x8x16xbf16>
    %101 = vector.shape_cast %100 : vector<1x8x8x16xbf16> to vector<8x8x16xbf16>
    %102 = vector.shape_cast %101 : vector<8x8x16xbf16> to vector<64x16xbf16>
    %c0_62 = arith.constant 0 : index
    %c0_63 = arith.constant 0 : index
    %c1_64 = arith.constant 1 : index
    %c0_65 = arith.constant 0 : index
    %c0_66 = arith.constant 0 : index
    %103 = vector.load %arg3[%c0_62, %c0_63, %c1_64, %c0_65, %c0_66] : memref<3x3x3x16x16xbf16, #tpu.memory_space<vmem>>, vector<1x1x1x16x16xbf16>
    %104 = vector.shape_cast %103 : vector<1x1x1x16x16xbf16> to vector<16x16xbf16>
    %cst_67 = arith.constant dense<0.000000e+00> : vector<64x16xf32>
    %105 = tpu.matmul %102, %104, %cst_67 {dimension_numbers = #tpu.dot_dimension_numbers<[1], [0], [0], [1], [0, 0, 1, 1], [], []>} : vector<64x16xbf16>, vector<16x16xbf16>, vector<64x16xf32> -> vector<64x16xf32>
    %106 = arith.addf %99, %105 : vector<64x16xf32>
    %c0_68 = arith.constant 0 : index
    %c0_69 = arith.constant 0 : index
    %c2_70 = arith.constant 2 : index
    %c0_71 = arith.constant 0 : index
    %107 = vector.load %arg11[%c0_68, %c0_69, %c2_70, %c0_71] : memref<3x10x10x16xbf16, #tpu.memory_space<vmem>>, vector<1x8x8x16xbf16>
    %108 = vector.shape_cast %107 : vector<1x8x8x16xbf16> to vector<8x8x16xbf16>
    %109 = vector.shape_cast %108 : vector<8x8x16xbf16> to vector<64x16xbf16>
    %c0_72 = arith.constant 0 : index
    %c0_73 = arith.constant 0 : index
    %c2_74 = arith.constant 2 : index
    %c0_75 = arith.constant 0 : index
    %c0_76 = arith.constant 0 : index
    %110 = vector.load %arg3[%c0_72, %c0_73, %c2_74, %c0_75, %c0_76] : memref<3x3x3x16x16xbf16, #tpu.memory_space<vmem>>, vector<1x1x1x16x16xbf16>
    %111 = vector.shape_cast %110 : vector<1x1x1x16x16xbf16> to vector<16x16xbf16>
    %cst_77 = arith.constant dense<0.000000e+00> : vector<64x16xf32>
    %112 = tpu.matmul %109, %111, %cst_77 {dimension_numbers = #tpu.dot_dimension_numbers<[1], [0], [0], [1], [0, 0, 1, 1], [], []>} : vector<64x16xbf16>, vector<16x16xbf16>, vector<64x16xf32> -> vector<64x16xf32>
    %113 = arith.addf %106, %112 : vector<64x16xf32>
    %c0_78 = arith.constant 0 : index
    %c1_79 = arith.constant 1 : index
    %c0_80 = arith.constant 0 : index
    %c0_81 = arith.constant 0 : index
    %114 = vector.load %arg11[%c0_78, %c1_79, %c0_80, %c0_81] : memref<3x10x10x16xbf16, #tpu.memory_space<vmem>>, vector<1x8x8x16xbf16>
    %115 = vector.shape_cast %114 : vector<1x8x8x16xbf16> to vector<8x8x16xbf16>
    %116 = vector.shape_cast %115 : vector<8x8x16xbf16> to vector<64x16xbf16>
    %c0_82 = arith.constant 0 : index
    %c1_83 = arith.constant 1 : index
    %c0_84 = arith.constant 0 : index
    %c0_85 = arith.constant 0 : index
    %c0_86 = arith.constant 0 : index
    %117 = vector.load %arg3[%c0_82, %c1_83, %c0_84, %c0_85, %c0_86] : memref<3x3x3x16x16xbf16, #tpu.memory_space<vmem>>, vector<1x1x1x16x16xbf16>
    %118 = vector.shape_cast %117 : vector<1x1x1x16x16xbf16> to vector<16x16xbf16>
    %cst_87 = arith.constant dense<0.000000e+00> : vector<64x16xf32>
    %119 = tpu.matmul %116, %118, %cst_87 {dimension_numbers = #tpu.dot_dimension_numbers<[1], [0], [0], [1], [0, 0, 1, 1], [], []>} : vector<64x16xbf16>, vector<16x16xbf16>, vector<64x16xf32> -> vector<64x16xf32>
    %120 = arith.addf %113, %119 : vector<64x16xf32>
    %c0_88 = arith.constant 0 : index
    %c1_89 = arith.constant 1 : index
    %c1_90 = arith.constant 1 : index
    %c0_91 = arith.constant 0 : index
    %121 = vector.load %arg11[%c0_88, %c1_89, %c1_90, %c0_91] : memref<3x10x10x16xbf16, #tpu.memory_space<vmem>>, vector<1x8x8x16xbf16>
    %122 = vector.shape_cast %121 : vector<1x8x8x16xbf16> to vector<8x8x16xbf16>
    %123 = vector.shape_cast %122 : vector<8x8x16xbf16> to vector<64x16xbf16>
    %c0_92 = arith.constant 0 : index
    %c1_93 = arith.constant 1 : index
    %c1_94 = arith.constant 1 : index
    %c0_95 = arith.constant 0 : index
    %c0_96 = arith.constant 0 : index
    %124 = vector.load %arg3[%c0_92, %c1_93, %c1_94, %c0_95, %c0_96] : memref<3x3x3x16x16xbf16, #tpu.memory_space<vmem>>, vector<1x1x1x16x16xbf16>
    %125 = vector.shape_cast %124 : vector<1x1x1x16x16xbf16> to vector<16x16xbf16>
    %cst_97 = arith.constant dense<0.000000e+00> : vector<64x16xf32>
    %126 = tpu.matmul %123, %125, %cst_97 {dimension_numbers = #tpu.dot_dimension_numbers<[1], [0], [0], [1], [0, 0, 1, 1], [], []>} : vector<64x16xbf16>, vector<16x16xbf16>, vector<64x16xf32> -> vector<64x16xf32>
    %127 = arith.addf %120, %126 : vector<64x16xf32>
    %c0_98 = arith.constant 0 : index
    %c1_99 = arith.constant 1 : index
    %c2_100 = arith.constant 2 : index
    %c0_101 = arith.constant 0 : index
    %128 = vector.load %arg11[%c0_98, %c1_99, %c2_100, %c0_101] : memref<3x10x10x16xbf16, #tpu.memory_space<vmem>>, vector<1x8x8x16xbf16>
    %129 = vector.shape_cast %128 : vector<1x8x8x16xbf16> to vector<8x8x16xbf16>
    %130 = vector.shape_cast %129 : vector<8x8x16xbf16> to vector<64x16xbf16>
    %c0_102 = arith.constant 0 : index
    %c1_103 = arith.constant 1 : index
    %c2_104 = arith.constant 2 : index
    %c0_105 = arith.constant 0 : index
    %c0_106 = arith.constant 0 : index
    %131 = vector.load %arg3[%c0_102, %c1_103, %c2_104, %c0_105, %c0_106] : memref<3x3x3x16x16xbf16, #tpu.memory_space<vmem>>, vector<1x1x1x16x16xbf16>
    %132 = vector.shape_cast %131 : vector<1x1x1x16x16xbf16> to vector<16x16xbf16>
    %cst_107 = arith.constant dense<0.000000e+00> : vector<64x16xf32>
    %133 = tpu.matmul %130, %132, %cst_107 {dimension_numbers = #tpu.dot_dimension_numbers<[1], [0], [0], [1], [0, 0, 1, 1], [], []>} : vector<64x16xbf16>, vector<16x16xbf16>, vector<64x16xf32> -> vector<64x16xf32>
    %134 = arith.addf %127, %133 : vector<64x16xf32>
    %c0_108 = arith.constant 0 : index
    %c2_109 = arith.constant 2 : index
    %c0_110 = arith.constant 0 : index
    %c0_111 = arith.constant 0 : index
    %135 = vector.load %arg11[%c0_108, %c2_109, %c0_110, %c0_111] : memref<3x10x10x16xbf16, #tpu.memory_space<vmem>>, vector<1x8x8x16xbf16>
    %136 = vector.shape_cast %135 : vector<1x8x8x16xbf16> to vector<8x8x16xbf16>
    %137 = vector.shape_cast %136 : vector<8x8x16xbf16> to vector<64x16xbf16>
    %c0_112 = arith.constant 0 : index
    %c2_113 = arith.constant 2 : index
    %c0_114 = arith.constant 0 : index
    %c0_115 = arith.constant 0 : index
    %c0_116 = arith.constant 0 : index
    %138 = vector.load %arg3[%c0_112, %c2_113, %c0_114, %c0_115, %c0_116] : memref<3x3x3x16x16xbf16, #tpu.memory_space<vmem>>, vector<1x1x1x16x16xbf16>
    %139 = vector.shape_cast %138 : vector<1x1x1x16x16xbf16> to vector<16x16xbf16>
    %cst_117 = arith.constant dense<0.000000e+00> : vector<64x16xf32>
    %140 = tpu.matmul %137, %139, %cst_117 {dimension_numbers = #tpu.dot_dimension_numbers<[1], [0], [0], [1], [0, 0, 1, 1], [], []>} : vector<64x16xbf16>, vector<16x16xbf16>, vector<64x16xf32> -> vector<64x16xf32>
    %141 = arith.addf %134, %140 : vector<64x16xf32>
    %c0_118 = arith.constant 0 : index
    %c2_119 = arith.constant 2 : index
    %c1_120 = arith.constant 1 : index
    %c0_121 = arith.constant 0 : index
    %142 = vector.load %arg11[%c0_118, %c2_119, %c1_120, %c0_121] : memref<3x10x10x16xbf16, #tpu.memory_space<vmem>>, vector<1x8x8x16xbf16>
    %143 = vector.shape_cast %142 : vector<1x8x8x16xbf16> to vector<8x8x16xbf16>
    %144 = vector.shape_cast %143 : vector<8x8x16xbf16> to vector<64x16xbf16>
    %c0_122 = arith.constant 0 : index
    %c2_123 = arith.constant 2 : index
    %c1_124 = arith.constant 1 : index
    %c0_125 = arith.constant 0 : index
    %c0_126 = arith.constant 0 : index
    %145 = vector.load %arg3[%c0_122, %c2_123, %c1_124, %c0_125, %c0_126] : memref<3x3x3x16x16xbf16, #tpu.memory_space<vmem>>, vector<1x1x1x16x16xbf16>
    %146 = vector.shape_cast %145 : vector<1x1x1x16x16xbf16> to vector<16x16xbf16>
    %cst_127 = arith.constant dense<0.000000e+00> : vector<64x16xf32>
    %147 = tpu.matmul %144, %146, %cst_127 {dimension_numbers = #tpu.dot_dimension_numbers<[1], [0], [0], [1], [0, 0, 1, 1], [], []>} : vector<64x16xbf16>, vector<16x16xbf16>, vector<64x16xf32> -> vector<64x16xf32>
    %148 = arith.addf %141, %147 : vector<64x16xf32>
    %c0_128 = arith.constant 0 : index
    %c2_129 = arith.constant 2 : index
    %c2_130 = arith.constant 2 : index
    %c0_131 = arith.constant 0 : index
    %149 = vector.load %arg11[%c0_128, %c2_129, %c2_130, %c0_131] : memref<3x10x10x16xbf16, #tpu.memory_space<vmem>>, vector<1x8x8x16xbf16>
    %150 = vector.shape_cast %149 : vector<1x8x8x16xbf16> to vector<8x8x16xbf16>
    %151 = vector.shape_cast %150 : vector<8x8x16xbf16> to vector<64x16xbf16>
    %c0_132 = arith.constant 0 : index
    %c2_133 = arith.constant 2 : index
    %c2_134 = arith.constant 2 : index
    %c0_135 = arith.constant 0 : index
    %c0_136 = arith.constant 0 : index
    %152 = vector.load %arg3[%c0_132, %c2_133, %c2_134, %c0_135, %c0_136] : memref<3x3x3x16x16xbf16, #tpu.memory_space<vmem>>, vector<1x1x1x16x16xbf16>
    %153 = vector.shape_cast %152 : vector<1x1x1x16x16xbf16> to vector<16x16xbf16>
    %cst_137 = arith.constant dense<0.000000e+00> : vector<64x16xf32>
    %154 = tpu.matmul %151, %153, %cst_137 {dimension_numbers = #tpu.dot_dimension_numbers<[1], [0], [0], [1], [0, 0, 1, 1], [], []>} : vector<64x16xbf16>, vector<16x16xbf16>, vector<64x16xf32> -> vector<64x16xf32>
    %155 = arith.addf %148, %154 : vector<64x16xf32>
    %c1_138 = arith.constant 1 : index
    %c0_139 = arith.constant 0 : index
    %c0_140 = arith.constant 0 : index
    %c0_141 = arith.constant 0 : index
    %156 = vector.load %arg11[%c1_138, %c0_139, %c0_140, %c0_141] : memref<3x10x10x16xbf16, #tpu.memory_space<vmem>>, vector<1x8x8x16xbf16>
    %157 = vector.shape_cast %156 : vector<1x8x8x16xbf16> to vector<8x8x16xbf16>
    %158 = vector.shape_cast %157 : vector<8x8x16xbf16> to vector<64x16xbf16>
    %c1_142 = arith.constant 1 : index
    %c0_143 = arith.constant 0 : index
    %c0_144 = arith.constant 0 : index
    %c0_145 = arith.constant 0 : index
    %c0_146 = arith.constant 0 : index
    %159 = vector.load %arg3[%c1_142, %c0_143, %c0_144, %c0_145, %c0_146] : memref<3x3x3x16x16xbf16, #tpu.memory_space<vmem>>, vector<1x1x1x16x16xbf16>
    %160 = vector.shape_cast %159 : vector<1x1x1x16x16xbf16> to vector<16x16xbf16>
    %cst_147 = arith.constant dense<0.000000e+00> : vector<64x16xf32>
    %161 = tpu.matmul %158, %160, %cst_147 {dimension_numbers = #tpu.dot_dimension_numbers<[1], [0], [0], [1], [0, 0, 1, 1], [], []>} : vector<64x16xbf16>, vector<16x16xbf16>, vector<64x16xf32> -> vector<64x16xf32>
    %162 = arith.addf %155, %161 : vector<64x16xf32>
    %c1_148 = arith.constant 1 : index
    %c0_149 = arith.constant 0 : index
    %c1_150 = arith.constant 1 : index
    %c0_151 = arith.constant 0 : index
    %163 = vector.load %arg11[%c1_148, %c0_149, %c1_150, %c0_151] : memref<3x10x10x16xbf16, #tpu.memory_space<vmem>>, vector<1x8x8x16xbf16>
    %164 = vector.shape_cast %163 : vector<1x8x8x16xbf16> to vector<8x8x16xbf16>
    %165 = vector.shape_cast %164 : vector<8x8x16xbf16> to vector<64x16xbf16>
    %c1_152 = arith.constant 1 : index
    %c0_153 = arith.constant 0 : index
    %c1_154 = arith.constant 1 : index
    %c0_155 = arith.constant 0 : index
    %c0_156 = arith.constant 0 : index
    %166 = vector.load %arg3[%c1_152, %c0_153, %c1_154, %c0_155, %c0_156] : memref<3x3x3x16x16xbf16, #tpu.memory_space<vmem>>, vector<1x1x1x16x16xbf16>
    %167 = vector.shape_cast %166 : vector<1x1x1x16x16xbf16> to vector<16x16xbf16>
    %cst_157 = arith.constant dense<0.000000e+00> : vector<64x16xf32>
    %168 = tpu.matmul %165, %167, %cst_157 {dimension_numbers = #tpu.dot_dimension_numbers<[1], [0], [0], [1], [0, 0, 1, 1], [], []>} : vector<64x16xbf16>, vector<16x16xbf16>, vector<64x16xf32> -> vector<64x16xf32>
    %169 = arith.addf %162, %168 : vector<64x16xf32>
    %c1_158 = arith.constant 1 : index
    %c0_159 = arith.constant 0 : index
    %c2_160 = arith.constant 2 : index
    %c0_161 = arith.constant 0 : index
    %170 = vector.load %arg11[%c1_158, %c0_159, %c2_160, %c0_161] : memref<3x10x10x16xbf16, #tpu.memory_space<vmem>>, vector<1x8x8x16xbf16>
    %171 = vector.shape_cast %170 : vector<1x8x8x16xbf16> to vector<8x8x16xbf16>
    %172 = vector.shape_cast %171 : vector<8x8x16xbf16> to vector<64x16xbf16>
    %c1_162 = arith.constant 1 : index
    %c0_163 = arith.constant 0 : index
    %c2_164 = arith.constant 2 : index
    %c0_165 = arith.constant 0 : index
    %c0_166 = arith.constant 0 : index
    %173 = vector.load %arg3[%c1_162, %c0_163, %c2_164, %c0_165, %c0_166] : memref<3x3x3x16x16xbf16, #tpu.memory_space<vmem>>, vector<1x1x1x16x16xbf16>
    %174 = vector.shape_cast %173 : vector<1x1x1x16x16xbf16> to vector<16x16xbf16>
    %cst_167 = arith.constant dense<0.000000e+00> : vector<64x16xf32>
    %175 = tpu.matmul %172, %174, %cst_167 {dimension_numbers = #tpu.dot_dimension_numbers<[1], [0], [0], [1], [0, 0, 1, 1], [], []>} : vector<64x16xbf16>, vector<16x16xbf16>, vector<64x16xf32> -> vector<64x16xf32>
    %176 = arith.addf %169, %175 : vector<64x16xf32>
    %c1_168 = arith.constant 1 : index
    %c1_169 = arith.constant 1 : index
    %c0_170 = arith.constant 0 : index
    %c0_171 = arith.constant 0 : index
    %177 = vector.load %arg11[%c1_168, %c1_169, %c0_170, %c0_171] : memref<3x10x10x16xbf16, #tpu.memory_space<vmem>>, vector<1x8x8x16xbf16>
    %178 = vector.shape_cast %177 : vector<1x8x8x16xbf16> to vector<8x8x16xbf16>
    %179 = vector.shape_cast %178 : vector<8x8x16xbf16> to vector<64x16xbf16>
    %c1_172 = arith.constant 1 : index
    %c1_173 = arith.constant 1 : index
    %c0_174 = arith.constant 0 : index
    %c0_175 = arith.constant 0 : index
    %c0_176 = arith.constant 0 : index
    %180 = vector.load %arg3[%c1_172, %c1_173, %c0_174, %c0_175, %c0_176] : memref<3x3x3x16x16xbf16, #tpu.memory_space<vmem>>, vector<1x1x1x16x16xbf16>
    %181 = vector.shape_cast %180 : vector<1x1x1x16x16xbf16> to vector<16x16xbf16>
    %cst_177 = arith.constant dense<0.000000e+00> : vector<64x16xf32>
    %182 = tpu.matmul %179, %181, %cst_177 {dimension_numbers = #tpu.dot_dimension_numbers<[1], [0], [0], [1], [0, 0, 1, 1], [], []>} : vector<64x16xbf16>, vector<16x16xbf16>, vector<64x16xf32> -> vector<64x16xf32>
    %183 = arith.addf %176, %182 : vector<64x16xf32>
    %c1_178 = arith.constant 1 : index
    %c1_179 = arith.constant 1 : index
    %c1_180 = arith.constant 1 : index
    %c0_181 = arith.constant 0 : index
    %184 = vector.load %arg11[%c1_178, %c1_179, %c1_180, %c0_181] : memref<3x10x10x16xbf16, #tpu.memory_space<vmem>>, vector<1x8x8x16xbf16>
    %185 = vector.shape_cast %184 : vector<1x8x8x16xbf16> to vector<8x8x16xbf16>
    %186 = vector.shape_cast %185 : vector<8x8x16xbf16> to vector<64x16xbf16>
    %c1_182 = arith.constant 1 : index
    %c1_183 = arith.constant 1 : index
    %c1_184 = arith.constant 1 : index
    %c0_185 = arith.constant 0 : index
    %c0_186 = arith.constant 0 : index
    %187 = vector.load %arg3[%c1_182, %c1_183, %c1_184, %c0_185, %c0_186] : memref<3x3x3x16x16xbf16, #tpu.memory_space<vmem>>, vector<1x1x1x16x16xbf16>
    %188 = vector.shape_cast %187 : vector<1x1x1x16x16xbf16> to vector<16x16xbf16>
    %cst_187 = arith.constant dense<0.000000e+00> : vector<64x16xf32>
    %189 = tpu.matmul %186, %188, %cst_187 {dimension_numbers = #tpu.dot_dimension_numbers<[1], [0], [0], [1], [0, 0, 1, 1], [], []>} : vector<64x16xbf16>, vector<16x16xbf16>, vector<64x16xf32> -> vector<64x16xf32>
    %190 = arith.addf %183, %189 : vector<64x16xf32>
    %c1_188 = arith.constant 1 : index
    %c1_189 = arith.constant 1 : index
    %c2_190 = arith.constant 2 : index
    %c0_191 = arith.constant 0 : index
    %191 = vector.load %arg11[%c1_188, %c1_189, %c2_190, %c0_191] : memref<3x10x10x16xbf16, #tpu.memory_space<vmem>>, vector<1x8x8x16xbf16>
    %192 = vector.shape_cast %191 : vector<1x8x8x16xbf16> to vector<8x8x16xbf16>
    %193 = vector.shape_cast %192 : vector<8x8x16xbf16> to vector<64x16xbf16>
    %c1_192 = arith.constant 1 : index
    %c1_193 = arith.constant 1 : index
    %c2_194 = arith.constant 2 : index
    %c0_195 = arith.constant 0 : index
    %c0_196 = arith.constant 0 : index
    %194 = vector.load %arg3[%c1_192, %c1_193, %c2_194, %c0_195, %c0_196] : memref<3x3x3x16x16xbf16, #tpu.memory_space<vmem>>, vector<1x1x1x16x16xbf16>
    %195 = vector.shape_cast %194 : vector<1x1x1x16x16xbf16> to vector<16x16xbf16>
    %cst_197 = arith.constant dense<0.000000e+00> : vector<64x16xf32>
    %196 = tpu.matmul %193, %195, %cst_197 {dimension_numbers = #tpu.dot_dimension_numbers<[1], [0], [0], [1], [0, 0, 1, 1], [], []>} : vector<64x16xbf16>, vector<16x16xbf16>, vector<64x16xf32> -> vector<64x16xf32>
    %197 = arith.addf %190, %196 : vector<64x16xf32>
    %c1_198 = arith.constant 1 : index
    %c2_199 = arith.constant 2 : index
    %c0_200 = arith.constant 0 : index
    %c0_201 = arith.constant 0 : index
    %198 = vector.load %arg11[%c1_198, %c2_199, %c0_200, %c0_201] : memref<3x10x10x16xbf16, #tpu.memory_space<vmem>>, vector<1x8x8x16xbf16>
    %199 = vector.shape_cast %198 : vector<1x8x8x16xbf16> to vector<8x8x16xbf16>
    %200 = vector.shape_cast %199 : vector<8x8x16xbf16> to vector<64x16xbf16>
    %c1_202 = arith.constant 1 : index
    %c2_203 = arith.constant 2 : index
    %c0_204 = arith.constant 0 : index
    %c0_205 = arith.constant 0 : index
    %c0_206 = arith.constant 0 : index
    %201 = vector.load %arg3[%c1_202, %c2_203, %c0_204, %c0_205, %c0_206] : memref<3x3x3x16x16xbf16, #tpu.memory_space<vmem>>, vector<1x1x1x16x16xbf16>
    %202 = vector.shape_cast %201 : vector<1x1x1x16x16xbf16> to vector<16x16xbf16>
    %cst_207 = arith.constant dense<0.000000e+00> : vector<64x16xf32>
    %203 = tpu.matmul %200, %202, %cst_207 {dimension_numbers = #tpu.dot_dimension_numbers<[1], [0], [0], [1], [0, 0, 1, 1], [], []>} : vector<64x16xbf16>, vector<16x16xbf16>, vector<64x16xf32> -> vector<64x16xf32>
    %204 = arith.addf %197, %203 : vector<64x16xf32>
    %c1_208 = arith.constant 1 : index
    %c2_209 = arith.constant 2 : index
    %c1_210 = arith.constant 1 : index
    %c0_211 = arith.constant 0 : index
    %205 = vector.load %arg11[%c1_208, %c2_209, %c1_210, %c0_211] : memref<3x10x10x16xbf16, #tpu.memory_space<vmem>>, vector<1x8x8x16xbf16>
    %206 = vector.shape_cast %205 : vector<1x8x8x16xbf16> to vector<8x8x16xbf16>
    %207 = vector.shape_cast %206 : vector<8x8x16xbf16> to vector<64x16xbf16>
    %c1_212 = arith.constant 1 : index
    %c2_213 = arith.constant 2 : index
    %c1_214 = arith.constant 1 : index
    %c0_215 = arith.constant 0 : index
    %c0_216 = arith.constant 0 : index
    %208 = vector.load %arg3[%c1_212, %c2_213, %c1_214, %c0_215, %c0_216] : memref<3x3x3x16x16xbf16, #tpu.memory_space<vmem>>, vector<1x1x1x16x16xbf16>
    %209 = vector.shape_cast %208 : vector<1x1x1x16x16xbf16> to vector<16x16xbf16>
    %cst_217 = arith.constant dense<0.000000e+00> : vector<64x16xf32>
    %210 = tpu.matmul %207, %209, %cst_217 {dimension_numbers = #tpu.dot_dimension_numbers<[1], [0], [0], [1], [0, 0, 1, 1], [], []>} : vector<64x16xbf16>, vector<16x16xbf16>, vector<64x16xf32> -> vector<64x16xf32>
    %211 = arith.addf %204, %210 : vector<64x16xf32>
    %c1_218 = arith.constant 1 : index
    %c2_219 = arith.constant 2 : index
    %c2_220 = arith.constant 2 : index
    %c0_221 = arith.constant 0 : index
    %212 = vector.load %arg11[%c1_218, %c2_219, %c2_220, %c0_221] : memref<3x10x10x16xbf16, #tpu.memory_space<vmem>>, vector<1x8x8x16xbf16>
    %213 = vector.shape_cast %212 : vector<1x8x8x16xbf16> to vector<8x8x16xbf16>
    %214 = vector.shape_cast %213 : vector<8x8x16xbf16> to vector<64x16xbf16>
    %c1_222 = arith.constant 1 : index
    %c2_223 = arith.constant 2 : index
    %c2_224 = arith.constant 2 : index
    %c0_225 = arith.constant 0 : index
    %c0_226 = arith.constant 0 : index
    %215 = vector.load %arg3[%c1_222, %c2_223, %c2_224, %c0_225, %c0_226] : memref<3x3x3x16x16xbf16, #tpu.memory_space<vmem>>, vector<1x1x1x16x16xbf16>
    %216 = vector.shape_cast %215 : vector<1x1x1x16x16xbf16> to vector<16x16xbf16>
    %cst_227 = arith.constant dense<0.000000e+00> : vector<64x16xf32>
    %217 = tpu.matmul %214, %216, %cst_227 {dimension_numbers = #tpu.dot_dimension_numbers<[1], [0], [0], [1], [0, 0, 1, 1], [], []>} : vector<64x16xbf16>, vector<16x16xbf16>, vector<64x16xf32> -> vector<64x16xf32>
    %218 = arith.addf %211, %217 : vector<64x16xf32>
    %c2_228 = arith.constant 2 : index
    %c0_229 = arith.constant 0 : index
    %c0_230 = arith.constant 0 : index
    %c0_231 = arith.constant 0 : index
    %219 = vector.load %arg11[%c2_228, %c0_229, %c0_230, %c0_231] : memref<3x10x10x16xbf16, #tpu.memory_space<vmem>>, vector<1x8x8x16xbf16>
    %220 = vector.shape_cast %219 : vector<1x8x8x16xbf16> to vector<8x8x16xbf16>
    %221 = vector.shape_cast %220 : vector<8x8x16xbf16> to vector<64x16xbf16>
    %c2_232 = arith.constant 2 : index
    %c0_233 = arith.constant 0 : index
    %c0_234 = arith.constant 0 : index
    %c0_235 = arith.constant 0 : index
    %c0_236 = arith.constant 0 : index
    %222 = vector.load %arg3[%c2_232, %c0_233, %c0_234, %c0_235, %c0_236] : memref<3x3x3x16x16xbf16, #tpu.memory_space<vmem>>, vector<1x1x1x16x16xbf16>
    %223 = vector.shape_cast %222 : vector<1x1x1x16x16xbf16> to vector<16x16xbf16>
    %cst_237 = arith.constant dense<0.000000e+00> : vector<64x16xf32>
    %224 = tpu.matmul %221, %223, %cst_237 {dimension_numbers = #tpu.dot_dimension_numbers<[1], [0], [0], [1], [0, 0, 1, 1], [], []>} : vector<64x16xbf16>, vector<16x16xbf16>, vector<64x16xf32> -> vector<64x16xf32>
    %225 = arith.addf %218, %224 : vector<64x16xf32>
    %c2_238 = arith.constant 2 : index
    %c0_239 = arith.constant 0 : index
    %c1_240 = arith.constant 1 : index
    %c0_241 = arith.constant 0 : index
    %226 = vector.load %arg11[%c2_238, %c0_239, %c1_240, %c0_241] : memref<3x10x10x16xbf16, #tpu.memory_space<vmem>>, vector<1x8x8x16xbf16>
    %227 = vector.shape_cast %226 : vector<1x8x8x16xbf16> to vector<8x8x16xbf16>
    %228 = vector.shape_cast %227 : vector<8x8x16xbf16> to vector<64x16xbf16>
    %c2_242 = arith.constant 2 : index
    %c0_243 = arith.constant 0 : index
    %c1_244 = arith.constant 1 : index
    %c0_245 = arith.constant 0 : index
    %c0_246 = arith.constant 0 : index
    %229 = vector.load %arg3[%c2_242, %c0_243, %c1_244, %c0_245, %c0_246] : memref<3x3x3x16x16xbf16, #tpu.memory_space<vmem>>, vector<1x1x1x16x16xbf16>
    %230 = vector.shape_cast %229 : vector<1x1x1x16x16xbf16> to vector<16x16xbf16>
    %cst_247 = arith.constant dense<0.000000e+00> : vector<64x16xf32>
    %231 = tpu.matmul %228, %230, %cst_247 {dimension_numbers = #tpu.dot_dimension_numbers<[1], [0], [0], [1], [0, 0, 1, 1], [], []>} : vector<64x16xbf16>, vector<16x16xbf16>, vector<64x16xf32> -> vector<64x16xf32>
    %232 = arith.addf %225, %231 : vector<64x16xf32>
    %c2_248 = arith.constant 2 : index
    %c0_249 = arith.constant 0 : index
    %c2_250 = arith.constant 2 : index
    %c0_251 = arith.constant 0 : index
    %233 = vector.load %arg11[%c2_248, %c0_249, %c2_250, %c0_251] : memref<3x10x10x16xbf16, #tpu.memory_space<vmem>>, vector<1x8x8x16xbf16>
    %234 = vector.shape_cast %233 : vector<1x8x8x16xbf16> to vector<8x8x16xbf16>
    %235 = vector.shape_cast %234 : vector<8x8x16xbf16> to vector<64x16xbf16>
    %c2_252 = arith.constant 2 : index
    %c0_253 = arith.constant 0 : index
    %c2_254 = arith.constant 2 : index
    %c0_255 = arith.constant 0 : index
    %c0_256 = arith.constant 0 : index
    %236 = vector.load %arg3[%c2_252, %c0_253, %c2_254, %c0_255, %c0_256] : memref<3x3x3x16x16xbf16, #tpu.memory_space<vmem>>, vector<1x1x1x16x16xbf16>
    %237 = vector.shape_cast %236 : vector<1x1x1x16x16xbf16> to vector<16x16xbf16>
    %cst_257 = arith.constant dense<0.000000e+00> : vector<64x16xf32>
    %238 = tpu.matmul %235, %237, %cst_257 {dimension_numbers = #tpu.dot_dimension_numbers<[1], [0], [0], [1], [0, 0, 1, 1], [], []>} : vector<64x16xbf16>, vector<16x16xbf16>, vector<64x16xf32> -> vector<64x16xf32>
    %239 = arith.addf %232, %238 : vector<64x16xf32>
    %c2_258 = arith.constant 2 : index
    %c1_259 = arith.constant 1 : index
    %c0_260 = arith.constant 0 : index
    %c0_261 = arith.constant 0 : index
    %240 = vector.load %arg11[%c2_258, %c1_259, %c0_260, %c0_261] : memref<3x10x10x16xbf16, #tpu.memory_space<vmem>>, vector<1x8x8x16xbf16>
    %241 = vector.shape_cast %240 : vector<1x8x8x16xbf16> to vector<8x8x16xbf16>
    %242 = vector.shape_cast %241 : vector<8x8x16xbf16> to vector<64x16xbf16>
    %c2_262 = arith.constant 2 : index
    %c1_263 = arith.constant 1 : index
    %c0_264 = arith.constant 0 : index
    %c0_265 = arith.constant 0 : index
    %c0_266 = arith.constant 0 : index
    %243 = vector.load %arg3[%c2_262, %c1_263, %c0_264, %c0_265, %c0_266] : memref<3x3x3x16x16xbf16, #tpu.memory_space<vmem>>, vector<1x1x1x16x16xbf16>
    %244 = vector.shape_cast %243 : vector<1x1x1x16x16xbf16> to vector<16x16xbf16>
    %cst_267 = arith.constant dense<0.000000e+00> : vector<64x16xf32>
    %245 = tpu.matmul %242, %244, %cst_267 {dimension_numbers = #tpu.dot_dimension_numbers<[1], [0], [0], [1], [0, 0, 1, 1], [], []>} : vector<64x16xbf16>, vector<16x16xbf16>, vector<64x16xf32> -> vector<64x16xf32>
    %246 = arith.addf %239, %245 : vector<64x16xf32>
    %c2_268 = arith.constant 2 : index
    %c1_269 = arith.constant 1 : index
    %c1_270 = arith.constant 1 : index
    %c0_271 = arith.constant 0 : index
    %247 = vector.load %arg11[%c2_268, %c1_269, %c1_270, %c0_271] : memref<3x10x10x16xbf16, #tpu.memory_space<vmem>>, vector<1x8x8x16xbf16>
    %248 = vector.shape_cast %247 : vector<1x8x8x16xbf16> to vector<8x8x16xbf16>
    %249 = vector.shape_cast %248 : vector<8x8x16xbf16> to vector<64x16xbf16>
    %c2_272 = arith.constant 2 : index
    %c1_273 = arith.constant 1 : index
    %c1_274 = arith.constant 1 : index
    %c0_275 = arith.constant 0 : index
    %c0_276 = arith.constant 0 : index
    %250 = vector.load %arg3[%c2_272, %c1_273, %c1_274, %c0_275, %c0_276] : memref<3x3x3x16x16xbf16, #tpu.memory_space<vmem>>, vector<1x1x1x16x16xbf16>
    %251 = vector.shape_cast %250 : vector<1x1x1x16x16xbf16> to vector<16x16xbf16>
    %cst_277 = arith.constant dense<0.000000e+00> : vector<64x16xf32>
    %252 = tpu.matmul %249, %251, %cst_277 {dimension_numbers = #tpu.dot_dimension_numbers<[1], [0], [0], [1], [0, 0, 1, 1], [], []>} : vector<64x16xbf16>, vector<16x16xbf16>, vector<64x16xf32> -> vector<64x16xf32>
    %253 = arith.addf %246, %252 : vector<64x16xf32>
    %c2_278 = arith.constant 2 : index
    %c1_279 = arith.constant 1 : index
    %c2_280 = arith.constant 2 : index
    %c0_281 = arith.constant 0 : index
    %254 = vector.load %arg11[%c2_278, %c1_279, %c2_280, %c0_281] : memref<3x10x10x16xbf16, #tpu.memory_space<vmem>>, vector<1x8x8x16xbf16>
    %255 = vector.shape_cast %254 : vector<1x8x8x16xbf16> to vector<8x8x16xbf16>
    %256 = vector.shape_cast %255 : vector<8x8x16xbf16> to vector<64x16xbf16>
    %c2_282 = arith.constant 2 : index
    %c1_283 = arith.constant 1 : index
    %c2_284 = arith.constant 2 : index
    %c0_285 = arith.constant 0 : index
    %c0_286 = arith.constant 0 : index
    %257 = vector.load %arg3[%c2_282, %c1_283, %c2_284, %c0_285, %c0_286] : memref<3x3x3x16x16xbf16, #tpu.memory_space<vmem>>, vector<1x1x1x16x16xbf16>
    %258 = vector.shape_cast %257 : vector<1x1x1x16x16xbf16> to vector<16x16xbf16>
    %cst_287 = arith.constant dense<0.000000e+00> : vector<64x16xf32>
    %259 = tpu.matmul %256, %258, %cst_287 {dimension_numbers = #tpu.dot_dimension_numbers<[1], [0], [0], [1], [0, 0, 1, 1], [], []>} : vector<64x16xbf16>, vector<16x16xbf16>, vector<64x16xf32> -> vector<64x16xf32>
    %260 = arith.addf %253, %259 : vector<64x16xf32>
    %c2_288 = arith.constant 2 : index
    %c2_289 = arith.constant 2 : index
    %c0_290 = arith.constant 0 : index
    %c0_291 = arith.constant 0 : index
    %261 = vector.load %arg11[%c2_288, %c2_289, %c0_290, %c0_291] : memref<3x10x10x16xbf16, #tpu.memory_space<vmem>>, vector<1x8x8x16xbf16>
    %262 = vector.shape_cast %261 : vector<1x8x8x16xbf16> to vector<8x8x16xbf16>
    %263 = vector.shape_cast %262 : vector<8x8x16xbf16> to vector<64x16xbf16>
    %c2_292 = arith.constant 2 : index
    %c2_293 = arith.constant 2 : index
    %c0_294 = arith.constant 0 : index
    %c0_295 = arith.constant 0 : index
    %c0_296 = arith.constant 0 : index
    %264 = vector.load %arg3[%c2_292, %c2_293, %c0_294, %c0_295, %c0_296] : memref<3x3x3x16x16xbf16, #tpu.memory_space<vmem>>, vector<1x1x1x16x16xbf16>
    %265 = vector.shape_cast %264 : vector<1x1x1x16x16xbf16> to vector<16x16xbf16>
    %cst_297 = arith.constant dense<0.000000e+00> : vector<64x16xf32>
    %266 = tpu.matmul %263, %265, %cst_297 {dimension_numbers = #tpu.dot_dimension_numbers<[1], [0], [0], [1], [0, 0, 1, 1], [], []>} : vector<64x16xbf16>, vector<16x16xbf16>, vector<64x16xf32> -> vector<64x16xf32>
    %267 = arith.addf %260, %266 : vector<64x16xf32>
    %c2_298 = arith.constant 2 : index
    %c2_299 = arith.constant 2 : index
    %c1_300 = arith.constant 1 : index
    %c0_301 = arith.constant 0 : index
    %268 = vector.load %arg11[%c2_298, %c2_299, %c1_300, %c0_301] : memref<3x10x10x16xbf16, #tpu.memory_space<vmem>>, vector<1x8x8x16xbf16>
    %269 = vector.shape_cast %268 : vector<1x8x8x16xbf16> to vector<8x8x16xbf16>
    %270 = vector.shape_cast %269 : vector<8x8x16xbf16> to vector<64x16xbf16>
    %c2_302 = arith.constant 2 : index
    %c2_303 = arith.constant 2 : index
    %c1_304 = arith.constant 1 : index
    %c0_305 = arith.constant 0 : index
    %c0_306 = arith.constant 0 : index
    %271 = vector.load %arg3[%c2_302, %c2_303, %c1_304, %c0_305, %c0_306] : memref<3x3x3x16x16xbf16, #tpu.memory_space<vmem>>, vector<1x1x1x16x16xbf16>
    %272 = vector.shape_cast %271 : vector<1x1x1x16x16xbf16> to vector<16x16xbf16>
    %cst_307 = arith.constant dense<0.000000e+00> : vector<64x16xf32>
    %273 = tpu.matmul %270, %272, %cst_307 {dimension_numbers = #tpu.dot_dimension_numbers<[1], [0], [0], [1], [0, 0, 1, 1], [], []>} : vector<64x16xbf16>, vector<16x16xbf16>, vector<64x16xf32> -> vector<64x16xf32>
    %274 = arith.addf %267, %273 : vector<64x16xf32>
    %c2_308 = arith.constant 2 : index
    %c2_309 = arith.constant 2 : index
    %c2_310 = arith.constant 2 : index
    %c0_311 = arith.constant 0 : index
    %275 = vector.load %arg11[%c2_308, %c2_309, %c2_310, %c0_311] : memref<3x10x10x16xbf16, #tpu.memory_space<vmem>>, vector<1x8x8x16xbf16>
    %276 = vector.shape_cast %275 : vector<1x8x8x16xbf16> to vector<8x8x16xbf16>
    %277 = vector.shape_cast %276 : vector<8x8x16xbf16> to vector<64x16xbf16>
    %c2_312 = arith.constant 2 : index
    %c2_313 = arith.constant 2 : index
    %c2_314 = arith.constant 2 : index
    %c0_315 = arith.constant 0 : index
    %c0_316 = arith.constant 0 : index
    %278 = vector.load %arg3[%c2_312, %c2_313, %c2_314, %c0_315, %c0_316] : memref<3x3x3x16x16xbf16, #tpu.memory_space<vmem>>, vector<1x1x1x16x16xbf16>
    %279 = vector.shape_cast %278 : vector<1x1x1x16x16xbf16> to vector<16x16xbf16>
    %cst_317 = arith.constant dense<0.000000e+00> : vector<64x16xf32>
    %280 = tpu.matmul %277, %279, %cst_317 {dimension_numbers = #tpu.dot_dimension_numbers<[1], [0], [0], [1], [0, 0, 1, 1], [], []>} : vector<64x16xbf16>, vector<16x16xbf16>, vector<64x16xf32> -> vector<64x16xf32>
    %281 = arith.addf %274, %280 : vector<64x16xf32>
    %c0_318 = arith.constant 0 : index
    %c0_319 = arith.constant 0 : index
    %282 = vector.load %arg4[%c0_318, %c0_319] : memref<1x16xf32, #tpu.memory_space<vmem>>, vector<1x16xf32>
    %283 = vector.broadcast %282 : vector<1x16xf32> to vector<64x16xf32>
    %284 = arith.addf %281, %283 : vector<64x16xf32>
    %285 = vector.shape_cast %284 : vector<64x16xf32> to vector<8x8x16xf32>
    %286 = arith.truncf %285 : vector<8x8x16xf32> to vector<8x8x16xbf16>
    %c0_320 = arith.constant 0 : index
    %c0_321 = arith.constant 0 : index
    %c0_322 = arith.constant 0 : index
    %c0_323 = arith.constant 0 : index
    %c0_324 = arith.constant 0 : index
    %287 = vector.load %arg8[%c0_320, %c0_321, %c0_322, %c0_323, %c0_324] : memref<1x1x8x8x16xbf16, #tpu.memory_space<vmem>>, vector<1x1x8x8x16xbf16>
    %288 = vector.shape_cast %287 : vector<1x1x8x8x16xbf16> to vector<8x8x16xbf16>
    %289 = vector.shape_cast %286 : vector<8x8x16xbf16> to vector<1x1x8x8x16xbf16>
    tpu.vector_store %arg8[%c0_320, %c0_321, %c0_322, %c0_323, %c0_324], %289 {strides = array<i32>} : memref<1x1x8x8x16xbf16, #tpu.memory_space<vmem>>, vector<1x1x8x8x16xbf16>,
    %cst_325 = arith.constant dense<0.000000e+00> : vector<16xf32>
    %290 = vector.multi_reduction <add>, %284, %cst_325 [0] : vector<64x16xf32> to vector<16xf32>
    %291 = vector.shape_cast %290 : vector<16xf32> to vector<1x16xf32>
    %c0_326 = arith.constant 0 : index
    %c0_327 = arith.constant 0 : index
    %c0_328 = arith.constant 0 : index
    %292 = vector.load %arg9[%c0_326, %c0_327, %c0_328] : memref<1x1x16xf32, #tpu.memory_space<vmem>>, vector<1x1x16xf32>
    %293 = vector.shape_cast %292 : vector<1x1x16xf32> to vector<1x16xf32>
    %294 = vector.shape_cast %291 : vector<1x16xf32> to vector<1x1x16xf32>
    tpu.vector_store %arg9[%c0_326, %c0_327, %c0_328], %294 {strides = array<i32>} : memref<1x1x16xf32, #tpu.memory_space<vmem>>, vector<1x1x16xf32>,
    %295 = arith.mulf %284, %284 : vector<64x16xf32>
    %cst_329 = arith.constant dense<0.000000e+00> : vector<16xf32>
    %296 = vector.multi_reduction <add>, %295, %cst_329 [0] : vector<64x16xf32> to vector<16xf32>
    %297 = vector.shape_cast %296 : vector<16xf32> to vector<1x16xf32>
    %c0_330 = arith.constant 0 : index
    %c0_331 = arith.constant 0 : index
    %c0_332 = arith.constant 0 : index
    %298 = vector.load %arg10[%c0_330, %c0_331, %c0_332] : memref<1x1x16xf32, #tpu.memory_space<vmem>>, vector<1x1x16xf32>
    %299 = vector.shape_cast %298 : vector<1x1x16xf32> to vector<1x16xf32>
    %300 = vector.shape_cast %297 : vector<1x16xf32> to vector<1x1x16xf32>
    tpu.vector_store %arg10[%c0_330, %c0_331, %c0_332], %300 {strides = array<i32>} : memref<1x1x16xf32, #tpu.memory_space<vmem>>, vector<1x1x16xf32>,
    return
  }
  func.func @transform_0(%arg0: i32, %arg1: i32) -> (i32, i32, i32, i32, i32) {
    %c0_i32 = arith.constant 0 : i32
    %c0_i32_0 = arith.constant 0 : i32
    %c0_i32_1 = arith.constant 0 : i32
    %c0_i32_2 = arith.constant 0 : i32
    %c0_i32_3 = arith.constant 0 : i32
    return %arg0, %c0_i32, %c0_i32_0, %c0_i32_1, %c0_i32_2 : i32, i32, i32, i32, i32
  }
  func.func @transform_1(%arg0: i32, %arg1: i32) -> (i32, i32, i32, i32, i32) {
    %c0_i32 = arith.constant 0 : i32
    %c0_i32_0 = arith.constant 0 : i32
    %c0_i32_1 = arith.constant 0 : i32
    %c0_i32_2 = arith.constant 0 : i32
    %c0_i32_3 = arith.constant 0 : i32
    %c0_i32_4 = arith.constant 0 : i32
    return %c0_i32, %c0_i32_0, %c0_i32_1, %c0_i32_2, %c0_i32_3 : i32, i32, i32, i32, i32
  }
  func.func @transform_2(%arg0: i32, %arg1: i32) -> (i32, i32) {
    %c0_i32 = arith.constant 0 : i32
    %c0_i32_0 = arith.constant 0 : i32
    %c0_i32_1 = arith.constant 0 : i32
    return %c0_i32, %c0_i32_0 : i32, i32
  }
  func.func @transform_3(%arg0: i32, %arg1: i32) -> (i32, i32) {
    %c0_i32 = arith.constant 0 : i32
    %c0_i32_0 = arith.constant 0 : i32
    %c0_i32_1 = arith.constant 0 : i32
    return %c0_i32, %c0_i32_0 : i32, i32
  }
  func.func @transform_4(%arg0: i32, %arg1: i32) -> (i32, i32) {
    %c0_i32 = arith.constant 0 : i32
    %c0_i32_0 = arith.constant 0 : i32
    %c0_i32_1 = arith.constant 0 : i32
    return %c0_i32, %c0_i32_0 : i32, i32
  }
  func.func @transform_5(%arg0: i32, %arg1: i32) -> (i32, i32) {
    %c0_i32 = arith.constant 0 : i32
    %c0_i32_0 = arith.constant 0 : i32
    %c0_i32_1 = arith.constant 0 : i32
    return %c0_i32, %c0_i32_0 : i32, i32
  }
  func.func @transform_6(%arg0: i32, %arg1: i32) -> (i32, i32, i32, i32, i32) {
    %c0_i32 = arith.constant 0 : i32
    %c0_i32_0 = arith.constant 0 : i32
    %c0_i32_1 = arith.constant 0 : i32
    %c0_i32_2 = arith.constant 0 : i32
    return %arg0, %arg1, %c0_i32, %c0_i32_0, %c0_i32_1 : i32, i32, i32, i32, i32
  }
  func.func @transform_7(%arg0: i32, %arg1: i32) -> (i32, i32, i32) {
    %c8_i32 = arith.constant 8 : i32
    %0 = arith.muli %arg0, %c8_i32 : i32
    %1 = arith.addi %0, %arg1 : i32
    %c0_i32 = arith.constant 0 : i32
    %c0_i32_0 = arith.constant 0 : i32
    %c0_i32_1 = arith.constant 0 : i32
    return %1, %c0_i32, %c0_i32_0 : i32, i32, i32
  }
  func.func @transform_8(%arg0: i32, %arg1: i32) -> (i32, i32, i32) {
    %c8_i32 = arith.constant 8 : i32
    %0 = arith.muli %arg0, %c8_i32 : i32
    %1 = arith.addi %0, %arg1 : i32
    %c0_i32 = arith.constant 0 : i32
    %c0_i32_0 = arith.constant 0 : i32
    %c0_i32_1 = arith.constant 0 : i32
    return %1, %c0_i32, %c0_i32_0 : i32, i32, i32
  }
}

module attributes {stable_mosaic.version = 11 : i64} {
  func.func @_bn_prelu_kernel(%arg0: i32, %arg1: memref<128x128xbf16, #tpu.memory_space<vmem>>, %arg2: memref<1x128xf32, #tpu.memory_space<vmem>>, %arg3: memref<1x128xf32, #tpu.memory_space<vmem>>, %arg4: memref<1x128xf32, #tpu.memory_space<vmem>>, %arg5: memref<128x128xf32, #tpu.memory_space<vmem>>) attributes {dimension_semantics = [#tpu.dimension_semantics<parallel>], iteration_bounds = array<i64: 1>, scalar_prefetch = 0 : i64, scratch_operands = 0 : i64, tpu.core_type = #tpu.core_type<tc>, window_params = [{transform_indices = @transform_0, window_bounds = array<i64: 128, 128>}, {pipeline_mode = #tpu.pipeline_mode<synchronous>, transform_indices = @transform_1, window_bounds = array<i64: 1, 128>}, {pipeline_mode = #tpu.pipeline_mode<synchronous>, transform_indices = @transform_2, window_bounds = array<i64: 1, 128>}, {pipeline_mode = #tpu.pipeline_mode<synchronous>, transform_indices = @transform_3, window_bounds = array<i64: 1, 128>}, {transform_indices = @transform_4, window_bounds = array<i64: 128, 128>}]} {
    %c0 = arith.constant 0 : index
    %c0_0 = arith.constant 0 : index
    %0 = vector.load %arg1[%c0, %c0_0] : memref<128x128xbf16, #tpu.memory_space<vmem>>, vector<128x128xbf16>
    %1 = arith.extf %0 : vector<128x128xbf16> to vector<128x128xf32>
    %c0_1 = arith.constant 0 : index
    %c0_2 = arith.constant 0 : index
    %2 = vector.load %arg2[%c0_1, %c0_2] : memref<1x128xf32, #tpu.memory_space<vmem>>, vector<1x128xf32>
    %3 = vector.broadcast %2 : vector<1x128xf32> to vector<128x128xf32>
    %4 = arith.mulf %1, %3 : vector<128x128xf32>
    %c0_3 = arith.constant 0 : index
    %c0_4 = arith.constant 0 : index
    %5 = vector.load %arg3[%c0_3, %c0_4] : memref<1x128xf32, #tpu.memory_space<vmem>>, vector<1x128xf32>
    %6 = vector.broadcast %5 : vector<1x128xf32> to vector<128x128xf32>
    %7 = arith.addf %4, %6 : vector<128x128xf32>
    %cst = arith.constant 0.000000e+00 : f32
    %8 = vector.broadcast %cst : f32 to vector<128x128xf32>
    %9 = arith.cmpf oge, %7, %8 : vector<128x128xf32>
    %c0_5 = arith.constant 0 : index
    %c0_6 = arith.constant 0 : index
    %10 = vector.load %arg4[%c0_5, %c0_6] : memref<1x128xf32, #tpu.memory_space<vmem>>, vector<1x128xf32>
    %11 = vector.broadcast %10 : vector<1x128xf32> to vector<128x128xf32>
    %12 = arith.mulf %11, %7 : vector<128x128xf32>
    %13 = arith.select %9, %7, %12 : vector<128x128xi1>, vector<128x128xf32>
    %c0_7 = arith.constant 0 : index
    %c0_8 = arith.constant 0 : index
    %14 = vector.load %arg5[%c0_7, %c0_8] : memref<128x128xf32, #tpu.memory_space<vmem>>, vector<128x128xf32>
    tpu.vector_store %arg5[%c0_7, %c0_8], %13 {strides = array<i32>} : memref<128x128xf32, #tpu.memory_space<vmem>>, vector<128x128xf32>,
    return
  }
  func.func @transform_0(%arg0: i32) -> (i32, i32) {
    %c0_i32 = arith.constant 0 : i32
    %c0_i32_0 = arith.constant 0 : i32
    return %arg0, %c0_i32 : i32, i32
  }
  func.func @transform_1(%arg0: i32) -> (i32, i32) {
    %c0_i32 = arith.constant 0 : i32
    %c0_i32_0 = arith.constant 0 : i32
    %c0_i32_1 = arith.constant 0 : i32
    return %c0_i32, %c0_i32_0 : i32, i32
  }
  func.func @transform_2(%arg0: i32) -> (i32, i32) {
    %c0_i32 = arith.constant 0 : i32
    %c0_i32_0 = arith.constant 0 : i32
    %c0_i32_1 = arith.constant 0 : i32
    return %c0_i32, %c0_i32_0 : i32, i32
  }
  func.func @transform_3(%arg0: i32) -> (i32, i32) {
    %c0_i32 = arith.constant 0 : i32
    %c0_i32_0 = arith.constant 0 : i32
    %c0_i32_1 = arith.constant 0 : i32
    return %c0_i32, %c0_i32_0 : i32, i32
  }
  func.func @transform_4(%arg0: i32) -> (i32, i32) {
    %c0_i32 = arith.constant 0 : i32
    %c0_i32_0 = arith.constant 0 : i32
    return %arg0, %c0_i32 : i32, i32
  }
}

</mosaic_0001>

<llo_original>
// kernel: tile.23
$region0: #{tile.23}
  #allocation0 [shape = 's32[1]{0}', space=sflag, size = 0x4, scoped, tag = 'scoped memory for tile.23']
  %s0 = inlined_call_operand.vmem [shape: f32[16], index: 0, kind: input, shape index: {}]
  %s1 = inlined_call_operand.vmem [shape: f32[2,16], index: 1, kind: output, shape index: {}]
  // Predicated region
  $region2: #{tile.23} parent=0 // pred_check
    _
  $region3: #{tile.23} parent=0 // pred_check_branch
    %3 = sbr.rel (0) target = $region5
  $region4: #{tile.23} parent=0 // pred_region
    _
  $region5: #{tile.23} parent=0 // pred_fallthru
    _
  %v4 = vld [vmem:[%s0] ss:$0 sm:$0xff]
  %5 = vst [vmem:[%s1] sm:$0x3] %v4

// kernel: tile.24
$region0: #{tile.24}
  %s0 = inlined_call_operand.vmem [shape: f32[2,16], index: 0, kind: input, shape index: {}]
  %s1 = inlined_call_operand.vmem [shape: f32[1,32], index: 1, kind: output, shape index: {}]
  $region1: #{tile.24} parent=0
    #allocation0 [shape = 'u8[4096]{0}', space=vmem, size = 0x1000, scoped, tag = 'scoped mem for output reshape']
    #allocation1 [shape = 'u8[4096]{0}', space=vmem, size = 0x1000, scoped, tag = 'scoped mem for input reshape']
    %s3 = sshllo.u32 0, 2
    %v4 = vld [vmem:[%s0] sm:%s3]
    %5 = vst [vmem:[#allocation1] sm:%s3] %v4
    %v6 = vld [vmem:[#allocation1] sm:$0x1]
    %vm7 = vcmask 130048
    %8 = vst.msk [vmem:[#allocation0] sm:$0x1] %vm7, %v6
    %s9 = scalar_lea.vmem [#allocation1], 1
    %v10 = vld [vmem:[%s9] sm:$0x1]
    %11 = vrot.lane.b32.xlu0 %v10, 16
    %v12 = vpop.permute.xlu0 %11
    %vm13 = vcmask 261248
    %14 = vst.msk [vmem:[#allocation0] sm:$0x1] %vm13, %v12
    %s16 = sshllo.u32 0, 1
    %v18 = vld [vmem:[#allocation0] sm:%s16]
    %s19 = sshllo.u32 0, 1
    %20 = vst [vmem:[%s1] sm:%s19] %v18

// kernel: tile.28
$region0: #{tile.28}
  #allocation0 [shape = 's32[1]{0}', space=sflag, size = 0x4, scoped, tag = 'scoped memory for tile.28']
  %s0 = inlined_call_operand.vmem [shape: f32[16], index: 0, kind: input, shape index: {}]
  %s1 = inlined_call_operand.vmem [shape: f32[8,16], index: 1, kind: output, shape index: {}]
  // Predicated region
  $region2: #{tile.28} parent=0 // pred_check
    _
  $region3: #{tile.28} parent=0 // pred_check_branch
    %3 = sbr.rel (0) target = $region5
  $region4: #{tile.28} parent=0 // pred_region
    _
  $region5: #{tile.28} parent=0 // pred_fallthru
    _
  %v4 = vld [vmem:[%s0] ss:$0 sm:$0xff]
  %5 = vst [vmem:[%s1] sm:$0xff] %v4

// kernel: tile.37
$region0: #{tile.37}
  %s0 = inlined_call_operand.vmem [shape: f32[8,16], index: 0, kind: input, shape index: {}]
  %s1 = inlined_call_operand.vmem [shape: f32[1,128], index: 1, kind: output, shape index: {}]
  $region1: #{tile.37} parent=0
    #allocation0 [shape = 'u8[4096]{0}', space=vmem, size = 0x1000, scoped, tag = 'scoped mem for output reshape']
    %v2 = vld [vmem:[%s0] sm:$0x1]
    %vm3 = vcmask 130048
    %4 = vst.msk [vmem:[#allocation0] sm:$0x1] %vm3, %v2
    %s5 = scalar_lea.vmem %s0, 7
    %v6 = vld [vmem:[%s5] sm:$0x1]
    %7 = vrot.lane.b32.xlu0 %v6, 112
    %v8 = vpop.permute.xlu0 %7
    %vm9 = vcmask 1048448
    %10 = vst.msk [vmem:[#allocation0] sm:$0x1] %vm9, %v8
    %s11 = scalar_lea.vmem %s0, 6
    %v12 = vld [vmem:[%s11] sm:$0x1]
    %13 = vrot.lane.b32.xlu0 %v12, 96
    %v14 = vpop.permute.xlu0 %13
    %vm15 = vcmask 917248
    %16 = vst.msk [vmem:[#allocation0] sm:$0x1] %vm15, %v14
    %s17 = scalar_lea.vmem %s0, 5
    %v18 = vld [vmem:[%s17] sm:$0x1]
    %19 = vrot.lane.b32.xlu0 %v18, 80
    %v20 = vpop.permute.xlu0 %19
    %vm21 = vcmask 786048
    %22 = vst.msk [vmem:[#allocation0] sm:$0x1] %vm21, %v20
    %s23 = scalar_lea.vmem %s0, 4
    %v24 = vld [vmem:[%s23] sm:$0x1]
    %25 = vrot.lane.b32.xlu0 %v24, 64
    %v26 = vpop.permute.xlu0 %25
    %vm27 = vcmask 654848
    %28 = vst.msk [vmem:[#allocation0] sm:$0x1] %vm27, %v26
    %s29 = scalar_lea.vmem %s0, 3
    %v30 = vld [vmem:[%s29] sm:$0x1]
    %31 = vrot.lane.b32.xlu0 %v30, 48
    %v32 = vpop.permute.xlu0 %31
    %vm33 = vcmask 523648
    %34 = vst.msk [vmem:[#allocation0] sm:$0x1] %vm33, %v32
    %s35 = scalar_lea.vmem %s0, 2
    %v36 = vld [vmem:[%s35] sm:$0x1]
    %37 = vrot.lane.b32.xlu0 %v36, 32
    %v38 = vpop.permute.xlu0 %37
    %vm39 = vcmask 392448
    %40 = vst.msk [vmem:[#allocation0] sm:$0x1] %vm39, %v38
    %s41 = scalar_lea.vmem %s0, 1
    %v42 = vld [vmem:[%s41] sm:$0x1]
    %43 = vrot.lane.b32.xlu0 %v42, 16
    %v44 = vpop.permute.xlu0 %43
    %vm45 = vcmask 261248
    %46 = vst.msk [vmem:[#allocation0] sm:$0x1] %vm45, %v44
    %s48 = sshllo.u32 0, 1
    %v50 = vld [vmem:[#allocation0] sm:%s48]
    %s51 = sshllo.u32 0, 1
    %52 = vst [vmem:[%s1] sm:%s51] %v50

// kernel: net_just_up_block_forward.4
$region0: #{net_just_up_block_forward.4}
  #allocation0 [shape = 'u32[]', space=smem, size = 0x4, offset = 0x4, fixed_abs, tag = 'smem constant byte address 0x4 - core index']
  #allocation1 [shape = 'u32[144,128]{1,0:T(1,128)}', space=vmem, size = 0x12000, scoped, tag = 'internal scratch']
  %s0 = inlined_call_operand.vmem [shape: bf16[2,4,4,4,16], index: 0, kind: input, shape index: {}]
  %s1 = inlined_call_operand.vmem [shape: bf16[2,2,16,32], index: 1, kind: input, shape index: {}]
  %s2 = inlined_call_operand.vmem [shape: f32[1,32], index: 2, kind: input, shape index: {}]
  %s3 = inlined_call_operand.vmem [shape: bf16[8,2,4,2,4,32], index: 3, kind: output, shape index: {0}]
  %s4 = inlined_call_operand.vmem [shape: f32[8,1,16], index: 4, kind: output, shape index: {1}]
  %s5 = inlined_call_operand.vmem [shape: f32[8,1,16], index: 5, kind: output, shape index: {2}]
  %6 = xla_tuple %s3, %s4, %s5
  %s7 = sld [smem:[#allocation0]]
  $region61: #{net_just_up_block_forward.4} parent=0
    _
  %s9 = ssub.s32 1, %s7
  %s10 = scalar_select 0, %s9, %s7
  loop: start=0, step=1, limit=10
  $region2: #{net_just_up_block_forward.4} parent=0 // loop_pre_header
    _
  $region3: #{net_just_up_block_forward.4} parent=0 // loop_header
    %s12 = sphi 0, %s16
    %p13 = scmp.ge.s32.totalorder %s12, 10
    %s19 = sphi 0, %s31
    %s20 = sphi 0, %s27
    %s21 = sphi 0, %s19
    %s22 = sphi 0, %s20
    %s23 = sphi 0, %s21
    %s24 = sphi 0, %s22
    %s36 = sphi 0, %s38
    %s39 = sphi 0, %s36
    %s40 = sphi 0, %s39
    %s56 = sphi 0, %s40
    %s60 = sphi 0, %s60
    %s62 = sphi 0, %s60
    %s63 = sphi 0, %s62
    %s77 = sphi 0, %s63
    %s81 = sphi 0, %s81
    %s83 = sphi 0, %s81
    %s84 = sphi 0, %s83
    %s98 = sphi 0, %s84
    %s108 = sphi 0, %s110
    %s111 = sphi 0, %s108
    %s112 = sphi 0, %s111
    %s128 = sphi 0, %s112
    %s138 = sphi 0, %s140
    %s141 = sphi 0, %s138
    %s142 = sphi 0, %s141
    %s158 = sphi 0, %s142
    %s168 = sphi 0, %s170
    %s171 = sphi 0, %s168
    %s172 = sphi 0, %s171
    %s188 = sphi 0, %s172
  $region4: #{net_just_up_block_forward.4} parent=0 // loop_header_branch
    %15 = sbr.rel (%p13) target = $region8
  $region5: #{net_just_up_block_forward.4} parent=0 // loop_body
    %s17 = ssub.s32 %s12, 1
    %s18 = ssub.s32 %s12, 2
    %s25 = sadd.s32 1, %s20
    %p26 = scmp.ge.s32.totalorder %s25, 4
    %s27 = scalar_select %p26, 0, %s25
    %s28 = sadd.s32 1, %s19
    %s29 = scalar_select %p26, %s28, %s19
    %p30 = scmp.ge.s32.totalorder %s29, 2
    %s31 = scalar_select %p30, 0, %s29
    %s32 = ssub.s32 %s19, %s31
    %s33 = ssub.s32 %s20, %s27
    %s34 = sor.u32 %s32, %s33
    %p35 = scmp.eq.s32.totalorder %s34, 0
    %s37 = sadd.s32 %s36, 1
    %s38 = scalar_select %p35, %s36, %s37
    %p41 = pneg %p35
    %p42 = scmp.eq.s32.totalorder %s12, 7
    %p43 = por %p41, %p42
    %p44 = scmp.ne.s32.totalorder %s36, %s39
    %p45 = scmp.eq.s32.totalorder %s12, 0
    %p46 = por %p44, %p45
    %p47 = scmp.ne.s32.totalorder %s36, %s39
    %p48 = scmp.eq.s32.totalorder %s17, 7
    %p49 = por %p47, %p48
    %p50 = scmp.ne.s32.totalorder %s39, %s40
    %p51 = scmp.eq.s32.totalorder %s17, 0
    %p52 = por %p50, %p51
    %p53 = scmp.ne.s32.totalorder %s39, %s40
    %p54 = scmp.eq.s32.totalorder %s18, 7
    %p55 = por %p53, %p54
    %p57 = scmp.ne.s32.totalorder %s40, %s56
    %p58 = scmp.eq.s32.totalorder %s18, 0
    %p59 = por %p57, %p58
    %s61 = sadd.s32 %s60, 1
    %p64 = scmp.eq.s32.totalorder %s12, 7
    %p65 = scmp.ne.s32.totalorder %s60, %s62
    %p66 = scmp.eq.s32.totalorder %s12, 0
    %p67 = por %p65, %p66
    %p68 = scmp.ne.s32.totalorder %s60, %s62
    %p69 = scmp.eq.s32.totalorder %s17, 7
    %p70 = por %p68, %p69
    %p71 = scmp.ne.s32.totalorder %s62, %s63
    %p72 = scmp.eq.s32.totalorder %s17, 0
    %p73 = por %p71, %p72
    %p74 = scmp.ne.s32.totalorder %s62, %s63
    %p75 = scmp.eq.s32.totalorder %s18, 7
    %p76 = por %p74, %p75
    %p78 = scmp.ne.s32.totalorder %s63, %s77
    %p79 = scmp.eq.s32.totalorder %s18, 0
    %p80 = por %p78, %p79
    %s82 = sadd.s32 %s81, 1
    %p85 = scmp.eq.s32.totalorder %s12, 7
    %p86 = scmp.ne.s32.totalorder %s81, %s83
    %p87 = scmp.eq.s32.totalorder %s12, 0
    %p88 = por %p86, %p87
    %p89 = scmp.ne.s32.totalorder %s81, %s83
    %p90 = scmp.eq.s32.totalorder %s17, 7
    %p91 = por %p89, %p90
    %p92 = scmp.ne.s32.totalorder %s83, %s84
    %p93 = scmp.eq.s32.totalorder %s17, 0
    %p94 = por %p92, %p93
    %p95 = scmp.ne.s32.totalorder %s83, %s84
    %p96 = scmp.eq.s32.totalorder %s18, 7
    %p97 = por %p95, %p96
    %p99 = scmp.ne.s32.totalorder %s84, %s98
    %p100 = scmp.eq.s32.totalorder %s18, 0
    %p101 = por %p99, %p100
    %s102 = smul.u32 %s19, 4
    %s103 = sadd.s32 %s102, %s20
    %s104 = smul.u32 %s31, 4
    %s105 = sadd.s32 %s104, %s27
    %s106 = ssub.s32 %s103, %s105
    %p107 = scmp.eq.s32.totalorder %s106, 0
    %s109 = sadd.s32 %s108, 1
    %s110 = scalar_select %p107, %s108, %s109
    %p113 = pneg %p107
    %p114 = scmp.eq.s32.totalorder %s12, 7
    %p115 = por %p113, %p114
    %p116 = scmp.ne.s32.totalorder %s108, %s111
    %p117 = scmp.eq.s32.totalorder %s12, 0
    %p118 = por %p116, %p117
    %p119 = scmp.ne.s32.totalorder %s108, %s111
    %p120 = scmp.eq.s32.totalorder %s17, 7
    %p121 = por %p119, %p120
    %p122 = scmp.ne.s32.totalorder %s111, %s112
    %p123 = scmp.eq.s32.totalorder %s17, 0
    %p124 = por %p122, %p123
    %p125 = scmp.ne.s32.totalorder %s111, %s112
    %p126 = scmp.eq.s32.totalorder %s18, 7
    %p127 = por %p125, %p126
    %p129 = scmp.ne.s32.totalorder %s112, %s128
    %p130 = scmp.eq.s32.totalorder %s18, 0
    %p131 = por %p129, %p130
    %s132 = smul.u32 %s19, 4
    %s133 = sadd.s32 %s132, %s20
    %s134 = smul.u32 %s31, 4
    %s135 = sadd.s32 %s134, %s27
    %s136 = ssub.s32 %s133, %s135
    %p137 = scmp.eq.s32.totalorder %s136, 0
    %s139 = sadd.s32 %s138, 1
    %s140 = scalar_select %p137, %s138, %s139
    %p143 = pneg %p137
    %p144 = scmp.eq.s32.totalorder %s12, 7
    %p145 = por %p143, %p144
    %p146 = scmp.ne.s32.totalorder %s138, %s141
    %p147 = scmp.eq.s32.totalorder %s12, 0
    %p148 = por %p146, %p147
    %p149 = scmp.ne.s32.totalorder %s138, %s141
    %p150 = scmp.eq.s32.totalorder %s17, 7
    %p151 = por %p149, %p150
    %p152 = scmp.ne.s32.totalorder %s141, %s142
    %p153 = scmp.eq.s32.totalorder %s17, 0
    %p154 = por %p152, %p153
    %p155 = scmp.ne.s32.totalorder %s141, %s142
    %p156 = scmp.eq.s32.totalorder %s18, 7
    %p157 = por %p155, %p156
    %p159 = scmp.ne.s32.totalorder %s142, %s158
    %p160 = scmp.eq.s32.totalorder %s18, 0
    %p161 = por %p159, %p160
    %s162 = smul.u32 %s19, 4
    %s163 = sadd.s32 %s162, %s20
    %s164 = smul.u32 %s31, 4
    %s165 = sadd.s32 %s164, %s27
    %s166 = ssub.s32 %s163, %s165
    %p167 = scmp.eq.s32.totalorder %s166, 0
    %s169 = sadd.s32 %s168, 1
    %s170 = scalar_select %p167, %s168, %s169
    %p173 = pneg %p167
    %p174 = scmp.eq.s32.totalorder %s12, 7
    %p175 = por %p173, %p174
    %p176 = scmp.ne.s32.totalorder %s168, %s171
    %p177 = scmp.eq.s32.totalorder %s12, 0
    %p178 = por %p176, %p177
    %p179 = scmp.ne.s32.totalorder %s168, %s171
    %p180 = scmp.eq.s32.totalorder %s17, 7
    %p181 = por %p179, %p180
    %p182 = scmp.ne.s32.totalorder %s171, %s172
    %p183 = scmp.eq.s32.totalorder %s17, 0
    %p184 = por %p182, %p183
    %p185 = scmp.ne.s32.totalorder %s171, %s172
    %p186 = scmp.eq.s32.totalorder %s18, 7
    %p187 = por %p185, %p186
    %p189 = scmp.ne.s32.totalorder %s172, %s188
    %p190 = scmp.eq.s32.totalorder %s18, 0
    %p191 = por %p189, %p190
    %p192 = scmp.le.s32.totalorder 1, %s12
    %p193 = scmp.lt.s32.totalorder %s12, 9
    %p194 = pnand %p192, %p193
    %p195 = pneg %p194
    // Predicated region
    $region9: #{net_just_up_block_forward.4} parent=5 // pred_check
      _
    $region10: #{net_just_up_block_forward.4} parent=5 // pred_check_branch
      %197 = sbr.rel (%p194) target = $region12
    $region11: #{net_just_up_block_forward.4} parent=5 // pred_region
      %s198 = ssub.s32 %s12, 1
      // Predicated region
      $region13: #{net_just_up_block_forward.4} parent=11 // pred_check
        %p199 = pneg %p73
      $region14: #{net_just_up_block_forward.4} parent=11 // pred_check_branch
        %201 = sbr.rel (%p199) target = $region16
      $region15: #{net_just_up_block_forward.4} parent=11 // pred_region
        _
      $region16: #{net_just_up_block_forward.4} parent=11 // pred_fallthru
        _
      // Predicated region
      $region17: #{net_just_up_block_forward.4} parent=11 // pred_check
        %p202 = pneg %p94
      $region18: #{net_just_up_block_forward.4} parent=11 // pred_check_branch
        %204 = sbr.rel (%p202) target = $region20
      $region19: #{net_just_up_block_forward.4} parent=11 // pred_region
        _
      $region20: #{net_just_up_block_forward.4} parent=11 // pred_fallthru
        _
    $region12: #{net_just_up_block_forward.4} parent=5 // pred_fallthru
      _
    %p205 = scmp.lt.s32.totalorder %s12, 8
    // Predicated region
    $region21: #{net_just_up_block_forward.4} parent=5 // pred_check
      %p206 = pneg %p205
    $region22: #{net_just_up_block_forward.4} parent=5 // pred_check_branch
      %208 = sbr.rel (%p206) target = $region24
    $region23: #{net_just_up_block_forward.4} parent=5 // pred_region
      // Predicated region
      $region25: #{net_just_up_block_forward.4} parent=23 // pred_check
        %p209 = pneg %p46
      $region26: #{net_just_up_block_forward.4} parent=23 // pred_check_branch
        %211 = sbr.rel (%p209) target = $region28
      $region27: #{net_just_up_block_forward.4} parent=23 // pred_region
        %p212 = scmp.lt.s32.totalorder %s19, 1
        %s213 = scalar_select %p212, %s19, 1
        %p214 = scmp.lt.s32.totalorder %s20, 3
        %s215 = scalar_select %p214, %s20, 3
        %s216 = smul.addr %s215, 4
        %s217 = smul.addr %s213, 16
        %s218 = sadd.s32 %s216, %s217
        %s219 = smul.addr %s218, 2
        %s220 = scalar_lea.vmem %s0, %s219
      $region28: #{net_just_up_block_forward.4} parent=23 // pred_fallthru
        _
    $region24: #{net_just_up_block_forward.4} parent=5 // pred_fallthru
      _
    %p221 = scmp.le.s32.totalorder 1, %s12
    %p222 = scmp.lt.s32.totalorder %s12, 9
    %p223 = pnand %p221, %p222
    %p224 = pneg %p223
    // Predicated region
    $region29: #{net_just_up_block_forward.4} parent=5 // pred_check
      _
    $region30: #{net_just_up_block_forward.4} parent=5 // pred_check_branch
      %226 = sbr.rel (%p223) target = $region32
    $region31: #{net_just_up_block_forward.4} parent=5 // pred_region
      %s227 = ssub.s32 %s12, 1
      %p228 = scmp.lt.s32.totalorder %s21, 1
      %s229 = scalar_select %p228, %s21, 1
      %p230 = scmp.lt.s32.totalorder %s22, 3
      %s231 = scalar_select %p230, %s22, 3
      %s232 = smul.addr %s231, 4
      %s233 = smul.addr %s229, 16
      %s234 = sadd.s32 %s232, %s233
      %s235 = smul.addr %s234, 2
      %s236 = scalar_lea.vmem %s0, %s235
      %p237 = pneg %p52
      %p238 = pneg %p49
      %p239 = pneg %p73
      %p240 = pneg %p70
      %p241 = pneg %p94
      %p242 = pneg %p91
      %p243 = pneg %p124
      %p244 = pneg %p121
      %s245 = smul.u32 %s21, 4
      %s246 = sadd.s32 %s245, %s22
      %p247 = scmp.lt.s32.totalorder %s246, 7
      %s248 = scalar_select %p247, %s246, 7
      %s249 = smul.addr %s248, 16
      %s250 = smul.addr %s249, 2
      %s251 = scalar_lea.vmem %s3, %s250
      %p252 = pneg %p154
      %p253 = pneg %p151
      %s254 = smul.u32 %s21, 4
      %s255 = sadd.s32 %s254, %s22
      %p256 = scmp.lt.s32.totalorder %s255, 7
      %s257 = scalar_select %p256, %s255, 7
      %s258 = scalar_lea.vmem %s4, %s257
      %p259 = pneg %p184
      %p260 = pneg %p181
      %s261 = smul.u32 %s21, 4
      %s262 = sadd.s32 %s261, %s22
      %p263 = scmp.lt.s32.totalorder %s262, 7
      %s264 = scalar_select %p263, %s262, 7
      %s265 = scalar_lea.vmem %s5, %s264
      %p266 = scmp.lt.s32.totalorder %s21, 1
      %s267 = scalar_select %p266, %s21, 1
      %p268 = scmp.lt.s32.totalorder %s22, 3
      %s269 = scalar_select %p268, %s22, 3
      %s270 = smul.addr %s269, 4
      %s271 = smul.addr %s267, 16
      %s272 = sadd.s32 %s270, %s271
      %s273 = smul.addr %s272, 2
      %s274 = scalar_lea.vmem %s0, %s273
      %s275 = smul.u32 %s21, 4
      %s276 = sadd.s32 %s275, %s22
      %p277 = scmp.lt.s32.totalorder %s276, 7
      %s278 = scalar_select %p277, %s276, 7
      %s279 = smul.addr %s278, 16
      %s280 = smul.addr %s279, 2
      %s281 = scalar_lea.vmem %s3, %s280
      %s282 = smul.u32 %s21, 4
      %s283 = sadd.s32 %s282, %s22
      %s284 = smul.u32 %s21, 4
      %s285 = sadd.s32 %s284, %s22
      %p286 = scmp.lt.s32.totalorder %s285, 7
      %s287 = scalar_select %p286, %s285, 7
      %s288 = scalar_lea.vmem %s4, %s287
      %s289 = smul.u32 %s21, 4
      %s290 = sadd.s32 %s289, %s22
      %s291 = smul.u32 %s21, 4
      %s292 = sadd.s32 %s291, %s22
      %p293 = scmp.lt.s32.totalorder %s292, 7
      %s294 = scalar_select %p293, %s292, 7
      %s295 = scalar_lea.vmem %s5, %s294
      %s296 = smul.u32 %s21, 4
      %s297 = sadd.s32 %s296, %s22
      %v299 = vld [vmem:[%s274] sm:$0x3]
      %v300 = vld [vmem:[%s274 + $0x2] sm:$0x3]
      %v301 = vld [vmem:[%s274 + $0x4] sm:$0x3]
      %v302 = vld [vmem:[%s274 + $0x6] sm:$0x3]
      %v303 = vld [vmem:[%s1] sm:$0xf]
      %v304 = vld [vmem:[%s1 + $0x4] sm:$0xf]
      %v305 = vld [vmem:[%s2] sm:$0x1]
      %v307 = vlaneseq
      %v308 = vshrl.u32 %v307, 7
      %v309 = vsub.s32 0, %v308
      %v310 = vrot.slane %v305, %v309
      %v316 = vcombine.low %v299, %v300
      %v317 = vcombine.low %v301, %v302
      %v319 = vunpack.c.l.s4 1983009808
      %v320 = vunpack.c.0.s8 %v319
      %v321 = vlaneseq
      %v322 = vshrl.u32 %v321, 7
      %v323 = vsub.s32 %v320, %v322
      %v324 = vrot.slane %v316, %v323
      %v326 = vunpack.c.l.s4 1983009808
      %v327 = vunpack.c.0.s8 %v326
      %v328 = vlaneseq
      %v329 = vshrl.u32 %v328, 7
      %v330 = vsub.s32 %v327, %v329
      %v331 = vrot.slane %v317, %v330
      %v332 = vcombine.low %v324, %v331
      %v335 = vunpack.c.l.b16 %v303
      %v336 = vunpack.c.l.b16 %v304
      %v337 = vpack.c.b16 %v336, %v335
      %vm339 = vcmask 130048
      %v341 = vsel %vm339, %v332, 0
      %343 = vmatprep.subr.bf16.mxu0 0
      %344 = vmatpush1.bf16.msra.mxu0 %v337
      %345 = vmatprep.subr.bf16.mxu0 0
      %346 = vmatpush1.bf16.msra.mxu0 0
      %347 = vmatprep.subr.bf16.mxu0 0
      %348 = vmatpush1.bf16.msra.mxu0 0
      %349 = vmatprep.subr.bf16.mxu0 0
      %350 = vmatpush1.bf16.msra.mxu0 0
      %351 = vmatprep.subr.bf16.mxu0 0
      %352 = vmatpush1.bf16.msra.mxu0 0
      %353 = vmatprep.subr.bf16.mxu0 0
      %354 = vmatpush1.bf16.msra.mxu0 0
      %355 = vmatprep.subr.bf16.mxu0 0
      %356 = vmatpush1.bf16.msra.mxu0 0
      %357 = vmatprep.subr.bf16.mxu0 0
      %358 = vmatpush1.bf16.msra.mxu0 0
      %359 = vmatprep.subr.bf16.mxu0 0
      %360 = vmatpush1.bf16.msra.mxu0 0
      %361 = vmatprep.subr.bf16.mxu0 0
      %362 = vmatpush1.bf16.msra.mxu0 0
      %363 = vmatprep.subr.bf16.mxu0 0
      %364 = vmatpush1.bf16.msra.mxu0 0
      %365 = vmatprep.subr.bf16.mxu0 0
      %366 = vmatpush1.bf16.msra.mxu0 0
      %367 = vmatprep.subr.bf16.mxu0 0
      %368 = vmatpush1.bf16.msra.mxu0 0
      %369 = vmatprep.subr.bf16.mxu0 0
      %370 = vmatpush1.bf16.msra.mxu0 0
      %371 = vmatprep.subr.bf16.mxu0 0
      %372 = vmatpush1.bf16.msra.mxu0 0
      %373 = vmatprep.subr.bf16.mxu0 0
      %374 = vmatpush1.bf16.msra.mxu0 0
      %375 = vmatprep.mubr.bf16.mxu0 0
      %376 = vmatmul.mubr.bf16.gmra.mrb[0].mxu0 %v341
      %v377 = vpop.f32.mrb[0].mxu0
      %v378 = vadd.f32 %v310, %v377
      %v379 = vpop.f32.mrb[0].mxu0
      %v380 = vpop.f32.mrb[0].mxu0
      %v381 = vadd.f32 %v310, %v380
      %v382 = vpop.f32.mrb[0].mxu0
      %383 = vdwg.mxu0
      %vm384 = vcmask 261120
      %v385 = vsel %vm384, %v378, 0.0
      %v386 = vsel %vm384, %v381, 0.0
      %v387 = vadd.f32 %v385, %v386
      %v388 = vrot.slane %v387, 4
      %v389 = vadd.f32 %v387, %v388
      %v390 = vrot.slane %v389, 2
      %v391 = vadd.f32 %v389, %v390
      %v392 = vrot.slane %v391, 1
      %v393 = vadd.f32 %v391, %v392
      %v394 = vmul.f32 %v378, %v378
      %v395 = vmul.f32 %v381, %v381
      %v396 = vsel %vm384, %v394, 0.0
      %v397 = vsel %vm384, %v395, 0.0
      %v398 = vadd.f32 %v396, %v397
      %v399 = vrot.slane %v398, 4
      %v400 = vadd.f32 %v398, %v399
      %v401 = vrot.slane %v400, 2
      %v402 = vadd.f32 %v400, %v401
      %v403 = vrot.slane %v402, 1
      %v404 = vadd.f32 %v402, %v403
      %v405 = vadd.f32 %v393, 0.0
      %407 = vrot.lane.b32.xlu0 %v393, 112
      %v408 = vpop.permute.xlu0 %407
      %v410 = vadd.f32 %v405, %v408
      %v411 = vadd.f32 %v404, 0.0
      %413 = vrot.lane.b32.xlu0 %v404, 112
      %v414 = vpop.permute.xlu0 %413
      %v416 = vadd.f32 %v411, %v414
      %v419 = vcombine.high %v378, %v378
      %v420 = vcombine.high %v381, %v381
      %v423 = vpack.c.bf16 %v378, %v378
      %v424 = vpack.c.bf16 %v419, %v419
      %v425 = vpack.c.bf16 %v381, %v381
      %v426 = vpack.c.bf16 %v420, %v420
      %vm427 = vcmask 254976
      %428 = vst.msk [vmem:[%s281] sm:$0x3] %vm427, %v423
      %429 = vst.msk [vmem:[%s281 + $0x4] sm:$0x3] %vm427, %v424
      %430 = vst.msk [vmem:[%s281 + $0x8] sm:$0x3] %vm427, %v425
      %431 = vst.msk [vmem:[%s281 + $0xc] sm:$0x3] %vm427, %v426
      %s432 = scalar_lea.vmem %s1, 8
      %v433 = vld [vmem:[%s432] sm:$0xf]
      %v434 = vld [vmem:[%s432 + $0x4] sm:$0xf]
      %v435 = vld [vmem:[%s2] sm:$0x1]
      %v437 = vlaneseq
      %v438 = vshrl.u32 %v437, 7
      %v439 = vsub.s32 0, %v438
      %v440 = vrot.slane %v435, %v439
      %v444 = vunpack.c.l.b16 %v433
      %v445 = vunpack.c.l.b16 %v434
      %v446 = vpack.c.b16 %v445, %v444
      %448 = vmatprep.subr.bf16.mxu0 0
      %449 = vmatpush1.bf16.msra.mxu0 %v446
      %450 = vmatprep.subr.bf16.mxu0 0
      %451 = vmatpush1.bf16.msra.mxu0 0
      %452 = vmatprep.subr.bf16.mxu0 0
      %453 = vmatpush1.bf16.msra.mxu0 0
      %454 = vmatprep.subr.bf16.mxu0 0
      %455 = vmatpush1.bf16.msra.mxu0 0
      %456 = vmatprep.subr.bf16.mxu0 0
      %457 = vmatpush1.bf16.msra.mxu0 0
      %458 = vmatprep.subr.bf16.mxu0 0
      %459 = vmatpush1.bf16.msra.mxu0 0
      %460 = vmatprep.subr.bf16.mxu0 0
      %461 = vmatpush1.bf16.msra.mxu0 0
      %462 = vmatprep.subr.bf16.mxu0 0
      %463 = vmatpush1.bf16.msra.mxu0 0
      %464 = vmatprep.subr.bf16.mxu0 0
      %465 = vmatpush1.bf16.msra.mxu0 0
      %466 = vmatprep.subr.bf16.mxu0 0
      %467 = vmatpush1.bf16.msra.mxu0 0
      %468 = vmatprep.subr.bf16.mxu0 0
      %469 = vmatpush1.bf16.msra.mxu0 0
      %470 = vmatprep.subr.bf16.mxu0 0
      %471 = vmatpush1.bf16.msra.mxu0 0
      %472 = vmatprep.subr.bf16.mxu0 0
      %473 = vmatpush1.bf16.msra.mxu0 0
      %474 = vmatprep.subr.bf16.mxu0 0
      %475 = vmatpush1.bf16.msra.mxu0 0
      %476 = vmatprep.subr.bf16.mxu0 0
      %477 = vmatpush1.bf16.msra.mxu0 0
      %478 = vmatprep.subr.bf16.mxu0 0
      %479 = vmatpush1.bf16.msra.mxu0 0
      %480 = vmatprep.mubr.bf16.mxu0 0
      %481 = vmatmul.mubr.bf16.gmra.mrb[0].mxu0 %v341
      %v482 = vpop.f32.mrb[0].mxu0
      %v483 = vadd.f32 %v440, %v482
      %v484 = vpop.f32.mrb[0].mxu0
      %v485 = vpop.f32.mrb[0].mxu0
      %v486 = vadd.f32 %v440, %v485
      %v487 = vpop.f32.mrb[0].mxu0
      %488 = vdwg.mxu0
      %v489 = vsel %vm384, %v483, 0.0
      %v490 = vsel %vm384, %v486, 0.0
      %v491 = vadd.f32 %v489, %v490
      %v492 = vrot.slane %v491, 4
      %v493 = vadd.f32 %v491, %v492
      %v494 = vrot.slane %v493, 2
      %v495 = vadd.f32 %v493, %v494
      %v496 = vrot.slane %v495, 1
      %v497 = vadd.f32 %v495, %v496
      %v498 = vmul.f32 %v483, %v483
      %v499 = vmul.f32 %v486, %v486
      %v500 = vsel %vm384, %v498, 0.0
      %v501 = vsel %vm384, %v499, 0.0
      %v502 = vadd.f32 %v500, %v501
      %v503 = vrot.slane %v502, 4
      %v504 = vadd.f32 %v502, %v503
      %v505 = vrot.slane %v504, 2
      %v506 = vadd.f32 %v504, %v505
      %v507 = vrot.slane %v506, 1
      %v508 = vadd.f32 %v506, %v507
      %v509 = vadd.f32 %v410, %v497
      %511 = vrot.lane.b32.xlu0 %v497, 112
      %v512 = vpop.permute.xlu0 %511
      %v514 = vadd.f32 %v509, %v512
      %v515 = vadd.f32 %v416, %v508
      %517 = vrot.lane.b32.xlu0 %v508, 112
      %v518 = vpop.permute.xlu0 %517
      %v520 = vadd.f32 %v515, %v518
      %v523 = vcombine.high %v483, %v483
      %v524 = vcombine.high %v486, %v486
      %v527 = vpack.c.bf16 %v483, %v483
      %v528 = vpack.c.bf16 %v523, %v523
      %v529 = vpack.c.bf16 %v486, %v486
      %v530 = vpack.c.bf16 %v524, %v524
      %s531 = scalar_lea.vmem %s281, 2
      %532 = vst.msk [vmem:[%s531] sm:$0x3] %vm427, %v527
      %533 = vst.msk [vmem:[%s531 + $0x4] sm:$0x3] %vm427, %v528
      %534 = vst.msk [vmem:[%s531 + $0x8] sm:$0x3] %vm427, %v529
      %535 = vst.msk [vmem:[%s531 + $0xc] sm:$0x3] %vm427, %v530
      %s536 = scalar_lea.vmem %s1, 16
      %v537 = vld [vmem:[%s536] sm:$0xf]
      %v538 = vld [vmem:[%s536 + $0x4] sm:$0xf]
      %v539 = vld [vmem:[%s2] sm:$0x1]
      %v541 = vlaneseq
      %v542 = vshrl.u32 %v541, 7
      %v543 = vsub.s32 0, %v542
      %v544 = vrot.slane %v539, %v543
      %v548 = vunpack.c.l.b16 %v537
      %v549 = vunpack.c.l.b16 %v538
      %v550 = vpack.c.b16 %v549, %v548
      %552 = vmatprep.subr.bf16.mxu0 0
      %553 = vmatpush1.bf16.msra.mxu0 %v550
      %554 = vmatprep.subr.bf16.mxu0 0
      %555 = vmatpush1.bf16.msra.mxu0 0
      %556 = vmatprep.subr.bf16.mxu0 0
      %557 = vmatpush1.bf16.msra.mxu0 0
      %558 = vmatprep.subr.bf16.mxu0 0
      %559 = vmatpush1.bf16.msra.mxu0 0
      %560 = vmatprep.subr.bf16.mxu0 0
      %561 = vmatpush1.bf16.msra.mxu0 0
      %562 = vmatprep.subr.bf16.mxu0 0
      %563 = vmatpush1.bf16.msra.mxu0 0
      %564 = vmatprep.subr.bf16.mxu0 0
      %565 = vmatpush1.bf16.msra.mxu0 0
      %566 = vmatprep.subr.bf16.mxu0 0
      %567 = vmatpush1.bf16.msra.mxu0 0
      %568 = vmatprep.subr.bf16.mxu0 0
      %569 = vmatpush1.bf16.msra.mxu0 0
      %570 = vmatprep.subr.bf16.mxu0 0
      %571 = vmatpush1.bf16.msra.mxu0 0
      %572 = vmatprep.subr.bf16.mxu0 0
      %573 = vmatpush1.bf16.msra.mxu0 0
      %574 = vmatprep.subr.bf16.mxu0 0
      %575 = vmatpush1.bf16.msra.mxu0 0
      %576 = vmatprep.subr.bf16.mxu0 0
      %577 = vmatpush1.bf16.msra.mxu0 0
      %578 = vmatprep.subr.bf16.mxu0 0
      %579 = vmatpush1.bf16.msra.mxu0 0
      %580 = vmatprep.subr.bf16.mxu0 0
      %581 = vmatpush1.bf16.msra.mxu0 0
      %582 = vmatprep.subr.bf16.mxu0 0
      %583 = vmatpush1.bf16.msra.mxu0 0
      %584 = vmatprep.mubr.bf16.mxu0 0
      %585 = vmatmul.mubr.bf16.gmra.mrb[0].mxu0 %v341
      %v586 = vpop.f32.mrb[0].mxu0
      %v587 = vadd.f32 %v544, %v586
      %v588 = vpop.f32.mrb[0].mxu0
      %v589 = vpop.f32.mrb[0].mxu0
      %v590 = vadd.f32 %v544, %v589
      %v591 = vpop.f32.mrb[0].mxu0
      %592 = vdwg.mxu0
      %v593 = vsel %vm384, %v587, 0.0
      %v594 = vsel %vm384, %v590, 0.0
      %v595 = vadd.f32 %v593, %v594
      %v596 = vrot.slane %v595, 4
      %v597 = vadd.f32 %v595, %v596
      %v598 = vrot.slane %v597, 2
      %v599 = vadd.f32 %v597, %v598
      %v600 = vrot.slane %v599, 1
      %v601 = vadd.f32 %v599, %v600
      %v602 = vmul.f32 %v587, %v587
      %v603 = vmul.f32 %v590, %v590
      %v604 = vsel %vm384, %v602, 0.0
      %v605 = vsel %vm384, %v603, 0.0
      %v606 = vadd.f32 %v604, %v605
      %v607 = vrot.slane %v606, 4
      %v608 = vadd.f32 %v606, %v607
      %v609 = vrot.slane %v608, 2
      %v610 = vadd.f32 %v608, %v609
      %v611 = vrot.slane %v610, 1
      %v612 = vadd.f32 %v610, %v611
      %v613 = vadd.f32 %v514, %v601
      %615 = vrot.lane.b32.xlu0 %v601, 112
      %v616 = vpop.permute.xlu0 %615
      %v618 = vadd.f32 %v613, %v616
      %v619 = vadd.f32 %v520, %v612
      %621 = vrot.lane.b32.xlu0 %v612, 112
      %v622 = vpop.permute.xlu0 %621
      %v624 = vadd.f32 %v619, %v622
      %v627 = vcombine.high %v587, %v587
      %v628 = vcombine.high %v590, %v590
      %v631 = vpack.c.bf16 %v587, %v587
      %v632 = vpack.c.bf16 %v627, %v627
      %v633 = vpack.c.bf16 %v590, %v590
      %v634 = vpack.c.bf16 %v628, %v628
      %s635 = scalar_lea.vmem %s281, 16
      %636 = vst.msk [vmem:[%s635] sm:$0x3] %vm427, %v631
      %637 = vst.msk [vmem:[%s635 + $0x4] sm:$0x3] %vm427, %v632
      %638 = vst.msk [vmem:[%s635 + $0x8] sm:$0x3] %vm427, %v633
      %639 = vst.msk [vmem:[%s635 + $0xc] sm:$0x3] %vm427, %v634
      %s640 = scalar_lea.vmem %s1, 24
      %v641 = vld [vmem:[%s640] sm:$0xf]
      %v642 = vld [vmem:[%s640 + $0x4] sm:$0xf]
      %v643 = vld [vmem:[%s2] sm:$0x1]
      %v645 = vlaneseq
      %v646 = vshrl.u32 %v645, 7
      %v647 = vsub.s32 0, %v646
      %v648 = vrot.slane %v643, %v647
      %v652 = vunpack.c.l.b16 %v641
      %v653 = vunpack.c.l.b16 %v642
      %v654 = vpack.c.b16 %v653, %v652
      %656 = vmatprep.subr.bf16.mxu0 0
      %657 = vmatpush1.bf16.msra.mxu0 %v654
      %658 = vmatprep.subr.bf16.mxu0 0
      %659 = vmatpush1.bf16.msra.mxu0 0
      %660 = vmatprep.subr.bf16.mxu0 0
      %661 = vmatpush1.bf16.msra.mxu0 0
      %662 = vmatprep.subr.bf16.mxu0 0
      %663 = vmatpush1.bf16.msra.mxu0 0
      %664 = vmatprep.subr.bf16.mxu0 0
      %665 = vmatpush1.bf16.msra.mxu0 0
      %666 = vmatprep.subr.bf16.mxu0 0
      %667 = vmatpush1.bf16.msra.mxu0 0
      %668 = vmatprep.subr.bf16.mxu0 0
      %669 = vmatpush1.bf16.msra.mxu0 0
      %670 = vmatprep.subr.bf16.mxu0 0
      %671 = vmatpush1.bf16.msra.mxu0 0
      %672 = vmatprep.subr.bf16.mxu0 0
      %673 = vmatpush1.bf16.msra.mxu0 0
      %674 = vmatprep.subr.bf16.mxu0 0
      %675 = vmatpush1.bf16.msra.mxu0 0
      %676 = vmatprep.subr.bf16.mxu0 0
      %677 = vmatpush1.bf16.msra.mxu0 0
      %678 = vmatprep.subr.bf16.mxu0 0
      %679 = vmatpush1.bf16.msra.mxu0 0
      %680 = vmatprep.subr.bf16.mxu0 0
      %681 = vmatpush1.bf16.msra.mxu0 0
      %682 = vmatprep.subr.bf16.mxu0 0
      %683 = vmatpush1.bf16.msra.mxu0 0
      %684 = vmatprep.subr.bf16.mxu0 0
      %685 = vmatpush1.bf16.msra.mxu0 0
      %686 = vmatprep.subr.bf16.mxu0 0
      %687 = vmatpush1.bf16.msra.mxu0 0
      %688 = vmatprep.mubr.bf16.mxu0 0
      %689 = vmatmul.mubr.bf16.gmra.mrb[0].mxu0 %v341
      %v690 = vpop.f32.mrb[0].mxu0
      %v691 = vadd.f32 %v648, %v690
      %v692 = vpop.f32.mrb[0].mxu0
      %v693 = vpop.f32.mrb[0].mxu0
      %v694 = vadd.f32 %v648, %v693
      %v695 = vpop.f32.mrb[0].mxu0
      %696 = vdwg.mxu0
      %v697 = vsel %vm384, %v691, 0.0
      %v698 = vsel %vm384, %v694, 0.0
      %v699 = vadd.f32 %v697, %v698
      %v700 = vrot.slane %v699, 4
      %v701 = vadd.f32 %v699, %v700
      %v702 = vrot.slane %v701, 2
      %v703 = vadd.f32 %v701, %v702
      %v704 = vrot.slane %v703, 1
      %v705 = vadd.f32 %v703, %v704
      %v706 = vmul.f32 %v691, %v691
      %v707 = vmul.f32 %v694, %v694
      %v708 = vsel %vm384, %v706, 0.0
      %v709 = vsel %vm384, %v707, 0.0
      %v710 = vadd.f32 %v708, %v709
      %v711 = vrot.slane %v710, 4
      %v712 = vadd.f32 %v710, %v711
      %v713 = vrot.slane %v712, 2
      %v714 = vadd.f32 %v712, %v713
      %v715 = vrot.slane %v714, 1
      %v716 = vadd.f32 %v714, %v715
      %v717 = vadd.f32 %v618, %v705
      %719 = vrot.lane.b32.xlu0 %v705, 112
      %v720 = vpop.permute.xlu0 %719
      %v722 = vadd.f32 %v717, %v720
      %v723 = vadd.f32 %v624, %v716
      %725 = vrot.lane.b32.xlu0 %v716, 112
      %v726 = vpop.permute.xlu0 %725
      %v728 = vadd.f32 %v723, %v726
      %v731 = vcombine.high %v691, %v691
      %v732 = vcombine.high %v694, %v694
      %v735 = vpack.c.bf16 %v691, %v691
      %v736 = vpack.c.bf16 %v731, %v731
      %v737 = vpack.c.bf16 %v694, %v694
      %v738 = vpack.c.bf16 %v732, %v732
      %s739 = scalar_lea.vmem %s281, 18
      %740 = vst.msk [vmem:[%s739] sm:$0x3] %vm427, %v735
      %741 = vst.msk [vmem:[%s739 + $0x4] sm:$0x3] %vm427, %v736
      %742 = vst.msk [vmem:[%s739 + $0x8] sm:$0x3] %vm427, %v737
      %743 = vst.msk [vmem:[%s739 + $0xc] sm:$0x3] %vm427, %v738
      %vm744 = vcmask 122880
      %745 = vst.msk [vmem:[%s288] sm:$0x1] %vm744, %v722
      %746 = vst.msk [vmem:[%s295] sm:$0x1] %vm744, %v728
      %s747 = smul.u32 %s21, 4
      %s748 = sadd.s32 %s747, %s22
      %p749 = scmp.lt.s32.totalorder %s748, 7
      %s750 = scalar_select %p749, %s748, 7
      %s751 = smul.addr %s750, 16
      %s752 = smul.addr %s751, 2
      %s753 = scalar_lea.vmem %s3, %s752
      %s754 = smul.u32 %s21, 4
      %s755 = sadd.s32 %s754, %s22
      %p756 = scmp.lt.s32.totalorder %s755, 7
      %s757 = scalar_select %p756, %s755, 7
      %s758 = scalar_lea.vmem %s4, %s757
      %s759 = smul.u32 %s21, 4
      %s760 = sadd.s32 %s759, %s22
      %p761 = scmp.lt.s32.totalorder %s760, 7
      %s762 = scalar_select %p761, %s760, 7
      %s763 = scalar_lea.vmem %s5, %s762
      // Predicated region
      $region33: #{net_just_up_block_forward.4} parent=31 // pred_check
        %p764 = pneg %p121
      $region34: #{net_just_up_block_forward.4} parent=31 // pred_check_branch
        %766 = sbr.rel (%p764) target = $region36
      $region35: #{net_just_up_block_forward.4} parent=31 // pred_region
        %s767 = smul.u32 %s21, 4
        %s768 = sadd.s32 %s767, %s22
      $region36: #{net_just_up_block_forward.4} parent=31 // pred_fallthru
        _
      // Predicated region
      $region37: #{net_just_up_block_forward.4} parent=31 // pred_check
        %p769 = pneg %p151
      $region38: #{net_just_up_block_forward.4} parent=31 // pred_check_branch
        %771 = sbr.rel (%p769) target = $region40
      $region39: #{net_just_up_block_forward.4} parent=31 // pred_region
        %s772 = smul.u32 %s21, 4
        %s773 = sadd.s32 %s772, %s22
      $region40: #{net_just_up_block_forward.4} parent=31 // pred_fallthru
        _
      // Predicated region
      $region41: #{net_just_up_block_forward.4} parent=31 // pred_check
        %p774 = pneg %p181
      $region42: #{net_just_up_block_forward.4} parent=31 // pred_check_branch
        %776 = sbr.rel (%p774) target = $region44
      $region43: #{net_just_up_block_forward.4} parent=31 // pred_region
        %s777 = smul.u32 %s21, 4
        %s778 = sadd.s32 %s777, %s22
      $region44: #{net_just_up_block_forward.4} parent=31 // pred_fallthru
        _
    $region32: #{net_just_up_block_forward.4} parent=5 // pred_fallthru
      _
    %p779 = scmp.le.s32.totalorder 2, %s12
    // Predicated region
    $region45: #{net_just_up_block_forward.4} parent=5 // pred_check
      %p780 = pneg %p779
    $region46: #{net_just_up_block_forward.4} parent=5 // pred_check_branch
      %782 = sbr.rel (%p780) target = $region48
    $region47: #{net_just_up_block_forward.4} parent=5 // pred_region
      %s783 = ssub.s32 %s12, 2
      // Predicated region
      $region49: #{net_just_up_block_forward.4} parent=47 // pred_check
        %p784 = pneg %p127
      $region50: #{net_just_up_block_forward.4} parent=47 // pred_check_branch
        %786 = sbr.rel (%p784) target = $region52
      $region51: #{net_just_up_block_forward.4} parent=47 // pred_region
        %s787 = smul.u32 %s23, 4
        %s788 = sadd.s32 %s787, %s24
        %p789 = scmp.lt.s32.totalorder %s788, 7
        %s790 = scalar_select %p789, %s788, 7
        %s791 = smul.addr %s790, 16
        %s792 = smul.addr %s791, 2
        %s793 = scalar_lea.vmem %s3, %s792
      $region52: #{net_just_up_block_forward.4} parent=47 // pred_fallthru
        _
      // Predicated region
      $region53: #{net_just_up_block_forward.4} parent=47 // pred_check
        %p794 = pneg %p157
      $region54: #{net_just_up_block_forward.4} parent=47 // pred_check_branch
        %796 = sbr.rel (%p794) target = $region56
      $region55: #{net_just_up_block_forward.4} parent=47 // pred_region
        %s797 = smul.u32 %s23, 4
        %s798 = sadd.s32 %s797, %s24
        %p799 = scmp.lt.s32.totalorder %s798, 7
        %s800 = scalar_select %p799, %s798, 7
        %s801 = scalar_lea.vmem %s4, %s800
      $region56: #{net_just_up_block_forward.4} parent=47 // pred_fallthru
        _
      // Predicated region
      $region57: #{net_just_up_block_forward.4} parent=47 // pred_check
        %p802 = pneg %p187
      $region58: #{net_just_up_block_forward.4} parent=47 // pred_check_branch
        %804 = sbr.rel (%p802) target = $region60
      $region59: #{net_just_up_block_forward.4} parent=47 // pred_region
        %s805 = smul.u32 %s23, 4
        %s806 = sadd.s32 %s805, %s24
        %p807 = scmp.lt.s32.totalorder %s806, 7
        %s808 = scalar_select %p807, %s806, 7
        %s809 = scalar_lea.vmem %s5, %s808
      $region60: #{net_just_up_block_forward.4} parent=47 // pred_fallthru
        _
    $region48: #{net_just_up_block_forward.4} parent=5 // pred_fallthru
      _
  $region6: #{net_just_up_block_forward.4} parent=0 // loop_footer
    %s16 = sadd.s32 1, %s12
  $region7: #{net_just_up_block_forward.4} parent=0 // loop_footer_branch
    %11 = sbr.rel target = $region3
  $region8: #{net_just_up_block_forward.4} parent=0 // loop_exit
    _

// kernel: net_just_up_block_forward.7
$region0: #{net_just_up_block_forward.7}
  #allocation0 [shape = 'u32[]', space=smem, size = 0x4, offset = 0x4, fixed_abs, tag = 'smem constant byte address 0x4 - core index']
  #allocation1 [shape = 'u32[144,128]{1,0:T(1,128)}', space=vmem, size = 0x12000, scoped, tag = 'internal scratch']
  %s0 = inlined_call_operand.vmem [shape: bf16[128,128], index: 0, kind: input, shape index: {}]
  %s1 = inlined_call_operand.vmem [shape: f32[1,128], index: 1, kind: input, shape index: {}]
  %s2 = inlined_call_operand.vmem [shape: f32[1,128], index: 2, kind: input, shape index: {}]
  %s3 = inlined_call_operand.vmem [shape: f32[1,128], index: 3, kind: input, shape index: {}]
  %s4 = inlined_call_operand.vmem [shape: f32[128,128], index: 4, kind: output, shape index: {}]
  %s5 = sld [smem:[#allocation0]]
  $region26: #{net_just_up_block_forward.7} parent=0
    _
  %s7 = ssub.s32 1, %s5
  %s8 = scalar_select 0, %s7, %s5
  // Predicated region
  $region2: #{net_just_up_block_forward.7} parent=0 // pred_check
    _
  $region3: #{net_just_up_block_forward.7} parent=0 // pred_check_branch
    %10 = sbr.rel (0) target = $region5
  $region4: #{net_just_up_block_forward.7} parent=0 // pred_region
    _
  $region5: #{net_just_up_block_forward.7} parent=0 // pred_fallthru
    _
  // Predicated region
  $region6: #{net_just_up_block_forward.7} parent=0 // pred_check
    _
  $region7: #{net_just_up_block_forward.7} parent=0 // pred_check_branch
    %12 = sbr.rel (0) target = $region9
  $region8: #{net_just_up_block_forward.7} parent=0 // pred_region
    _
  $region9: #{net_just_up_block_forward.7} parent=0 // pred_fallthru
    _
  // Predicated region
  $region10: #{net_just_up_block_forward.7} parent=0 // pred_check
    _
  $region11: #{net_just_up_block_forward.7} parent=0 // pred_check_branch
    %14 = sbr.rel (0) target = $region13
  $region12: #{net_just_up_block_forward.7} parent=0 // pred_region
    _
  $region13: #{net_just_up_block_forward.7} parent=0 // pred_fallthru
    _
  // Predicated region
  $region14: #{net_just_up_block_forward.7} parent=0 // pred_check
    _
  $region15: #{net_just_up_block_forward.7} parent=0 // pred_check_branch
    %16 = sbr.rel (0) target = $region17
  $region16: #{net_just_up_block_forward.7} parent=0 // pred_region
    _
  $region17: #{net_just_up_block_forward.7} parent=0 // pred_fallthru
    _
  %v17 = vld [vmem:[%s0] sm:$0xf]
  %v18 = vld [vmem:[%s0 + $0x4] sm:$0xf]
  %v19 = vld [vmem:[%s0 + $0x8] sm:$0xf]
  %v20 = vld [vmem:[%s0 + $0xc] sm:$0xf]
  %v21 = vld [vmem:[%s0 + $0x10] sm:$0xf]
  %v22 = vld [vmem:[%s0 + $0x14] sm:$0xf]
  %v23 = vld [vmem:[%s0 + $0x18] sm:$0xf]
  %v24 = vld [vmem:[%s0 + $0x1c] sm:$0xf]
  %v25 = vld [vmem:[%s0 + $0x20] sm:$0xf]
  %v26 = vld [vmem:[%s0 + $0x24] sm:$0xf]
  %v27 = vld [vmem:[%s0 + $0x28] sm:$0xf]
  %v28 = vld [vmem:[%s0 + $0x2c] sm:$0xf]
  %v29 = vld [vmem:[%s0 + $0x30] sm:$0xf]
  %v30 = vld [vmem:[%s0 + $0x34] sm:$0xf]
  %v31 = vld [vmem:[%s0 + $0x38] sm:$0xf]
  %v32 = vld [vmem:[%s0 + $0x3c] sm:$0xf]
  %v33 = vunpack.c.l.bf16 %v17
  %v34 = vunpack.c.l.bf16 %v18
  %v35 = vunpack.c.l.bf16 %v19
  %v36 = vunpack.c.l.bf16 %v20
  %v37 = vunpack.c.l.bf16 %v21
  %v38 = vunpack.c.l.bf16 %v22
  %v39 = vunpack.c.l.bf16 %v23
  %v40 = vunpack.c.l.bf16 %v24
  %v41 = vunpack.c.l.bf16 %v25
  %v42 = vunpack.c.l.bf16 %v26
  %v43 = vunpack.c.l.bf16 %v27
  %v44 = vunpack.c.l.bf16 %v28
  %v45 = vunpack.c.l.bf16 %v29
  %v46 = vunpack.c.l.bf16 %v30
  %v47 = vunpack.c.l.bf16 %v31
  %v48 = vunpack.c.l.bf16 %v32
  %v49 = vld [vmem:[%s1] sm:$0x1]
  %v51 = vlaneseq
  %v52 = vshrl.u32 %v51, 7
  %v53 = vsub.s32 0, %v52
  %v54 = vrot.slane %v49, %v53
  %v56 = vmul.f32 %v33, %v54
  %v57 = vmul.f32 %v34, %v54
  %v58 = vmul.f32 %v35, %v54
  %v59 = vmul.f32 %v36, %v54
  %v60 = vmul.f32 %v37, %v54
  %v61 = vmul.f32 %v38, %v54
  %v62 = vmul.f32 %v39, %v54
  %v63 = vmul.f32 %v40, %v54
  %v64 = vmul.f32 %v41, %v54
  %v65 = vmul.f32 %v42, %v54
  %v66 = vmul.f32 %v43, %v54
  %v67 = vmul.f32 %v44, %v54
  %v68 = vmul.f32 %v45, %v54
  %v69 = vmul.f32 %v46, %v54
  %v70 = vmul.f32 %v47, %v54
  %v71 = vmul.f32 %v48, %v54
  %v72 = vld [vmem:[%s2] sm:$0x1]
  %v74 = vlaneseq
  %v75 = vshrl.u32 %v74, 7
  %v76 = vsub.s32 0, %v75
  %v77 = vrot.slane %v72, %v76
  %v79 = vadd.f32 %v56, %v77
  %v80 = vadd.f32 %v57, %v77
  %v81 = vadd.f32 %v58, %v77
  %v82 = vadd.f32 %v59, %v77
  %v83 = vadd.f32 %v60, %v77
  %v84 = vadd.f32 %v61, %v77
  %v85 = vadd.f32 %v62, %v77
  %v86 = vadd.f32 %v63, %v77
  %v87 = vadd.f32 %v64, %v77
  %v88 = vadd.f32 %v65, %v77
  %v89 = vadd.f32 %v66, %v77
  %v90 = vadd.f32 %v67, %v77
  %v91 = vadd.f32 %v68, %v77
  %v92 = vadd.f32 %v69, %v77
  %v93 = vadd.f32 %v70, %v77
  %v94 = vadd.f32 %v71, %v77
  %vm95 = vcmp.ge.f32.partialorder %v79, 0.0
  %vm96 = vcmp.ge.f32.partialorder %v80, 0.0
  %vm97 = vcmp.ge.f32.partialorder %v81, 0.0
  %vm98 = vcmp.ge.f32.partialorder %v82, 0.0
  %vm99 = vcmp.ge.f32.partialorder %v83, 0.0
  %vm100 = vcmp.ge.f32.partialorder %v84, 0.0
  %vm101 = vcmp.ge.f32.partialorder %v85, 0.0
  %vm102 = vcmp.ge.f32.partialorder %v86, 0.0
  %vm103 = vcmp.ge.f32.partialorder %v87, 0.0
  %vm104 = vcmp.ge.f32.partialorder %v88, 0.0
  %vm105 = vcmp.ge.f32.partialorder %v89, 0.0
  %vm106 = vcmp.ge.f32.partialorder %v90, 0.0
  %vm107 = vcmp.ge.f32.partialorder %v91, 0.0
  %vm108 = vcmp.ge.f32.partialorder %v92, 0.0
  %vm109 = vcmp.ge.f32.partialorder %v93, 0.0
  %vm110 = vcmp.ge.f32.partialorder %v94, 0.0
  %v111 = vld [vmem:[%s3] sm:$0x1]
  %v113 = vlaneseq
  %v114 = vshrl.u32 %v113, 7
  %v115 = vsub.s32 0, %v114
  %v116 = vrot.slane %v111, %v115
  %v118 = vmul.f32 %v116, %v79
  %v119 = vmul.f32 %v116, %v80
  %v120 = vmul.f32 %v116, %v81
  %v121 = vmul.f32 %v116, %v82
  %v122 = vmul.f32 %v116, %v83
  %v123 = vmul.f32 %v116, %v84
  %v124 = vmul.f32 %v116, %v85
  %v125 = vmul.f32 %v116, %v86
  %v126 = vmul.f32 %v116, %v87
  %v127 = vmul.f32 %v116, %v88
  %v128 = vmul.f32 %v116, %v89
  %v129 = vmul.f32 %v116, %v90
  %v130 = vmul.f32 %v116, %v91
  %v131 = vmul.f32 %v116, %v92
  %v132 = vmul.f32 %v116, %v93
  %v133 = vmul.f32 %v116, %v94
  %v134 = vsel %vm95, %v79, %v118
  %v135 = vsel %vm96, %v80, %v119
  %v136 = vsel %vm97, %v81, %v120
  %v137 = vsel %vm98, %v82, %v121
  %v138 = vsel %vm99, %v83, %v122
  %v139 = vsel %vm100, %v84, %v123
  %v140 = vsel %vm101, %v85, %v124
  %v141 = vsel %vm102, %v86, %v125
  %v142 = vsel %vm103, %v87, %v126
  %v143 = vsel %vm104, %v88, %v127
  %v144 = vsel %vm105, %v89, %v128
  %v145 = vsel %vm106, %v90, %v129
  %v146 = vsel %vm107, %v91, %v130
  %v147 = vsel %vm108, %v92, %v131
  %v148 = vsel %vm109, %v93, %v132
  %v149 = vsel %vm110, %v94, %v133
  %150 = vst [vmem:[%s4] sm:$0xff] %v134
  %151 = vst [vmem:[%s4 + $0x8] sm:$0xff] %v135
  %152 = vst [vmem:[%s4 + $0x10] sm:$0xff] %v136
  %153 = vst [vmem:[%s4 + $0x18] sm:$0xff] %v137
  %154 = vst [vmem:[%s4 + $0x20] sm:$0xff] %v138
  %155 = vst [vmem:[%s4 + $0x28] sm:$0xff] %v139
  %156 = vst [vmem:[%s4 + $0x30] sm:$0xff] %v140
  %157 = vst [vmem:[%s4 + $0x38] sm:$0xff] %v141
  %158 = vst [vmem:[%s4 + $0x40] sm:$0xff] %v142
  %159 = vst [vmem:[%s4 + $0x48] sm:$0xff] %v143
  %160 = vst [vmem:[%s4 + $0x50] sm:$0xff] %v144
  %161 = vst [vmem:[%s4 + $0x58] sm:$0xff] %v145
  %162 = vst [vmem:[%s4 + $0x60] sm:$0xff] %v146
  %163 = vst [vmem:[%s4 + $0x68] sm:$0xff] %v147
  %164 = vst [vmem:[%s4 + $0x70] sm:$0xff] %v148
  %165 = vst [vmem:[%s4 + $0x78] sm:$0xff] %v149
  // Predicated region
  $region18: #{net_just_up_block_forward.7} parent=0 // pred_check
    _
  $region19: #{net_just_up_block_forward.7} parent=0 // pred_check_branch
    %167 = sbr.rel (0) target = $region21
  $region20: #{net_just_up_block_forward.7} parent=0 // pred_region
    _
  $region21: #{net_just_up_block_forward.7} parent=0 // pred_fallthru
    _
  // Predicated region
  $region22: #{net_just_up_block_forward.7} parent=0 // pred_check
    _
  $region23: #{net_just_up_block_forward.7} parent=0 // pred_check_branch
    %169 = sbr.rel (0) target = $region25
  $region24: #{net_just_up_block_forward.7} parent=0 // pred_region
    _
  $region25: #{net_just_up_block_forward.7} parent=0 // pred_fallthru
    _

// kernel: net_just_up_block_forward.5
$region0: #{net_just_up_block_forward.5}
  #allocation0 [shape = 'u32[]', space=smem, size = 0x4, offset = 0x4, fixed_abs, tag = 'smem constant byte address 0x4 - core index']
  #allocation1 [shape = 'u32[144,128]{1,0:T(1,128)}', space=vmem, size = 0x12000, scoped, tag = 'internal scratch']
  #allocation2 [shape = 'bf16[3,10,10,16]{3,2,1,0:T(8,128)(2,1)}', space=vmem, size = 0x1e000, scoped, tag = 'scratch operand']
  %s0 = inlined_call_operand.vmem [shape: bf16[2,8,8,8,16], index: 0, kind: input, shape index: {}]
  %s1 = inlined_call_operand.vmem [shape: bf16[3,3,3,16,16], index: 1, kind: input, shape index: {}]
  %s2 = inlined_call_operand.vmem [shape: f32[1,16], index: 2, kind: input, shape index: {}]
  %s3 = inlined_call_operand.vmem [shape: f32[1,16], index: 3, kind: input, shape index: {}]
  %s4 = inlined_call_operand.vmem [shape: f32[1,16], index: 4, kind: input, shape index: {}]
  %s5 = inlined_call_operand.vmem [shape: f32[1,16], index: 5, kind: input, shape index: {}]
  %s6 = inlined_call_operand.vmem [shape: bf16[2,8,8,8,16], index: 6, kind: output, shape index: {0}]
  %s7 = inlined_call_operand.vmem [shape: f32[16,1,16], index: 7, kind: output, shape index: {1}]
  %s8 = inlined_call_operand.vmem [shape: f32[16,1,16], index: 8, kind: output, shape index: {2}]
  %9 = xla_tuple %s6, %s7, %s8
  %s10 = sld [smem:[#allocation0]]
  $region73: #{net_just_up_block_forward.5} parent=0
    _
  %s12 = ssub.s32 1, %s10
  %s13 = scalar_select 0, %s12, %s10
  loop: start=0, step=1, limit=18
  $region2: #{net_just_up_block_forward.5} parent=0 // loop_pre_header
    _
  $region3: #{net_just_up_block_forward.5} parent=0 // loop_header
    %s15 = sphi 0, %s19
    %p16 = scmp.ge.s32.totalorder %s15, 18
    %s22 = sphi 0, %s34
    %s23 = sphi 0, %s30
    %s24 = sphi 0, %s22
    %s25 = sphi 0, %s23
    %s26 = sphi 0, %s24
    %s27 = sphi 0, %s25
    %s37 = sphi 0, %s39
    %s40 = sphi 0, %s37
    %s41 = sphi 0, %s40
    %s57 = sphi 0, %s41
    %s61 = sphi 0, %s61
    %s63 = sphi 0, %s61
    %s64 = sphi 0, %s63
    %s78 = sphi 0, %s64
    %s82 = sphi 0, %s82
    %s84 = sphi 0, %s82
    %s85 = sphi 0, %s84
    %s99 = sphi 0, %s85
    %s103 = sphi 0, %s103
    %s105 = sphi 0, %s103
    %s106 = sphi 0, %s105
    %s120 = sphi 0, %s106
    %s124 = sphi 0, %s124
    %s126 = sphi 0, %s124
    %s127 = sphi 0, %s126
    %s141 = sphi 0, %s127
    %s145 = sphi 0, %s145
    %s147 = sphi 0, %s145
    %s148 = sphi 0, %s147
    %s162 = sphi 0, %s148
    %s170 = sphi 0, %s172
    %s173 = sphi 0, %s170
    %s174 = sphi 0, %s173
    %s190 = sphi 0, %s174
    %s200 = sphi 0, %s202
    %s203 = sphi 0, %s200
    %s204 = sphi 0, %s203
    %s220 = sphi 0, %s204
    %s230 = sphi 0, %s232
    %s233 = sphi 0, %s230
    %s234 = sphi 0, %s233
    %s250 = sphi 0, %s234
  $region4: #{net_just_up_block_forward.5} parent=0 // loop_header_branch
    %18 = sbr.rel (%p16) target = $region8
  $region5: #{net_just_up_block_forward.5} parent=0 // loop_body
    %s20 = ssub.s32 %s15, 1
    %s21 = ssub.s32 %s15, 2
    %s28 = sadd.s32 1, %s23
    %p29 = scmp.ge.s32.totalorder %s28, 8
    %s30 = scalar_select %p29, 0, %s28
    %s31 = sadd.s32 1, %s22
    %s32 = scalar_select %p29, %s31, %s22
    %p33 = scmp.ge.s32.totalorder %s32, 2
    %s34 = scalar_select %p33, 0, %s32
    %s35 = ssub.s32 %s22, %s34
    %p36 = scmp.eq.s32.totalorder %s35, 0
    %s38 = sadd.s32 %s37, 1
    %s39 = scalar_select %p36, %s37, %s38
    %p42 = pneg %p36
    %p43 = scmp.eq.s32.totalorder %s15, 15
    %p44 = por %p42, %p43
    %p45 = scmp.ne.s32.totalorder %s37, %s40
    %p46 = scmp.eq.s32.totalorder %s15, 0
    %p47 = por %p45, %p46
    %p48 = scmp.ne.s32.totalorder %s37, %s40
    %p49 = scmp.eq.s32.totalorder %s20, 15
    %p50 = por %p48, %p49
    %p51 = scmp.ne.s32.totalorder %s40, %s41
    %p52 = scmp.eq.s32.totalorder %s20, 0
    %p53 = por %p51, %p52
    %p54 = scmp.ne.s32.totalorder %s40, %s41
    %p55 = scmp.eq.s32.totalorder %s21, 15
    %p56 = por %p54, %p55
    %p58 = scmp.ne.s32.totalorder %s41, %s57
    %p59 = scmp.eq.s32.totalorder %s21, 0
    %p60 = por %p58, %p59
    %s62 = sadd.s32 %s61, 1
    %p65 = scmp.eq.s32.totalorder %s15, 15
    %p66 = scmp.ne.s32.totalorder %s61, %s63
    %p67 = scmp.eq.s32.totalorder %s15, 0
    %p68 = por %p66, %p67
    %p69 = scmp.ne.s32.totalorder %s61, %s63
    %p70 = scmp.eq.s32.totalorder %s20, 15
    %p71 = por %p69, %p70
    %p72 = scmp.ne.s32.totalorder %s63, %s64
    %p73 = scmp.eq.s32.totalorder %s20, 0
    %p74 = por %p72, %p73
    %p75 = scmp.ne.s32.totalorder %s63, %s64
    %p76 = scmp.eq.s32.totalorder %s21, 15
    %p77 = por %p75, %p76
    %p79 = scmp.ne.s32.totalorder %s64, %s78
    %p80 = scmp.eq.s32.totalorder %s21, 0
    %p81 = por %p79, %p80
    %s83 = sadd.s32 %s82, 1
    %p86 = scmp.eq.s32.totalorder %s15, 15
    %p87 = scmp.ne.s32.totalorder %s82, %s84
    %p88 = scmp.eq.s32.totalorder %s15, 0
    %p89 = por %p87, %p88
    %p90 = scmp.ne.s32.totalorder %s82, %s84
    %p91 = scmp.eq.s32.totalorder %s20, 15
    %p92 = por %p90, %p91
    %p93 = scmp.ne.s32.totalorder %s84, %s85
    %p94 = scmp.eq.s32.totalorder %s20, 0
    %p95 = por %p93, %p94
    %p96 = scmp.ne.s32.totalorder %s84, %s85
    %p97 = scmp.eq.s32.totalorder %s21, 15
    %p98 = por %p96, %p97
    %p100 = scmp.ne.s32.totalorder %s85, %s99
    %p101 = scmp.eq.s32.totalorder %s21, 0
    %p102 = por %p100, %p101
    %s104 = sadd.s32 %s103, 1
    %p107 = scmp.eq.s32.totalorder %s15, 15
    %p108 = scmp.ne.s32.totalorder %s103, %s105
    %p109 = scmp.eq.s32.totalorder %s15, 0
    %p110 = por %p108, %p109
    %p111 = scmp.ne.s32.totalorder %s103, %s105
    %p112 = scmp.eq.s32.totalorder %s20, 15
    %p113 = por %p111, %p112
    %p114 = scmp.ne.s32.totalorder %s105, %s106
    %p115 = scmp.eq.s32.totalorder %s20, 0
    %p116 = por %p114, %p115
    %p117 = scmp.ne.s32.totalorder %s105, %s106
    %p118 = scmp.eq.s32.totalorder %s21, 15
    %p119 = por %p117, %p118
    %p121 = scmp.ne.s32.totalorder %s106, %s120
    %p122 = scmp.eq.s32.totalorder %s21, 0
    %p123 = por %p121, %p122
    %s125 = sadd.s32 %s124, 1
    %p128 = scmp.eq.s32.totalorder %s15, 15
    %p129 = scmp.ne.s32.totalorder %s124, %s126
    %p130 = scmp.eq.s32.totalorder %s15, 0
    %p131 = por %p129, %p130
    %p132 = scmp.ne.s32.totalorder %s124, %s126
    %p133 = scmp.eq.s32.totalorder %s20, 15
    %p134 = por %p132, %p133
    %p135 = scmp.ne.s32.totalorder %s126, %s127
    %p136 = scmp.eq.s32.totalorder %s20, 0
    %p137 = por %p135, %p136
    %p138 = scmp.ne.s32.totalorder %s126, %s127
    %p139 = scmp.eq.s32.totalorder %s21, 15
    %p140 = por %p138, %p139
    %p142 = scmp.ne.s32.totalorder %s127, %s141
    %p143 = scmp.eq.s32.totalorder %s21, 0
    %p144 = por %p142, %p143
    %s146 = sadd.s32 %s145, 1
    %p149 = scmp.eq.s32.totalorder %s15, 15
    %p150 = scmp.ne.s32.totalorder %s145, %s147
    %p151 = scmp.eq.s32.totalorder %s15, 0
    %p152 = por %p150, %p151
    %p153 = scmp.ne.s32.totalorder %s145, %s147
    %p154 = scmp.eq.s32.totalorder %s20, 15
    %p155 = por %p153, %p154
    %p156 = scmp.ne.s32.totalorder %s147, %s148
    %p157 = scmp.eq.s32.totalorder %s20, 0
    %p158 = por %p156, %p157
    %p159 = scmp.ne.s32.totalorder %s147, %s148
    %p160 = scmp.eq.s32.totalorder %s21, 15
    %p161 = por %p159, %p160
    %p163 = scmp.ne.s32.totalorder %s148, %s162
    %p164 = scmp.eq.s32.totalorder %s21, 0
    %p165 = por %p163, %p164
    %s166 = ssub.s32 %s22, %s34
    %s167 = ssub.s32 %s23, %s30
    %s168 = sor.u32 %s166, %s167
    %p169 = scmp.eq.s32.totalorder %s168, 0
    %s171 = sadd.s32 %s170, 1
    %s172 = scalar_select %p169, %s170, %s171
    %p175 = pneg %p169
    %p176 = scmp.eq.s32.totalorder %s15, 15
    %p177 = por %p175, %p176
    %p178 = scmp.ne.s32.totalorder %s170, %s173
    %p179 = scmp.eq.s32.totalorder %s15, 0
    %p180 = por %p178, %p179
    %p181 = scmp.ne.s32.totalorder %s170, %s173
    %p182 = scmp.eq.s32.totalorder %s20, 15
    %p183 = por %p181, %p182
    %p184 = scmp.ne.s32.totalorder %s173, %s174
    %p185 = scmp.eq.s32.totalorder %s20, 0
    %p186 = por %p184, %p185
    %p187 = scmp.ne.s32.totalorder %s173, %s174
    %p188 = scmp.eq.s32.totalorder %s21, 15
    %p189 = por %p187, %p188
    %p191 = scmp.ne.s32.totalorder %s174, %s190
    %p192 = scmp.eq.s32.totalorder %s21, 0
    %p193 = por %p191, %p192
    %s194 = smul.u32 %s22, 8
    %s195 = sadd.s32 %s194, %s23
    %s196 = smul.u32 %s34, 8
    %s197 = sadd.s32 %s196, %s30
    %s198 = ssub.s32 %s195, %s197
    %p199 = scmp.eq.s32.totalorder %s198, 0
    %s201 = sadd.s32 %s200, 1
    %s202 = scalar_select %p199, %s200, %s201
    %p205 = pneg %p199
    %p206 = scmp.eq.s32.totalorder %s15, 15
    %p207 = por %p205, %p206
    %p208 = scmp.ne.s32.totalorder %s200, %s203
    %p209 = scmp.eq.s32.totalorder %s15, 0
    %p210 = por %p208, %p209
    %p211 = scmp.ne.s32.totalorder %s200, %s203
    %p212 = scmp.eq.s32.totalorder %s20, 15
    %p213 = por %p211, %p212
    %p214 = scmp.ne.s32.totalorder %s203, %s204
    %p215 = scmp.eq.s32.totalorder %s20, 0
    %p216 = por %p214, %p215
    %p217 = scmp.ne.s32.totalorder %s203, %s204
    %p218 = scmp.eq.s32.totalorder %s21, 15
    %p219 = por %p217, %p218
    %p221 = scmp.ne.s32.totalorder %s204, %s220
    %p222 = scmp.eq.s32.totalorder %s21, 0
    %p223 = por %p221, %p222
    %s224 = smul.u32 %s22, 8
    %s225 = sadd.s32 %s224, %s23
    %s226 = smul.u32 %s34, 8
    %s227 = sadd.s32 %s226, %s30
    %s228 = ssub.s32 %s225, %s227
    %p229 = scmp.eq.s32.totalorder %s228, 0
    %s231 = sadd.s32 %s230, 1
    %s232 = scalar_select %p229, %s230, %s231
    %p235 = pneg %p229
    %p236 = scmp.eq.s32.totalorder %s15, 15
    %p237 = por %p235, %p236
    %p238 = scmp.ne.s32.totalorder %s230, %s233
    %p239 = scmp.eq.s32.totalorder %s15, 0
    %p240 = por %p238, %p239
    %p241 = scmp.ne.s32.totalorder %s230, %s233
    %p242 = scmp.eq.s32.totalorder %s20, 15
    %p243 = por %p241, %p242
    %p244 = scmp.ne.s32.totalorder %s233, %s234
    %p245 = scmp.eq.s32.totalorder %s20, 0
    %p246 = por %p244, %p245
    %p247 = scmp.ne.s32.totalorder %s233, %s234
    %p248 = scmp.eq.s32.totalorder %s21, 15
    %p249 = por %p247, %p248
    %p251 = scmp.ne.s32.totalorder %s234, %s250
    %p252 = scmp.eq.s32.totalorder %s21, 0
    %p253 = por %p251, %p252
    %p254 = scmp.le.s32.totalorder 1, %s15
    %p255 = scmp.lt.s32.totalorder %s15, 17
    %p256 = pnand %p254, %p255
    %p257 = pneg %p256
    // Predicated region
    $region9: #{net_just_up_block_forward.5} parent=5 // pred_check
      _
    $region10: #{net_just_up_block_forward.5} parent=5 // pred_check_branch
      %259 = sbr.rel (%p256) target = $region12
    $region11: #{net_just_up_block_forward.5} parent=5 // pred_region
      %s260 = ssub.s32 %s15, 1
      // Predicated region
      $region13: #{net_just_up_block_forward.5} parent=11 // pred_check
        %p261 = pneg %p74
      $region14: #{net_just_up_block_forward.5} parent=11 // pred_check_branch
        %263 = sbr.rel (%p261) target = $region16
      $region15: #{net_just_up_block_forward.5} parent=11 // pred_region
        _
      $region16: #{net_just_up_block_forward.5} parent=11 // pred_fallthru
        _
      // Predicated region
      $region17: #{net_just_up_block_forward.5} parent=11 // pred_check
        %p264 = pneg %p95
      $region18: #{net_just_up_block_forward.5} parent=11 // pred_check_branch
        %266 = sbr.rel (%p264) target = $region20
      $region19: #{net_just_up_block_forward.5} parent=11 // pred_region
        _
      $region20: #{net_just_up_block_forward.5} parent=11 // pred_fallthru
        _
      // Predicated region
      $region21: #{net_just_up_block_forward.5} parent=11 // pred_check
        %p267 = pneg %p116
      $region22: #{net_just_up_block_forward.5} parent=11 // pred_check_branch
        %269 = sbr.rel (%p267) target = $region24
      $region23: #{net_just_up_block_forward.5} parent=11 // pred_region
        _
      $region24: #{net_just_up_block_forward.5} parent=11 // pred_fallthru
        _
      // Predicated region
      $region25: #{net_just_up_block_forward.5} parent=11 // pred_check
        %p270 = pneg %p137
      $region26: #{net_just_up_block_forward.5} parent=11 // pred_check_branch
        %272 = sbr.rel (%p270) target = $region28
      $region27: #{net_just_up_block_forward.5} parent=11 // pred_region
        _
      $region28: #{net_just_up_block_forward.5} parent=11 // pred_fallthru
        _
      // Predicated region
      $region29: #{net_just_up_block_forward.5} parent=11 // pred_check
        %p273 = pneg %p158
      $region30: #{net_just_up_block_forward.5} parent=11 // pred_check_branch
        %275 = sbr.rel (%p273) target = $region32
      $region31: #{net_just_up_block_forward.5} parent=11 // pred_region
        _
      $region32: #{net_just_up_block_forward.5} parent=11 // pred_fallthru
        _
    $region12: #{net_just_up_block_forward.5} parent=5 // pred_fallthru
      _
    %p276 = scmp.lt.s32.totalorder %s15, 16
    // Predicated region
    $region33: #{net_just_up_block_forward.5} parent=5 // pred_check
      %p277 = pneg %p276
    $region34: #{net_just_up_block_forward.5} parent=5 // pred_check_branch
      %279 = sbr.rel (%p277) target = $region36
    $region35: #{net_just_up_block_forward.5} parent=5 // pred_region
      // Predicated region
      $region37: #{net_just_up_block_forward.5} parent=35 // pred_check
        %p280 = pneg %p47
      $region38: #{net_just_up_block_forward.5} parent=35 // pred_check_branch
        %282 = sbr.rel (%p280) target = $region40
      $region39: #{net_just_up_block_forward.5} parent=35 // pred_region
        %p283 = scmp.lt.s32.totalorder %s22, 1
        %s284 = scalar_select %p283, %s22, 1
        %s285 = smul.addr %s284, 64
        %s286 = smul.addr %s285, 4
        %s287 = scalar_lea.vmem %s0, %s286
      $region40: #{net_just_up_block_forward.5} parent=35 // pred_fallthru
        _
    $region36: #{net_just_up_block_forward.5} parent=5 // pred_fallthru
      _
    %p288 = scmp.le.s32.totalorder 1, %s15
    %p289 = scmp.lt.s32.totalorder %s15, 17
    %p290 = pnand %p288, %p289
    %p291 = pneg %p290
    // Predicated region
    $region41: #{net_just_up_block_forward.5} parent=5 // pred_check
      _
    $region42: #{net_just_up_block_forward.5} parent=5 // pred_check_branch
      %293 = sbr.rel (%p290) target = $region44
    $region43: #{net_just_up_block_forward.5} parent=5 // pred_region
      %s294 = ssub.s32 %s15, 1
      %p295 = scmp.lt.s32.totalorder %s24, 1
      %s296 = scalar_select %p295, %s24, 1
      %s297 = smul.addr %s296, 64
      %s298 = smul.addr %s297, 4
      %s299 = scalar_lea.vmem %s0, %s298
      %p300 = pneg %p53
      %p301 = pneg %p50
      %p302 = pneg %p74
      %p303 = pneg %p71
      %p304 = pneg %p95
      %p305 = pneg %p92
      %p306 = pneg %p116
      %p307 = pneg %p113
      %p308 = pneg %p137
      %p309 = pneg %p134
      %p310 = pneg %p158
      %p311 = pneg %p155
      %p312 = pneg %p186
      %p313 = pneg %p183
      %p314 = scmp.lt.s32.totalorder %s24, 1
      %s315 = scalar_select %p314, %s24, 1
      %p316 = scmp.lt.s32.totalorder %s25, 7
      %s317 = scalar_select %p316, %s25, 7
      %s318 = smul.addr %s317, 8
      %s319 = smul.addr %s315, 64
      %s320 = sadd.s32 %s318, %s319
      %s321 = smul.addr %s320, 4
      %s322 = scalar_lea.vmem %s6, %s321
      %p323 = pneg %p216
      %p324 = pneg %p213
      %s325 = smul.u32 %s24, 8
      %s326 = sadd.s32 %s325, %s25
      %p327 = scmp.lt.s32.totalorder %s326, 15
      %s328 = scalar_select %p327, %s326, 15
      %s329 = scalar_lea.vmem %s7, %s328
      %p330 = pneg %p246
      %p331 = pneg %p243
      %s332 = smul.u32 %s24, 8
      %s333 = sadd.s32 %s332, %s25
      %p334 = scmp.lt.s32.totalorder %s333, 15
      %s335 = scalar_select %p334, %s333, 15
      %s336 = scalar_lea.vmem %s8, %s335
      %p337 = scmp.lt.s32.totalorder %s24, 1
      %s338 = scalar_select %p337, %s24, 1
      %s339 = smul.addr %s338, 64
      %s340 = smul.addr %s339, 4
      %s341 = scalar_lea.vmem %s0, %s340
      %p342 = scmp.lt.s32.totalorder %s24, 1
      %s343 = scalar_select %p342, %s24, 1
      %p344 = scmp.lt.s32.totalorder %s25, 7
      %s345 = scalar_select %p344, %s25, 7
      %s346 = smul.addr %s345, 8
      %s347 = smul.addr %s343, 64
      %s348 = sadd.s32 %s346, %s347
      %s349 = smul.addr %s348, 4
      %s350 = scalar_lea.vmem %s6, %s349
      %s351 = smul.u32 %s24, 8
      %s352 = sadd.s32 %s351, %s25
      %p353 = scmp.lt.s32.totalorder %s352, 15
      %s354 = scalar_select %p353, %s352, 15
      %s355 = scalar_lea.vmem %s7, %s354
      %s356 = smul.u32 %s24, 8
      %s357 = sadd.s32 %s356, %s25
      %s358 = smul.u32 %s24, 8
      %s359 = sadd.s32 %s358, %s25
      %p360 = scmp.lt.s32.totalorder %s359, 15
      %s361 = scalar_select %p360, %s359, 15
      %s362 = scalar_lea.vmem %s8, %s361
      %s363 = smul.u32 %s24, 8
      %s364 = sadd.s32 %s363, %s25
      %v366 = vld [vmem:[%s3] sm:$0x1]
      %v367 = vld [vmem:[%s4] sm:$0x1]
      %v368 = vld [vmem:[%s5] sm:$0x1]
      %vm369 = vcmask 125952
      %370 = vst.msk [vmem:[#allocation2] sm:$0xf] %vm369, 0
      %vm371 = vcmask 122880
      %372 = vst.msk [vmem:[#allocation2 + $0x4] sm:$0x1] %vm371, 0
      %373 = vst.msk [vmem:[#allocation2 + $0x8] sm:$0xf] %vm369, 0
      %374 = vst.msk [vmem:[#allocation2 + $0xc] sm:$0x1] %vm371, 0
      %375 = vst.msk [vmem:[#allocation2 + $0x10] sm:$0xf] %vm369, 0
      %376 = vst.msk [vmem:[#allocation2 + $0x14] sm:$0x1] %vm371, 0
      %377 = vst.msk [vmem:[#allocation2 + $0x18] sm:$0xf] %vm369, 0
      %378 = vst.msk [vmem:[#allocation2 + $0x1c] sm:$0x1] %vm371, 0
      %379 = vst.msk [vmem:[#allocation2 + $0x20] sm:$0xf] %vm369, 0
      %380 = vst.msk [vmem:[#allocation2 + $0x24] sm:$0x1] %vm371, 0
      %381 = vst.msk [vmem:[#allocation2 + $0x28] sm:$0xf] %vm369, 0
      %382 = vst.msk [vmem:[#allocation2 + $0x2c] sm:$0x1] %vm371, 0
      %383 = vst.msk [vmem:[#allocation2 + $0x30] sm:$0xf] %vm369, 0
      %384 = vst.msk [vmem:[#allocation2 + $0x34] sm:$0x1] %vm371, 0
      %385 = vst.msk [vmem:[#allocation2 + $0x38] sm:$0xf] %vm369, 0
      %386 = vst.msk [vmem:[#allocation2 + $0x3c] sm:$0x1] %vm371, 0
      %387 = vst.msk [vmem:[#allocation2 + $0x40] sm:$0xf] %vm369, 0
      %388 = vst.msk [vmem:[#allocation2 + $0x44] sm:$0x1] %vm371, 0
      %389 = vst.msk [vmem:[#allocation2 + $0x48] sm:$0xf] %vm369, 0
      %390 = vst.msk [vmem:[#allocation2 + $0x4c] sm:$0x1] %vm371, 0
      %391 = vst.msk [vmem:[#allocation2 + $0x50] sm:$0xf] %vm369, 0
      %392 = vst.msk [vmem:[#allocation2 + $0x54] sm:$0x1] %vm371, 0
      %393 = vst.msk [vmem:[#allocation2 + $0x58] sm:$0xf] %vm369, 0
      %394 = vst.msk [vmem:[#allocation2 + $0x5c] sm:$0x1] %vm371, 0
      %395 = vst.msk [vmem:[#allocation2 + $0x60] sm:$0xf] %vm369, 0
      %396 = vst.msk [vmem:[#allocation2 + $0x64] sm:$0x1] %vm371, 0
      %397 = vst.msk [vmem:[#allocation2 + $0x68] sm:$0xf] %vm369, 0
      %398 = vst.msk [vmem:[#allocation2 + $0x6c] sm:$0x1] %vm371, 0
      %399 = vst.msk [vmem:[#allocation2 + $0x70] sm:$0xf] %vm369, 0
      %400 = vst.msk [vmem:[#allocation2 + $0x74] sm:$0x1] %vm371, 0
      %401 = vst.msk [vmem:[#allocation2 + $0x78] sm:$0xf] %vm369, 0
      %402 = vst.msk [vmem:[#allocation2 + $0x7c] sm:$0x1] %vm371, 0
      %403 = vst.msk [vmem:[#allocation2 + $0x80] sm:$0xf] %vm369, 0
      %404 = vst.msk [vmem:[#allocation2 + $0x84] sm:$0x1] %vm371, 0
      %405 = vst.msk [vmem:[#allocation2 + $0x88] sm:$0xf] %vm369, 0
      %406 = vst.msk [vmem:[#allocation2 + $0x8c] sm:$0x1] %vm371, 0
      %407 = vst.msk [vmem:[#allocation2 + $0x90] sm:$0xf] %vm369, 0
      %408 = vst.msk [vmem:[#allocation2 + $0x94] sm:$0x1] %vm371, 0
      %409 = vst.msk [vmem:[#allocation2 + $0x98] sm:$0xf] %vm369, 0
      %410 = vst.msk [vmem:[#allocation2 + $0x9c] sm:$0x1] %vm371, 0
      %411 = vst.msk [vmem:[#allocation2 + $0xa0] sm:$0xf] %vm369, 0
      %412 = vst.msk [vmem:[#allocation2 + $0xa4] sm:$0x1] %vm371, 0
      %413 = vst.msk [vmem:[#allocation2 + $0xa8] sm:$0xf] %vm369, 0
      %414 = vst.msk [vmem:[#allocation2 + $0xac] sm:$0x1] %vm371, 0
      %415 = vst.msk [vmem:[#allocation2 + $0xb0] sm:$0xf] %vm369, 0
      %416 = vst.msk [vmem:[#allocation2 + $0xb4] sm:$0x1] %vm371, 0
      %417 = vst.msk [vmem:[#allocation2 + $0xb8] sm:$0xf] %vm369, 0
      %418 = vst.msk [vmem:[#allocation2 + $0xbc] sm:$0x1] %vm371, 0
      %419 = vst.msk [vmem:[#allocation2 + $0xc0] sm:$0xf] %vm369, 0
      %420 = vst.msk [vmem:[#allocation2 + $0xc4] sm:$0x1] %vm371, 0
      %421 = vst.msk [vmem:[#allocation2 + $0xc8] sm:$0xf] %vm369, 0
      %422 = vst.msk [vmem:[#allocation2 + $0xcc] sm:$0x1] %vm371, 0
      %423 = vst.msk [vmem:[#allocation2 + $0xd0] sm:$0xf] %vm369, 0
      %424 = vst.msk [vmem:[#allocation2 + $0xd4] sm:$0x1] %vm371, 0
      %425 = vst.msk [vmem:[#allocation2 + $0xd8] sm:$0xf] %vm369, 0
      %426 = vst.msk [vmem:[#allocation2 + $0xdc] sm:$0x1] %vm371, 0
      %427 = vst.msk [vmem:[#allocation2 + $0xe0] sm:$0xf] %vm369, 0
      %428 = vst.msk [vmem:[#allocation2 + $0xe4] sm:$0x1] %vm371, 0
      %429 = vst.msk [vmem:[#allocation2 + $0xe8] sm:$0xf] %vm369, 0
      %430 = vst.msk [vmem:[#allocation2 + $0xec] sm:$0x1] %vm371, 0
      %s431 = sadd.s32 %s25, 4294967295
      %p432 = scmp.ge.s32.totalorder %s431, 0
      %p433 = scmp.lt.s32.totalorder %s431, 8
      %p434 = pnand %p432, %p433
      %p435 = pneg %p434
      %p436 = scmp.gt.s32.totalorder %s431, 0
      %s437 = scalar_select %p436, %s431, 0
      %p438 = scmp.lt.s32.totalorder %s437, 7
      %s439 = scalar_select %p438, %s437, 7
      %s440 = smul.u32 %s439, 8
      %s441 = smul.addr %s440, 4
      %s442 = scalar_lea.vmem %s341, %s441
      %v443 = vld [vmem:[%s442] sm:$0xf]
      %v444 = vld [vmem:[%s442 + $0x4] sm:$0xf]
      %v445 = vld [vmem:[%s442 + $0x8] sm:$0xf]
      %v446 = vld [vmem:[%s442 + $0xc] sm:$0xf]
      %v447 = vld [vmem:[%s442 + $0x10] sm:$0xf]
      %v448 = vld [vmem:[%s442 + $0x14] sm:$0xf]
      %v449 = vld [vmem:[%s442 + $0x18] sm:$0xf]
      %v450 = vld [vmem:[%s442 + $0x1c] sm:$0xf]
      %v451 = vunpack.c.l.bf16 %v443
      %v452 = vunpack.c.l.bf16 %v444
      %v453 = vunpack.c.l.bf16 %v445
      %v454 = vunpack.c.l.bf16 %v446
      %v455 = vunpack.c.l.bf16 %v447
      %v456 = vunpack.c.l.bf16 %v448
      %v457 = vunpack.c.l.bf16 %v449
      %v458 = vunpack.c.l.bf16 %v450
      %v460 = vlaneseq
      %v461 = vshrl.u32 %v460, 7
      %v462 = vsub.s32 0, %v461
      %v463 = vrot.slane %v366, %v462
      %v465 = vmul.f32 %v451, %v463
      %v466 = vmul.f32 %v452, %v463
      %v467 = vmul.f32 %v453, %v463
      %v468 = vmul.f32 %v454, %v463
      %v469 = vmul.f32 %v455, %v463
      %v470 = vmul.f32 %v456, %v463
      %v471 = vmul.f32 %v457, %v463
      %v472 = vmul.f32 %v458, %v463
      %v474 = vlaneseq
      %v475 = vshrl.u32 %v474, 7
      %v476 = vsub.s32 0, %v475
      %v477 = vrot.slane %v367, %v476
      %v479 = vadd.f32 %v465, %v477
      %v480 = vadd.f32 %v466, %v477
      %v481 = vadd.f32 %v467, %v477
      %v482 = vadd.f32 %v468, %v477
      %v483 = vadd.f32 %v469, %v477
      %v484 = vadd.f32 %v470, %v477
      %v485 = vadd.f32 %v471, %v477
      %v486 = vadd.f32 %v472, %v477
      %vm487 = vcmp.ge.f32.partialorder %v479, 0.0
      %vm488 = vcmp.ge.f32.partialorder %v480, 0.0
      %vm489 = vcmp.ge.f32.partialorder %v481, 0.0
      %vm490 = vcmp.ge.f32.partialorder %v482, 0.0
      %vm491 = vcmp.ge.f32.partialorder %v483, 0.0
      %vm492 = vcmp.ge.f32.partialorder %v484, 0.0
      %vm493 = vcmp.ge.f32.partialorder %v485, 0.0
      %vm494 = vcmp.ge.f32.partialorder %v486, 0.0
      %v496 = vlaneseq
      %v497 = vshrl.u32 %v496, 7
      %v498 = vsub.s32 0, %v497
      %v499 = vrot.slane %v368, %v498
      %v501 = vmul.f32 %v499, %v479
      %v502 = vmul.f32 %v499, %v480
      %v503 = vmul.f32 %v499, %v481
      %v504 = vmul.f32 %v499, %v482
      %v505 = vmul.f32 %v499, %v483
      %v506 = vmul.f32 %v499, %v484
      %v507 = vmul.f32 %v499, %v485
      %v508 = vmul.f32 %v499, %v486
      %v509 = vsel %vm487, %v479, %v501
      %v510 = vsel %vm488, %v480, %v502
      %v511 = vsel %vm489, %v481, %v503
      %v512 = vsel %vm490, %v482, %v504
      %v513 = vsel %vm491, %v483, %v505
      %v514 = vsel %vm492, %v484, %v506
      %v515 = vsel %vm493, %v485, %v507
      %v516 = vsel %vm494, %v486, %v508
      %s517 = scalar_select %p435, 1, 0
      %v518 = vstv %s517
      %vm519 = vcmp.eq.s32.totalorder %v518, 1
      %v520 = vsel %vm519, %v509, 0.0
      %v521 = vsel %vm519, %v510, 0.0
      %v522 = vsel %vm519, %v511, 0.0
      %v523 = vsel %vm519, %v512, 0.0
      %v524 = vsel %vm519, %v513, 0.0
      %v525 = vsel %vm519, %v514, 0.0
      %v526 = vsel %vm519, %v515, 0.0
      %v527 = vsel %vm519, %v516, 0.0
      %v528 = vpack.c.bf16 %v520, %v520
      %v529 = vpack.c.bf16 %v521, %v521
      %v530 = vpack.c.bf16 %v522, %v522
      %v531 = vpack.c.bf16 %v523, %v523
      %v532 = vpack.c.bf16 %v524, %v524
      %v533 = vpack.c.bf16 %v525, %v525
      %v534 = vpack.c.bf16 %v526, %v526
      %v535 = vpack.c.bf16 %v527, %v527
      %v544 = vunpack.c.l.b16 %v528
      %v545 = vunpack.c.l.b16 %v529
      %v546 = vunpack.c.l.b16 %v530
      %v547 = vunpack.c.l.b16 %v531
      %v548 = vunpack.c.l.b16 %v532
      %v549 = vunpack.c.l.b16 %v533
      %v550 = vunpack.c.l.b16 %v534
      %v551 = vunpack.c.l.b16 %v535
      %v552 = vpack.c.b16 %v544, %v544
      %v553 = vpack.c.b16 %v545, %v545
      %v554 = vpack.c.b16 %v546, %v546
      %v555 = vpack.c.b16 %v547, %v547
      %v556 = vpack.c.b16 %v548, %v548
      %v557 = vpack.c.b16 %v549, %v549
      %v558 = vpack.c.b16 %v550, %v550
      %v559 = vpack.c.b16 %v551, %v551
      %v561 = vshrl.u32 %v552, 16
      %v563 = vrot.slane %v561, 7
      %v564 = vshll.u32 %v552, 16
      %v566 = vor.u32 %v563, %v564
      %v567 = vrot.slane %v563, 4
      %v569 = vshrl.u32 %v553, 16
      %v571 = vrot.slane %v569, 7
      %v572 = vshll.u32 %v553, 16
      %v574 = vor.u32 %v571, %v572
      %v575 = vrot.slane %v571, 4
      %v577 = vshrl.u32 %v554, 16
      %v579 = vrot.slane %v577, 7
      %v580 = vshll.u32 %v554, 16
      %v582 = vor.u32 %v579, %v580
      %v583 = vrot.slane %v579, 4
      %v585 = vshrl.u32 %v555, 16
      %v587 = vrot.slane %v585, 7
      %v588 = vshll.u32 %v555, 16
      %v590 = vor.u32 %v587, %v588
      %v591 = vrot.slane %v587, 4
      %v593 = vshrl.u32 %v556, 16
      %v595 = vrot.slane %v593, 7
      %v596 = vshll.u32 %v556, 16
      %v598 = vor.u32 %v595, %v596
      %v599 = vrot.slane %v595, 4
      %v601 = vshrl.u32 %v557, 16
      %v603 = vrot.slane %v601, 7
      %v604 = vshll.u32 %v557, 16
      %v606 = vor.u32 %v603, %v604
      %v607 = vrot.slane %v603, 4
      %v609 = vshrl.u32 %v558, 16
      %v611 = vrot.slane %v609, 7
      %v612 = vshll.u32 %v558, 16
      %v614 = vor.u32 %v611, %v612
      %v615 = vrot.slane %v611, 4
      %v617 = vshrl.u32 %v559, 16
      %v619 = vrot.slane %v617, 7
      %v620 = vshll.u32 %v559, 16
      %v622 = vor.u32 %v619, %v620
      %v623 = vrot.slane %v619, 4
      %s640 = scalar_lea.vmem [#allocation2], 8
      %vm641 = vcmask 125952
      %vm642 = vsmask.f32 7938
      %vm643 = vmand %vm641, %vm642
      %v644 = vld [vmem:[%s640] sm:$0xf]
      %v645 = vsel %vm643, %v566, %v644
      %646 = vst [vmem:[%s640] sm:$0xf] %v645
      %vm647 = vcmask 122880
      %vm648 = vsmask.f32 256
      %vm649 = vmand %vm647, %vm648
      %v650 = vld [vmem:[%s640 + $0x4] sm:$0x1]
      %v651 = vsel %vm649, %v567, %v650
      %652 = vst [vmem:[%s640 + $0x4] sm:$0x1] %v651
      %v653 = vld [vmem:[%s640 + $0x8] sm:$0xf]
      %v654 = vsel %vm643, %v574, %v653
      %655 = vst [vmem:[%s640 + $0x8] sm:$0xf] %v654
      %v656 = vld [vmem:[%s640 + $0xc] sm:$0x1]
      %v657 = vsel %vm649, %v575, %v656
      %658 = vst [vmem:[%s640 + $0xc] sm:$0x1] %v657
      %v659 = vld [vmem:[%s640 + $0x10] sm:$0xf]
      %v660 = vsel %vm643, %v582, %v659
      %661 = vst [vmem:[%s640 + $0x10] sm:$0xf] %v660
      %v662 = vld [vmem:[%s640 + $0x14] sm:$0x1]
      %v663 = vsel %vm649, %v583, %v662
      %664 = vst [vmem:[%s640 + $0x14] sm:$0x1] %v663
      %v665 = vld [vmem:[%s640 + $0x18] sm:$0xf]
      %v666 = vsel %vm643, %v590, %v665
      %667 = vst [vmem:[%s640 + $0x18] sm:$0xf] %v666
      %v668 = vld [vmem:[%s640 + $0x1c] sm:$0x1]
      %v669 = vsel %vm649, %v591, %v668
      %670 = vst [vmem:[%s640 + $0x1c] sm:$0x1] %v669
      %v671 = vld [vmem:[%s640 + $0x20] sm:$0xf]
      %v672 = vsel %vm643, %v598, %v671
      %673 = vst [vmem:[%s640 + $0x20] sm:$0xf] %v672
      %v674 = vld [vmem:[%s640 + $0x24] sm:$0x1]
      %v675 = vsel %vm649, %v599, %v674
      %676 = vst [vmem:[%s640 + $0x24] sm:$0x1] %v675
      %v677 = vld [vmem:[%s640 + $0x28] sm:$0xf]
      %v678 = vsel %vm643, %v606, %v677
      %679 = vst [vmem:[%s640 + $0x28] sm:$0xf] %v678
      %v680 = vld [vmem:[%s640 + $0x2c] sm:$0x1]
      %v681 = vsel %vm649, %v607, %v680
      %682 = vst [vmem:[%s640 + $0x2c] sm:$0x1] %v681
      %v683 = vld [vmem:[%s640 + $0x30] sm:$0xf]
      %v684 = vsel %vm643, %v614, %v683
      %685 = vst [vmem:[%s640 + $0x30] sm:$0xf] %v684
      %v686 = vld [vmem:[%s640 + $0x34] sm:$0x1]
      %v687 = vsel %vm649, %v615, %v686
      %688 = vst [vmem:[%s640 + $0x34] sm:$0x1] %v687
      %v689 = vld [vmem:[%s640 + $0x38] sm:$0xf]
      %v690 = vsel %vm643, %v622, %v689
      %691 = vst [vmem:[%s640 + $0x38] sm:$0xf] %v690
      %v692 = vld [vmem:[%s640 + $0x3c] sm:$0x1]
      %v693 = vsel %vm649, %v623, %v692
      %694 = vst [vmem:[%s640 + $0x3c] sm:$0x1] %v693
      %p695 = scmp.ge.s32.totalorder %s25, 0
      %p696 = scmp.lt.s32.totalorder %s25, 8
      %p697 = pnand %p695, %p696
      %p698 = pneg %p697
      %p699 = scmp.gt.s32.totalorder %s25, 0
      %s700 = scalar_select %p699, %s25, 0
      %p701 = scmp.lt.s32.totalorder %s700, 7
      %s702 = scalar_select %p701, %s700, 7
      %s703 = smul.u32 %s702, 8
      %s704 = smul.addr %s703, 4
      %s705 = scalar_lea.vmem %s341, %s704
      %v706 = vld [vmem:[%s705] sm:$0xf]
      %v707 = vld [vmem:[%s705 + $0x4] sm:$0xf]
      %v708 = vld [vmem:[%s705 + $0x8] sm:$0xf]
      %v709 = vld [vmem:[%s705 + $0xc] sm:$0xf]
      %v710 = vld [vmem:[%s705 + $0x10] sm:$0xf]
      %v711 = vld [vmem:[%s705 + $0x14] sm:$0xf]
      %v712 = vld [vmem:[%s705 + $0x18] sm:$0xf]
      %v713 = vld [vmem:[%s705 + $0x1c] sm:$0xf]
      %v714 = vunpack.c.l.bf16 %v706
      %v715 = vunpack.c.l.bf16 %v707
      %v716 = vunpack.c.l.bf16 %v708
      %v717 = vunpack.c.l.bf16 %v709
      %v718 = vunpack.c.l.bf16 %v710
      %v719 = vunpack.c.l.bf16 %v711
      %v720 = vunpack.c.l.bf16 %v712
      %v721 = vunpack.c.l.bf16 %v713
      %v722 = vmul.f32 %v714, %v463
      %v723 = vmul.f32 %v715, %v463
      %v724 = vmul.f32 %v716, %v463
      %v725 = vmul.f32 %v717, %v463
      %v726 = vmul.f32 %v718, %v463
      %v727 = vmul.f32 %v719, %v463
      %v728 = vmul.f32 %v720, %v463
      %v729 = vmul.f32 %v721, %v463
      %v730 = vadd.f32 %v722, %v477
      %v731 = vadd.f32 %v723, %v477
      %v732 = vadd.f32 %v724, %v477
      %v733 = vadd.f32 %v725, %v477
      %v734 = vadd.f32 %v726, %v477
      %v735 = vadd.f32 %v727, %v477
      %v736 = vadd.f32 %v728, %v477
      %v737 = vadd.f32 %v729, %v477
      %vm738 = vcmp.ge.f32.partialorder %v730, 0.0
      %vm739 = vcmp.ge.f32.partialorder %v731, 0.0
      %vm740 = vcmp.ge.f32.partialorder %v732, 0.0
      %vm741 = vcmp.ge.f32.partialorder %v733, 0.0
      %vm742 = vcmp.ge.f32.partialorder %v734, 0.0
      %vm743 = vcmp.ge.f32.partialorder %v735, 0.0
      %vm744 = vcmp.ge.f32.partialorder %v736, 0.0
      %vm745 = vcmp.ge.f32.partialorder %v737, 0.0
      %v746 = vmul.f32 %v499, %v730
      %v747 = vmul.f32 %v499, %v731
      %v748 = vmul.f32 %v499, %v732
      %v749 = vmul.f32 %v499, %v733
      %v750 = vmul.f32 %v499, %v734
      %v751 = vmul.f32 %v499, %v735
      %v752 = vmul.f32 %v499, %v736
      %v753 = vmul.f32 %v499, %v737
      %v754 = vsel %vm738, %v730, %v746
      %v755 = vsel %vm739, %v731, %v747
      %v756 = vsel %vm740, %v732, %v748
      %v757 = vsel %vm741, %v733, %v749
      %v758 = vsel %vm742, %v734, %v750
      %v759 = vsel %vm743, %v735, %v751
      %v760 = vsel %vm744, %v736, %v752
      %v761 = vsel %vm745, %v737, %v753
      %s762 = scalar_select %p698, 1, 0
      %v763 = vstv %s762
      %vm764 = vcmp.eq.s32.totalorder %v763, 1
      %v765 = vsel %vm764, %v754, 0.0
      %v766 = vsel %vm764, %v755, 0.0
      %v767 = vsel %vm764, %v756, 0.0
      %v768 = vsel %vm764, %v757, 0.0
      %v769 = vsel %vm764, %v758, 0.0
      %v770 = vsel %vm764, %v759, 0.0
      %v771 = vsel %vm764, %v760, 0.0
      %v772 = vsel %vm764, %v761, 0.0
      %v773 = vpack.c.bf16 %v765, %v765
      %v774 = vpack.c.bf16 %v766, %v766
      %v775 = vpack.c.bf16 %v767, %v767
      %v776 = vpack.c.bf16 %v768, %v768
      %v777 = vpack.c.bf16 %v769, %v769
      %v778 = vpack.c.bf16 %v770, %v770
      %v779 = vpack.c.bf16 %v771, %v771
      %v780 = vpack.c.bf16 %v772, %v772
      %v789 = vunpack.c.l.b16 %v773
      %v790 = vunpack.c.l.b16 %v774
      %v791 = vunpack.c.l.b16 %v775
      %v792 = vunpack.c.l.b16 %v776
      %v793 = vunpack.c.l.b16 %v777
      %v794 = vunpack.c.l.b16 %v778
      %v795 = vunpack.c.l.b16 %v779
      %v796 = vunpack.c.l.b16 %v780
      %v797 = vpack.c.b16 %v789, %v789
      %v798 = vpack.c.b16 %v790, %v790
      %v799 = vpack.c.b16 %v791, %v791
      %v800 = vpack.c.b16 %v792, %v792
      %v801 = vpack.c.b16 %v793, %v793
      %v802 = vpack.c.b16 %v794, %v794
      %v803 = vpack.c.b16 %v795, %v795
      %v804 = vpack.c.b16 %v796, %v796
      %v806 = vshrl.u32 %v797, 16
      %v808 = vrot.slane %v806, 7
      %v809 = vshll.u32 %v797, 16
      %v811 = vor.u32 %v808, %v809
      %v812 = vrot.slane %v808, 4
      %v814 = vshrl.u32 %v798, 16
      %v816 = vrot.slane %v814, 7
      %v817 = vshll.u32 %v798, 16
      %v819 = vor.u32 %v816, %v817
      %v820 = vrot.slane %v816, 4
      %v822 = vshrl.u32 %v799, 16
      %v824 = vrot.slane %v822, 7
      %v825 = vshll.u32 %v799, 16
      %v827 = vor.u32 %v824, %v825
      %v828 = vrot.slane %v824, 4
      %v830 = vshrl.u32 %v800, 16
      %v832 = vrot.slane %v830, 7
      %v833 = vshll.u32 %v800, 16
      %v835 = vor.u32 %v832, %v833
      %v836 = vrot.slane %v832, 4
      %v838 = vshrl.u32 %v801, 16
      %v840 = vrot.slane %v838, 7
      %v841 = vshll.u32 %v801, 16
      %v843 = vor.u32 %v840, %v841
      %v844 = vrot.slane %v840, 4
      %v846 = vshrl.u32 %v802, 16
      %v848 = vrot.slane %v846, 7
      %v849 = vshll.u32 %v802, 16
      %v851 = vor.u32 %v848, %v849
      %v852 = vrot.slane %v848, 4
      %v854 = vshrl.u32 %v803, 16
      %v856 = vrot.slane %v854, 7
      %v857 = vshll.u32 %v803, 16
      %v859 = vor.u32 %v856, %v857
      %v860 = vrot.slane %v856, 4
      %v862 = vshrl.u32 %v804, 16
      %v864 = vrot.slane %v862, 7
      %v865 = vshll.u32 %v804, 16
      %v867 = vor.u32 %v864, %v865
      %v868 = vrot.slane %v864, 4
      %s885 = scalar_lea.vmem [#allocation2], 88
      %v886 = vld [vmem:[%s885] sm:$0xf]
      %v887 = vsel %vm643, %v811, %v886
      %888 = vst [vmem:[%s885] sm:$0xf] %v887
      %v889 = vld [vmem:[%s885 + $0x4] sm:$0x1]
      %v890 = vsel %vm649, %v812, %v889
      %891 = vst [vmem:[%s885 + $0x4] sm:$0x1] %v890
      %v892 = vld [vmem:[%s885 + $0x8] sm:$0xf]
      %v893 = vsel %vm643, %v819, %v892
      %894 = vst [vmem:[%s885 + $0x8] sm:$0xf] %v893
      %v895 = vld [vmem:[%s885 + $0xc] sm:$0x1]
      %v896 = vsel %vm649, %v820, %v895
      %897 = vst [vmem:[%s885 + $0xc] sm:$0x1] %v896
      %v898 = vld [vmem:[%s885 + $0x10] sm:$0xf]
      %v899 = vsel %vm643, %v827, %v898
      %900 = vst [vmem:[%s885 + $0x10] sm:$0xf] %v899
      %v901 = vld [vmem:[%s885 + $0x14] sm:$0x1]
      %v902 = vsel %vm649, %v828, %v901
      %903 = vst [vmem:[%s885 + $0x14] sm:$0x1] %v902
      %v904 = vld [vmem:[%s885 + $0x18] sm:$0xf]
      %v905 = vsel %vm643, %v835, %v904
      %906 = vst [vmem:[%s885 + $0x18] sm:$0xf] %v905
      %v907 = vld [vmem:[%s885 + $0x1c] sm:$0x1]
      %v908 = vsel %vm649, %v836, %v907
      %909 = vst [vmem:[%s885 + $0x1c] sm:$0x1] %v908
      %v910 = vld [vmem:[%s885 + $0x20] sm:$0xf]
      %v911 = vsel %vm643, %v843, %v910
      %912 = vst [vmem:[%s885 + $0x20] sm:$0xf] %v911
      %v913 = vld [vmem:[%s885 + $0x24] sm:$0x1]
      %v914 = vsel %vm649, %v844, %v913
      %915 = vst [vmem:[%s885 + $0x24] sm:$0x1] %v914
      %v916 = vld [vmem:[%s885 + $0x28] sm:$0xf]
      %v917 = vsel %vm643, %v851, %v916
      %918 = vst [vmem:[%s885 + $0x28] sm:$0xf] %v917
      %v919 = vld [vmem:[%s885 + $0x2c] sm:$0x1]
      %v920 = vsel %vm649, %v852, %v919
      %921 = vst [vmem:[%s885 + $0x2c] sm:$0x1] %v920
      %v922 = vld [vmem:[%s885 + $0x30] sm:$0xf]
      %v923 = vsel %vm643, %v859, %v922
      %924 = vst [vmem:[%s885 + $0x30] sm:$0xf] %v923
      %v925 = vld [vmem:[%s885 + $0x34] sm:$0x1]
      %v926 = vsel %vm649, %v860, %v925
      %927 = vst [vmem:[%s885 + $0x34] sm:$0x1] %v926
      %v928 = vld [vmem:[%s885 + $0x38] sm:$0xf]
      %v929 = vsel %vm643, %v867, %v928
      %930 = vst [vmem:[%s885 + $0x38] sm:$0xf] %v929
      %v931 = vld [vmem:[%s885 + $0x3c] sm:$0x1]
      %v932 = vsel %vm649, %v868, %v931
      %933 = vst [vmem:[%s885 + $0x3c] sm:$0x1] %v932
      %s934 = sadd.s32 %s25, 1
      %p935 = scmp.ge.s32.totalorder %s934, 0
      %p936 = scmp.lt.s32.totalorder %s934, 8
      %p937 = pnand %p935, %p936
      %p938 = pneg %p937
      %p939 = scmp.gt.s32.totalorder %s934, 0
      %s940 = scalar_select %p939, %s934, 0
      %p941 = scmp.lt.s32.totalorder %s940, 7
      %s942 = scalar_select %p941, %s940, 7
      %s943 = smul.u32 %s942, 8
      %s944 = smul.addr %s943, 4
      %s945 = scalar_lea.vmem %s341, %s944
      %v946 = vld [vmem:[%s945] sm:$0xf]
      %v947 = vld [vmem:[%s945 + $0x4] sm:$0xf]
      %v948 = vld [vmem:[%s945 + $0x8] sm:$0xf]
      %v949 = vld [vmem:[%s945 + $0xc] sm:$0xf]
      %v950 = vld [vmem:[%s945 + $0x10] sm:$0xf]
      %v951 = vld [vmem:[%s945 + $0x14] sm:$0xf]
      %v952 = vld [vmem:[%s945 + $0x18] sm:$0xf]
      %v953 = vld [vmem:[%s945 + $0x1c] sm:$0xf]
      %v954 = vunpack.c.l.bf16 %v946
      %v955 = vunpack.c.l.bf16 %v947
      %v956 = vunpack.c.l.bf16 %v948
      %v957 = vunpack.c.l.bf16 %v949
      %v958 = vunpack.c.l.bf16 %v950
      %v959 = vunpack.c.l.bf16 %v951
      %v960 = vunpack.c.l.bf16 %v952
      %v961 = vunpack.c.l.bf16 %v953
      %v962 = vmul.f32 %v954, %v463
      %v963 = vmul.f32 %v955, %v463
      %v964 = vmul.f32 %v956, %v463
      %v965 = vmul.f32 %v957, %v463
      %v966 = vmul.f32 %v958, %v463
      %v967 = vmul.f32 %v959, %v463
      %v968 = vmul.f32 %v960, %v463
      %v969 = vmul.f32 %v961, %v463
      %v970 = vadd.f32 %v962, %v477
      %v971 = vadd.f32 %v963, %v477
      %v972 = vadd.f32 %v964, %v477
      %v973 = vadd.f32 %v965, %v477
      %v974 = vadd.f32 %v966, %v477
      %v975 = vadd.f32 %v967, %v477
      %v976 = vadd.f32 %v968, %v477
      %v977 = vadd.f32 %v969, %v477
      %vm978 = vcmp.ge.f32.partialorder %v970, 0.0
      %vm979 = vcmp.ge.f32.partialorder %v971, 0.0
      %vm980 = vcmp.ge.f32.partialorder %v972, 0.0
      %vm981 = vcmp.ge.f32.partialorder %v973, 0.0
      %vm982 = vcmp.ge.f32.partialorder %v974, 0.0
      %vm983 = vcmp.ge.f32.partialorder %v975, 0.0
      %vm984 = vcmp.ge.f32.partialorder %v976, 0.0
      %vm985 = vcmp.ge.f32.partialorder %v977, 0.0
      %v986 = vmul.f32 %v499, %v970
      %v987 = vmul.f32 %v499, %v971
      %v988 = vmul.f32 %v499, %v972
      %v989 = vmul.f32 %v499, %v973
      %v990 = vmul.f32 %v499, %v974
      %v991 = vmul.f32 %v499, %v975
      %v992 = vmul.f32 %v499, %v976
      %v993 = vmul.f32 %v499, %v977
      %v994 = vsel %vm978, %v970, %v986
      %v995 = vsel %vm979, %v971, %v987
      %v996 = vsel %vm980, %v972, %v988
      %v997 = vsel %vm981, %v973, %v989
      %v998 = vsel %vm982, %v974, %v990
      %v999 = vsel %vm983, %v975, %v991
      %v1000 = vsel %vm984, %v976, %v992
      %v1001 = vsel %vm985, %v977, %v993
      %s1002 = scalar_select %p938, 1, 0
      %v1003 = vstv %s1002
      %vm1004 = vcmp.eq.s32.totalorder %v1003, 1
      %v1005 = vsel %vm1004, %v994, 0.0
      %v1006 = vsel %vm1004, %v995, 0.0
      %v1007 = vsel %vm1004, %v996, 0.0
      %v1008 = vsel %vm1004, %v997, 0.0
      %v1009 = vsel %vm1004, %v998, 0.0
      %v1010 = vsel %vm1004, %v999, 0.0
      %v1011 = vsel %vm1004, %v1000, 0.0
      %v1012 = vsel %vm1004, %v1001, 0.0
      %v1013 = vpack.c.bf16 %v1005, %v1005
      %v1014 = vpack.c.bf16 %v1006, %v1006
      %v1015 = vpack.c.bf16 %v1007, %v1007
      %v1016 = vpack.c.bf16 %v1008, %v1008
      %v1017 = vpack.c.bf16 %v1009, %v1009
      %v1018 = vpack.c.bf16 %v1010, %v1010
      %v1019 = vpack.c.bf16 %v1011, %v1011
      %v1020 = vpack.c.bf16 %v1012, %v1012
      %v1029 = vunpack.c.l.b16 %v1013
      %v1030 = vunpack.c.l.b16 %v1014
      %v1031 = vunpack.c.l.b16 %v1015
      %v1032 = vunpack.c.l.b16 %v1016
      %v1033 = vunpack.c.l.b16 %v1017
      %v1034 = vunpack.c.l.b16 %v1018
      %v1035 = vunpack.c.l.b16 %v1019
      %v1036 = vunpack.c.l.b16 %v1020
      %v1037 = vpack.c.b16 %v1029, %v1029
      %v1038 = vpack.c.b16 %v1030, %v1030
      %v1039 = vpack.c.b16 %v1031, %v1031
      %v1040 = vpack.c.b16 %v1032, %v1032
      %v1041 = vpack.c.b16 %v1033, %v1033
      %v1042 = vpack.c.b16 %v1034, %v1034
      %v1043 = vpack.c.b16 %v1035, %v1035
      %v1044 = vpack.c.b16 %v1036, %v1036
      %v1046 = vshrl.u32 %v1037, 16
      %v1048 = vrot.slane %v1046, 7
      %v1049 = vshll.u32 %v1037, 16
      %v1051 = vor.u32 %v1048, %v1049
      %v1052 = vrot.slane %v1048, 4
      %v1054 = vshrl.u32 %v1038, 16
      %v1056 = vrot.slane %v1054, 7
      %v1057 = vshll.u32 %v1038, 16
      %v1059 = vor.u32 %v1056, %v1057
      %v1060 = vrot.slane %v1056, 4
      %v1062 = vshrl.u32 %v1039, 16
      %v1064 = vrot.slane %v1062, 7
      %v1065 = vshll.u32 %v1039, 16
      %v1067 = vor.u32 %v1064, %v1065
      %v1068 = vrot.slane %v1064, 4
      %v1070 = vshrl.u32 %v1040, 16
      %v1072 = vrot.slane %v1070, 7
      %v1073 = vshll.u32 %v1040, 16
      %v1075 = vor.u32 %v1072, %v1073
      %v1076 = vrot.slane %v1072, 4
      %v1078 = vshrl.u32 %v1041, 16
      %v1080 = vrot.slane %v1078, 7
      %v1081 = vshll.u32 %v1041, 16
      %v1083 = vor.u32 %v1080, %v1081
      %v1084 = vrot.slane %v1080, 4
      %v1086 = vshrl.u32 %v1042, 16
      %v1088 = vrot.slane %v1086, 7
      %v1089 = vshll.u32 %v1042, 16
      %v1091 = vor.u32 %v1088, %v1089
      %v1092 = vrot.slane %v1088, 4
      %v1094 = vshrl.u32 %v1043, 16
      %v1096 = vrot.slane %v1094, 7
      %v1097 = vshll.u32 %v1043, 16
      %v1099 = vor.u32 %v1096, %v1097
      %v1100 = vrot.slane %v1096, 4
      %v1102 = vshrl.u32 %v1044, 16
      %v1104 = vrot.slane %v1102, 7
      %v1105 = vshll.u32 %v1044, 16
      %v1107 = vor.u32 %v1104, %v1105
      %v1108 = vrot.slane %v1104, 4
      %s1125 = scalar_lea.vmem [#allocation2], 168
      %v1126 = vld [vmem:[%s1125] sm:$0xf]
      %v1127 = vsel %vm643, %v1051, %v1126
      %1128 = vst [vmem:[%s1125] sm:$0xf] %v1127
      %v1129 = vld [vmem:[%s1125 + $0x4] sm:$0x1]
      %v1130 = vsel %vm649, %v1052, %v1129
      %1131 = vst [vmem:[%s1125 + $0x4] sm:$0x1] %v1130
      %v1132 = vld [vmem:[%s1125 + $0x8] sm:$0xf]
      %v1133 = vsel %vm643, %v1059, %v1132
      %1134 = vst [vmem:[%s1125 + $0x8] sm:$0xf] %v1133
      %v1135 = vld [vmem:[%s1125 + $0xc] sm:$0x1]
      %v1136 = vsel %vm649, %v1060, %v1135
      %1137 = vst [vmem:[%s1125 + $0xc] sm:$0x1] %v1136
      %v1138 = vld [vmem:[%s1125 + $0x10] sm:$0xf]
      %v1139 = vsel %vm643, %v1067, %v1138
      %1140 = vst [vmem:[%s1125 + $0x10] sm:$0xf] %v1139
      %v1141 = vld [vmem:[%s1125 + $0x14] sm:$0x1]
      %v1142 = vsel %vm649, %v1068, %v1141
      %1143 = vst [vmem:[%s1125 + $0x14] sm:$0x1] %v1142
      %v1144 = vld [vmem:[%s1125 + $0x18] sm:$0xf]
      %v1145 = vsel %vm643, %v1075, %v1144
      %1146 = vst [vmem:[%s1125 + $0x18] sm:$0xf] %v1145
      %v1147 = vld [vmem:[%s1125 + $0x1c] sm:$0x1]
      %v1148 = vsel %vm649, %v1076, %v1147
      %1149 = vst [vmem:[%s1125 + $0x1c] sm:$0x1] %v1148
      %v1150 = vld [vmem:[%s1125 + $0x20] sm:$0xf]
      %v1151 = vsel %vm643, %v1083, %v1150
      %1152 = vst [vmem:[%s1125 + $0x20] sm:$0xf] %v1151
      %v1153 = vld [vmem:[%s1125 + $0x24] sm:$0x1]
      %v1154 = vsel %vm649, %v1084, %v1153
      %1155 = vst [vmem:[%s1125 + $0x24] sm:$0x1] %v1154
      %v1156 = vld [vmem:[%s1125 + $0x28] sm:$0xf]
      %v1157 = vsel %vm643, %v1091, %v1156
      %1158 = vst [vmem:[%s1125 + $0x28] sm:$0xf] %v1157
      %v1159 = vld [vmem:[%s1125 + $0x2c] sm:$0x1]
      %v1160 = vsel %vm649, %v1092, %v1159
      %1161 = vst [vmem:[%s1125 + $0x2c] sm:$0x1] %v1160
      %v1162 = vld [vmem:[%s1125 + $0x30] sm:$0xf]
      %v1163 = vsel %vm643, %v1099, %v1162
      %1164 = vst [vmem:[%s1125 + $0x30] sm:$0xf] %v1163
      %v1165 = vld [vmem:[%s1125 + $0x34] sm:$0x1]
      %v1166 = vsel %vm649, %v1100, %v1165
      %1167 = vst [vmem:[%s1125 + $0x34] sm:$0x1] %v1166
      %v1168 = vld [vmem:[%s1125 + $0x38] sm:$0xf]
      %v1169 = vsel %vm643, %v1107, %v1168
      %1170 = vst [vmem:[%s1125 + $0x38] sm:$0xf] %v1169
      %v1171 = vld [vmem:[%s1125 + $0x3c] sm:$0x1]
      %v1172 = vsel %vm649, %v1108, %v1171
      %1173 = vst [vmem:[%s1125 + $0x3c] sm:$0x1] %v1172
      %v1174 = vld [vmem:[#allocation2] sm:$0xf]
      %v1175 = vld [vmem:[#allocation2 + $0x8] sm:$0xf]
      %v1176 = vld [vmem:[#allocation2 + $0x10] sm:$0xf]
      %v1177 = vld [vmem:[#allocation2 + $0x18] sm:$0xf]
      %v1178 = vld [vmem:[#allocation2 + $0x20] sm:$0xf]
      %v1179 = vld [vmem:[#allocation2 + $0x28] sm:$0xf]
      %v1180 = vld [vmem:[#allocation2 + $0x30] sm:$0xf]
      %v1181 = vld [vmem:[#allocation2 + $0x38] sm:$0xf]
      %v1182 = vld [vmem:[%s1] sm:$0xf]
      %v1183 = vld [vmem:[%s1 + $0x4] sm:$0xf]
      %v1184 = vld [vmem:[#allocation2 + $0x4] sm:$0x1]
      %v1185 = vld [vmem:[#allocation2 + $0xc] sm:$0x1]
      %v1186 = vld [vmem:[#allocation2 + $0x14] sm:$0x1]
      %v1187 = vld [vmem:[#allocation2 + $0x1c] sm:$0x1]
      %v1188 = vld [vmem:[#allocation2 + $0x24] sm:$0x1]
      %v1189 = vld [vmem:[#allocation2 + $0x2c] sm:$0x1]
      %v1190 = vld [vmem:[#allocation2 + $0x34] sm:$0x1]
      %v1191 = vld [vmem:[#allocation2 + $0x3c] sm:$0x1]
      %vm1192 = vsmask.f32 3328
      %vm1193 = vsmask.f32 7440
      %vm1194 = vmor %vm1192, %vm1193
      %v1196 = vshrl.u32 %v1174, 16
      %v1198 = vrot.slane %v1196, 4
      %v1199 = vshll.u32 %v1174, 16
      %v1201 = vrot.slane %v1199, 5
      %v1202 = vor.u32 %v1198, %v1201
      %v1203 = vrot.slane %v1202, 4
      %v1205 = vshll.u32 %v1184, 16
      %v1207 = vrot.slane %v1205, 5
      %v1208 = vsel %vm1194, %v1203, %v1207
      %v1210 = vshrl.u32 %v1175, 16
      %v1212 = vrot.slane %v1210, 4
      %v1213 = vshll.u32 %v1175, 16
      %v1215 = vrot.slane %v1213, 5
      %v1216 = vor.u32 %v1212, %v1215
      %v1217 = vrot.slane %v1216, 4
      %v1219 = vshll.u32 %v1185, 16
      %v1221 = vrot.slane %v1219, 5
      %v1222 = vsel %vm1194, %v1217, %v1221
      %v1224 = vshrl.u32 %v1176, 16
      %v1226 = vrot.slane %v1224, 4
      %v1227 = vshll.u32 %v1176, 16
      %v1229 = vrot.slane %v1227, 5
      %v1230 = vor.u32 %v1226, %v1229
      %v1231 = vrot.slane %v1230, 4
      %v1233 = vshll.u32 %v1186, 16
      %v1235 = vrot.slane %v1233, 5
      %v1236 = vsel %vm1194, %v1231, %v1235
      %v1238 = vshrl.u32 %v1177, 16
      %v1240 = vrot.slane %v1238, 4
      %v1241 = vshll.u32 %v1177, 16
      %v1243 = vrot.slane %v1241, 5
      %v1244 = vor.u32 %v1240, %v1243
      %v1245 = vrot.slane %v1244, 4
      %v1247 = vshll.u32 %v1187, 16
      %v1249 = vrot.slane %v1247, 5
      %v1250 = vsel %vm1194, %v1245, %v1249
      %v1252 = vshrl.u32 %v1178, 16
      %v1254 = vrot.slane %v1252, 4
      %v1255 = vshll.u32 %v1178, 16
      %v1257 = vrot.slane %v1255, 5
      %v1258 = vor.u32 %v1254, %v1257
      %v1259 = vrot.slane %v1258, 4
      %v1261 = vshll.u32 %v1188, 16
      %v1263 = vrot.slane %v1261, 5
      %v1264 = vsel %vm1194, %v1259, %v1263
      %v1266 = vshrl.u32 %v1179, 16
      %v1268 = vrot.slane %v1266, 4
      %v1269 = vshll.u32 %v1179, 16
      %v1271 = vrot.slane %v1269, 5
      %v1272 = vor.u32 %v1268, %v1271
      %v1273 = vrot.slane %v1272, 4
      %v1275 = vshll.u32 %v1189, 16
      %v1277 = vrot.slane %v1275, 5
      %v1278 = vsel %vm1194, %v1273, %v1277
      %v1280 = vshrl.u32 %v1180, 16
      %v1282 = vrot.slane %v1280, 4
      %v1283 = vshll.u32 %v1180, 16
      %v1285 = vrot.slane %v1283, 5
      %v1286 = vor.u32 %v1282, %v1285
      %v1287 = vrot.slane %v1286, 4
      %v1289 = vshll.u32 %v1190, 16
      %v1291 = vrot.slane %v1289, 5
      %v1292 = vsel %vm1194, %v1287, %v1291
      %v1294 = vshrl.u32 %v1181, 16
      %v1296 = vrot.slane %v1294, 4
      %v1297 = vshll.u32 %v1181, 16
      %v1299 = vrot.slane %v1297, 5
      %v1300 = vor.u32 %v1296, %v1299
      %v1301 = vrot.slane %v1300, 4
      %v1303 = vshll.u32 %v1191, 16
      %v1305 = vrot.slane %v1303, 5
      %v1306 = vsel %vm1194, %v1301, %v1305
      %s1307 = scalar_lea.vmem %s1, 8
      %v1308 = vld [vmem:[%s1307] sm:$0xf]
      %v1309 = vld [vmem:[%s1307 + $0x4] sm:$0xf]
      %v1310 = vunpack.c.l.b16 %v1208
      %v1311 = vunpack.c.l.b16 %v1222
      %v1312 = vunpack.c.l.b16 %v1236
      %v1313 = vunpack.c.l.b16 %v1250
      %v1314 = vunpack.c.l.b16 %v1264
      %v1315 = vunpack.c.l.b16 %v1278
      %v1316 = vunpack.c.l.b16 %v1292
      %v1317 = vunpack.c.l.b16 %v1306
      %v1318 = vpack.c.b16 %v1311, %v1310
      %v1319 = vpack.c.b16 %v1313, %v1312
      %v1320 = vpack.c.b16 %v1315, %v1314
      %v1321 = vpack.c.b16 %v1317, %v1316
      %v1324 = vunpack.c.l.b16 %v1308
      %v1325 = vunpack.c.l.b16 %v1309
      %v1326 = vpack.c.b16 %v1325, %v1324
      %vm1328 = vcmask 130048
      %v1330 = vsel %vm1328, %v1318, 0
      %v1333 = vsel %vm1328, %v1319, 0
      %v1336 = vsel %vm1328, %v1320, 0
      %v1339 = vsel %vm1328, %v1321, 0
      %1341 = vmatprep.subr.bf16.mxu0 0
      %1342 = vmatpush1.bf16.msra.mxu0 %v1326
      %1343 = vmatprep.subr.bf16.mxu0 0
      %1344 = vmatpush1.bf16.msra.mxu0 0
      %1345 = vmatprep.subr.bf16.mxu0 0
      %1346 = vmatpush1.bf16.msra.mxu0 0
      %1347 = vmatprep.subr.bf16.mxu0 0
      %1348 = vmatpush1.bf16.msra.mxu0 0
      %1349 = vmatprep.subr.bf16.mxu0 0
      %1350 = vmatpush1.bf16.msra.mxu0 0
      %1351 = vmatprep.subr.bf16.mxu0 0
      %1352 = vmatpush1.bf16.msra.mxu0 0
      %1353 = vmatprep.subr.bf16.mxu0 0
      %1354 = vmatpush1.bf16.msra.mxu0 0
      %1355 = vmatprep.subr.bf16.mxu0 0
      %1356 = vmatpush1.bf16.msra.mxu0 0
      %1357 = vmatprep.subr.bf16.mxu0 0
      %1358 = vmatpush1.bf16.msra.mxu0 0
      %1359 = vmatprep.subr.bf16.mxu0 0
      %1360 = vmatpush1.bf16.msra.mxu0 0
      %1361 = vmatprep.subr.bf16.mxu0 0
      %1362 = vmatpush1.bf16.msra.mxu0 0
      %1363 = vmatprep.subr.bf16.mxu0 0
      %1364 = vmatpush1.bf16.msra.mxu0 0
      %1365 = vmatprep.subr.bf16.mxu0 0
      %1366 = vmatpush1.bf16.msra.mxu0 0
      %1367 = vmatprep.subr.bf16.mxu0 0
      %1368 = vmatpush1.bf16.msra.mxu0 0
      %1369 = vmatprep.subr.bf16.mxu0 0
      %1370 = vmatpush1.bf16.msra.mxu0 0
      %1371 = vmatprep.subr.bf16.mxu0 0
      %1372 = vmatpush1.bf16.msra.mxu0 0
      %1373 = vmatprep.mubr.bf16.mxu0 0
      %1374 = vmatmul.mubr.bf16.gmra.mrb[0].mxu0 %v1330
      %v1375 = vpop.f32.mrb[0].mxu0
      %v1376 = vadd.f32 0.0, %v1375
      %v1377 = vpop.f32.mrb[0].mxu0
      %v1378 = vpop.f32.mrb[0].mxu0
      %v1379 = vadd.f32 0.0, %v1378
      %v1380 = vpop.f32.mrb[0].mxu0
      %1381 = vmatprep.mubr.bf16.mxu0 0
      %1382 = vmatmul.mubr.bf16.gmra.mrb[0].mxu0 %v1333
      %v1383 = vpop.f32.mrb[0].mxu0
      %v1384 = vadd.f32 0.0, %v1383
      %v1385 = vpop.f32.mrb[0].mxu0
      %v1386 = vpop.f32.mrb[0].mxu0
      %v1387 = vadd.f32 0.0, %v1386
      %v1388 = vpop.f32.mrb[0].mxu0
      %1389 = vmatprep.mubr.bf16.mxu0 0
      %1390 = vmatmul.mubr.bf16.gmra.mrb[0].mxu0 %v1336
      %v1391 = vpop.f32.mrb[0].mxu0
      %v1392 = vadd.f32 0.0, %v1391
      %v1393 = vpop.f32.mrb[0].mxu0
      %v1394 = vpop.f32.mrb[0].mxu0
      %v1395 = vadd.f32 0.0, %v1394
      %v1396 = vpop.f32.mrb[0].mxu0
      %1397 = vmatprep.mubr.bf16.mxu0 0
      %1398 = vmatmul.mubr.bf16.gmra.mrb[0].mxu0 %v1339
      %v1399 = vpop.f32.mrb[0].mxu0
      %v1400 = vadd.f32 0.0, %v1399
      %v1401 = vpop.f32.mrb[0].mxu0
      %v1402 = vpop.f32.mrb[0].mxu0
      %v1403 = vadd.f32 0.0, %v1402
      %v1404 = vpop.f32.mrb[0].mxu0
      %1405 = vdwg.mxu0
      %v1414 = vunpack.c.l.b16 %v1174
      %v1415 = vunpack.c.l.b16 %v1175
      %v1416 = vunpack.c.l.b16 %v1176
      %v1417 = vunpack.c.l.b16 %v1177
      %v1418 = vunpack.c.l.b16 %v1178
      %v1419 = vunpack.c.l.b16 %v1179
      %v1420 = vunpack.c.l.b16 %v1180
      %v1421 = vunpack.c.l.b16 %v1181
      %v1422 = vpack.c.b16 %v1415, %v1414
      %v1423 = vpack.c.b16 %v1417, %v1416
      %v1424 = vpack.c.b16 %v1419, %v1418
      %v1425 = vpack.c.b16 %v1421, %v1420
      %v1428 = vunpack.c.l.b16 %v1182
      %v1429 = vunpack.c.l.b16 %v1183
      %v1430 = vpack.c.b16 %v1429, %v1428
      %v1433 = vsel %vm1328, %v1422, 0
      %v1436 = vsel %vm1328, %v1423, 0
      %v1439 = vsel %vm1328, %v1424, 0
      %v1442 = vsel %vm1328, %v1425, 0
      %1444 = vmatprep.subr.bf16.mxu0 0
      %1445 = vmatpush1.bf16.msra.mxu0 %v1430
      %1446 = vmatprep.subr.bf16.mxu0 0
      %1447 = vmatpush1.bf16.msra.mxu0 0
      %1448 = vmatprep.subr.bf16.mxu0 0
      %1449 = vmatpush1.bf16.msra.mxu0 0
      %1450 = vmatprep.subr.bf16.mxu0 0
      %1451 = vmatpush1.bf16.msra.mxu0 0
      %1452 = vmatprep.subr.bf16.mxu0 0
      %1453 = vmatpush1.bf16.msra.mxu0 0
      %1454 = vmatprep.subr.bf16.mxu0 0
      %1455 = vmatpush1.bf16.msra.mxu0 0
      %1456 = vmatprep.subr.bf16.mxu0 0
      %1457 = vmatpush1.bf16.msra.mxu0 0
      %1458 = vmatprep.subr.bf16.mxu0 0
      %1459 = vmatpush1.bf16.msra.mxu0 0
      %1460 = vmatprep.subr.bf16.mxu0 0
      %1461 = vmatpush1.bf16.msra.mxu0 0
      %1462 = vmatprep.subr.bf16.mxu0 0
      %1463 = vmatpush1.bf16.msra.mxu0 0
      %1464 = vmatprep.subr.bf16.mxu0 0
      %1465 = vmatpush1.bf16.msra.mxu0 0
      %1466 = vmatprep.subr.bf16.mxu0 0
      %1467 = vmatpush1.bf16.msra.mxu0 0
      %1468 = vmatprep.subr.bf16.mxu0 0
      %1469 = vmatpush1.bf16.msra.mxu0 0
      %1470 = vmatprep.subr.bf16.mxu0 0
      %1471 = vmatpush1.bf16.msra.mxu0 0
      %1472 = vmatprep.subr.bf16.mxu0 0
      %1473 = vmatpush1.bf16.msra.mxu0 0
      %1474 = vmatprep.subr.bf16.mxu0 0
      %1475 = vmatpush1.bf16.msra.mxu0 0
      %1476 = vmatprep.mubr.bf16.mxu0 0
      %1477 = vmatmul.mubr.bf16.gmra.mrb[0].mxu0 %v1433
      %v1478 = vpop.f32.mrb[0].mxu0
      %v1479 = vadd.f32 %v1376, %v1478
      %v1480 = vpop.f32.mrb[0].mxu0
      %v1481 = vpop.f32.mrb[0].mxu0
      %v1482 = vadd.f32 %v1379, %v1481
      %v1483 = vpop.f32.mrb[0].mxu0
      %1484 = vmatprep.mubr.bf16.mxu0 0
      %1485 = vmatmul.mubr.bf16.gmra.mrb[0].mxu0 %v1436
      %v1486 = vpop.f32.mrb[0].mxu0
      %v1487 = vadd.f32 %v1384, %v1486
      %v1488 = vpop.f32.mrb[0].mxu0
      %v1489 = vpop.f32.mrb[0].mxu0
      %v1490 = vadd.f32 %v1387, %v1489
      %v1491 = vpop.f32.mrb[0].mxu0
      %1492 = vmatprep.mubr.bf16.mxu0 0
      %1493 = vmatmul.mubr.bf16.gmra.mrb[0].mxu0 %v1439
      %v1494 = vpop.f32.mrb[0].mxu0
      %v1495 = vadd.f32 %v1392, %v1494
      %v1496 = vpop.f32.mrb[0].mxu0
      %v1497 = vpop.f32.mrb[0].mxu0
      %v1498 = vadd.f32 %v1395, %v1497
      %v1499 = vpop.f32.mrb[0].mxu0
      %1500 = vmatprep.mubr.bf16.mxu0 0
      %1501 = vmatmul.mubr.bf16.gmra.mrb[0].mxu0 %v1442
      %v1502 = vpop.f32.mrb[0].mxu0
      %v1503 = vadd.f32 %v1400, %v1502
      %v1504 = vpop.f32.mrb[0].mxu0
      %v1505 = vpop.f32.mrb[0].mxu0
      %v1506 = vadd.f32 %v1403, %v1505
      %v1507 = vpop.f32.mrb[0].mxu0
      %1508 = vdwg.mxu0
      %v1509 = vld [vmem:[#allocation2] sm:$0xe]
      %v1510 = vld [vmem:[#allocation2 + $0x8] sm:$0xe]
      %v1511 = vld [vmem:[#allocation2 + $0x10] sm:$0xe]
      %v1512 = vld [vmem:[#allocation2 + $0x18] sm:$0xe]
      %v1513 = vld [vmem:[#allocation2 + $0x20] sm:$0xe]
      %v1514 = vld [vmem:[#allocation2 + $0x28] sm:$0xe]
      %v1515 = vld [vmem:[#allocation2 + $0x30] sm:$0xe]
      %v1516 = vld [vmem:[#allocation2 + $0x38] sm:$0xe]
      %vm1533 = vcmask 1042432
      %vm1534 = vcmask 1046532
      %vm1535 = vmor %vm1533, %vm1534
      %v1536 = vrot.slane %v1509, 5
      %v1537 = vrot.slane %v1536, 4
      %v1538 = vrot.slane %v1184, 5
      %v1539 = vsel %vm1535, %v1537, %v1538
      %v1540 = vrot.slane %v1510, 5
      %v1541 = vrot.slane %v1540, 4
      %v1542 = vrot.slane %v1185, 5
      %v1543 = vsel %vm1535, %v1541, %v1542
      %v1544 = vrot.slane %v1511, 5
      %v1545 = vrot.slane %v1544, 4
      %v1546 = vrot.slane %v1186, 5
      %v1547 = vsel %vm1535, %v1545, %v1546
      %v1548 = vrot.slane %v1512, 5
      %v1549 = vrot.slane %v1548, 4
      %v1550 = vrot.slane %v1187, 5
      %v1551 = vsel %vm1535, %v1549, %v1550
      %v1552 = vrot.slane %v1513, 5
      %v1553 = vrot.slane %v1552, 4
      %v1554 = vrot.slane %v1188, 5
      %v1555 = vsel %vm1535, %v1553, %v1554
      %v1556 = vrot.slane %v1514, 5
      %v1557 = vrot.slane %v1556, 4
      %v1558 = vrot.slane %v1189, 5
      %v1559 = vsel %vm1535, %v1557, %v1558
      %v1560 = vrot.slane %v1515, 5
      %v1561 = vrot.slane %v1560, 4
      %v1562 = vrot.slane %v1190, 5
      %v1563 = vsel %vm1535, %v1561, %v1562
      %v1564 = vrot.slane %v1516, 5
      %v1565 = vrot.slane %v1564, 4
      %v1566 = vrot.slane %v1191, 5
      %v1567 = vsel %vm1535, %v1565, %v1566
      %s1568 = scalar_lea.vmem %s1, 16
      %v1569 = vld [vmem:[%s1568] sm:$0xf]
      %v1570 = vld [vmem:[%s1568 + $0x4] sm:$0xf]
      %v1571 = vunpack.c.l.b16 %v1539
      %v1572 = vunpack.c.l.b16 %v1543
      %v1573 = vunpack.c.l.b16 %v1547
      %v1574 = vunpack.c.l.b16 %v1551
      %v1575 = vunpack.c.l.b16 %v1555
      %v1576 = vunpack.c.l.b16 %v1559
      %v1577 = vunpack.c.l.b16 %v1563
      %v1578 = vunpack.c.l.b16 %v1567
      %v1579 = vpack.c.b16 %v1572, %v1571
      %v1580 = vpack.c.b16 %v1574, %v1573
      %v1581 = vpack.c.b16 %v1576, %v1575
      %v1582 = vpack.c.b16 %v1578, %v1577
      %v1585 = vunpack.c.l.b16 %v1569
      %v1586 = vunpack.c.l.b16 %v1570
      %v1587 = vpack.c.b16 %v1586, %v1585
      %v1590 = vsel %vm1328, %v1579, 0
      %v1593 = vsel %vm1328, %v1580, 0
      %v1596 = vsel %vm1328, %v1581, 0
      %v1599 = vsel %vm1328, %v1582, 0
      %1601 = vmatprep.subr.bf16.mxu0 0
      %1602 = vmatpush1.bf16.msra.mxu0 %v1587
      %1603 = vmatprep.subr.bf16.mxu0 0
      %1604 = vmatpush1.bf16.msra.mxu0 0
      %1605 = vmatprep.subr.bf16.mxu0 0
      %1606 = vmatpush1.bf16.msra.mxu0 0
      %1607 = vmatprep.subr.bf16.mxu0 0
      %1608 = vmatpush1.bf16.msra.mxu0 0
      %1609 = vmatprep.subr.bf16.mxu0 0
      %1610 = vmatpush1.bf16.msra.mxu0 0
      %1611 = vmatprep.subr.bf16.mxu0 0
      %1612 = vmatpush1.bf16.msra.mxu0 0
      %1613 = vmatprep.subr.bf16.mxu0 0
      %1614 = vmatpush1.bf16.msra.mxu0 0
      %1615 = vmatprep.subr.bf16.mxu0 0
      %1616 = vmatpush1.bf16.msra.mxu0 0
      %1617 = vmatprep.subr.bf16.mxu0 0
      %1618 = vmatpush1.bf16.msra.mxu0 0
      %1619 = vmatprep.subr.bf16.mxu0 0
      %1620 = vmatpush1.bf16.msra.mxu0 0
      %1621 = vmatprep.subr.bf16.mxu0 0
      %1622 = vmatpush1.bf16.msra.mxu0 0
      %1623 = vmatprep.subr.bf16.mxu0 0
      %1624 = vmatpush1.bf16.msra.mxu0 0
      %1625 = vmatprep.subr.bf16.mxu0 0
      %1626 = vmatpush1.bf16.msra.mxu0 0
      %1627 = vmatprep.subr.bf16.mxu0 0
      %1628 = vmatpush1.bf16.msra.mxu0 0
      %1629 = vmatprep.subr.bf16.mxu0 0
      %1630 = vmatpush1.bf16.msra.mxu0 0
      %1631 = vmatprep.subr.bf16.mxu0 0
      %1632 = vmatpush1.bf16.msra.mxu0 0
      %1633 = vmatprep.mubr.bf16.mxu0 0
      %1634 = vmatmul.mubr.bf16.gmra.mrb[0].mxu0 %v1590
      %v1635 = vpop.f32.mrb[0].mxu0
      %v1636 = vadd.f32 0.0, %v1635
      %v1637 = vpop.f32.mrb[0].mxu0
      %v1638 = vpop.f32.mrb[0].mxu0
      %v1639 = vadd.f32 0.0, %v1638
      %v1640 = vpop.f32.mrb[0].mxu0
      %1641 = vmatprep.mubr.bf16.mxu0 0
      %1642 = vmatmul.mubr.bf16.gmra.mrb[0].mxu0 %v1593
      %v1643 = vpop.f32.mrb[0].mxu0
      %v1644 = vadd.f32 0.0, %v1643
      %v1645 = vpop.f32.mrb[0].mxu0
      %v1646 = vpop.f32.mrb[0].mxu0
      %v1647 = vadd.f32 0.0, %v1646
      %v1648 = vpop.f32.mrb[0].mxu0
      %1649 = vmatprep.mubr.bf16.mxu0 0
      %1650 = vmatmul.mubr.bf16.gmra.mrb[0].mxu0 %v1596
      %v1651 = vpop.f32.mrb[0].mxu0
      %v1652 = vadd.f32 0.0, %v1651
      %v1653 = vpop.f32.mrb[0].mxu0
      %v1654 = vpop.f32.mrb[0].mxu0
      %v1655 = vadd.f32 0.0, %v1654
      %v1656 = vpop.f32.mrb[0].mxu0
      %1657 = vmatprep.mubr.bf16.mxu0 0
      %1658 = vmatmul.mubr.bf16.gmra.mrb[0].mxu0 %v1599
      %v1659 = vpop.f32.mrb[0].mxu0
      %v1660 = vadd.f32 0.0, %v1659
      %v1661 = vpop.f32.mrb[0].mxu0
      %v1662 = vpop.f32.mrb[0].mxu0
      %v1663 = vadd.f32 0.0, %v1662
      %v1664 = vpop.f32.mrb[0].mxu0
      %1665 = vdwg.mxu0
      %v1666 = vadd.f32 %v1479, %v1636
      %v1667 = vadd.f32 %v1482, %v1639
      %v1668 = vadd.f32 %v1487, %v1644
      %v1669 = vadd.f32 %v1490, %v1647
      %v1670 = vadd.f32 %v1495, %v1652
      %v1671 = vadd.f32 %v1498, %v1655
      %v1672 = vadd.f32 %v1503, %v1660
      %v1673 = vadd.f32 %v1506, %v1663
      %v1674 = vld [vmem:[%s640] sm:$0xf]
      %v1675 = vld [vmem:[%s640 + $0x8] sm:$0xf]
      %v1676 = vld [vmem:[%s640 + $0x10] sm:$0xf]
      %v1677 = vld [vmem:[%s640 + $0x18] sm:$0xf]
      %v1678 = vld [vmem:[%s640 + $0x20] sm:$0xf]
      %v1679 = vld [vmem:[%s640 + $0x28] sm:$0xf]
      %v1680 = vld [vmem:[%s640 + $0x30] sm:$0xf]
      %v1681 = vld [vmem:[%s640 + $0x38] sm:$0xf]
      %s1682 = scalar_lea.vmem %s1, 24
      %v1683 = vld [vmem:[%s1682] sm:$0xf]
      %v1684 = vld [vmem:[%s1682 + $0x4] sm:$0xf]
      %v1693 = vunpack.c.l.b16 %v1674
      %v1694 = vunpack.c.l.b16 %v1675
      %v1695 = vunpack.c.l.b16 %v1676
      %v1696 = vunpack.c.l.b16 %v1677
      %v1697 = vunpack.c.l.b16 %v1678
      %v1698 = vunpack.c.l.b16 %v1679
      %v1699 = vunpack.c.l.b16 %v1680
      %v1700 = vunpack.c.l.b16 %v1681
      %v1701 = vpack.c.b16 %v1694, %v1693
      %v1702 = vpack.c.b16 %v1696, %v1695
      %v1703 = vpack.c.b16 %v1698, %v1697
      %v1704 = vpack.c.b16 %v1700, %v1699
      %v1707 = vunpack.c.l.b16 %v1683
      %v1708 = vunpack.c.l.b16 %v1684
      %v1709 = vpack.c.b16 %v1708, %v1707
      %v1712 = vsel %vm1328, %v1701, 0
      %v1715 = vsel %vm1328, %v1702, 0
      %v1718 = vsel %vm1328, %v1703, 0
      %v1721 = vsel %vm1328, %v1704, 0
      %1723 = vmatprep.subr.bf16.mxu0 0
      %1724 = vmatpush1.bf16.msra.mxu0 %v1709
      %1725 = vmatprep.subr.bf16.mxu0 0
      %1726 = vmatpush1.bf16.msra.mxu0 0
      %1727 = vmatprep.subr.bf16.mxu0 0
      %1728 = vmatpush1.bf16.msra.mxu0 0
      %1729 = vmatprep.subr.bf16.mxu0 0
      %1730 = vmatpush1.bf16.msra.mxu0 0
      %1731 = vmatprep.subr.bf16.mxu0 0
      %1732 = vmatpush1.bf16.msra.mxu0 0
      %1733 = vmatprep.subr.bf16.mxu0 0
      %1734 = vmatpush1.bf16.msra.mxu0 0
      %1735 = vmatprep.subr.bf16.mxu0 0
      %1736 = vmatpush1.bf16.msra.mxu0 0
      %1737 = vmatprep.subr.bf16.mxu0 0
      %1738 = vmatpush1.bf16.msra.mxu0 0
      %1739 = vmatprep.subr.bf16.mxu0 0
      %1740 = vmatpush1.bf16.msra.mxu0 0
      %1741 = vmatprep.subr.bf16.mxu0 0
      %1742 = vmatpush1.bf16.msra.mxu0 0
      %1743 = vmatprep.subr.bf16.mxu0 0
      %1744 = vmatpush1.bf16.msra.mxu0 0
      %1745 = vmatprep.subr.bf16.mxu0 0
      %1746 = vmatpush1.bf16.msra.mxu0 0
      %1747 = vmatprep.subr.bf16.mxu0 0
      %1748 = vmatpush1.bf16.msra.mxu0 0
      %1749 = vmatprep.subr.bf16.mxu0 0
      %1750 = vmatpush1.bf16.msra.mxu0 0
      %1751 = vmatprep.subr.bf16.mxu0 0
      %1752 = vmatpush1.bf16.msra.mxu0 0
      %1753 = vmatprep.subr.bf16.mxu0 0
      %1754 = vmatpush1.bf16.msra.mxu0 0
      %1755 = vmatprep.mubr.bf16.mxu0 0
      %1756 = vmatmul.mubr.bf16.gmra.mrb[0].mxu0 %v1712
      %v1757 = vpop.f32.mrb[0].mxu0
      %v1758 = vadd.f32 0.0, %v1757
      %v1759 = vpop.f32.mrb[0].mxu0
      %v1760 = vpop.f32.mrb[0].mxu0
      %v1761 = vadd.f32 0.0, %v1760
      %v1762 = vpop.f32.mrb[0].mxu0
      %1763 = vmatprep.mubr.bf16.mxu0 0
      %1764 = vmatmul.mubr.bf16.gmra.mrb[0].mxu0 %v1715
      %v1765 = vpop.f32.mrb[0].mxu0
      %v1766 = vadd.f32 0.0, %v1765
      %v1767 = vpop.f32.mrb[0].mxu0
      %v1768 = vpop.f32.mrb[0].mxu0
      %v1769 = vadd.f32 0.0, %v1768
      %v1770 = vpop.f32.mrb[0].mxu0
      %1771 = vmatprep.mubr.bf16.mxu0 0
      %1772 = vmatmul.mubr.bf16.gmra.mrb[0].mxu0 %v1718
      %v1773 = vpop.f32.mrb[0].mxu0
      %v1774 = vadd.f32 0.0, %v1773
      %v1775 = vpop.f32.mrb[0].mxu0
      %v1776 = vpop.f32.mrb[0].mxu0
      %v1777 = vadd.f32 0.0, %v1776
      %v1778 = vpop.f32.mrb[0].mxu0
      %1779 = vmatprep.mubr.bf16.mxu0 0
      %1780 = vmatmul.mubr.bf16.gmra.mrb[0].mxu0 %v1721
      %v1781 = vpop.f32.mrb[0].mxu0
      %v1782 = vadd.f32 0.0, %v1781
      %v1783 = vpop.f32.mrb[0].mxu0
      %v1784 = vpop.f32.mrb[0].mxu0
      %v1785 = vadd.f32 0.0, %v1784
      %v1786 = vpop.f32.mrb[0].mxu0
      %1787 = vdwg.mxu0
      %v1788 = vadd.f32 %v1666, %v1758
      %v1789 = vadd.f32 %v1667, %v1761
      %v1790 = vadd.f32 %v1668, %v1766
      %v1791 = vadd.f32 %v1669, %v1769
      %v1792 = vadd.f32 %v1670, %v1774
      %v1793 = vadd.f32 %v1671, %v1777
      %v1794 = vadd.f32 %v1672, %v1782
      %v1795 = vadd.f32 %v1673, %v1785
      %v1796 = vld [vmem:[%s640] sm:$0xf]
      %v1797 = vld [vmem:[%s640 + $0x4] sm:$0x1]
      %v1798 = vld [vmem:[%s640 + $0x8] sm:$0xf]
      %v1799 = vld [vmem:[%s640 + $0xc] sm:$0x1]
      %v1800 = vld [vmem:[%s640 + $0x10] sm:$0xf]
      %v1801 = vld [vmem:[%s640 + $0x14] sm:$0x1]
      %v1802 = vld [vmem:[%s640 + $0x18] sm:$0xf]
      %v1803 = vld [vmem:[%s640 + $0x1c] sm:$0x1]
      %v1804 = vld [vmem:[%s640 + $0x20] sm:$0xf]
      %v1805 = vld [vmem:[%s640 + $0x24] sm:$0x1]
      %v1806 = vld [vmem:[%s640 + $0x28] sm:$0xf]
      %v1807 = vld [vmem:[%s640 + $0x2c] sm:$0x1]
      %v1808 = vld [vmem:[%s640 + $0x30] sm:$0xf]
      %v1809 = vld [vmem:[%s640 + $0x34] sm:$0x1]
      %v1810 = vld [vmem:[%s640 + $0x38] sm:$0xf]
      %v1811 = vld [vmem:[%s640 + $0x3c] sm:$0x1]
      %v1813 = vshrl.u32 %v1796, 16
      %v1815 = vrot.slane %v1813, 4
      %v1816 = vshll.u32 %v1796, 16
      %v1818 = vrot.slane %v1816, 5
      %v1819 = vor.u32 %v1815, %v1818
      %v1820 = vrot.slane %v1819, 4
      %v1822 = vshll.u32 %v1797, 16
      %v1824 = vrot.slane %v1822, 5
      %v1825 = vsel %vm1194, %v1820, %v1824
      %v1827 = vshrl.u32 %v1798, 16
      %v1829 = vrot.slane %v1827, 4
      %v1830 = vshll.u32 %v1798, 16
      %v1832 = vrot.slane %v1830, 5
      %v1833 = vor.u32 %v1829, %v1832
      %v1834 = vrot.slane %v1833, 4
      %v1836 = vshll.u32 %v1799, 16
      %v1838 = vrot.slane %v1836, 5
      %v1839 = vsel %vm1194, %v1834, %v1838
      %v1841 = vshrl.u32 %v1800, 16
      %v1843 = vrot.slane %v1841, 4
      %v1844 = vshll.u32 %v1800, 16
      %v1846 = vrot.slane %v1844, 5
      %v1847 = vor.u32 %v1843, %v1846
      %v1848 = vrot.slane %v1847, 4
      %v1850 = vshll.u32 %v1801, 16
      %v1852 = vrot.slane %v1850, 5
      %v1853 = vsel %vm1194, %v1848, %v1852
      %v1855 = vshrl.u32 %v1802, 16
      %v1857 = vrot.slane %v1855, 4
      %v1858 = vshll.u32 %v1802, 16
      %v1860 = vrot.slane %v1858, 5
      %v1861 = vor.u32 %v1857, %v1860
      %v1862 = vrot.slane %v1861, 4
      %v1864 = vshll.u32 %v1803, 16
      %v1866 = vrot.slane %v1864, 5
      %v1867 = vsel %vm1194, %v1862, %v1866
      %v1869 = vshrl.u32 %v1804, 16
      %v1871 = vrot.slane %v1869, 4
      %v1872 = vshll.u32 %v1804, 16
      %v1874 = vrot.slane %v1872, 5
      %v1875 = vor.u32 %v1871, %v1874
      %v1876 = vrot.slane %v1875, 4
      %v1878 = vshll.u32 %v1805, 16
      %v1880 = vrot.slane %v1878, 5
      %v1881 = vsel %vm1194, %v1876, %v1880
      %v1883 = vshrl.u32 %v1806, 16
      %v1885 = vrot.slane %v1883, 4
      %v1886 = vshll.u32 %v1806, 16
      %v1888 = vrot.slane %v1886, 5
      %v1889 = vor.u32 %v1885, %v1888
      %v1890 = vrot.slane %v1889, 4
      %v1892 = vshll.u32 %v1807, 16
      %v1894 = vrot.slane %v1892, 5
      %v1895 = vsel %vm1194, %v1890, %v1894
      %v1897 = vshrl.u32 %v1808, 16
      %v1899 = vrot.slane %v1897, 4
      %v1900 = vshll.u32 %v1808, 16
      %v1902 = vrot.slane %v1900, 5
      %v1903 = vor.u32 %v1899, %v1902
      %v1904 = vrot.slane %v1903, 4
      %v1906 = vshll.u32 %v1809, 16
      %v1908 = vrot.slane %v1906, 5
      %v1909 = vsel %vm1194, %v1904, %v1908
      %v1911 = vshrl.u32 %v1810, 16
      %v1913 = vrot.slane %v1911, 4
      %v1914 = vshll.u32 %v1810, 16
      %v1916 = vrot.slane %v1914, 5
      %v1917 = vor.u32 %v1913, %v1916
      %v1918 = vrot.slane %v1917, 4
      %v1920 = vshll.u32 %v1811, 16
      %v1922 = vrot.slane %v1920, 5
      %v1923 = vsel %vm1194, %v1918, %v1922
      %s1924 = scalar_lea.vmem %s1, 32
      %v1925 = vld [vmem:[%s1924] sm:$0xf]
      %v1926 = vld [vmem:[%s1924 + $0x4] sm:$0xf]
      %v1927 = vunpack.c.l.b16 %v1825
      %v1928 = vunpack.c.l.b16 %v1839
      %v1929 = vunpack.c.l.b16 %v1853
      %v1930 = vunpack.c.l.b16 %v1867
      %v1931 = vunpack.c.l.b16 %v1881
      %v1932 = vunpack.c.l.b16 %v1895
      %v1933 = vunpack.c.l.b16 %v1909
      %v1934 = vunpack.c.l.b16 %v1923
      %v1935 = vpack.c.b16 %v1928, %v1927
      %v1936 = vpack.c.b16 %v1930, %v1929
      %v1937 = vpack.c.b16 %v1932, %v1931
      %v1938 = vpack.c.b16 %v1934, %v1933
      %v1941 = vunpack.c.l.b16 %v1925
      %v1942 = vunpack.c.l.b16 %v1926
      %v1943 = vpack.c.b16 %v1942, %v1941
      %v1946 = vsel %vm1328, %v1935, 0
      %v1949 = vsel %vm1328, %v1936, 0
      %v1952 = vsel %vm1328, %v1937, 0
      %v1955 = vsel %vm1328, %v1938, 0
      %1957 = vmatprep.subr.bf16.mxu0 0
      %1958 = vmatpush1.bf16.msra.mxu0 %v1943
      %1959 = vmatprep.subr.bf16.mxu0 0
      %1960 = vmatpush1.bf16.msra.mxu0 0
      %1961 = vmatprep.subr.bf16.mxu0 0
      %1962 = vmatpush1.bf16.msra.mxu0 0
      %1963 = vmatprep.subr.bf16.mxu0 0
      %1964 = vmatpush1.bf16.msra.mxu0 0
      %1965 = vmatprep.subr.bf16.mxu0 0
      %1966 = vmatpush1.bf16.msra.mxu0 0
      %1967 = vmatprep.subr.bf16.mxu0 0
      %1968 = vmatpush1.bf16.msra.mxu0 0
      %1969 = vmatprep.subr.bf16.mxu0 0
      %1970 = vmatpush1.bf16.msra.mxu0 0
      %1971 = vmatprep.subr.bf16.mxu0 0
      %1972 = vmatpush1.bf16.msra.mxu0 0
      %1973 = vmatprep.subr.bf16.mxu0 0
      %1974 = vmatpush1.bf16.msra.mxu0 0
      %1975 = vmatprep.subr.bf16.mxu0 0
      %1976 = vmatpush1.bf16.msra.mxu0 0
      %1977 = vmatprep.subr.bf16.mxu0 0
      %1978 = vmatpush1.bf16.msra.mxu0 0
      %1979 = vmatprep.subr.bf16.mxu0 0
      %1980 = vmatpush1.bf16.msra.mxu0 0
      %1981 = vmatprep.subr.bf16.mxu0 0
      %1982 = vmatpush1.bf16.msra.mxu0 0
      %1983 = vmatprep.subr.bf16.mxu0 0
      %1984 = vmatpush1.bf16.msra.mxu0 0
      %1985 = vmatprep.subr.bf16.mxu0 0
      %1986 = vmatpush1.bf16.msra.mxu0 0
      %1987 = vmatprep.subr.bf16.mxu0 0
      %1988 = vmatpush1.bf16.msra.mxu0 0
      %1989 = vmatprep.mubr.bf16.mxu0 0
      %1990 = vmatmul.mubr.bf16.gmra.mrb[0].mxu0 %v1946
      %v1991 = vpop.f32.mrb[0].mxu0
      %v1992 = vadd.f32 0.0, %v1991
      %v1993 = vpop.f32.mrb[0].mxu0
      %v1994 = vpop.f32.mrb[0].mxu0
      %v1995 = vadd.f32 0.0, %v1994
      %v1996 = vpop.f32.mrb[0].mxu0
      %1997 = vmatprep.mubr.bf16.mxu0 0
      %1998 = vmatmul.mubr.bf16.gmra.mrb[0].mxu0 %v1949
      %v1999 = vpop.f32.mrb[0].mxu0
      %v2000 = vadd.f32 0.0, %v1999
      %v2001 = vpop.f32.mrb[0].mxu0
      %v2002 = vpop.f32.mrb[0].mxu0
      %v2003 = vadd.f32 0.0, %v2002
      %v2004 = vpop.f32.mrb[0].mxu0
      %2005 = vmatprep.mubr.bf16.mxu0 0
      %2006 = vmatmul.mubr.bf16.gmra.mrb[0].mxu0 %v1952
      %v2007 = vpop.f32.mrb[0].mxu0
      %v2008 = vadd.f32 0.0, %v2007
      %v2009 = vpop.f32.mrb[0].mxu0
      %v2010 = vpop.f32.mrb[0].mxu0
      %v2011 = vadd.f32 0.0, %v2010
      %v2012 = vpop.f32.mrb[0].mxu0
      %2013 = vmatprep.mubr.bf16.mxu0 0
      %2014 = vmatmul.mubr.bf16.gmra.mrb[0].mxu0 %v1955
      %v2015 = vpop.f32.mrb[0].mxu0
      %v2016 = vadd.f32 0.0, %v2015
      %v2017 = vpop.f32.mrb[0].mxu0
      %v2018 = vpop.f32.mrb[0].mxu0
      %v2019 = vadd.f32 0.0, %v2018
      %v2020 = vpop.f32.mrb[0].mxu0
      %2021 = vdwg.mxu0
      %v2022 = vadd.f32 %v1788, %v1992
      %v2023 = vadd.f32 %v1789, %v1995
      %v2024 = vadd.f32 %v1790, %v2000
      %v2025 = vadd.f32 %v1791, %v2003
      %v2026 = vadd.f32 %v1792, %v2008
      %v2027 = vadd.f32 %v1793, %v2011
      %v2028 = vadd.f32 %v1794, %v2016
      %v2029 = vadd.f32 %v1795, %v2019
      %v2030 = vld [vmem:[%s640] sm:$0xe]
      %v2031 = vld [vmem:[%s640 + $0x8] sm:$0xe]
      %v2032 = vld [vmem:[%s640 + $0x10] sm:$0xe]
      %v2033 = vld [vmem:[%s640 + $0x18] sm:$0xe]
      %v2034 = vld [vmem:[%s640 + $0x20] sm:$0xe]
      %v2035 = vld [vmem:[%s640 + $0x28] sm:$0xe]
      %v2036 = vld [vmem:[%s640 + $0x30] sm:$0xe]
      %v2037 = vld [vmem:[%s640 + $0x38] sm:$0xe]
      %v2054 = vrot.slane %v2030, 5
      %v2055 = vrot.slane %v2054, 4
      %v2056 = vrot.slane %v1797, 5
      %v2057 = vsel %vm1535, %v2055, %v2056
      %v2058 = vrot.slane %v2031, 5
      %v2059 = vrot.slane %v2058, 4
      %v2060 = vrot.slane %v1799, 5
      %v2061 = vsel %vm1535, %v2059, %v2060
      %v2062 = vrot.slane %v2032, 5
      %v2063 = vrot.slane %v2062, 4
      %v2064 = vrot.slane %v1801, 5
      %v2065 = vsel %vm1535, %v2063, %v2064
      %v2066 = vrot.slane %v2033, 5
      %v2067 = vrot.slane %v2066, 4
      %v2068 = vrot.slane %v1803, 5
      %v2069 = vsel %vm1535, %v2067, %v2068
      %v2070 = vrot.slane %v2034, 5
      %v2071 = vrot.slane %v2070, 4
      %v2072 = vrot.slane %v1805, 5
      %v2073 = vsel %vm1535, %v2071, %v2072
      %v2074 = vrot.slane %v2035, 5
      %v2075 = vrot.slane %v2074, 4
      %v2076 = vrot.slane %v1807, 5
      %v2077 = vsel %vm1535, %v2075, %v2076
      %v2078 = vrot.slane %v2036, 5
      %v2079 = vrot.slane %v2078, 4
      %v2080 = vrot.slane %v1809, 5
      %v2081 = vsel %vm1535, %v2079, %v2080
      %v2082 = vrot.slane %v2037, 5
      %v2083 = vrot.slane %v2082, 4
      %v2084 = vrot.slane %v1811, 5
      %v2085 = vsel %vm1535, %v2083, %v2084
      %s2086 = scalar_lea.vmem %s1, 40
      %v2087 = vld [vmem:[%s2086] sm:$0xf]
      %v2088 = vld [vmem:[%s2086 + $0x4] sm:$0xf]
      %v2089 = vunpack.c.l.b16 %v2057
      %v2090 = vunpack.c.l.b16 %v2061
      %v2091 = vunpack.c.l.b16 %v2065
      %v2092 = vunpack.c.l.b16 %v2069
      %v2093 = vunpack.c.l.b16 %v2073
      %v2094 = vunpack.c.l.b16 %v2077
      %v2095 = vunpack.c.l.b16 %v2081
      %v2096 = vunpack.c.l.b16 %v2085
      %v2097 = vpack.c.b16 %v2090, %v2089
      %v2098 = vpack.c.b16 %v2092, %v2091
      %v2099 = vpack.c.b16 %v2094, %v2093
      %v2100 = vpack.c.b16 %v2096, %v2095
      %v2103 = vunpack.c.l.b16 %v2087
      %v2104 = vunpack.c.l.b16 %v2088
      %v2105 = vpack.c.b16 %v2104, %v2103
      %v2108 = vsel %vm1328, %v2097, 0
      %v2111 = vsel %vm1328, %v2098, 0
      %v2114 = vsel %vm1328, %v2099, 0
      %v2117 = vsel %vm1328, %v2100, 0
      %2119 = vmatprep.subr.bf16.mxu0 0
      %2120 = vmatpush1.bf16.msra.mxu0 %v2105
      %2121 = vmatprep.subr.bf16.mxu0 0
      %2122 = vmatpush1.bf16.msra.mxu0 0
      %2123 = vmatprep.subr.bf16.mxu0 0
      %2124 = vmatpush1.bf16.msra.mxu0 0
      %2125 = vmatprep.subr.bf16.mxu0 0
      %2126 = vmatpush1.bf16.msra.mxu0 0
      %2127 = vmatprep.subr.bf16.mxu0 0
      %2128 = vmatpush1.bf16.msra.mxu0 0
      %2129 = vmatprep.subr.bf16.mxu0 0
      %2130 = vmatpush1.bf16.msra.mxu0 0
      %2131 = vmatprep.subr.bf16.mxu0 0
      %2132 = vmatpush1.bf16.msra.mxu0 0
      %2133 = vmatprep.subr.bf16.mxu0 0
      %2134 = vmatpush1.bf16.msra.mxu0 0
      %2135 = vmatprep.subr.bf16.mxu0 0
      %2136 = vmatpush1.bf16.msra.mxu0 0
      %2137 = vmatprep.subr.bf16.mxu0 0
      %2138 = vmatpush1.bf16.msra.mxu0 0
      %2139 = vmatprep.subr.bf16.mxu0 0
      %2140 = vmatpush1.bf16.msra.mxu0 0
      %2141 = vmatprep.subr.bf16.mxu0 0
      %2142 = vmatpush1.bf16.msra.mxu0 0
      %2143 = vmatprep.subr.bf16.mxu0 0
      %2144 = vmatpush1.bf16.msra.mxu0 0
      %2145 = vmatprep.subr.bf16.mxu0 0
      %2146 = vmatpush1.bf16.msra.mxu0 0
      %2147 = vmatprep.subr.bf16.mxu0 0
      %2148 = vmatpush1.bf16.msra.mxu0 0
      %2149 = vmatprep.subr.bf16.mxu0 0
      %2150 = vmatpush1.bf16.msra.mxu0 0
      %2151 = vmatprep.mubr.bf16.mxu0 0
      %2152 = vmatmul.mubr.bf16.gmra.mrb[0].mxu0 %v2108
      %v2153 = vpop.f32.mrb[0].mxu0
      %v2154 = vadd.f32 0.0, %v2153
      %v2155 = vpop.f32.mrb[0].mxu0
      %v2156 = vpop.f32.mrb[0].mxu0
      %v2157 = vadd.f32 0.0, %v2156
      %v2158 = vpop.f32.mrb[0].mxu0
      %2159 = vmatprep.mubr.bf16.mxu0 0
      %2160 = vmatmul.mubr.bf16.gmra.mrb[0].mxu0 %v2111
      %v2161 = vpop.f32.mrb[0].mxu0
      %v2162 = vadd.f32 0.0, %v2161
      %v2163 = vpop.f32.mrb[0].mxu0
      %v2164 = vpop.f32.mrb[0].mxu0
      %v2165 = vadd.f32 0.0, %v2164
      %v2166 = vpop.f32.mrb[0].mxu0
      %2167 = vmatprep.mubr.bf16.mxu0 0
      %2168 = vmatmul.mubr.bf16.gmra.mrb[0].mxu0 %v2114
      %v2169 = vpop.f32.mrb[0].mxu0
      %v2170 = vadd.f32 0.0, %v2169
      %v2171 = vpop.f32.mrb[0].mxu0
      %v2172 = vpop.f32.mrb[0].mxu0
      %v2173 = vadd.f32 0.0, %v2172
      %v2174 = vpop.f32.mrb[0].mxu0
      %2175 = vmatprep.mubr.bf16.mxu0 0
      %2176 = vmatmul.mubr.bf16.gmra.mrb[0].mxu0 %v2117
      %v2177 = vpop.f32.mrb[0].mxu0
      %v2178 = vadd.f32 0.0, %v2177
      %v2179 = vpop.f32.mrb[0].mxu0
      %v2180 = vpop.f32.mrb[0].mxu0
      %v2181 = vadd.f32 0.0, %v2180
      %v2182 = vpop.f32.mrb[0].mxu0
      %2183 = vdwg.mxu0
      %v2184 = vadd.f32 %v2022, %v2154
      %v2185 = vadd.f32 %v2023, %v2157
      %v2186 = vadd.f32 %v2024, %v2162
      %v2187 = vadd.f32 %v2025, %v2165
      %v2188 = vadd.f32 %v2026, %v2170
      %v2189 = vadd.f32 %v2027, %v2173
      %v2190 = vadd.f32 %v2028, %v2178
      %v2191 = vadd.f32 %v2029, %v2181
      %s2192 = scalar_lea.vmem [#allocation2], 16
      %v2193 = vld [vmem:[%s2192] sm:$0xf]
      %v2194 = vld [vmem:[%s2192 + $0x8] sm:$0xf]
      %v2195 = vld [vmem:[%s2192 + $0x10] sm:$0xf]
      %v2196 = vld [vmem:[%s2192 + $0x18] sm:$0xf]
      %v2197 = vld [vmem:[%s2192 + $0x20] sm:$0xf]
      %v2198 = vld [vmem:[%s2192 + $0x28] sm:$0xf]
      %v2199 = vld [vmem:[%s2192 + $0x30] sm:$0xf]
      %v2200 = vld [vmem:[%s2192 + $0x38] sm:$0xf]
      %s2201 = scalar_lea.vmem %s1, 48
      %v2202 = vld [vmem:[%s2201] sm:$0xf]
      %v2203 = vld [vmem:[%s2201 + $0x4] sm:$0xf]
      %v2212 = vunpack.c.l.b16 %v2193
      %v2213 = vunpack.c.l.b16 %v2194
      %v2214 = vunpack.c.l.b16 %v2195
      %v2215 = vunpack.c.l.b16 %v2196
      %v2216 = vunpack.c.l.b16 %v2197
      %v2217 = vunpack.c.l.b16 %v2198
      %v2218 = vunpack.c.l.b16 %v2199
      %v2219 = vunpack.c.l.b16 %v2200
      %v2220 = vpack.c.b16 %v2213, %v2212
      %v2221 = vpack.c.b16 %v2215, %v2214
      %v2222 = vpack.c.b16 %v2217, %v2216
      %v2223 = vpack.c.b16 %v2219, %v2218
      %v2226 = vunpack.c.l.b16 %v2202
      %v2227 = vunpack.c.l.b16 %v2203
      %v2228 = vpack.c.b16 %v2227, %v2226
      %v2231 = vsel %vm1328, %v2220, 0
      %v2234 = vsel %vm1328, %v2221, 0
      %v2237 = vsel %vm1328, %v2222, 0
      %v2240 = vsel %vm1328, %v2223, 0
      %2242 = vmatprep.subr.bf16.mxu0 0
      %2243 = vmatpush1.bf16.msra.mxu0 %v2228
      %2244 = vmatprep.subr.bf16.mxu0 0
      %2245 = vmatpush1.bf16.msra.mxu0 0
      %2246 = vmatprep.subr.bf16.mxu0 0
      %2247 = vmatpush1.bf16.msra.mxu0 0
      %2248 = vmatprep.subr.bf16.mxu0 0
      %2249 = vmatpush1.bf16.msra.mxu0 0
      %2250 = vmatprep.subr.bf16.mxu0 0
      %2251 = vmatpush1.bf16.msra.mxu0 0
      %2252 = vmatprep.subr.bf16.mxu0 0
      %2253 = vmatpush1.bf16.msra.mxu0 0
      %2254 = vmatprep.subr.bf16.mxu0 0
      %2255 = vmatpush1.bf16.msra.mxu0 0
      %2256 = vmatprep.subr.bf16.mxu0 0
      %2257 = vmatpush1.bf16.msra.mxu0 0
      %2258 = vmatprep.subr.bf16.mxu0 0
      %2259 = vmatpush1.bf16.msra.mxu0 0
      %2260 = vmatprep.subr.bf16.mxu0 0
      %2261 = vmatpush1.bf16.msra.mxu0 0
      %2262 = vmatprep.subr.bf16.mxu0 0
      %2263 = vmatpush1.bf16.msra.mxu0 0
      %2264 = vmatprep.subr.bf16.mxu0 0
      %2265 = vmatpush1.bf16.msra.mxu0 0
      %2266 = vmatprep.subr.bf16.mxu0 0
      %2267 = vmatpush1.bf16.msra.mxu0 0
      %2268 = vmatprep.subr.bf16.mxu0 0
      %2269 = vmatpush1.bf16.msra.mxu0 0
      %2270 = vmatprep.subr.bf16.mxu0 0
      %2271 = vmatpush1.bf16.msra.mxu0 0
      %2272 = vmatprep.subr.bf16.mxu0 0
      %2273 = vmatpush1.bf16.msra.mxu0 0
      %2274 = vmatprep.mubr.bf16.mxu0 0
      %2275 = vmatmul.mubr.bf16.gmra.mrb[0].mxu0 %v2231
      %v2276 = vpop.f32.mrb[0].mxu0
      %v2277 = vadd.f32 0.0, %v2276
      %v2278 = vpop.f32.mrb[0].mxu0
      %v2279 = vpop.f32.mrb[0].mxu0
      %v2280 = vadd.f32 0.0, %v2279
      %v2281 = vpop.f32.mrb[0].mxu0
      %2282 = vmatprep.mubr.bf16.mxu0 0
      %2283 = vmatmul.mubr.bf16.gmra.mrb[0].mxu0 %v2234
      %v2284 = vpop.f32.mrb[0].mxu0
      %v2285 = vadd.f32 0.0, %v2284
      %v2286 = vpop.f32.mrb[0].mxu0
      %v2287 = vpop.f32.mrb[0].mxu0
      %v2288 = vadd.f32 0.0, %v2287
      %v2289 = vpop.f32.mrb[0].mxu0
      %2290 = vmatprep.mubr.bf16.mxu0 0
      %2291 = vmatmul.mubr.bf16.gmra.mrb[0].mxu0 %v2237
      %v2292 = vpop.f32.mrb[0].mxu0
      %v2293 = vadd.f32 0.0, %v2292
      %v2294 = vpop.f32.mrb[0].mxu0
      %v2295 = vpop.f32.mrb[0].mxu0
      %v2296 = vadd.f32 0.0, %v2295
      %v2297 = vpop.f32.mrb[0].mxu0
      %2298 = vmatprep.mubr.bf16.mxu0 0
      %2299 = vmatmul.mubr.bf16.gmra.mrb[0].mxu0 %v2240
      %v2300 = vpop.f32.mrb[0].mxu0
      %v2301 = vadd.f32 0.0, %v2300
      %v2302 = vpop.f32.mrb[0].mxu0
      %v2303 = vpop.f32.mrb[0].mxu0
      %v2304 = vadd.f32 0.0, %v2303
      %v2305 = vpop.f32.mrb[0].mxu0
      %2306 = vdwg.mxu0
      %v2307 = vadd.f32 %v2184, %v2277
      %v2308 = vadd.f32 %v2185, %v2280
      %v2309 = vadd.f32 %v2186, %v2285
      %v2310 = vadd.f32 %v2187, %v2288
      %v2311 = vadd.f32 %v2188, %v2293
      %v2312 = vadd.f32 %v2189, %v2296
      %v2313 = vadd.f32 %v2190, %v2301
      %v2314 = vadd.f32 %v2191, %v2304
      %v2315 = vld [vmem:[%s2192] sm:$0xf]
      %v2316 = vld [vmem:[%s2192 + $0x4] sm:$0x1]
      %v2317 = vld [vmem:[%s2192 + $0x8] sm:$0xf]
      %v2318 = vld [vmem:[%s2192 + $0xc] sm:$0x1]
      %v2319 = vld [vmem:[%s2192 + $0x10] sm:$0xf]
      %v2320 = vld [vmem:[%s2192 + $0x14] sm:$0x1]
      %v2321 = vld [vmem:[%s2192 + $0x18] sm:$0xf]
      %v2322 = vld [vmem:[%s2192 + $0x1c] sm:$0x1]
      %v2323 = vld [vmem:[%s2192 + $0x20] sm:$0xf]
      %v2324 = vld [vmem:[%s2192 + $0x24] sm:$0x1]
      %v2325 = vld [vmem:[%s2192 + $0x28] sm:$0xf]
      %v2326 = vld [vmem:[%s2192 + $0x2c] sm:$0x1]
      %v2327 = vld [vmem:[%s2192 + $0x30] sm:$0xf]
      %v2328 = vld [vmem:[%s2192 + $0x34] sm:$0x1]
      %v2329 = vld [vmem:[%s2192 + $0x38] sm:$0xf]
      %v2330 = vld [vmem:[%s2192 + $0x3c] sm:$0x1]
      %v2332 = vshrl.u32 %v2315, 16
      %v2334 = vrot.slane %v2332, 4
      %v2335 = vshll.u32 %v2315, 16
      %v2337 = vrot.slane %v2335, 5
      %v2338 = vor.u32 %v2334, %v2337
      %v2339 = vrot.slane %v2338, 4
      %v2341 = vshll.u32 %v2316, 16
      %v2343 = vrot.slane %v2341, 5
      %v2344 = vsel %vm1194, %v2339, %v2343
      %v2346 = vshrl.u32 %v2317, 16
      %v2348 = vrot.slane %v2346, 4
      %v2349 = vshll.u32 %v2317, 16
      %v2351 = vrot.slane %v2349, 5
      %v2352 = vor.u32 %v2348, %v2351
      %v2353 = vrot.slane %v2352, 4
      %v2355 = vshll.u32 %v2318, 16
      %v2357 = vrot.slane %v2355, 5
      %v2358 = vsel %vm1194, %v2353, %v2357
      %v2360 = vshrl.u32 %v2319, 16
      %v2362 = vrot.slane %v2360, 4
      %v2363 = vshll.u32 %v2319, 16
      %v2365 = vrot.slane %v2363, 5
      %v2366 = vor.u32 %v2362, %v2365
      %v2367 = vrot.slane %v2366, 4
      %v2369 = vshll.u32 %v2320, 16
      %v2371 = vrot.slane %v2369, 5
      %v2372 = vsel %vm1194, %v2367, %v2371
      %v2374 = vshrl.u32 %v2321, 16
      %v2376 = vrot.slane %v2374, 4
      %v2377 = vshll.u32 %v2321, 16
      %v2379 = vrot.slane %v2377, 5
      %v2380 = vor.u32 %v2376, %v2379
      %v2381 = vrot.slane %v2380, 4
      %v2383 = vshll.u32 %v2322, 16
      %v2385 = vrot.slane %v2383, 5
      %v2386 = vsel %vm1194, %v2381, %v2385
      %v2388 = vshrl.u32 %v2323, 16
      %v2390 = vrot.slane %v2388, 4
      %v2391 = vshll.u32 %v2323, 16
      %v2393 = vrot.slane %v2391, 5
      %v2394 = vor.u32 %v2390, %v2393
      %v2395 = vrot.slane %v2394, 4
      %v2397 = vshll.u32 %v2324, 16
      %v2399 = vrot.slane %v2397, 5
      %v2400 = vsel %vm1194, %v2395, %v2399
      %v2402 = vshrl.u32 %v2325, 16
      %v2404 = vrot.slane %v2402, 4
      %v2405 = vshll.u32 %v2325, 16
      %v2407 = vrot.slane %v2405, 5
      %v2408 = vor.u32 %v2404, %v2407
      %v2409 = vrot.slane %v2408, 4
      %v2411 = vshll.u32 %v2326, 16
      %v2413 = vrot.slane %v2411, 5
      %v2414 = vsel %vm1194, %v2409, %v2413
      %v2416 = vshrl.u32 %v2327, 16
      %v2418 = vrot.slane %v2416, 4
      %v2419 = vshll.u32 %v2327, 16
      %v2421 = vrot.slane %v2419, 5
      %v2422 = vor.u32 %v2418, %v2421
      %v2423 = vrot.slane %v2422, 4
      %v2425 = vshll.u32 %v2328, 16
      %v2427 = vrot.slane %v2425, 5
      %v2428 = vsel %vm1194, %v2423, %v2427
      %v2430 = vshrl.u32 %v2329, 16
      %v2432 = vrot.slane %v2430, 4
      %v2433 = vshll.u32 %v2329, 16
      %v2435 = vrot.slane %v2433, 5
      %v2436 = vor.u32 %v2432, %v2435
      %v2437 = vrot.slane %v2436, 4
      %v2439 = vshll.u32 %v2330, 16
      %v2441 = vrot.slane %v2439, 5
      %v2442 = vsel %vm1194, %v2437, %v2441
      %s2443 = scalar_lea.vmem %s1, 56
      %v2444 = vld [vmem:[%s2443] sm:$0xf]
      %v2445 = vld [vmem:[%s2443 + $0x4] sm:$0xf]
      %v2446 = vunpack.c.l.b16 %v2344
      %v2447 = vunpack.c.l.b16 %v2358
      %v2448 = vunpack.c.l.b16 %v2372
      %v2449 = vunpack.c.l.b16 %v2386
      %v2450 = vunpack.c.l.b16 %v2400
      %v2451 = vunpack.c.l.b16 %v2414
      %v2452 = vunpack.c.l.b16 %v2428
      %v2453 = vunpack.c.l.b16 %v2442
      %v2454 = vpack.c.b16 %v2447, %v2446
      %v2455 = vpack.c.b16 %v2449, %v2448
      %v2456 = vpack.c.b16 %v2451, %v2450
      %v2457 = vpack.c.b16 %v2453, %v2452
      %v2460 = vunpack.c.l.b16 %v2444
      %v2461 = vunpack.c.l.b16 %v2445
      %v2462 = vpack.c.b16 %v2461, %v2460
      %v2465 = vsel %vm1328, %v2454, 0
      %v2468 = vsel %vm1328, %v2455, 0
      %v2471 = vsel %vm1328, %v2456, 0
      %v2474 = vsel %vm1328, %v2457, 0
      %2476 = vmatprep.subr.bf16.mxu0 0
      %2477 = vmatpush1.bf16.msra.mxu0 %v2462
      %2478 = vmatprep.subr.bf16.mxu0 0
      %2479 = vmatpush1.bf16.msra.mxu0 0
      %2480 = vmatprep.subr.bf16.mxu0 0
      %2481 = vmatpush1.bf16.msra.mxu0 0
      %2482 = vmatprep.subr.bf16.mxu0 0
      %2483 = vmatpush1.bf16.msra.mxu0 0
      %2484 = vmatprep.subr.bf16.mxu0 0
      %2485 = vmatpush1.bf16.msra.mxu0 0
      %2486 = vmatprep.subr.bf16.mxu0 0
      %2487 = vmatpush1.bf16.msra.mxu0 0
      %2488 = vmatprep.subr.bf16.mxu0 0
      %2489 = vmatpush1.bf16.msra.mxu0 0
      %2490 = vmatprep.subr.bf16.mxu0 0
      %2491 = vmatpush1.bf16.msra.mxu0 0
      %2492 = vmatprep.subr.bf16.mxu0 0
      %2493 = vmatpush1.bf16.msra.mxu0 0
      %2494 = vmatprep.subr.bf16.mxu0 0
      %2495 = vmatpush1.bf16.msra.mxu0 0
      %2496 = vmatprep.subr.bf16.mxu0 0
      %2497 = vmatpush1.bf16.msra.mxu0 0
      %2498 = vmatprep.subr.bf16.mxu0 0
      %2499 = vmatpush1.bf16.msra.mxu0 0
      %2500 = vmatprep.subr.bf16.mxu0 0
      %2501 = vmatpush1.bf16.msra.mxu0 0
      %2502 = vmatprep.subr.bf16.mxu0 0
      %2503 = vmatpush1.bf16.msra.mxu0 0
      %2504 = vmatprep.subr.bf16.mxu0 0
      %2505 = vmatpush1.bf16.msra.mxu0 0
      %2506 = vmatprep.subr.bf16.mxu0 0
      %2507 = vmatpush1.bf16.msra.mxu0 0
      %2508 = vmatprep.mubr.bf16.mxu0 0
      %2509 = vmatmul.mubr.bf16.gmra.mrb[0].mxu0 %v2465
      %v2510 = vpop.f32.mrb[0].mxu0
      %v2511 = vadd.f32 0.0, %v2510
      %v2512 = vpop.f32.mrb[0].mxu0
      %v2513 = vpop.f32.mrb[0].mxu0
      %v2514 = vadd.f32 0.0, %v2513
      %v2515 = vpop.f32.mrb[0].mxu0
      %2516 = vmatprep.mubr.bf16.mxu0 0
      %2517 = vmatmul.mubr.bf16.gmra.mrb[0].mxu0 %v2468
      %v2518 = vpop.f32.mrb[0].mxu0
      %v2519 = vadd.f32 0.0, %v2518
      %v2520 = vpop.f32.mrb[0].mxu0
      %v2521 = vpop.f32.mrb[0].mxu0
      %v2522 = vadd.f32 0.0, %v2521
      %v2523 = vpop.f32.mrb[0].mxu0
      %2524 = vmatprep.mubr.bf16.mxu0 0
      %2525 = vmatmul.mubr.bf16.gmra.mrb[0].mxu0 %v2471
      %v2526 = vpop.f32.mrb[0].mxu0
      %v2527 = vadd.f32 0.0, %v2526
      %v2528 = vpop.f32.mrb[0].mxu0
      %v2529 = vpop.f32.mrb[0].mxu0
      %v2530 = vadd.f32 0.0, %v2529
      %v2531 = vpop.f32.mrb[0].mxu0
      %2532 = vmatprep.mubr.bf16.mxu0 0
      %2533 = vmatmul.mubr.bf16.gmra.mrb[0].mxu0 %v2474
      %v2534 = vpop.f32.mrb[0].mxu0
      %v2535 = vadd.f32 0.0, %v2534
      %v2536 = vpop.f32.mrb[0].mxu0
      %v2537 = vpop.f32.mrb[0].mxu0
      %v2538 = vadd.f32 0.0, %v2537
      %v2539 = vpop.f32.mrb[0].mxu0
      %2540 = vdwg.mxu0
      %v2541 = vadd.f32 %v2307, %v2511
      %v2542 = vadd.f32 %v2308, %v2514
      %v2543 = vadd.f32 %v2309, %v2519
      %v2544 = vadd.f32 %v2310, %v2522
      %v2545 = vadd.f32 %v2311, %v2527
      %v2546 = vadd.f32 %v2312, %v2530
      %v2547 = vadd.f32 %v2313, %v2535
      %v2548 = vadd.f32 %v2314, %v2538
      %v2549 = vld [vmem:[%s2192] sm:$0xe]
      %v2550 = vld [vmem:[%s2192 + $0x8] sm:$0xe]
      %v2551 = vld [vmem:[%s2192 + $0x10] sm:$0xe]
      %v2552 = vld [vmem:[%s2192 + $0x18] sm:$0xe]
      %v2553 = vld [vmem:[%s2192 + $0x20] sm:$0xe]
      %v2554 = vld [vmem:[%s2192 + $0x28] sm:$0xe]
      %v2555 = vld [vmem:[%s2192 + $0x30] sm:$0xe]
      %v2556 = vld [vmem:[%s2192 + $0x38] sm:$0xe]
      %v2573 = vrot.slane %v2549, 5
      %v2574 = vrot.slane %v2573, 4
      %v2575 = vrot.slane %v2316, 5
      %v2576 = vsel %vm1535, %v2574, %v2575
      %v2577 = vrot.slane %v2550, 5
      %v2578 = vrot.slane %v2577, 4
      %v2579 = vrot.slane %v2318, 5
      %v2580 = vsel %vm1535, %v2578, %v2579
      %v2581 = vrot.slane %v2551, 5
      %v2582 = vrot.slane %v2581, 4
      %v2583 = vrot.slane %v2320, 5
      %v2584 = vsel %vm1535, %v2582, %v2583
      %v2585 = vrot.slane %v2552, 5
      %v2586 = vrot.slane %v2585, 4
      %v2587 = vrot.slane %v2322, 5
      %v2588 = vsel %vm1535, %v2586, %v2587
      %v2589 = vrot.slane %v2553, 5
      %v2590 = vrot.slane %v2589, 4
      %v2591 = vrot.slane %v2324, 5
      %v2592 = vsel %vm1535, %v2590, %v2591
      %v2593 = vrot.slane %v2554, 5
      %v2594 = vrot.slane %v2593, 4
      %v2595 = vrot.slane %v2326, 5
      %v2596 = vsel %vm1535, %v2594, %v2595
      %v2597 = vrot.slane %v2555, 5
      %v2598 = vrot.slane %v2597, 4
      %v2599 = vrot.slane %v2328, 5
      %v2600 = vsel %vm1535, %v2598, %v2599
      %v2601 = vrot.slane %v2556, 5
      %v2602 = vrot.slane %v2601, 4
      %v2603 = vrot.slane %v2330, 5
      %v2604 = vsel %vm1535, %v2602, %v2603
      %s2605 = scalar_lea.vmem %s1, 64
      %v2606 = vld [vmem:[%s2605] sm:$0xf]
      %v2607 = vld [vmem:[%s2605 + $0x4] sm:$0xf]
      %v2608 = vunpack.c.l.b16 %v2576
      %v2609 = vunpack.c.l.b16 %v2580
      %v2610 = vunpack.c.l.b16 %v2584
      %v2611 = vunpack.c.l.b16 %v2588
      %v2612 = vunpack.c.l.b16 %v2592
      %v2613 = vunpack.c.l.b16 %v2596
      %v2614 = vunpack.c.l.b16 %v2600
      %v2615 = vunpack.c.l.b16 %v2604
      %v2616 = vpack.c.b16 %v2609, %v2608
      %v2617 = vpack.c.b16 %v2611, %v2610
      %v2618 = vpack.c.b16 %v2613, %v2612
      %v2619 = vpack.c.b16 %v2615, %v2614
      %v2622 = vunpack.c.l.b16 %v2606
      %v2623 = vunpack.c.l.b16 %v2607
      %v2624 = vpack.c.b16 %v2623, %v2622
      %v2627 = vsel %vm1328, %v2616, 0
      %v2630 = vsel %vm1328, %v2617, 0
      %v2633 = vsel %vm1328, %v2618, 0
      %v2636 = vsel %vm1328, %v2619, 0
      %2638 = vmatprep.subr.bf16.mxu0 0
      %2639 = vmatpush1.bf16.msra.mxu0 %v2624
      %2640 = vmatprep.subr.bf16.mxu0 0
      %2641 = vmatpush1.bf16.msra.mxu0 0
      %2642 = vmatprep.subr.bf16.mxu0 0
      %2643 = vmatpush1.bf16.msra.mxu0 0
      %2644 = vmatprep.subr.bf16.mxu0 0
      %2645 = vmatpush1.bf16.msra.mxu0 0
      %2646 = vmatprep.subr.bf16.mxu0 0
      %2647 = vmatpush1.bf16.msra.mxu0 0
      %2648 = vmatprep.subr.bf16.mxu0 0
      %2649 = vmatpush1.bf16.msra.mxu0 0
      %2650 = vmatprep.subr.bf16.mxu0 0
      %2651 = vmatpush1.bf16.msra.mxu0 0
      %2652 = vmatprep.subr.bf16.mxu0 0
      %2653 = vmatpush1.bf16.msra.mxu0 0
      %2654 = vmatprep.subr.bf16.mxu0 0
      %2655 = vmatpush1.bf16.msra.mxu0 0
      %2656 = vmatprep.subr.bf16.mxu0 0
      %2657 = vmatpush1.bf16.msra.mxu0 0
      %2658 = vmatprep.subr.bf16.mxu0 0
      %2659 = vmatpush1.bf16.msra.mxu0 0
      %2660 = vmatprep.subr.bf16.mxu0 0
      %2661 = vmatpush1.bf16.msra.mxu0 0
      %2662 = vmatprep.subr.bf16.mxu0 0
      %2663 = vmatpush1.bf16.msra.mxu0 0
      %2664 = vmatprep.subr.bf16.mxu0 0
      %2665 = vmatpush1.bf16.msra.mxu0 0
      %2666 = vmatprep.subr.bf16.mxu0 0
      %2667 = vmatpush1.bf16.msra.mxu0 0
      %2668 = vmatprep.subr.bf16.mxu0 0
      %2669 = vmatpush1.bf16.msra.mxu0 0
      %2670 = vmatprep.mubr.bf16.mxu0 0
      %2671 = vmatmul.mubr.bf16.gmra.mrb[0].mxu0 %v2627
      %v2672 = vpop.f32.mrb[0].mxu0
      %v2673 = vadd.f32 0.0, %v2672
      %v2674 = vpop.f32.mrb[0].mxu0
      %v2675 = vpop.f32.mrb[0].mxu0
      %v2676 = vadd.f32 0.0, %v2675
      %v2677 = vpop.f32.mrb[0].mxu0
      %2678 = vmatprep.mubr.bf16.mxu0 0
      %2679 = vmatmul.mubr.bf16.gmra.mrb[0].mxu0 %v2630
      %v2680 = vpop.f32.mrb[0].mxu0
      %v2681 = vadd.f32 0.0, %v2680
      %v2682 = vpop.f32.mrb[0].mxu0
      %v2683 = vpop.f32.mrb[0].mxu0
      %v2684 = vadd.f32 0.0, %v2683
      %v2685 = vpop.f32.mrb[0].mxu0
      %2686 = vmatprep.mubr.bf16.mxu0 0
      %2687 = vmatmul.mubr.bf16.gmra.mrb[0].mxu0 %v2633
      %v2688 = vpop.f32.mrb[0].mxu0
      %v2689 = vadd.f32 0.0, %v2688
      %v2690 = vpop.f32.mrb[0].mxu0
      %v2691 = vpop.f32.mrb[0].mxu0
      %v2692 = vadd.f32 0.0, %v2691
      %v2693 = vpop.f32.mrb[0].mxu0
      %2694 = vmatprep.mubr.bf16.mxu0 0
      %2695 = vmatmul.mubr.bf16.gmra.mrb[0].mxu0 %v2636
      %v2696 = vpop.f32.mrb[0].mxu0
      %v2697 = vadd.f32 0.0, %v2696
      %v2698 = vpop.f32.mrb[0].mxu0
      %v2699 = vpop.f32.mrb[0].mxu0
      %v2700 = vadd.f32 0.0, %v2699
      %v2701 = vpop.f32.mrb[0].mxu0
      %2702 = vdwg.mxu0
      %v2703 = vadd.f32 %v2541, %v2673
      %v2704 = vadd.f32 %v2542, %v2676
      %v2705 = vadd.f32 %v2543, %v2681
      %v2706 = vadd.f32 %v2544, %v2684
      %v2707 = vadd.f32 %v2545, %v2689
      %v2708 = vadd.f32 %v2546, %v2692
      %v2709 = vadd.f32 %v2547, %v2697
      %v2710 = vadd.f32 %v2548, %v2700
      %s2711 = scalar_lea.vmem [#allocation2], 80
      %v2712 = vld [vmem:[%s2711] sm:$0xf]
      %v2713 = vld [vmem:[%s2711 + $0x8] sm:$0xf]
      %v2714 = vld [vmem:[%s2711 + $0x10] sm:$0xf]
      %v2715 = vld [vmem:[%s2711 + $0x18] sm:$0xf]
      %v2716 = vld [vmem:[%s2711 + $0x20] sm:$0xf]
      %v2717 = vld [vmem:[%s2711 + $0x28] sm:$0xf]
      %v2718 = vld [vmem:[%s2711 + $0x30] sm:$0xf]
      %v2719 = vld [vmem:[%s2711 + $0x38] sm:$0xf]
      %s2720 = scalar_lea.vmem %s1, 72
      %v2721 = vld [vmem:[%s2720] sm:$0xf]
      %v2722 = vld [vmem:[%s2720 + $0x4] sm:$0xf]
      %v2731 = vunpack.c.l.b16 %v2712
      %v2732 = vunpack.c.l.b16 %v2713
      %v2733 = vunpack.c.l.b16 %v2714
      %v2734 = vunpack.c.l.b16 %v2715
      %v2735 = vunpack.c.l.b16 %v2716
      %v2736 = vunpack.c.l.b16 %v2717
      %v2737 = vunpack.c.l.b16 %v2718
      %v2738 = vunpack.c.l.b16 %v2719
      %v2739 = vpack.c.b16 %v2732, %v2731
      %v2740 = vpack.c.b16 %v2734, %v2733
      %v2741 = vpack.c.b16 %v2736, %v2735
      %v2742 = vpack.c.b16 %v2738, %v2737
      %v2745 = vunpack.c.l.b16 %v2721
      %v2746 = vunpack.c.l.b16 %v2722
      %v2747 = vpack.c.b16 %v2746, %v2745
      %v2750 = vsel %vm1328, %v2739, 0
      %v2753 = vsel %vm1328, %v2740, 0
      %v2756 = vsel %vm1328, %v2741, 0
      %v2759 = vsel %vm1328, %v2742, 0
      %2761 = vmatprep.subr.bf16.mxu0 0
      %2762 = vmatpush1.bf16.msra.mxu0 %v2747
      %2763 = vmatprep.subr.bf16.mxu0 0
      %2764 = vmatpush1.bf16.msra.mxu0 0
      %2765 = vmatprep.subr.bf16.mxu0 0
      %2766 = vmatpush1.bf16.msra.mxu0 0
      %2767 = vmatprep.subr.bf16.mxu0 0
      %2768 = vmatpush1.bf16.msra.mxu0 0
      %2769 = vmatprep.subr.bf16.mxu0 0
      %2770 = vmatpush1.bf16.msra.mxu0 0
      %2771 = vmatprep.subr.bf16.mxu0 0
      %2772 = vmatpush1.bf16.msra.mxu0 0
      %2773 = vmatprep.subr.bf16.mxu0 0
      %2774 = vmatpush1.bf16.msra.mxu0 0
      %2775 = vmatprep.subr.bf16.mxu0 0
      %2776 = vmatpush1.bf16.msra.mxu0 0
      %2777 = vmatprep.subr.bf16.mxu0 0
      %2778 = vmatpush1.bf16.msra.mxu0 0
      %2779 = vmatprep.subr.bf16.mxu0 0
      %2780 = vmatpush1.bf16.msra.mxu0 0
      %2781 = vmatprep.subr.bf16.mxu0 0
      %2782 = vmatpush1.bf16.msra.mxu0 0
      %2783 = vmatprep.subr.bf16.mxu0 0
      %2784 = vmatpush1.bf16.msra.mxu0 0
      %2785 = vmatprep.subr.bf16.mxu0 0
      %2786 = vmatpush1.bf16.msra.mxu0 0
      %2787 = vmatprep.subr.bf16.mxu0 0
      %2788 = vmatpush1.bf16.msra.mxu0 0
      %2789 = vmatprep.subr.bf16.mxu0 0
      %2790 = vmatpush1.bf16.msra.mxu0 0
      %2791 = vmatprep.subr.bf16.mxu0 0
      %2792 = vmatpush1.bf16.msra.mxu0 0
      %2793 = vmatprep.mubr.bf16.mxu0 0
      %2794 = vmatmul.mubr.bf16.gmra.mrb[0].mxu0 %v2750
      %v2795 = vpop.f32.mrb[0].mxu0
      %v2796 = vadd.f32 0.0, %v2795
      %v2797 = vpop.f32.mrb[0].mxu0
      %v2798 = vpop.f32.mrb[0].mxu0
      %v2799 = vadd.f32 0.0, %v2798
      %v2800 = vpop.f32.mrb[0].mxu0
      %2801 = vmatprep.mubr.bf16.mxu0 0
      %2802 = vmatmul.mubr.bf16.gmra.mrb[0].mxu0 %v2753
      %v2803 = vpop.f32.mrb[0].mxu0
      %v2804 = vadd.f32 0.0, %v2803
      %v2805 = vpop.f32.mrb[0].mxu0
      %v2806 = vpop.f32.mrb[0].mxu0
      %v2807 = vadd.f32 0.0, %v2806
      %v2808 = vpop.f32.mrb[0].mxu0
      %2809 = vmatprep.mubr.bf16.mxu0 0
      %2810 = vmatmul.mubr.bf16.gmra.mrb[0].mxu0 %v2756
      %v2811 = vpop.f32.mrb[0].mxu0
      %v2812 = vadd.f32 0.0, %v2811
      %v2813 = vpop.f32.mrb[0].mxu0
      %v2814 = vpop.f32.mrb[0].mxu0
      %v2815 = vadd.f32 0.0, %v2814
      %v2816 = vpop.f32.mrb[0].mxu0
      %2817 = vmatprep.mubr.bf16.mxu0 0
      %2818 = vmatmul.mubr.bf16.gmra.mrb[0].mxu0 %v2759
      %v2819 = vpop.f32.mrb[0].mxu0
      %v2820 = vadd.f32 0.0, %v2819
      %v2821 = vpop.f32.mrb[0].mxu0
      %v2822 = vpop.f32.mrb[0].mxu0
      %v2823 = vadd.f32 0.0, %v2822
      %v2824 = vpop.f32.mrb[0].mxu0
      %2825 = vdwg.mxu0
      %v2826 = vadd.f32 %v2703, %v2796
      %v2827 = vadd.f32 %v2704, %v2799
      %v2828 = vadd.f32 %v2705, %v2804
      %v2829 = vadd.f32 %v2706, %v2807
      %v2830 = vadd.f32 %v2707, %v2812
      %v2831 = vadd.f32 %v2708, %v2815
      %v2832 = vadd.f32 %v2709, %v2820
      %v2833 = vadd.f32 %v2710, %v2823
      %v2834 = vld [vmem:[%s2711] sm:$0xf]
      %v2835 = vld [vmem:[%s2711 + $0x4] sm:$0x1]
      %v2836 = vld [vmem:[%s2711 + $0x8] sm:$0xf]
      %v2837 = vld [vmem:[%s2711 + $0xc] sm:$0x1]
      %v2838 = vld [vmem:[%s2711 + $0x10] sm:$0xf]
      %v2839 = vld [vmem:[%s2711 + $0x14] sm:$0x1]
      %v2840 = vld [vmem:[%s2711 + $0x18] sm:$0xf]
      %v2841 = vld [vmem:[%s2711 + $0x1c] sm:$0x1]
      %v2842 = vld [vmem:[%s2711 + $0x20] sm:$0xf]
      %v2843 = vld [vmem:[%s2711 + $0x24] sm:$0x1]
      %v2844 = vld [vmem:[%s2711 + $0x28] sm:$0xf]
      %v2845 = vld [vmem:[%s2711 + $0x2c] sm:$0x1]
      %v2846 = vld [vmem:[%s2711 + $0x30] sm:$0xf]
      %v2847 = vld [vmem:[%s2711 + $0x34] sm:$0x1]
      %v2848 = vld [vmem:[%s2711 + $0x38] sm:$0xf]
      %v2849 = vld [vmem:[%s2711 + $0x3c] sm:$0x1]
      %v2851 = vshrl.u32 %v2834, 16
      %v2853 = vrot.slane %v2851, 4
      %v2854 = vshll.u32 %v2834, 16
      %v2856 = vrot.slane %v2854, 5
      %v2857 = vor.u32 %v2853, %v2856
      %v2858 = vrot.slane %v2857, 4
      %v2860 = vshll.u32 %v2835, 16
      %v2862 = vrot.slane %v2860, 5
      %v2863 = vsel %vm1194, %v2858, %v2862
      %v2865 = vshrl.u32 %v2836, 16
      %v2867 = vrot.slane %v2865, 4
      %v2868 = vshll.u32 %v2836, 16
      %v2870 = vrot.slane %v2868, 5
      %v2871 = vor.u32 %v2867, %v2870
      %v2872 = vrot.slane %v2871, 4
      %v2874 = vshll.u32 %v2837, 16
      %v2876 = vrot.slane %v2874, 5
      %v2877 = vsel %vm1194, %v2872, %v2876
      %v2879 = vshrl.u32 %v2838, 16
      %v2881 = vrot.slane %v2879, 4
      %v2882 = vshll.u32 %v2838, 16
      %v2884 = vrot.slane %v2882, 5
      %v2885 = vor.u32 %v2881, %v2884
      %v2886 = vrot.slane %v2885, 4
      %v2888 = vshll.u32 %v2839, 16
      %v2890 = vrot.slane %v2888, 5
      %v2891 = vsel %vm1194, %v2886, %v2890
      %v2893 = vshrl.u32 %v2840, 16
      %v2895 = vrot.slane %v2893, 4
      %v2896 = vshll.u32 %v2840, 16
      %v2898 = vrot.slane %v2896, 5
      %v2899 = vor.u32 %v2895, %v2898
      %v2900 = vrot.slane %v2899, 4
      %v2902 = vshll.u32 %v2841, 16
      %v2904 = vrot.slane %v2902, 5
      %v2905 = vsel %vm1194, %v2900, %v2904
      %v2907 = vshrl.u32 %v2842, 16
      %v2909 = vrot.slane %v2907, 4
      %v2910 = vshll.u32 %v2842, 16
      %v2912 = vrot.slane %v2910, 5
      %v2913 = vor.u32 %v2909, %v2912
      %v2914 = vrot.slane %v2913, 4
      %v2916 = vshll.u32 %v2843, 16
      %v2918 = vrot.slane %v2916, 5
      %v2919 = vsel %vm1194, %v2914, %v2918
      %v2921 = vshrl.u32 %v2844, 16
      %v2923 = vrot.slane %v2921, 4
      %v2924 = vshll.u32 %v2844, 16
      %v2926 = vrot.slane %v2924, 5
      %v2927 = vor.u32 %v2923, %v2926
      %v2928 = vrot.slane %v2927, 4
      %v2930 = vshll.u32 %v2845, 16
      %v2932 = vrot.slane %v2930, 5
      %v2933 = vsel %vm1194, %v2928, %v2932
      %v2935 = vshrl.u32 %v2846, 16
      %v2937 = vrot.slane %v2935, 4
      %v2938 = vshll.u32 %v2846, 16
      %v2940 = vrot.slane %v2938, 5
      %v2941 = vor.u32 %v2937, %v2940
      %v2942 = vrot.slane %v2941, 4
      %v2944 = vshll.u32 %v2847, 16
      %v2946 = vrot.slane %v2944, 5
      %v2947 = vsel %vm1194, %v2942, %v2946
      %v2949 = vshrl.u32 %v2848, 16
      %v2951 = vrot.slane %v2949, 4
      %v2952 = vshll.u32 %v2848, 16
      %v2954 = vrot.slane %v2952, 5
      %v2955 = vor.u32 %v2951, %v2954
      %v2956 = vrot.slane %v2955, 4
      %v2958 = vshll.u32 %v2849, 16
      %v2960 = vrot.slane %v2958, 5
      %v2961 = vsel %vm1194, %v2956, %v2960
      %s2962 = scalar_lea.vmem %s1, 80
      %v2963 = vld [vmem:[%s2962] sm:$0xf]
      %v2964 = vld [vmem:[%s2962 + $0x4] sm:$0xf]
      %v2965 = vunpack.c.l.b16 %v2863
      %v2966 = vunpack.c.l.b16 %v2877
      %v2967 = vunpack.c.l.b16 %v2891
      %v2968 = vunpack.c.l.b16 %v2905
      %v2969 = vunpack.c.l.b16 %v2919
      %v2970 = vunpack.c.l.b16 %v2933
      %v2971 = vunpack.c.l.b16 %v2947
      %v2972 = vunpack.c.l.b16 %v2961
      %v2973 = vpack.c.b16 %v2966, %v2965
      %v2974 = vpack.c.b16 %v2968, %v2967
      %v2975 = vpack.c.b16 %v2970, %v2969
      %v2976 = vpack.c.b16 %v2972, %v2971
      %v2979 = vunpack.c.l.b16 %v2963
      %v2980 = vunpack.c.l.b16 %v2964
      %v2981 = vpack.c.b16 %v2980, %v2979
      %v2984 = vsel %vm1328, %v2973, 0
      %v2987 = vsel %vm1328, %v2974, 0
      %v2990 = vsel %vm1328, %v2975, 0
      %v2993 = vsel %vm1328, %v2976, 0
      %2995 = vmatprep.subr.bf16.mxu0 0
      %2996 = vmatpush1.bf16.msra.mxu0 %v2981
      %2997 = vmatprep.subr.bf16.mxu0 0
      %2998 = vmatpush1.bf16.msra.mxu0 0
      %2999 = vmatprep.subr.bf16.mxu0 0
      %3000 = vmatpush1.bf16.msra.mxu0 0
      %3001 = vmatprep.subr.bf16.mxu0 0
      %3002 = vmatpush1.bf16.msra.mxu0 0
      %3003 = vmatprep.subr.bf16.mxu0 0
      %3004 = vmatpush1.bf16.msra.mxu0 0
      %3005 = vmatprep.subr.bf16.mxu0 0
      %3006 = vmatpush1.bf16.msra.mxu0 0
      %3007 = vmatprep.subr.bf16.mxu0 0
      %3008 = vmatpush1.bf16.msra.mxu0 0
      %3009 = vmatprep.subr.bf16.mxu0 0
      %3010 = vmatpush1.bf16.msra.mxu0 0
      %3011 = vmatprep.subr.bf16.mxu0 0
      %3012 = vmatpush1.bf16.msra.mxu0 0
      %3013 = vmatprep.subr.bf16.mxu0 0
      %3014 = vmatpush1.bf16.msra.mxu0 0
      %3015 = vmatprep.subr.bf16.mxu0 0
      %3016 = vmatpush1.bf16.msra.mxu0 0
      %3017 = vmatprep.subr.bf16.mxu0 0
      %3018 = vmatpush1.bf16.msra.mxu0 0
      %3019 = vmatprep.subr.bf16.mxu0 0
      %3020 = vmatpush1.bf16.msra.mxu0 0
      %3021 = vmatprep.subr.bf16.mxu0 0
      %3022 = vmatpush1.bf16.msra.mxu0 0
      %3023 = vmatprep.subr.bf16.mxu0 0
      %3024 = vmatpush1.bf16.msra.mxu0 0
      %3025 = vmatprep.subr.bf16.mxu0 0
      %3026 = vmatpush1.bf16.msra.mxu0 0
      %3027 = vmatprep.mubr.bf16.mxu0 0
      %3028 = vmatmul.mubr.bf16.gmra.mrb[0].mxu0 %v2984
      %v3029 = vpop.f32.mrb[0].mxu0
      %v3030 = vadd.f32 0.0, %v3029
      %v3031 = vpop.f32.mrb[0].mxu0
      %v3032 = vpop.f32.mrb[0].mxu0
      %v3033 = vadd.f32 0.0, %v3032
      %v3034 = vpop.f32.mrb[0].mxu0
      %3035 = vmatprep.mubr.bf16.mxu0 0
      %3036 = vmatmul.mubr.bf16.gmra.mrb[0].mxu0 %v2987
      %v3037 = vpop.f32.mrb[0].mxu0
      %v3038 = vadd.f32 0.0, %v3037
      %v3039 = vpop.f32.mrb[0].mxu0
      %v3040 = vpop.f32.mrb[0].mxu0
      %v3041 = vadd.f32 0.0, %v3040
      %v3042 = vpop.f32.mrb[0].mxu0
      %3043 = vmatprep.mubr.bf16.mxu0 0
      %3044 = vmatmul.mubr.bf16.gmra.mrb[0].mxu0 %v2990
      %v3045 = vpop.f32.mrb[0].mxu0
      %v3046 = vadd.f32 0.0, %v3045
      %v3047 = vpop.f32.mrb[0].mxu0
      %v3048 = vpop.f32.mrb[0].mxu0
      %v3049 = vadd.f32 0.0, %v3048
      %v3050 = vpop.f32.mrb[0].mxu0
      %3051 = vmatprep.mubr.bf16.mxu0 0
      %3052 = vmatmul.mubr.bf16.gmra.mrb[0].mxu0 %v2993
      %v3053 = vpop.f32.mrb[0].mxu0
      %v3054 = vadd.f32 0.0, %v3053
      %v3055 = vpop.f32.mrb[0].mxu0
      %v3056 = vpop.f32.mrb[0].mxu0
      %v3057 = vadd.f32 0.0, %v3056
      %v3058 = vpop.f32.mrb[0].mxu0
      %3059 = vdwg.mxu0
      %v3060 = vadd.f32 %v2826, %v3030
      %v3061 = vadd.f32 %v2827, %v3033
      %v3062 = vadd.f32 %v2828, %v3038
      %v3063 = vadd.f32 %v2829, %v3041
      %v3064 = vadd.f32 %v2830, %v3046
      %v3065 = vadd.f32 %v2831, %v3049
      %v3066 = vadd.f32 %v2832, %v3054
      %v3067 = vadd.f32 %v2833, %v3057
      %v3068 = vld [vmem:[%s2711] sm:$0xe]
      %v3069 = vld [vmem:[%s2711 + $0x8] sm:$0xe]
      %v3070 = vld [vmem:[%s2711 + $0x10] sm:$0xe]
      %v3071 = vld [vmem:[%s2711 + $0x18] sm:$0xe]
      %v3072 = vld [vmem:[%s2711 + $0x20] sm:$0xe]
      %v3073 = vld [vmem:[%s2711 + $0x28] sm:$0xe]
      %v3074 = vld [vmem:[%s2711 + $0x30] sm:$0xe]
      %v3075 = vld [vmem:[%s2711 + $0x38] sm:$0xe]
      %v3092 = vrot.slane %v3068, 5
      %v3093 = vrot.slane %v3092, 4
      %v3094 = vrot.slane %v2835, 5
      %v3095 = vsel %vm1535, %v3093, %v3094
      %v3096 = vrot.slane %v3069, 5
      %v3097 = vrot.slane %v3096, 4
      %v3098 = vrot.slane %v2837, 5
      %v3099 = vsel %vm1535, %v3097, %v3098
      %v3100 = vrot.slane %v3070, 5
      %v3101 = vrot.slane %v3100, 4
      %v3102 = vrot.slane %v2839, 5
      %v3103 = vsel %vm1535, %v3101, %v3102
      %v3104 = vrot.slane %v3071, 5
      %v3105 = vrot.slane %v3104, 4
      %v3106 = vrot.slane %v2841, 5
      %v3107 = vsel %vm1535, %v3105, %v3106
      %v3108 = vrot.slane %v3072, 5
      %v3109 = vrot.slane %v3108, 4
      %v3110 = vrot.slane %v2843, 5
      %v3111 = vsel %vm1535, %v3109, %v3110
      %v3112 = vrot.slane %v3073, 5
      %v3113 = vrot.slane %v3112, 4
      %v3114 = vrot.slane %v2845, 5
      %v3115 = vsel %vm1535, %v3113, %v3114
      %v3116 = vrot.slane %v3074, 5
      %v3117 = vrot.slane %v3116, 4
      %v3118 = vrot.slane %v2847, 5
      %v3119 = vsel %vm1535, %v3117, %v3118
      %v3120 = vrot.slane %v3075, 5
      %v3121 = vrot.slane %v3120, 4
      %v3122 = vrot.slane %v2849, 5
      %v3123 = vsel %vm1535, %v3121, %v3122
      %s3124 = scalar_lea.vmem %s1, 88
      %v3125 = vld [vmem:[%s3124] sm:$0xf]
      %v3126 = vld [vmem:[%s3124 + $0x4] sm:$0xf]
      %v3127 = vunpack.c.l.b16 %v3095
      %v3128 = vunpack.c.l.b16 %v3099
      %v3129 = vunpack.c.l.b16 %v3103
      %v3130 = vunpack.c.l.b16 %v3107
      %v3131 = vunpack.c.l.b16 %v3111
      %v3132 = vunpack.c.l.b16 %v3115
      %v3133 = vunpack.c.l.b16 %v3119
      %v3134 = vunpack.c.l.b16 %v3123
      %v3135 = vpack.c.b16 %v3128, %v3127
      %v3136 = vpack.c.b16 %v3130, %v3129
      %v3137 = vpack.c.b16 %v3132, %v3131
      %v3138 = vpack.c.b16 %v3134, %v3133
      %v3141 = vunpack.c.l.b16 %v3125
      %v3142 = vunpack.c.l.b16 %v3126
      %v3143 = vpack.c.b16 %v3142, %v3141
      %v3146 = vsel %vm1328, %v3135, 0
      %v3149 = vsel %vm1328, %v3136, 0
      %v3152 = vsel %vm1328, %v3137, 0
      %v3155 = vsel %vm1328, %v3138, 0
      %3157 = vmatprep.subr.bf16.mxu0 0
      %3158 = vmatpush1.bf16.msra.mxu0 %v3143
      %3159 = vmatprep.subr.bf16.mxu0 0
      %3160 = vmatpush1.bf16.msra.mxu0 0
      %3161 = vmatprep.subr.bf16.mxu0 0
      %3162 = vmatpush1.bf16.msra.mxu0 0
      %3163 = vmatprep.subr.bf16.mxu0 0
      %3164 = vmatpush1.bf16.msra.mxu0 0
      %3165 = vmatprep.subr.bf16.mxu0 0
      %3166 = vmatpush1.bf16.msra.mxu0 0
      %3167 = vmatprep.subr.bf16.mxu0 0
      %3168 = vmatpush1.bf16.msra.mxu0 0
      %3169 = vmatprep.subr.bf16.mxu0 0
      %3170 = vmatpush1.bf16.msra.mxu0 0
      %3171 = vmatprep.subr.bf16.mxu0 0
      %3172 = vmatpush1.bf16.msra.mxu0 0
      %3173 = vmatprep.subr.bf16.mxu0 0
      %3174 = vmatpush1.bf16.msra.mxu0 0
      %3175 = vmatprep.subr.bf16.mxu0 0
      %3176 = vmatpush1.bf16.msra.mxu0 0
      %3177 = vmatprep.subr.bf16.mxu0 0
      %3178 = vmatpush1.bf16.msra.mxu0 0
      %3179 = vmatprep.subr.bf16.mxu0 0
      %3180 = vmatpush1.bf16.msra.mxu0 0
      %3181 = vmatprep.subr.bf16.mxu0 0
      %3182 = vmatpush1.bf16.msra.mxu0 0
      %3183 = vmatprep.subr.bf16.mxu0 0
      %3184 = vmatpush1.bf16.msra.mxu0 0
      %3185 = vmatprep.subr.bf16.mxu0 0
      %3186 = vmatpush1.bf16.msra.mxu0 0
      %3187 = vmatprep.subr.bf16.mxu0 0
      %3188 = vmatpush1.bf16.msra.mxu0 0
      %3189 = vmatprep.mubr.bf16.mxu0 0
      %3190 = vmatmul.mubr.bf16.gmra.mrb[0].mxu0 %v3146
      %v3191 = vpop.f32.mrb[0].mxu0
      %v3192 = vadd.f32 0.0, %v3191
      %v3193 = vpop.f32.mrb[0].mxu0
      %v3194 = vpop.f32.mrb[0].mxu0
      %v3195 = vadd.f32 0.0, %v3194
      %v3196 = vpop.f32.mrb[0].mxu0
      %3197 = vmatprep.mubr.bf16.mxu0 0
      %3198 = vmatmul.mubr.bf16.gmra.mrb[0].mxu0 %v3149
      %v3199 = vpop.f32.mrb[0].mxu0
      %v3200 = vadd.f32 0.0, %v3199
      %v3201 = vpop.f32.mrb[0].mxu0
      %v3202 = vpop.f32.mrb[0].mxu0
      %v3203 = vadd.f32 0.0, %v3202
      %v3204 = vpop.f32.mrb[0].mxu0
      %3205 = vmatprep.mubr.bf16.mxu0 0
      %3206 = vmatmul.mubr.bf16.gmra.mrb[0].mxu0 %v3152
      %v3207 = vpop.f32.mrb[0].mxu0
      %v3208 = vadd.f32 0.0, %v3207
      %v3209 = vpop.f32.mrb[0].mxu0
      %v3210 = vpop.f32.mrb[0].mxu0
      %v3211 = vadd.f32 0.0, %v3210
      %v3212 = vpop.f32.mrb[0].mxu0
      %3213 = vmatprep.mubr.bf16.mxu0 0
      %3214 = vmatmul.mubr.bf16.gmra.mrb[0].mxu0 %v3155
      %v3215 = vpop.f32.mrb[0].mxu0
      %v3216 = vadd.f32 0.0, %v3215
      %v3217 = vpop.f32.mrb[0].mxu0
      %v3218 = vpop.f32.mrb[0].mxu0
      %v3219 = vadd.f32 0.0, %v3218
      %v3220 = vpop.f32.mrb[0].mxu0
      %3221 = vdwg.mxu0
      %v3222 = vadd.f32 %v3060, %v3192
      %v3223 = vadd.f32 %v3061, %v3195
      %v3224 = vadd.f32 %v3062, %v3200
      %v3225 = vadd.f32 %v3063, %v3203
      %v3226 = vadd.f32 %v3064, %v3208
      %v3227 = vadd.f32 %v3065, %v3211
      %v3228 = vadd.f32 %v3066, %v3216
      %v3229 = vadd.f32 %v3067, %v3219
      %v3230 = vld [vmem:[%s885] sm:$0xf]
      %v3231 = vld [vmem:[%s885 + $0x8] sm:$0xf]
      %v3232 = vld [vmem:[%s885 + $0x10] sm:$0xf]
      %v3233 = vld [vmem:[%s885 + $0x18] sm:$0xf]
      %v3234 = vld [vmem:[%s885 + $0x20] sm:$0xf]
      %v3235 = vld [vmem:[%s885 + $0x28] sm:$0xf]
      %v3236 = vld [vmem:[%s885 + $0x30] sm:$0xf]
      %v3237 = vld [vmem:[%s885 + $0x38] sm:$0xf]
      %s3238 = scalar_lea.vmem %s1, 96
      %v3239 = vld [vmem:[%s3238] sm:$0xf]
      %v3240 = vld [vmem:[%s3238 + $0x4] sm:$0xf]
      %v3249 = vunpack.c.l.b16 %v3230
      %v3250 = vunpack.c.l.b16 %v3231
      %v3251 = vunpack.c.l.b16 %v3232
      %v3252 = vunpack.c.l.b16 %v3233
      %v3253 = vunpack.c.l.b16 %v3234
      %v3254 = vunpack.c.l.b16 %v3235
      %v3255 = vunpack.c.l.b16 %v3236
      %v3256 = vunpack.c.l.b16 %v3237
      %v3257 = vpack.c.b16 %v3250, %v3249
      %v3258 = vpack.c.b16 %v3252, %v3251
      %v3259 = vpack.c.b16 %v3254, %v3253
      %v3260 = vpack.c.b16 %v3256, %v3255
      %v3263 = vunpack.c.l.b16 %v3239
      %v3264 = vunpack.c.l.b16 %v3240
      %v3265 = vpack.c.b16 %v3264, %v3263
      %v3268 = vsel %vm1328, %v3257, 0
      %v3271 = vsel %vm1328, %v3258, 0
      %v3274 = vsel %vm1328, %v3259, 0
      %v3277 = vsel %vm1328, %v3260, 0
      %3279 = vmatprep.subr.bf16.mxu0 0
      %3280 = vmatpush1.bf16.msra.mxu0 %v3265
      %3281 = vmatprep.subr.bf16.mxu0 0
      %3282 = vmatpush1.bf16.msra.mxu0 0
      %3283 = vmatprep.subr.bf16.mxu0 0
      %3284 = vmatpush1.bf16.msra.mxu0 0
      %3285 = vmatprep.subr.bf16.mxu0 0
      %3286 = vmatpush1.bf16.msra.mxu0 0
      %3287 = vmatprep.subr.bf16.mxu0 0
      %3288 = vmatpush1.bf16.msra.mxu0 0
      %3289 = vmatprep.subr.bf16.mxu0 0
      %3290 = vmatpush1.bf16.msra.mxu0 0
      %3291 = vmatprep.subr.bf16.mxu0 0
      %3292 = vmatpush1.bf16.msra.mxu0 0
      %3293 = vmatprep.subr.bf16.mxu0 0
      %3294 = vmatpush1.bf16.msra.mxu0 0
      %3295 = vmatprep.subr.bf16.mxu0 0
      %3296 = vmatpush1.bf16.msra.mxu0 0
      %3297 = vmatprep.subr.bf16.mxu0 0
      %3298 = vmatpush1.bf16.msra.mxu0 0
      %3299 = vmatprep.subr.bf16.mxu0 0
      %3300 = vmatpush1.bf16.msra.mxu0 0
      %3301 = vmatprep.subr.bf16.mxu0 0
      %3302 = vmatpush1.bf16.msra.mxu0 0
      %3303 = vmatprep.subr.bf16.mxu0 0
      %3304 = vmatpush1.bf16.msra.mxu0 0
      %3305 = vmatprep.subr.bf16.mxu0 0
      %3306 = vmatpush1.bf16.msra.mxu0 0
      %3307 = vmatprep.subr.bf16.mxu0 0
      %3308 = vmatpush1.bf16.msra.mxu0 0
      %3309 = vmatprep.subr.bf16.mxu0 0
      %3310 = vmatpush1.bf16.msra.mxu0 0
      %3311 = vmatprep.mubr.bf16.mxu0 0
      %3312 = vmatmul.mubr.bf16.gmra.mrb[0].mxu0 %v3268
      %v3313 = vpop.f32.mrb[0].mxu0
      %v3314 = vadd.f32 0.0, %v3313
      %v3315 = vpop.f32.mrb[0].mxu0
      %v3316 = vpop.f32.mrb[0].mxu0
      %v3317 = vadd.f32 0.0, %v3316
      %v3318 = vpop.f32.mrb[0].mxu0
      %3319 = vmatprep.mubr.bf16.mxu0 0
      %3320 = vmatmul.mubr.bf16.gmra.mrb[0].mxu0 %v3271
      %v3321 = vpop.f32.mrb[0].mxu0
      %v3322 = vadd.f32 0.0, %v3321
      %v3323 = vpop.f32.mrb[0].mxu0
      %v3324 = vpop.f32.mrb[0].mxu0
      %v3325 = vadd.f32 0.0, %v3324
      %v3326 = vpop.f32.mrb[0].mxu0
      %3327 = vmatprep.mubr.bf16.mxu0 0
      %3328 = vmatmul.mubr.bf16.gmra.mrb[0].mxu0 %v3274
      %v3329 = vpop.f32.mrb[0].mxu0
      %v3330 = vadd.f32 0.0, %v3329
      %v3331 = vpop.f32.mrb[0].mxu0
      %v3332 = vpop.f32.mrb[0].mxu0
      %v3333 = vadd.f32 0.0, %v3332
      %v3334 = vpop.f32.mrb[0].mxu0
      %3335 = vmatprep.mubr.bf16.mxu0 0
      %3336 = vmatmul.mubr.bf16.gmra.mrb[0].mxu0 %v3277
      %v3337 = vpop.f32.mrb[0].mxu0
      %v3338 = vadd.f32 0.0, %v3337
      %v3339 = vpop.f32.mrb[0].mxu0
      %v3340 = vpop.f32.mrb[0].mxu0
      %v3341 = vadd.f32 0.0, %v3340
      %v3342 = vpop.f32.mrb[0].mxu0
      %3343 = vdwg.mxu0
      %v3344 = vadd.f32 %v3222, %v3314
      %v3345 = vadd.f32 %v3223, %v3317
      %v3346 = vadd.f32 %v3224, %v3322
      %v3347 = vadd.f32 %v3225, %v3325
      %v3348 = vadd.f32 %v3226, %v3330
      %v3349 = vadd.f32 %v3227, %v3333
      %v3350 = vadd.f32 %v3228, %v3338
      %v3351 = vadd.f32 %v3229, %v3341
      %v3352 = vld [vmem:[%s885] sm:$0xf]
      %v3353 = vld [vmem:[%s885 + $0x4] sm:$0x1]
      %v3354 = vld [vmem:[%s885 + $0x8] sm:$0xf]
      %v3355 = vld [vmem:[%s885 + $0xc] sm:$0x1]
      %v3356 = vld [vmem:[%s885 + $0x10] sm:$0xf]
      %v3357 = vld [vmem:[%s885 + $0x14] sm:$0x1]
      %v3358 = vld [vmem:[%s885 + $0x18] sm:$0xf]
      %v3359 = vld [vmem:[%s885 + $0x1c] sm:$0x1]
      %v3360 = vld [vmem:[%s885 + $0x20] sm:$0xf]
      %v3361 = vld [vmem:[%s885 + $0x24] sm:$0x1]
      %v3362 = vld [vmem:[%s885 + $0x28] sm:$0xf]
      %v3363 = vld [vmem:[%s885 + $0x2c] sm:$0x1]
      %v3364 = vld [vmem:[%s885 + $0x30] sm:$0xf]
      %v3365 = vld [vmem:[%s885 + $0x34] sm:$0x1]
      %v3366 = vld [vmem:[%s885 + $0x38] sm:$0xf]
      %v3367 = vld [vmem:[%s885 + $0x3c] sm:$0x1]
      %v3369 = vshrl.u32 %v3352, 16
      %v3371 = vrot.slane %v3369, 4
      %v3372 = vshll.u32 %v3352, 16
      %v3374 = vrot.slane %v3372, 5
      %v3375 = vor.u32 %v3371, %v3374
      %v3376 = vrot.slane %v3375, 4
      %v3378 = vshll.u32 %v3353, 16
      %v3380 = vrot.slane %v3378, 5
      %v3381 = vsel %vm1194, %v3376, %v3380
      %v3383 = vshrl.u32 %v3354, 16
      %v3385 = vrot.slane %v3383, 4
      %v3386 = vshll.u32 %v3354, 16
      %v3388 = vrot.slane %v3386, 5
      %v3389 = vor.u32 %v3385, %v3388
      %v3390 = vrot.slane %v3389, 4
      %v3392 = vshll.u32 %v3355, 16
      %v3394 = vrot.slane %v3392, 5
      %v3395 = vsel %vm1194, %v3390, %v3394
      %v3397 = vshrl.u32 %v3356, 16
      %v3399 = vrot.slane %v3397, 4
      %v3400 = vshll.u32 %v3356, 16
      %v3402 = vrot.slane %v3400, 5
      %v3403 = vor.u32 %v3399, %v3402
      %v3404 = vrot.slane %v3403, 4
      %v3406 = vshll.u32 %v3357, 16
      %v3408 = vrot.slane %v3406, 5
      %v3409 = vsel %vm1194, %v3404, %v3408
      %v3411 = vshrl.u32 %v3358, 16
      %v3413 = vrot.slane %v3411, 4
      %v3414 = vshll.u32 %v3358, 16
      %v3416 = vrot.slane %v3414, 5
      %v3417 = vor.u32 %v3413, %v3416
      %v3418 = vrot.slane %v3417, 4
      %v3420 = vshll.u32 %v3359, 16
      %v3422 = vrot.slane %v3420, 5
      %v3423 = vsel %vm1194, %v3418, %v3422
      %v3425 = vshrl.u32 %v3360, 16
      %v3427 = vrot.slane %v3425, 4
      %v3428 = vshll.u32 %v3360, 16
      %v3430 = vrot.slane %v3428, 5
      %v3431 = vor.u32 %v3427, %v3430
      %v3432 = vrot.slane %v3431, 4
      %v3434 = vshll.u32 %v3361, 16
      %v3436 = vrot.slane %v3434, 5
      %v3437 = vsel %vm1194, %v3432, %v3436
      %v3439 = vshrl.u32 %v3362, 16
      %v3441 = vrot.slane %v3439, 4
      %v3442 = vshll.u32 %v3362, 16
      %v3444 = vrot.slane %v3442, 5
      %v3445 = vor.u32 %v3441, %v3444
      %v3446 = vrot.slane %v3445, 4
      %v3448 = vshll.u32 %v3363, 16
      %v3450 = vrot.slane %v3448, 5
      %v3451 = vsel %vm1194, %v3446, %v3450
      %v3453 = vshrl.u32 %v3364, 16
      %v3455 = vrot.slane %v3453, 4
      %v3456 = vshll.u32 %v3364, 16
      %v3458 = vrot.slane %v3456, 5
      %v3459 = vor.u32 %v3455, %v3458
      %v3460 = vrot.slane %v3459, 4
      %v3462 = vshll.u32 %v3365, 16
      %v3464 = vrot.slane %v3462, 5
      %v3465 = vsel %vm1194, %v3460, %v3464
      %v3467 = vshrl.u32 %v3366, 16
      %v3469 = vrot.slane %v3467, 4
      %v3470 = vshll.u32 %v3366, 16
      %v3472 = vrot.slane %v3470, 5
      %v3473 = vor.u32 %v3469, %v3472
      %v3474 = vrot.slane %v3473, 4
      %v3476 = vshll.u32 %v3367, 16
      %v3478 = vrot.slane %v3476, 5
      %v3479 = vsel %vm1194, %v3474, %v3478
      %s3480 = scalar_lea.vmem %s1, 104
      %v3481 = vld [vmem:[%s3480] sm:$0xf]
      %v3482 = vld [vmem:[%s3480 + $0x4] sm:$0xf]
      %v3483 = vunpack.c.l.b16 %v3381
      %v3484 = vunpack.c.l.b16 %v3395
      %v3485 = vunpack.c.l.b16 %v3409
      %v3486 = vunpack.c.l.b16 %v3423
      %v3487 = vunpack.c.l.b16 %v3437
      %v3488 = vunpack.c.l.b16 %v3451
      %v3489 = vunpack.c.l.b16 %v3465
      %v3490 = vunpack.c.l.b16 %v3479
      %v3491 = vpack.c.b16 %v3484, %v3483
      %v3492 = vpack.c.b16 %v3486, %v3485
      %v3493 = vpack.c.b16 %v3488, %v3487
      %v3494 = vpack.c.b16 %v3490, %v3489
      %v3497 = vunpack.c.l.b16 %v3481
      %v3498 = vunpack.c.l.b16 %v3482
      %v3499 = vpack.c.b16 %v3498, %v3497
      %v3502 = vsel %vm1328, %v3491, 0
      %v3505 = vsel %vm1328, %v3492, 0
      %v3508 = vsel %vm1328, %v3493, 0
      %v3511 = vsel %vm1328, %v3494, 0
      %3513 = vmatprep.subr.bf16.mxu0 0
      %3514 = vmatpush1.bf16.msra.mxu0 %v3499
      %3515 = vmatprep.subr.bf16.mxu0 0
      %3516 = vmatpush1.bf16.msra.mxu0 0
      %3517 = vmatprep.subr.bf16.mxu0 0
      %3518 = vmatpush1.bf16.msra.mxu0 0
      %3519 = vmatprep.subr.bf16.mxu0 0
      %3520 = vmatpush1.bf16.msra.mxu0 0
      %3521 = vmatprep.subr.bf16.mxu0 0
      %3522 = vmatpush1.bf16.msra.mxu0 0
      %3523 = vmatprep.subr.bf16.mxu0 0
      %3524 = vmatpush1.bf16.msra.mxu0 0
      %3525 = vmatprep.subr.bf16.mxu0 0
      %3526 = vmatpush1.bf16.msra.mxu0 0
      %3527 = vmatprep.subr.bf16.mxu0 0
      %3528 = vmatpush1.bf16.msra.mxu0 0
      %3529 = vmatprep.subr.bf16.mxu0 0
      %3530 = vmatpush1.bf16.msra.mxu0 0
      %3531 = vmatprep.subr.bf16.mxu0 0
      %3532 = vmatpush1.bf16.msra.mxu0 0
      %3533 = vmatprep.subr.bf16.mxu0 0
      %3534 = vmatpush1.bf16.msra.mxu0 0
      %3535 = vmatprep.subr.bf16.mxu0 0
      %3536 = vmatpush1.bf16.msra.mxu0 0
      %3537 = vmatprep.subr.bf16.mxu0 0
      %3538 = vmatpush1.bf16.msra.mxu0 0
      %3539 = vmatprep.subr.bf16.mxu0 0
      %3540 = vmatpush1.bf16.msra.mxu0 0
      %3541 = vmatprep.subr.bf16.mxu0 0
      %3542 = vmatpush1.bf16.msra.mxu0 0
      %3543 = vmatprep.subr.bf16.mxu0 0
      %3544 = vmatpush1.bf16.msra.mxu0 0
      %3545 = vmatprep.mubr.bf16.mxu0 0
      %3546 = vmatmul.mubr.bf16.gmra.mrb[0].mxu0 %v3502
      %v3547 = vpop.f32.mrb[0].mxu0
      %v3548 = vadd.f32 0.0, %v3547
      %v3549 = vpop.f32.mrb[0].mxu0
      %v3550 = vpop.f32.mrb[0].mxu0
      %v3551 = vadd.f32 0.0, %v3550
      %v3552 = vpop.f32.mrb[0].mxu0
      %3553 = vmatprep.mubr.bf16.mxu0 0
      %3554 = vmatmul.mubr.bf16.gmra.mrb[0].mxu0 %v3505
      %v3555 = vpop.f32.mrb[0].mxu0
      %v3556 = vadd.f32 0.0, %v3555
      %v3557 = vpop.f32.mrb[0].mxu0
      %v3558 = vpop.f32.mrb[0].mxu0
      %v3559 = vadd.f32 0.0, %v3558
      %v3560 = vpop.f32.mrb[0].mxu0
      %3561 = vmatprep.mubr.bf16.mxu0 0
      %3562 = vmatmul.mubr.bf16.gmra.mrb[0].mxu0 %v3508
      %v3563 = vpop.f32.mrb[0].mxu0
      %v3564 = vadd.f32 0.0, %v3563
      %v3565 = vpop.f32.mrb[0].mxu0
      %v3566 = vpop.f32.mrb[0].mxu0
      %v3567 = vadd.f32 0.0, %v3566
      %v3568 = vpop.f32.mrb[0].mxu0
      %3569 = vmatprep.mubr.bf16.mxu0 0
      %3570 = vmatmul.mubr.bf16.gmra.mrb[0].mxu0 %v3511
      %v3571 = vpop.f32.mrb[0].mxu0
      %v3572 = vadd.f32 0.0, %v3571
      %v3573 = vpop.f32.mrb[0].mxu0
      %v3574 = vpop.f32.mrb[0].mxu0
      %v3575 = vadd.f32 0.0, %v3574
      %v3576 = vpop.f32.mrb[0].mxu0
      %3577 = vdwg.mxu0
      %v3578 = vadd.f32 %v3344, %v3548
      %v3579 = vadd.f32 %v3345, %v3551
      %v3580 = vadd.f32 %v3346, %v3556
      %v3581 = vadd.f32 %v3347, %v3559
      %v3582 = vadd.f32 %v3348, %v3564
      %v3583 = vadd.f32 %v3349, %v3567
      %v3584 = vadd.f32 %v3350, %v3572
      %v3585 = vadd.f32 %v3351, %v3575
      %v3586 = vld [vmem:[%s885] sm:$0xe]
      %v3587 = vld [vmem:[%s885 + $0x8] sm:$0xe]
      %v3588 = vld [vmem:[%s885 + $0x10] sm:$0xe]
      %v3589 = vld [vmem:[%s885 + $0x18] sm:$0xe]
      %v3590 = vld [vmem:[%s885 + $0x20] sm:$0xe]
      %v3591 = vld [vmem:[%s885 + $0x28] sm:$0xe]
      %v3592 = vld [vmem:[%s885 + $0x30] sm:$0xe]
      %v3593 = vld [vmem:[%s885 + $0x38] sm:$0xe]
      %v3610 = vrot.slane %v3586, 5
      %v3611 = vrot.slane %v3610, 4
      %v3612 = vrot.slane %v3353, 5
      %v3613 = vsel %vm1535, %v3611, %v3612
      %v3614 = vrot.slane %v3587, 5
      %v3615 = vrot.slane %v3614, 4
      %v3616 = vrot.slane %v3355, 5
      %v3617 = vsel %vm1535, %v3615, %v3616
      %v3618 = vrot.slane %v3588, 5
      %v3619 = vrot.slane %v3618, 4
      %v3620 = vrot.slane %v3357, 5
      %v3621 = vsel %vm1535, %v3619, %v3620
      %v3622 = vrot.slane %v3589, 5
      %v3623 = vrot.slane %v3622, 4
      %v3624 = vrot.slane %v3359, 5
      %v3625 = vsel %vm1535, %v3623, %v3624
      %v3626 = vrot.slane %v3590, 5
      %v3627 = vrot.slane %v3626, 4
      %v3628 = vrot.slane %v3361, 5
      %v3629 = vsel %vm1535, %v3627, %v3628
      %v3630 = vrot.slane %v3591, 5
      %v3631 = vrot.slane %v3630, 4
      %v3632 = vrot.slane %v3363, 5
      %v3633 = vsel %vm1535, %v3631, %v3632
      %v3634 = vrot.slane %v3592, 5
      %v3635 = vrot.slane %v3634, 4
      %v3636 = vrot.slane %v3365, 5
      %v3637 = vsel %vm1535, %v3635, %v3636
      %v3638 = vrot.slane %v3593, 5
      %v3639 = vrot.slane %v3638, 4
      %v3640 = vrot.slane %v3367, 5
      %v3641 = vsel %vm1535, %v3639, %v3640
      %s3642 = scalar_lea.vmem %s1, 112
      %v3643 = vld [vmem:[%s3642] sm:$0xf]
      %v3644 = vld [vmem:[%s3642 + $0x4] sm:$0xf]
      %v3645 = vunpack.c.l.b16 %v3613
      %v3646 = vunpack.c.l.b16 %v3617
      %v3647 = vunpack.c.l.b16 %v3621
      %v3648 = vunpack.c.l.b16 %v3625
      %v3649 = vunpack.c.l.b16 %v3629
      %v3650 = vunpack.c.l.b16 %v3633
      %v3651 = vunpack.c.l.b16 %v3637
      %v3652 = vunpack.c.l.b16 %v3641
      %v3653 = vpack.c.b16 %v3646, %v3645
      %v3654 = vpack.c.b16 %v3648, %v3647
      %v3655 = vpack.c.b16 %v3650, %v3649
      %v3656 = vpack.c.b16 %v3652, %v3651
      %v3659 = vunpack.c.l.b16 %v3643
      %v3660 = vunpack.c.l.b16 %v3644
      %v3661 = vpack.c.b16 %v3660, %v3659
      %v3664 = vsel %vm1328, %v3653, 0
      %v3667 = vsel %vm1328, %v3654, 0
      %v3670 = vsel %vm1328, %v3655, 0
      %v3673 = vsel %vm1328, %v3656, 0
      %3675 = vmatprep.subr.bf16.mxu0 0
      %3676 = vmatpush1.bf16.msra.mxu0 %v3661
      %3677 = vmatprep.subr.bf16.mxu0 0
      %3678 = vmatpush1.bf16.msra.mxu0 0
      %3679 = vmatprep.subr.bf16.mxu0 0
      %3680 = vmatpush1.bf16.msra.mxu0 0
      %3681 = vmatprep.subr.bf16.mxu0 0
      %3682 = vmatpush1.bf16.msra.mxu0 0
      %3683 = vmatprep.subr.bf16.mxu0 0
      %3684 = vmatpush1.bf16.msra.mxu0 0
      %3685 = vmatprep.subr.bf16.mxu0 0
      %3686 = vmatpush1.bf16.msra.mxu0 0
      %3687 = vmatprep.subr.bf16.mxu0 0
      %3688 = vmatpush1.bf16.msra.mxu0 0
      %3689 = vmatprep.subr.bf16.mxu0 0
      %3690 = vmatpush1.bf16.msra.mxu0 0
      %3691 = vmatprep.subr.bf16.mxu0 0
      %3692 = vmatpush1.bf16.msra.mxu0 0
      %3693 = vmatprep.subr.bf16.mxu0 0
      %3694 = vmatpush1.bf16.msra.mxu0 0
      %3695 = vmatprep.subr.bf16.mxu0 0
      %3696 = vmatpush1.bf16.msra.mxu0 0
      %3697 = vmatprep.subr.bf16.mxu0 0
      %3698 = vmatpush1.bf16.msra.mxu0 0
      %3699 = vmatprep.subr.bf16.mxu0 0
      %3700 = vmatpush1.bf16.msra.mxu0 0
      %3701 = vmatprep.subr.bf16.mxu0 0
      %3702 = vmatpush1.bf16.msra.mxu0 0
      %3703 = vmatprep.subr.bf16.mxu0 0
      %3704 = vmatpush1.bf16.msra.mxu0 0
      %3705 = vmatprep.subr.bf16.mxu0 0
      %3706 = vmatpush1.bf16.msra.mxu0 0
      %3707 = vmatprep.mubr.bf16.mxu0 0
      %3708 = vmatmul.mubr.bf16.gmra.mrb[0].mxu0 %v3664
      %v3709 = vpop.f32.mrb[0].mxu0
      %v3710 = vadd.f32 0.0, %v3709
      %v3711 = vpop.f32.mrb[0].mxu0
      %v3712 = vpop.f32.mrb[0].mxu0
      %v3713 = vadd.f32 0.0, %v3712
      %v3714 = vpop.f32.mrb[0].mxu0
      %3715 = vmatprep.mubr.bf16.mxu0 0
      %3716 = vmatmul.mubr.bf16.gmra.mrb[0].mxu0 %v3667
      %v3717 = vpop.f32.mrb[0].mxu0
      %v3718 = vadd.f32 0.0, %v3717
      %v3719 = vpop.f32.mrb[0].mxu0
      %v3720 = vpop.f32.mrb[0].mxu0
      %v3721 = vadd.f32 0.0, %v3720
      %v3722 = vpop.f32.mrb[0].mxu0
      %3723 = vmatprep.mubr.bf16.mxu0 0
      %3724 = vmatmul.mubr.bf16.gmra.mrb[0].mxu0 %v3670
      %v3725 = vpop.f32.mrb[0].mxu0
      %v3726 = vadd.f32 0.0, %v3725
      %v3727 = vpop.f32.mrb[0].mxu0
      %v3728 = vpop.f32.mrb[0].mxu0
      %v3729 = vadd.f32 0.0, %v3728
      %v3730 = vpop.f32.mrb[0].mxu0
      %3731 = vmatprep.mubr.bf16.mxu0 0
      %3732 = vmatmul.mubr.bf16.gmra.mrb[0].mxu0 %v3673
      %v3733 = vpop.f32.mrb[0].mxu0
      %v3734 = vadd.f32 0.0, %v3733
      %v3735 = vpop.f32.mrb[0].mxu0
      %v3736 = vpop.f32.mrb[0].mxu0
      %v3737 = vadd.f32 0.0, %v3736
      %v3738 = vpop.f32.mrb[0].mxu0
      %3739 = vdwg.mxu0
      %v3740 = vadd.f32 %v3578, %v3710
      %v3741 = vadd.f32 %v3579, %v3713
      %v3742 = vadd.f32 %v3580, %v3718
      %v3743 = vadd.f32 %v3581, %v3721
      %v3744 = vadd.f32 %v3582, %v3726
      %v3745 = vadd.f32 %v3583, %v3729
      %v3746 = vadd.f32 %v3584, %v3734
      %v3747 = vadd.f32 %v3585, %v3737
      %s3748 = scalar_lea.vmem [#allocation2], 96
      %v3749 = vld [vmem:[%s3748] sm:$0xf]
      %v3750 = vld [vmem:[%s3748 + $0x8] sm:$0xf]
      %v3751 = vld [vmem:[%s3748 + $0x10] sm:$0xf]
      %v3752 = vld [vmem:[%s3748 + $0x18] sm:$0xf]
      %v3753 = vld [vmem:[%s3748 + $0x20] sm:$0xf]
      %v3754 = vld [vmem:[%s3748 + $0x28] sm:$0xf]
      %v3755 = vld [vmem:[%s3748 + $0x30] sm:$0xf]
      %v3756 = vld [vmem:[%s3748 + $0x38] sm:$0xf]
      %s3757 = scalar_lea.vmem %s1, 120
      %v3758 = vld [vmem:[%s3757] sm:$0xf]
      %v3759 = vld [vmem:[%s3757 + $0x4] sm:$0xf]
      %v3768 = vunpack.c.l.b16 %v3749
      %v3769 = vunpack.c.l.b16 %v3750
      %v3770 = vunpack.c.l.b16 %v3751
      %v3771 = vunpack.c.l.b16 %v3752
      %v3772 = vunpack.c.l.b16 %v3753
      %v3773 = vunpack.c.l.b16 %v3754
      %v3774 = vunpack.c.l.b16 %v3755
      %v3775 = vunpack.c.l.b16 %v3756
      %v3776 = vpack.c.b16 %v3769, %v3768
      %v3777 = vpack.c.b16 %v3771, %v3770
      %v3778 = vpack.c.b16 %v3773, %v3772
      %v3779 = vpack.c.b16 %v3775, %v3774
      %v3782 = vunpack.c.l.b16 %v3758
      %v3783 = vunpack.c.l.b16 %v3759
      %v3784 = vpack.c.b16 %v3783, %v3782
      %v3787 = vsel %vm1328, %v3776, 0
      %v3790 = vsel %vm1328, %v3777, 0
      %v3793 = vsel %vm1328, %v3778, 0
      %v3796 = vsel %vm1328, %v3779, 0
      %3798 = vmatprep.subr.bf16.mxu0 0
      %3799 = vmatpush1.bf16.msra.mxu0 %v3784
      %3800 = vmatprep.subr.bf16.mxu0 0
      %3801 = vmatpush1.bf16.msra.mxu0 0
      %3802 = vmatprep.subr.bf16.mxu0 0
      %3803 = vmatpush1.bf16.msra.mxu0 0
      %3804 = vmatprep.subr.bf16.mxu0 0
      %3805 = vmatpush1.bf16.msra.mxu0 0
      %3806 = vmatprep.subr.bf16.mxu0 0
      %3807 = vmatpush1.bf16.msra.mxu0 0
      %3808 = vmatprep.subr.bf16.mxu0 0
      %3809 = vmatpush1.bf16.msra.mxu0 0
      %3810 = vmatprep.subr.bf16.mxu0 0
      %3811 = vmatpush1.bf16.msra.mxu0 0
      %3812 = vmatprep.subr.bf16.mxu0 0
      %3813 = vmatpush1.bf16.msra.mxu0 0
      %3814 = vmatprep.subr.bf16.mxu0 0
      %3815 = vmatpush1.bf16.msra.mxu0 0
      %3816 = vmatprep.subr.bf16.mxu0 0
      %3817 = vmatpush1.bf16.msra.mxu0 0
      %3818 = vmatprep.subr.bf16.mxu0 0
      %3819 = vmatpush1.bf16.msra.mxu0 0
      %3820 = vmatprep.subr.bf16.mxu0 0
      %3821 = vmatpush1.bf16.msra.mxu0 0
      %3822 = vmatprep.subr.bf16.mxu0 0
      %3823 = vmatpush1.bf16.msra.mxu0 0
      %3824 = vmatprep.subr.bf16.mxu0 0
      %3825 = vmatpush1.bf16.msra.mxu0 0
      %3826 = vmatprep.subr.bf16.mxu0 0
      %3827 = vmatpush1.bf16.msra.mxu0 0
      %3828 = vmatprep.subr.bf16.mxu0 0
      %3829 = vmatpush1.bf16.msra.mxu0 0
      %3830 = vmatprep.mubr.bf16.mxu0 0
      %3831 = vmatmul.mubr.bf16.gmra.mrb[0].mxu0 %v3787
      %v3832 = vpop.f32.mrb[0].mxu0
      %v3833 = vadd.f32 0.0, %v3832
      %v3834 = vpop.f32.mrb[0].mxu0
      %v3835 = vpop.f32.mrb[0].mxu0
      %v3836 = vadd.f32 0.0, %v3835
      %v3837 = vpop.f32.mrb[0].mxu0
      %3838 = vmatprep.mubr.bf16.mxu0 0
      %3839 = vmatmul.mubr.bf16.gmra.mrb[0].mxu0 %v3790
      %v3840 = vpop.f32.mrb[0].mxu0
      %v3841 = vadd.f32 0.0, %v3840
      %v3842 = vpop.f32.mrb[0].mxu0
      %v3843 = vpop.f32.mrb[0].mxu0
      %v3844 = vadd.f32 0.0, %v3843
      %v3845 = vpop.f32.mrb[0].mxu0
      %3846 = vmatprep.mubr.bf16.mxu0 0
      %3847 = vmatmul.mubr.bf16.gmra.mrb[0].mxu0 %v3793
      %v3848 = vpop.f32.mrb[0].mxu0
      %v3849 = vadd.f32 0.0, %v3848
      %v3850 = vpop.f32.mrb[0].mxu0
      %v3851 = vpop.f32.mrb[0].mxu0
      %v3852 = vadd.f32 0.0, %v3851
      %v3853 = vpop.f32.mrb[0].mxu0
      %3854 = vmatprep.mubr.bf16.mxu0 0
      %3855 = vmatmul.mubr.bf16.gmra.mrb[0].mxu0 %v3796
      %v3856 = vpop.f32.mrb[0].mxu0
      %v3857 = vadd.f32 0.0, %v3856
      %v3858 = vpop.f32.mrb[0].mxu0
      %v3859 = vpop.f32.mrb[0].mxu0
      %v3860 = vadd.f32 0.0, %v3859
      %v3861 = vpop.f32.mrb[0].mxu0
      %3862 = vdwg.mxu0
      %v3863 = vadd.f32 %v3740, %v3833
      %v3864 = vadd.f32 %v3741, %v3836
      %v3865 = vadd.f32 %v3742, %v3841
      %v3866 = vadd.f32 %v3743, %v3844
      %v3867 = vadd.f32 %v3744, %v3849
      %v3868 = vadd.f32 %v3745, %v3852
      %v3869 = vadd.f32 %v3746, %v3857
      %v3870 = vadd.f32 %v3747, %v3860
      %v3871 = vld [vmem:[%s3748] sm:$0xf]
      %v3872 = vld [vmem:[%s3748 + $0x4] sm:$0x1]
      %v3873 = vld [vmem:[%s3748 + $0x8] sm:$0xf]
      %v3874 = vld [vmem:[%s3748 + $0xc] sm:$0x1]
      %v3875 = vld [vmem:[%s3748 + $0x10] sm:$0xf]
      %v3876 = vld [vmem:[%s3748 + $0x14] sm:$0x1]
      %v3877 = vld [vmem:[%s3748 + $0x18] sm:$0xf]
      %v3878 = vld [vmem:[%s3748 + $0x1c] sm:$0x1]
      %v3879 = vld [vmem:[%s3748 + $0x20] sm:$0xf]
      %v3880 = vld [vmem:[%s3748 + $0x24] sm:$0x1]
      %v3881 = vld [vmem:[%s3748 + $0x28] sm:$0xf]
      %v3882 = vld [vmem:[%s3748 + $0x2c] sm:$0x1]
      %v3883 = vld [vmem:[%s3748 + $0x30] sm:$0xf]
      %v3884 = vld [vmem:[%s3748 + $0x34] sm:$0x1]
      %v3885 = vld [vmem:[%s3748 + $0x38] sm:$0xf]
      %v3886 = vld [vmem:[%s3748 + $0x3c] sm:$0x1]
      %v3888 = vshrl.u32 %v3871, 16
      %v3890 = vrot.slane %v3888, 4
      %v3891 = vshll.u32 %v3871, 16
      %v3893 = vrot.slane %v3891, 5
      %v3894 = vor.u32 %v3890, %v3893
      %v3895 = vrot.slane %v3894, 4
      %v3897 = vshll.u32 %v3872, 16
      %v3899 = vrot.slane %v3897, 5
      %v3900 = vsel %vm1194, %v3895, %v3899
      %v3902 = vshrl.u32 %v3873, 16
      %v3904 = vrot.slane %v3902, 4
      %v3905 = vshll.u32 %v3873, 16
      %v3907 = vrot.slane %v3905, 5
      %v3908 = vor.u32 %v3904, %v3907
      %v3909 = vrot.slane %v3908, 4
      %v3911 = vshll.u32 %v3874, 16
      %v3913 = vrot.slane %v3911, 5
      %v3914 = vsel %vm1194, %v3909, %v3913
      %v3916 = vshrl.u32 %v3875, 16
      %v3918 = vrot.slane %v3916, 4
      %v3919 = vshll.u32 %v3875, 16
      %v3921 = vrot.slane %v3919, 5
      %v3922 = vor.u32 %v3918, %v3921
      %v3923 = vrot.slane %v3922, 4
      %v3925 = vshll.u32 %v3876, 16
      %v3927 = vrot.slane %v3925, 5
      %v3928 = vsel %vm1194, %v3923, %v3927
      %v3930 = vshrl.u32 %v3877, 16
      %v3932 = vrot.slane %v3930, 4
      %v3933 = vshll.u32 %v3877, 16
      %v3935 = vrot.slane %v3933, 5
      %v3936 = vor.u32 %v3932, %v3935
      %v3937 = vrot.slane %v3936, 4
      %v3939 = vshll.u32 %v3878, 16
      %v3941 = vrot.slane %v3939, 5
      %v3942 = vsel %vm1194, %v3937, %v3941
      %v3944 = vshrl.u32 %v3879, 16
      %v3946 = vrot.slane %v3944, 4
      %v3947 = vshll.u32 %v3879, 16
      %v3949 = vrot.slane %v3947, 5
      %v3950 = vor.u32 %v3946, %v3949
      %v3951 = vrot.slane %v3950, 4
      %v3953 = vshll.u32 %v3880, 16
      %v3955 = vrot.slane %v3953, 5
      %v3956 = vsel %vm1194, %v3951, %v3955
      %v3958 = vshrl.u32 %v3881, 16
      %v3960 = vrot.slane %v3958, 4
      %v3961 = vshll.u32 %v3881, 16
      %v3963 = vrot.slane %v3961, 5
      %v3964 = vor.u32 %v3960, %v3963
      %v3965 = vrot.slane %v3964, 4
      %v3967 = vshll.u32 %v3882, 16
      %v3969 = vrot.slane %v3967, 5
      %v3970 = vsel %vm1194, %v3965, %v3969
      %v3972 = vshrl.u32 %v3883, 16
      %v3974 = vrot.slane %v3972, 4
      %v3975 = vshll.u32 %v3883, 16
      %v3977 = vrot.slane %v3975, 5
      %v3978 = vor.u32 %v3974, %v3977
      %v3979 = vrot.slane %v3978, 4
      %v3981 = vshll.u32 %v3884, 16
      %v3983 = vrot.slane %v3981, 5
      %v3984 = vsel %vm1194, %v3979, %v3983
      %v3986 = vshrl.u32 %v3885, 16
      %v3988 = vrot.slane %v3986, 4
      %v3989 = vshll.u32 %v3885, 16
      %v3991 = vrot.slane %v3989, 5
      %v3992 = vor.u32 %v3988, %v3991
      %v3993 = vrot.slane %v3992, 4
      %v3995 = vshll.u32 %v3886, 16
      %v3997 = vrot.slane %v3995, 5
      %v3998 = vsel %vm1194, %v3993, %v3997
      %s3999 = scalar_lea.vmem %s1, 128
      %v4000 = vld [vmem:[%s3999] sm:$0xf]
      %v4001 = vld [vmem:[%s3999 + $0x4] sm:$0xf]
      %v4002 = vunpack.c.l.b16 %v3900
      %v4003 = vunpack.c.l.b16 %v3914
      %v4004 = vunpack.c.l.b16 %v3928
      %v4005 = vunpack.c.l.b16 %v3942
      %v4006 = vunpack.c.l.b16 %v3956
      %v4007 = vunpack.c.l.b16 %v3970
      %v4008 = vunpack.c.l.b16 %v3984
      %v4009 = vunpack.c.l.b16 %v3998
      %v4010 = vpack.c.b16 %v4003, %v4002
      %v4011 = vpack.c.b16 %v4005, %v4004
      %v4012 = vpack.c.b16 %v4007, %v4006
      %v4013 = vpack.c.b16 %v4009, %v4008
      %v4016 = vunpack.c.l.b16 %v4000
      %v4017 = vunpack.c.l.b16 %v4001
      %v4018 = vpack.c.b16 %v4017, %v4016
      %v4021 = vsel %vm1328, %v4010, 0
      %v4024 = vsel %vm1328, %v4011, 0
      %v4027 = vsel %vm1328, %v4012, 0
      %v4030 = vsel %vm1328, %v4013, 0
      %4032 = vmatprep.subr.bf16.mxu0 0
      %4033 = vmatpush1.bf16.msra.mxu0 %v4018
      %4034 = vmatprep.subr.bf16.mxu0 0
      %4035 = vmatpush1.bf16.msra.mxu0 0
      %4036 = vmatprep.subr.bf16.mxu0 0
      %4037 = vmatpush1.bf16.msra.mxu0 0
      %4038 = vmatprep.subr.bf16.mxu0 0
      %4039 = vmatpush1.bf16.msra.mxu0 0
      %4040 = vmatprep.subr.bf16.mxu0 0
      %4041 = vmatpush1.bf16.msra.mxu0 0
      %4042 = vmatprep.subr.bf16.mxu0 0
      %4043 = vmatpush1.bf16.msra.mxu0 0
      %4044 = vmatprep.subr.bf16.mxu0 0
      %4045 = vmatpush1.bf16.msra.mxu0 0
      %4046 = vmatprep.subr.bf16.mxu0 0
      %4047 = vmatpush1.bf16.msra.mxu0 0
      %4048 = vmatprep.subr.bf16.mxu0 0
      %4049 = vmatpush1.bf16.msra.mxu0 0
      %4050 = vmatprep.subr.bf16.mxu0 0
      %4051 = vmatpush1.bf16.msra.mxu0 0
      %4052 = vmatprep.subr.bf16.mxu0 0
      %4053 = vmatpush1.bf16.msra.mxu0 0
      %4054 = vmatprep.subr.bf16.mxu0 0
      %4055 = vmatpush1.bf16.msra.mxu0 0
      %4056 = vmatprep.subr.bf16.mxu0 0
      %4057 = vmatpush1.bf16.msra.mxu0 0
      %4058 = vmatprep.subr.bf16.mxu0 0
      %4059 = vmatpush1.bf16.msra.mxu0 0
      %4060 = vmatprep.subr.bf16.mxu0 0
      %4061 = vmatpush1.bf16.msra.mxu0 0
      %4062 = vmatprep.subr.bf16.mxu0 0
      %4063 = vmatpush1.bf16.msra.mxu0 0
      %4064 = vmatprep.mubr.bf16.mxu0 0
      %4065 = vmatmul.mubr.bf16.gmra.mrb[0].mxu0 %v4021
      %v4066 = vpop.f32.mrb[0].mxu0
      %v4067 = vadd.f32 0.0, %v4066
      %v4068 = vpop.f32.mrb[0].mxu0
      %v4069 = vpop.f32.mrb[0].mxu0
      %v4070 = vadd.f32 0.0, %v4069
      %v4071 = vpop.f32.mrb[0].mxu0
      %4072 = vmatprep.mubr.bf16.mxu0 0
      %4073 = vmatmul.mubr.bf16.gmra.mrb[0].mxu0 %v4024
      %v4074 = vpop.f32.mrb[0].mxu0
      %v4075 = vadd.f32 0.0, %v4074
      %v4076 = vpop.f32.mrb[0].mxu0
      %v4077 = vpop.f32.mrb[0].mxu0
      %v4078 = vadd.f32 0.0, %v4077
      %v4079 = vpop.f32.mrb[0].mxu0
      %4080 = vmatprep.mubr.bf16.mxu0 0
      %4081 = vmatmul.mubr.bf16.gmra.mrb[0].mxu0 %v4027
      %v4082 = vpop.f32.mrb[0].mxu0
      %v4083 = vadd.f32 0.0, %v4082
      %v4084 = vpop.f32.mrb[0].mxu0
      %v4085 = vpop.f32.mrb[0].mxu0
      %v4086 = vadd.f32 0.0, %v4085
      %v4087 = vpop.f32.mrb[0].mxu0
      %4088 = vmatprep.mubr.bf16.mxu0 0
      %4089 = vmatmul.mubr.bf16.gmra.mrb[0].mxu0 %v4030
      %v4090 = vpop.f32.mrb[0].mxu0
      %v4091 = vadd.f32 0.0, %v4090
      %v4092 = vpop.f32.mrb[0].mxu0
      %v4093 = vpop.f32.mrb[0].mxu0
      %v4094 = vadd.f32 0.0, %v4093
      %v4095 = vpop.f32.mrb[0].mxu0
      %4096 = vdwg.mxu0
      %v4097 = vadd.f32 %v3863, %v4067
      %v4098 = vadd.f32 %v3864, %v4070
      %v4099 = vadd.f32 %v3865, %v4075
      %v4100 = vadd.f32 %v3866, %v4078
      %v4101 = vadd.f32 %v3867, %v4083
      %v4102 = vadd.f32 %v3868, %v4086
      %v4103 = vadd.f32 %v3869, %v4091
      %v4104 = vadd.f32 %v3870, %v4094
      %v4105 = vld [vmem:[%s3748] sm:$0xe]
      %v4106 = vld [vmem:[%s3748 + $0x8] sm:$0xe]
      %v4107 = vld [vmem:[%s3748 + $0x10] sm:$0xe]
      %v4108 = vld [vmem:[%s3748 + $0x18] sm:$0xe]
      %v4109 = vld [vmem:[%s3748 + $0x20] sm:$0xe]
      %v4110 = vld [vmem:[%s3748 + $0x28] sm:$0xe]
      %v4111 = vld [vmem:[%s3748 + $0x30] sm:$0xe]
      %v4112 = vld [vmem:[%s3748 + $0x38] sm:$0xe]
      %v4129 = vrot.slane %v4105, 5
      %v4130 = vrot.slane %v4129, 4
      %v4131 = vrot.slane %v3872, 5
      %v4132 = vsel %vm1535, %v4130, %v4131
      %v4133 = vrot.slane %v4106, 5
      %v4134 = vrot.slane %v4133, 4
      %v4135 = vrot.slane %v3874, 5
      %v4136 = vsel %vm1535, %v4134, %v4135
      %v4137 = vrot.slane %v4107, 5
      %v4138 = vrot.slane %v4137, 4
      %v4139 = vrot.slane %v3876, 5
      %v4140 = vsel %vm1535, %v4138, %v4139
      %v4141 = vrot.slane %v4108, 5
      %v4142 = vrot.slane %v4141, 4
      %v4143 = vrot.slane %v3878, 5
      %v4144 = vsel %vm1535, %v4142, %v4143
      %v4145 = vrot.slane %v4109, 5
      %v4146 = vrot.slane %v4145, 4
      %v4147 = vrot.slane %v3880, 5
      %v4148 = vsel %vm1535, %v4146, %v4147
      %v4149 = vrot.slane %v4110, 5
      %v4150 = vrot.slane %v4149, 4
      %v4151 = vrot.slane %v3882, 5
      %v4152 = vsel %vm1535, %v4150, %v4151
      %v4153 = vrot.slane %v4111, 5
      %v4154 = vrot.slane %v4153, 4
      %v4155 = vrot.slane %v3884, 5
      %v4156 = vsel %vm1535, %v4154, %v4155
      %v4157 = vrot.slane %v4112, 5
      %v4158 = vrot.slane %v4157, 4
      %v4159 = vrot.slane %v3886, 5
      %v4160 = vsel %vm1535, %v4158, %v4159
      %s4161 = scalar_lea.vmem %s1, 136
      %v4162 = vld [vmem:[%s4161] sm:$0xf]
      %v4163 = vld [vmem:[%s4161 + $0x4] sm:$0xf]
      %v4164 = vunpack.c.l.b16 %v4132
      %v4165 = vunpack.c.l.b16 %v4136
      %v4166 = vunpack.c.l.b16 %v4140
      %v4167 = vunpack.c.l.b16 %v4144
      %v4168 = vunpack.c.l.b16 %v4148
      %v4169 = vunpack.c.l.b16 %v4152
      %v4170 = vunpack.c.l.b16 %v4156
      %v4171 = vunpack.c.l.b16 %v4160
      %v4172 = vpack.c.b16 %v4165, %v4164
      %v4173 = vpack.c.b16 %v4167, %v4166
      %v4174 = vpack.c.b16 %v4169, %v4168
      %v4175 = vpack.c.b16 %v4171, %v4170
      %v4178 = vunpack.c.l.b16 %v4162
      %v4179 = vunpack.c.l.b16 %v4163
      %v4180 = vpack.c.b16 %v4179, %v4178
      %v4183 = vsel %vm1328, %v4172, 0
      %v4186 = vsel %vm1328, %v4173, 0
      %v4189 = vsel %vm1328, %v4174, 0
      %v4192 = vsel %vm1328, %v4175, 0
      %4194 = vmatprep.subr.bf16.mxu0 0
      %4195 = vmatpush1.bf16.msra.mxu0 %v4180
      %4196 = vmatprep.subr.bf16.mxu0 0
      %4197 = vmatpush1.bf16.msra.mxu0 0
      %4198 = vmatprep.subr.bf16.mxu0 0
      %4199 = vmatpush1.bf16.msra.mxu0 0
      %4200 = vmatprep.subr.bf16.mxu0 0
      %4201 = vmatpush1.bf16.msra.mxu0 0
      %4202 = vmatprep.subr.bf16.mxu0 0
      %4203 = vmatpush1.bf16.msra.mxu0 0
      %4204 = vmatprep.subr.bf16.mxu0 0
      %4205 = vmatpush1.bf16.msra.mxu0 0
      %4206 = vmatprep.subr.bf16.mxu0 0
      %4207 = vmatpush1.bf16.msra.mxu0 0
      %4208 = vmatprep.subr.bf16.mxu0 0
      %4209 = vmatpush1.bf16.msra.mxu0 0
      %4210 = vmatprep.subr.bf16.mxu0 0
      %4211 = vmatpush1.bf16.msra.mxu0 0
      %4212 = vmatprep.subr.bf16.mxu0 0
      %4213 = vmatpush1.bf16.msra.mxu0 0
      %4214 = vmatprep.subr.bf16.mxu0 0
      %4215 = vmatpush1.bf16.msra.mxu0 0
      %4216 = vmatprep.subr.bf16.mxu0 0
      %4217 = vmatpush1.bf16.msra.mxu0 0
      %4218 = vmatprep.subr.bf16.mxu0 0
      %4219 = vmatpush1.bf16.msra.mxu0 0
      %4220 = vmatprep.subr.bf16.mxu0 0
      %4221 = vmatpush1.bf16.msra.mxu0 0
      %4222 = vmatprep.subr.bf16.mxu0 0
      %4223 = vmatpush1.bf16.msra.mxu0 0
      %4224 = vmatprep.subr.bf16.mxu0 0
      %4225 = vmatpush1.bf16.msra.mxu0 0
      %4226 = vmatprep.mubr.bf16.mxu0 0
      %4227 = vmatmul.mubr.bf16.gmra.mrb[0].mxu0 %v4183
      %v4228 = vpop.f32.mrb[0].mxu0
      %v4229 = vadd.f32 0.0, %v4228
      %v4230 = vpop.f32.mrb[0].mxu0
      %v4231 = vpop.f32.mrb[0].mxu0
      %v4232 = vadd.f32 0.0, %v4231
      %v4233 = vpop.f32.mrb[0].mxu0
      %4234 = vmatprep.mubr.bf16.mxu0 0
      %4235 = vmatmul.mubr.bf16.gmra.mrb[0].mxu0 %v4186
      %v4236 = vpop.f32.mrb[0].mxu0
      %v4237 = vadd.f32 0.0, %v4236
      %v4238 = vpop.f32.mrb[0].mxu0
      %v4239 = vpop.f32.mrb[0].mxu0
      %v4240 = vadd.f32 0.0, %v4239
      %v4241 = vpop.f32.mrb[0].mxu0
      %4242 = vmatprep.mubr.bf16.mxu0 0
      %4243 = vmatmul.mubr.bf16.gmra.mrb[0].mxu0 %v4189
      %v4244 = vpop.f32.mrb[0].mxu0
      %v4245 = vadd.f32 0.0, %v4244
      %v4246 = vpop.f32.mrb[0].mxu0
      %v4247 = vpop.f32.mrb[0].mxu0
      %v4248 = vadd.f32 0.0, %v4247
      %v4249 = vpop.f32.mrb[0].mxu0
      %4250 = vmatprep.mubr.bf16.mxu0 0
      %4251 = vmatmul.mubr.bf16.gmra.mrb[0].mxu0 %v4192
      %v4252 = vpop.f32.mrb[0].mxu0
      %v4253 = vadd.f32 0.0, %v4252
      %v4254 = vpop.f32.mrb[0].mxu0
      %v4255 = vpop.f32.mrb[0].mxu0
      %v4256 = vadd.f32 0.0, %v4255
      %v4257 = vpop.f32.mrb[0].mxu0
      %4258 = vdwg.mxu0
      %v4259 = vadd.f32 %v4097, %v4229
      %v4260 = vadd.f32 %v4098, %v4232
      %v4261 = vadd.f32 %v4099, %v4237
      %v4262 = vadd.f32 %v4100, %v4240
      %v4263 = vadd.f32 %v4101, %v4245
      %v4264 = vadd.f32 %v4102, %v4248
      %v4265 = vadd.f32 %v4103, %v4253
      %v4266 = vadd.f32 %v4104, %v4256
      %s4267 = scalar_lea.vmem [#allocation2], 160
      %v4268 = vld [vmem:[%s4267] sm:$0xf]
      %v4269 = vld [vmem:[%s4267 + $0x8] sm:$0xf]
      %v4270 = vld [vmem:[%s4267 + $0x10] sm:$0xf]
      %v4271 = vld [vmem:[%s4267 + $0x18] sm:$0xf]
      %v4272 = vld [vmem:[%s4267 + $0x20] sm:$0xf]
      %v4273 = vld [vmem:[%s4267 + $0x28] sm:$0xf]
      %v4274 = vld [vmem:[%s4267 + $0x30] sm:$0xf]
      %v4275 = vld [vmem:[%s4267 + $0x38] sm:$0xf]
      %s4276 = scalar_lea.vmem %s1, 144
      %v4277 = vld [vmem:[%s4276] sm:$0xf]
      %v4278 = vld [vmem:[%s4276 + $0x4] sm:$0xf]
      %v4287 = vunpack.c.l.b16 %v4268
      %v4288 = vunpack.c.l.b16 %v4269
      %v4289 = vunpack.c.l.b16 %v4270
      %v4290 = vunpack.c.l.b16 %v4271
      %v4291 = vunpack.c.l.b16 %v4272
      %v4292 = vunpack.c.l.b16 %v4273
      %v4293 = vunpack.c.l.b16 %v4274
      %v4294 = vunpack.c.l.b16 %v4275
      %v4295 = vpack.c.b16 %v4288, %v4287
      %v4296 = vpack.c.b16 %v4290, %v4289
      %v4297 = vpack.c.b16 %v4292, %v4291
      %v4298 = vpack.c.b16 %v4294, %v4293
      %v4301 = vunpack.c.l.b16 %v4277
      %v4302 = vunpack.c.l.b16 %v4278
      %v4303 = vpack.c.b16 %v4302, %v4301
      %v4306 = vsel %vm1328, %v4295, 0
      %v4309 = vsel %vm1328, %v4296, 0
      %v4312 = vsel %vm1328, %v4297, 0
      %v4315 = vsel %vm1328, %v4298, 0
      %4317 = vmatprep.subr.bf16.mxu0 0
      %4318 = vmatpush1.bf16.msra.mxu0 %v4303
      %4319 = vmatprep.subr.bf16.mxu0 0
      %4320 = vmatpush1.bf16.msra.mxu0 0
      %4321 = vmatprep.subr.bf16.mxu0 0
      %4322 = vmatpush1.bf16.msra.mxu0 0
      %4323 = vmatprep.subr.bf16.mxu0 0
      %4324 = vmatpush1.bf16.msra.mxu0 0
      %4325 = vmatprep.subr.bf16.mxu0 0
      %4326 = vmatpush1.bf16.msra.mxu0 0
      %4327 = vmatprep.subr.bf16.mxu0 0
      %4328 = vmatpush1.bf16.msra.mxu0 0
      %4329 = vmatprep.subr.bf16.mxu0 0
      %4330 = vmatpush1.bf16.msra.mxu0 0
      %4331 = vmatprep.subr.bf16.mxu0 0
      %4332 = vmatpush1.bf16.msra.mxu0 0
      %4333 = vmatprep.subr.bf16.mxu0 0
      %4334 = vmatpush1.bf16.msra.mxu0 0
      %4335 = vmatprep.subr.bf16.mxu0 0
      %4336 = vmatpush1.bf16.msra.mxu0 0
      %4337 = vmatprep.subr.bf16.mxu0 0
      %4338 = vmatpush1.bf16.msra.mxu0 0
      %4339 = vmatprep.subr.bf16.mxu0 0
      %4340 = vmatpush1.bf16.msra.mxu0 0
      %4341 = vmatprep.subr.bf16.mxu0 0
      %4342 = vmatpush1.bf16.msra.mxu0 0
      %4343 = vmatprep.subr.bf16.mxu0 0
      %4344 = vmatpush1.bf16.msra.mxu0 0
      %4345 = vmatprep.subr.bf16.mxu0 0
      %4346 = vmatpush1.bf16.msra.mxu0 0
      %4347 = vmatprep.subr.bf16.mxu0 0
      %4348 = vmatpush1.bf16.msra.mxu0 0
      %4349 = vmatprep.mubr.bf16.mxu0 0
      %4350 = vmatmul.mubr.bf16.gmra.mrb[0].mxu0 %v4306
      %v4351 = vpop.f32.mrb[0].mxu0
      %v4352 = vadd.f32 0.0, %v4351
      %v4353 = vpop.f32.mrb[0].mxu0
      %v4354 = vpop.f32.mrb[0].mxu0
      %v4355 = vadd.f32 0.0, %v4354
      %v4356 = vpop.f32.mrb[0].mxu0
      %4357 = vmatprep.mubr.bf16.mxu0 0
      %4358 = vmatmul.mubr.bf16.gmra.mrb[0].mxu0 %v4309
      %v4359 = vpop.f32.mrb[0].mxu0
      %v4360 = vadd.f32 0.0, %v4359
      %v4361 = vpop.f32.mrb[0].mxu0
      %v4362 = vpop.f32.mrb[0].mxu0
      %v4363 = vadd.f32 0.0, %v4362
      %v4364 = vpop.f32.mrb[0].mxu0
      %4365 = vmatprep.mubr.bf16.mxu0 0
      %4366 = vmatmul.mubr.bf16.gmra.mrb[0].mxu0 %v4312
      %v4367 = vpop.f32.mrb[0].mxu0
      %v4368 = vadd.f32 0.0, %v4367
      %v4369 = vpop.f32.mrb[0].mxu0
      %v4370 = vpop.f32.mrb[0].mxu0
      %v4371 = vadd.f32 0.0, %v4370
      %v4372 = vpop.f32.mrb[0].mxu0
      %4373 = vmatprep.mubr.bf16.mxu0 0
      %4374 = vmatmul.mubr.bf16.gmra.mrb[0].mxu0 %v4315
      %v4375 = vpop.f32.mrb[0].mxu0
      %v4376 = vadd.f32 0.0, %v4375
      %v4377 = vpop.f32.mrb[0].mxu0
      %v4378 = vpop.f32.mrb[0].mxu0
      %v4379 = vadd.f32 0.0, %v4378
      %v4380 = vpop.f32.mrb[0].mxu0
      %4381 = vdwg.mxu0
      %v4382 = vadd.f32 %v4259, %v4352
      %v4383 = vadd.f32 %v4260, %v4355
      %v4384 = vadd.f32 %v4261, %v4360
      %v4385 = vadd.f32 %v4262, %v4363
      %v4386 = vadd.f32 %v4263, %v4368
      %v4387 = vadd.f32 %v4264, %v4371
      %v4388 = vadd.f32 %v4265, %v4376
      %v4389 = vadd.f32 %v4266, %v4379
      %v4390 = vld [vmem:[%s4267] sm:$0xf]
      %v4391 = vld [vmem:[%s4267 + $0x4] sm:$0x1]
      %v4392 = vld [vmem:[%s4267 + $0x8] sm:$0xf]
      %v4393 = vld [vmem:[%s4267 + $0xc] sm:$0x1]
      %v4394 = vld [vmem:[%s4267 + $0x10] sm:$0xf]
      %v4395 = vld [vmem:[%s4267 + $0x14] sm:$0x1]
      %v4396 = vld [vmem:[%s4267 + $0x18] sm:$0xf]
      %v4397 = vld [vmem:[%s4267 + $0x1c] sm:$0x1]
      %v4398 = vld [vmem:[%s4267 + $0x20] sm:$0xf]
      %v4399 = vld [vmem:[%s4267 + $0x24] sm:$0x1]
      %v4400 = vld [vmem:[%s4267 + $0x28] sm:$0xf]
      %v4401 = vld [vmem:[%s4267 + $0x2c] sm:$0x1]
      %v4402 = vld [vmem:[%s4267 + $0x30] sm:$0xf]
      %v4403 = vld [vmem:[%s4267 + $0x34] sm:$0x1]
      %v4404 = vld [vmem:[%s4267 + $0x38] sm:$0xf]
      %v4405 = vld [vmem:[%s4267 + $0x3c] sm:$0x1]
      %v4407 = vshrl.u32 %v4390, 16
      %v4409 = vrot.slane %v4407, 4
      %v4410 = vshll.u32 %v4390, 16
      %v4412 = vrot.slane %v4410, 5
      %v4413 = vor.u32 %v4409, %v4412
      %v4414 = vrot.slane %v4413, 4
      %v4416 = vshll.u32 %v4391, 16
      %v4418 = vrot.slane %v4416, 5
      %v4419 = vsel %vm1194, %v4414, %v4418
      %v4421 = vshrl.u32 %v4392, 16
      %v4423 = vrot.slane %v4421, 4
      %v4424 = vshll.u32 %v4392, 16
      %v4426 = vrot.slane %v4424, 5
      %v4427 = vor.u32 %v4423, %v4426
      %v4428 = vrot.slane %v4427, 4
      %v4430 = vshll.u32 %v4393, 16
      %v4432 = vrot.slane %v4430, 5
      %v4433 = vsel %vm1194, %v4428, %v4432
      %v4435 = vshrl.u32 %v4394, 16
      %v4437 = vrot.slane %v4435, 4
      %v4438 = vshll.u32 %v4394, 16
      %v4440 = vrot.slane %v4438, 5
      %v4441 = vor.u32 %v4437, %v4440
      %v4442 = vrot.slane %v4441, 4
      %v4444 = vshll.u32 %v4395, 16
      %v4446 = vrot.slane %v4444, 5
      %v4447 = vsel %vm1194, %v4442, %v4446
      %v4449 = vshrl.u32 %v4396, 16
      %v4451 = vrot.slane %v4449, 4
      %v4452 = vshll.u32 %v4396, 16
      %v4454 = vrot.slane %v4452, 5
      %v4455 = vor.u32 %v4451, %v4454
      %v4456 = vrot.slane %v4455, 4
      %v4458 = vshll.u32 %v4397, 16
      %v4460 = vrot.slane %v4458, 5
      %v4461 = vsel %vm1194, %v4456, %v4460
      %v4463 = vshrl.u32 %v4398, 16
      %v4465 = vrot.slane %v4463, 4
      %v4466 = vshll.u32 %v4398, 16
      %v4468 = vrot.slane %v4466, 5
      %v4469 = vor.u32 %v4465, %v4468
      %v4470 = vrot.slane %v4469, 4
      %v4472 = vshll.u32 %v4399, 16
      %v4474 = vrot.slane %v4472, 5
      %v4475 = vsel %vm1194, %v4470, %v4474
      %v4477 = vshrl.u32 %v4400, 16
      %v4479 = vrot.slane %v4477, 4
      %v4480 = vshll.u32 %v4400, 16
      %v4482 = vrot.slane %v4480, 5
      %v4483 = vor.u32 %v4479, %v4482
      %v4484 = vrot.slane %v4483, 4
      %v4486 = vshll.u32 %v4401, 16
      %v4488 = vrot.slane %v4486, 5
      %v4489 = vsel %vm1194, %v4484, %v4488
      %v4491 = vshrl.u32 %v4402, 16
      %v4493 = vrot.slane %v4491, 4
      %v4494 = vshll.u32 %v4402, 16
      %v4496 = vrot.slane %v4494, 5
      %v4497 = vor.u32 %v4493, %v4496
      %v4498 = vrot.slane %v4497, 4
      %v4500 = vshll.u32 %v4403, 16
      %v4502 = vrot.slane %v4500, 5
      %v4503 = vsel %vm1194, %v4498, %v4502
      %v4505 = vshrl.u32 %v4404, 16
      %v4507 = vrot.slane %v4505, 4
      %v4508 = vshll.u32 %v4404, 16
      %v4510 = vrot.slane %v4508, 5
      %v4511 = vor.u32 %v4507, %v4510
      %v4512 = vrot.slane %v4511, 4
      %v4514 = vshll.u32 %v4405, 16
      %v4516 = vrot.slane %v4514, 5
      %v4517 = vsel %vm1194, %v4512, %v4516
      %s4518 = scalar_lea.vmem %s1, 152
      %v4519 = vld [vmem:[%s4518] sm:$0xf]
      %v4520 = vld [vmem:[%s4518 + $0x4] sm:$0xf]
      %v4521 = vunpack.c.l.b16 %v4419
      %v4522 = vunpack.c.l.b16 %v4433
      %v4523 = vunpack.c.l.b16 %v4447
      %v4524 = vunpack.c.l.b16 %v4461
      %v4525 = vunpack.c.l.b16 %v4475
      %v4526 = vunpack.c.l.b16 %v4489
      %v4527 = vunpack.c.l.b16 %v4503
      %v4528 = vunpack.c.l.b16 %v4517
      %v4529 = vpack.c.b16 %v4522, %v4521
      %v4530 = vpack.c.b16 %v4524, %v4523
      %v4531 = vpack.c.b16 %v4526, %v4525
      %v4532 = vpack.c.b16 %v4528, %v4527
      %v4535 = vunpack.c.l.b16 %v4519
      %v4536 = vunpack.c.l.b16 %v4520
      %v4537 = vpack.c.b16 %v4536, %v4535
      %v4540 = vsel %vm1328, %v4529, 0
      %v4543 = vsel %vm1328, %v4530, 0
      %v4546 = vsel %vm1328, %v4531, 0
      %v4549 = vsel %vm1328, %v4532, 0
      %4551 = vmatprep.subr.bf16.mxu0 0
      %4552 = vmatpush1.bf16.msra.mxu0 %v4537
      %4553 = vmatprep.subr.bf16.mxu0 0
      %4554 = vmatpush1.bf16.msra.mxu0 0
      %4555 = vmatprep.subr.bf16.mxu0 0
      %4556 = vmatpush1.bf16.msra.mxu0 0
      %4557 = vmatprep.subr.bf16.mxu0 0
      %4558 = vmatpush1.bf16.msra.mxu0 0
      %4559 = vmatprep.subr.bf16.mxu0 0
      %4560 = vmatpush1.bf16.msra.mxu0 0
      %4561 = vmatprep.subr.bf16.mxu0 0
      %4562 = vmatpush1.bf16.msra.mxu0 0
      %4563 = vmatprep.subr.bf16.mxu0 0
      %4564 = vmatpush1.bf16.msra.mxu0 0
      %4565 = vmatprep.subr.bf16.mxu0 0
      %4566 = vmatpush1.bf16.msra.mxu0 0
      %4567 = vmatprep.subr.bf16.mxu0 0
      %4568 = vmatpush1.bf16.msra.mxu0 0
      %4569 = vmatprep.subr.bf16.mxu0 0
      %4570 = vmatpush1.bf16.msra.mxu0 0
      %4571 = vmatprep.subr.bf16.mxu0 0
      %4572 = vmatpush1.bf16.msra.mxu0 0
      %4573 = vmatprep.subr.bf16.mxu0 0
      %4574 = vmatpush1.bf16.msra.mxu0 0
      %4575 = vmatprep.subr.bf16.mxu0 0
      %4576 = vmatpush1.bf16.msra.mxu0 0
      %4577 = vmatprep.subr.bf16.mxu0 0
      %4578 = vmatpush1.bf16.msra.mxu0 0
      %4579 = vmatprep.subr.bf16.mxu0 0
      %4580 = vmatpush1.bf16.msra.mxu0 0
      %4581 = vmatprep.subr.bf16.mxu0 0
      %4582 = vmatpush1.bf16.msra.mxu0 0
      %4583 = vmatprep.mubr.bf16.mxu0 0
      %4584 = vmatmul.mubr.bf16.gmra.mrb[0].mxu0 %v4540
      %v4585 = vpop.f32.mrb[0].mxu0
      %v4586 = vadd.f32 0.0, %v4585
      %v4587 = vpop.f32.mrb[0].mxu0
      %v4588 = vpop.f32.mrb[0].mxu0
      %v4589 = vadd.f32 0.0, %v4588
      %v4590 = vpop.f32.mrb[0].mxu0
      %4591 = vmatprep.mubr.bf16.mxu0 0
      %4592 = vmatmul.mubr.bf16.gmra.mrb[0].mxu0 %v4543
      %v4593 = vpop.f32.mrb[0].mxu0
      %v4594 = vadd.f32 0.0, %v4593
      %v4595 = vpop.f32.mrb[0].mxu0
      %v4596 = vpop.f32.mrb[0].mxu0
      %v4597 = vadd.f32 0.0, %v4596
      %v4598 = vpop.f32.mrb[0].mxu0
      %4599 = vmatprep.mubr.bf16.mxu0 0
      %4600 = vmatmul.mubr.bf16.gmra.mrb[0].mxu0 %v4546
      %v4601 = vpop.f32.mrb[0].mxu0
      %v4602 = vadd.f32 0.0, %v4601
      %v4603 = vpop.f32.mrb[0].mxu0
      %v4604 = vpop.f32.mrb[0].mxu0
      %v4605 = vadd.f32 0.0, %v4604
      %v4606 = vpop.f32.mrb[0].mxu0
      %4607 = vmatprep.mubr.bf16.mxu0 0
      %4608 = vmatmul.mubr.bf16.gmra.mrb[0].mxu0 %v4549
      %v4609 = vpop.f32.mrb[0].mxu0
      %v4610 = vadd.f32 0.0, %v4609
      %v4611 = vpop.f32.mrb[0].mxu0
      %v4612 = vpop.f32.mrb[0].mxu0
      %v4613 = vadd.f32 0.0, %v4612
      %v4614 = vpop.f32.mrb[0].mxu0
      %4615 = vdwg.mxu0
      %v4616 = vadd.f32 %v4382, %v4586
      %v4617 = vadd.f32 %v4383, %v4589
      %v4618 = vadd.f32 %v4384, %v4594
      %v4619 = vadd.f32 %v4385, %v4597
      %v4620 = vadd.f32 %v4386, %v4602
      %v4621 = vadd.f32 %v4387, %v4605
      %v4622 = vadd.f32 %v4388, %v4610
      %v4623 = vadd.f32 %v4389, %v4613
      %v4624 = vld [vmem:[%s4267] sm:$0xe]
      %v4625 = vld [vmem:[%s4267 + $0x8] sm:$0xe]
      %v4626 = vld [vmem:[%s4267 + $0x10] sm:$0xe]
      %v4627 = vld [vmem:[%s4267 + $0x18] sm:$0xe]
      %v4628 = vld [vmem:[%s4267 + $0x20] sm:$0xe]
      %v4629 = vld [vmem:[%s4267 + $0x28] sm:$0xe]
      %v4630 = vld [vmem:[%s4267 + $0x30] sm:$0xe]
      %v4631 = vld [vmem:[%s4267 + $0x38] sm:$0xe]
      %v4648 = vrot.slane %v4624, 5
      %v4649 = vrot.slane %v4648, 4
      %v4650 = vrot.slane %v4391, 5
      %v4651 = vsel %vm1535, %v4649, %v4650
      %v4652 = vrot.slane %v4625, 5
      %v4653 = vrot.slane %v4652, 4
      %v4654 = vrot.slane %v4393, 5
      %v4655 = vsel %vm1535, %v4653, %v4654
      %v4656 = vrot.slane %v4626, 5
      %v4657 = vrot.slane %v4656, 4
      %v4658 = vrot.slane %v4395, 5
      %v4659 = vsel %vm1535, %v4657, %v4658
      %v4660 = vrot.slane %v4627, 5
      %v4661 = vrot.slane %v4660, 4
      %v4662 = vrot.slane %v4397, 5
      %v4663 = vsel %vm1535, %v4661, %v4662
      %v4664 = vrot.slane %v4628, 5
      %v4665 = vrot.slane %v4664, 4
      %v4666 = vrot.slane %v4399, 5
      %v4667 = vsel %vm1535, %v4665, %v4666
      %v4668 = vrot.slane %v4629, 5
      %v4669 = vrot.slane %v4668, 4
      %v4670 = vrot.slane %v4401, 5
      %v4671 = vsel %vm1535, %v4669, %v4670
      %v4672 = vrot.slane %v4630, 5
      %v4673 = vrot.slane %v4672, 4
      %v4674 = vrot.slane %v4403, 5
      %v4675 = vsel %vm1535, %v4673, %v4674
      %v4676 = vrot.slane %v4631, 5
      %v4677 = vrot.slane %v4676, 4
      %v4678 = vrot.slane %v4405, 5
      %v4679 = vsel %vm1535, %v4677, %v4678
      %s4680 = scalar_lea.vmem %s1, 160
      %v4681 = vld [vmem:[%s4680] sm:$0xf]
      %v4682 = vld [vmem:[%s4680 + $0x4] sm:$0xf]
      %v4683 = vunpack.c.l.b16 %v4651
      %v4684 = vunpack.c.l.b16 %v4655
      %v4685 = vunpack.c.l.b16 %v4659
      %v4686 = vunpack.c.l.b16 %v4663
      %v4687 = vunpack.c.l.b16 %v4667
      %v4688 = vunpack.c.l.b16 %v4671
      %v4689 = vunpack.c.l.b16 %v4675
      %v4690 = vunpack.c.l.b16 %v4679
      %v4691 = vpack.c.b16 %v4684, %v4683
      %v4692 = vpack.c.b16 %v4686, %v4685
      %v4693 = vpack.c.b16 %v4688, %v4687
      %v4694 = vpack.c.b16 %v4690, %v4689
      %v4697 = vunpack.c.l.b16 %v4681
      %v4698 = vunpack.c.l.b16 %v4682
      %v4699 = vpack.c.b16 %v4698, %v4697
      %v4702 = vsel %vm1328, %v4691, 0
      %v4705 = vsel %vm1328, %v4692, 0
      %v4708 = vsel %vm1328, %v4693, 0
      %v4711 = vsel %vm1328, %v4694, 0
      %4713 = vmatprep.subr.bf16.mxu0 0
      %4714 = vmatpush1.bf16.msra.mxu0 %v4699
      %4715 = vmatprep.subr.bf16.mxu0 0
      %4716 = vmatpush1.bf16.msra.mxu0 0
      %4717 = vmatprep.subr.bf16.mxu0 0
      %4718 = vmatpush1.bf16.msra.mxu0 0
      %4719 = vmatprep.subr.bf16.mxu0 0
      %4720 = vmatpush1.bf16.msra.mxu0 0
      %4721 = vmatprep.subr.bf16.mxu0 0
      %4722 = vmatpush1.bf16.msra.mxu0 0
      %4723 = vmatprep.subr.bf16.mxu0 0
      %4724 = vmatpush1.bf16.msra.mxu0 0
      %4725 = vmatprep.subr.bf16.mxu0 0
      %4726 = vmatpush1.bf16.msra.mxu0 0
      %4727 = vmatprep.subr.bf16.mxu0 0
      %4728 = vmatpush1.bf16.msra.mxu0 0
      %4729 = vmatprep.subr.bf16.mxu0 0
      %4730 = vmatpush1.bf16.msra.mxu0 0
      %4731 = vmatprep.subr.bf16.mxu0 0
      %4732 = vmatpush1.bf16.msra.mxu0 0
      %4733 = vmatprep.subr.bf16.mxu0 0
      %4734 = vmatpush1.bf16.msra.mxu0 0
      %4735 = vmatprep.subr.bf16.mxu0 0
      %4736 = vmatpush1.bf16.msra.mxu0 0
      %4737 = vmatprep.subr.bf16.mxu0 0
      %4738 = vmatpush1.bf16.msra.mxu0 0
      %4739 = vmatprep.subr.bf16.mxu0 0
      %4740 = vmatpush1.bf16.msra.mxu0 0
      %4741 = vmatprep.subr.bf16.mxu0 0
      %4742 = vmatpush1.bf16.msra.mxu0 0
      %4743 = vmatprep.subr.bf16.mxu0 0
      %4744 = vmatpush1.bf16.msra.mxu0 0
      %4745 = vmatprep.mubr.bf16.mxu0 0
      %4746 = vmatmul.mubr.bf16.gmra.mrb[0].mxu0 %v4702
      %v4747 = vpop.f32.mrb[0].mxu0
      %v4748 = vadd.f32 0.0, %v4747
      %v4749 = vpop.f32.mrb[0].mxu0
      %v4750 = vpop.f32.mrb[0].mxu0
      %v4751 = vadd.f32 0.0, %v4750
      %v4752 = vpop.f32.mrb[0].mxu0
      %4753 = vmatprep.mubr.bf16.mxu0 0
      %4754 = vmatmul.mubr.bf16.gmra.mrb[0].mxu0 %v4705
      %v4755 = vpop.f32.mrb[0].mxu0
      %v4756 = vadd.f32 0.0, %v4755
      %v4757 = vpop.f32.mrb[0].mxu0
      %v4758 = vpop.f32.mrb[0].mxu0
      %v4759 = vadd.f32 0.0, %v4758
      %v4760 = vpop.f32.mrb[0].mxu0
      %4761 = vmatprep.mubr.bf16.mxu0 0
      %4762 = vmatmul.mubr.bf16.gmra.mrb[0].mxu0 %v4708
      %v4763 = vpop.f32.mrb[0].mxu0
      %v4764 = vadd.f32 0.0, %v4763
      %v4765 = vpop.f32.mrb[0].mxu0
      %v4766 = vpop.f32.mrb[0].mxu0
      %v4767 = vadd.f32 0.0, %v4766
      %v4768 = vpop.f32.mrb[0].mxu0
      %4769 = vmatprep.mubr.bf16.mxu0 0
      %4770 = vmatmul.mubr.bf16.gmra.mrb[0].mxu0 %v4711
      %v4771 = vpop.f32.mrb[0].mxu0
      %v4772 = vadd.f32 0.0, %v4771
      %v4773 = vpop.f32.mrb[0].mxu0
      %v4774 = vpop.f32.mrb[0].mxu0
      %v4775 = vadd.f32 0.0, %v4774
      %v4776 = vpop.f32.mrb[0].mxu0
      %4777 = vdwg.mxu0
      %v4778 = vadd.f32 %v4616, %v4748
      %v4779 = vadd.f32 %v4617, %v4751
      %v4780 = vadd.f32 %v4618, %v4756
      %v4781 = vadd.f32 %v4619, %v4759
      %v4782 = vadd.f32 %v4620, %v4764
      %v4783 = vadd.f32 %v4621, %v4767
      %v4784 = vadd.f32 %v4622, %v4772
      %v4785 = vadd.f32 %v4623, %v4775
      %v4786 = vld [vmem:[%s1125] sm:$0xf]
      %v4787 = vld [vmem:[%s1125 + $0x8] sm:$0xf]
      %v4788 = vld [vmem:[%s1125 + $0x10] sm:$0xf]
      %v4789 = vld [vmem:[%s1125 + $0x18] sm:$0xf]
      %v4790 = vld [vmem:[%s1125 + $0x20] sm:$0xf]
      %v4791 = vld [vmem:[%s1125 + $0x28] sm:$0xf]
      %v4792 = vld [vmem:[%s1125 + $0x30] sm:$0xf]
      %v4793 = vld [vmem:[%s1125 + $0x38] sm:$0xf]
      %s4794 = scalar_lea.vmem %s1, 168
      %v4795 = vld [vmem:[%s4794] sm:$0xf]
      %v4796 = vld [vmem:[%s4794 + $0x4] sm:$0xf]
      %v4805 = vunpack.c.l.b16 %v4786
      %v4806 = vunpack.c.l.b16 %v4787
      %v4807 = vunpack.c.l.b16 %v4788
      %v4808 = vunpack.c.l.b16 %v4789
      %v4809 = vunpack.c.l.b16 %v4790
      %v4810 = vunpack.c.l.b16 %v4791
      %v4811 = vunpack.c.l.b16 %v4792
      %v4812 = vunpack.c.l.b16 %v4793
      %v4813 = vpack.c.b16 %v4806, %v4805
      %v4814 = vpack.c.b16 %v4808, %v4807
      %v4815 = vpack.c.b16 %v4810, %v4809
      %v4816 = vpack.c.b16 %v4812, %v4811
      %v4819 = vunpack.c.l.b16 %v4795
      %v4820 = vunpack.c.l.b16 %v4796
      %v4821 = vpack.c.b16 %v4820, %v4819
      %v4824 = vsel %vm1328, %v4813, 0
      %v4827 = vsel %vm1328, %v4814, 0
      %v4830 = vsel %vm1328, %v4815, 0
      %v4833 = vsel %vm1328, %v4816, 0
      %4835 = vmatprep.subr.bf16.mxu0 0
      %4836 = vmatpush1.bf16.msra.mxu0 %v4821
      %4837 = vmatprep.subr.bf16.mxu0 0
      %4838 = vmatpush1.bf16.msra.mxu0 0
      %4839 = vmatprep.subr.bf16.mxu0 0
      %4840 = vmatpush1.bf16.msra.mxu0 0
      %4841 = vmatprep.subr.bf16.mxu0 0
      %4842 = vmatpush1.bf16.msra.mxu0 0
      %4843 = vmatprep.subr.bf16.mxu0 0
      %4844 = vmatpush1.bf16.msra.mxu0 0
      %4845 = vmatprep.subr.bf16.mxu0 0
      %4846 = vmatpush1.bf16.msra.mxu0 0
      %4847 = vmatprep.subr.bf16.mxu0 0
      %4848 = vmatpush1.bf16.msra.mxu0 0
      %4849 = vmatprep.subr.bf16.mxu0 0
      %4850 = vmatpush1.bf16.msra.mxu0 0
      %4851 = vmatprep.subr.bf16.mxu0 0
      %4852 = vmatpush1.bf16.msra.mxu0 0
      %4853 = vmatprep.subr.bf16.mxu0 0
      %4854 = vmatpush1.bf16.msra.mxu0 0
      %4855 = vmatprep.subr.bf16.mxu0 0
      %4856 = vmatpush1.bf16.msra.mxu0 0
      %4857 = vmatprep.subr.bf16.mxu0 0
      %4858 = vmatpush1.bf16.msra.mxu0 0
      %4859 = vmatprep.subr.bf16.mxu0 0
      %4860 = vmatpush1.bf16.msra.mxu0 0
      %4861 = vmatprep.subr.bf16.mxu0 0
      %4862 = vmatpush1.bf16.msra.mxu0 0
      %4863 = vmatprep.subr.bf16.mxu0 0
      %4864 = vmatpush1.bf16.msra.mxu0 0
      %4865 = vmatprep.subr.bf16.mxu0 0
      %4866 = vmatpush1.bf16.msra.mxu0 0
      %4867 = vmatprep.mubr.bf16.mxu0 0
      %4868 = vmatmul.mubr.bf16.gmra.mrb[0].mxu0 %v4824
      %v4869 = vpop.f32.mrb[0].mxu0
      %v4870 = vadd.f32 0.0, %v4869
      %v4871 = vpop.f32.mrb[0].mxu0
      %v4872 = vpop.f32.mrb[0].mxu0
      %v4873 = vadd.f32 0.0, %v4872
      %v4874 = vpop.f32.mrb[0].mxu0
      %4875 = vmatprep.mubr.bf16.mxu0 0
      %4876 = vmatmul.mubr.bf16.gmra.mrb[0].mxu0 %v4827
      %v4877 = vpop.f32.mrb[0].mxu0
      %v4878 = vadd.f32 0.0, %v4877
      %v4879 = vpop.f32.mrb[0].mxu0
      %v4880 = vpop.f32.mrb[0].mxu0
      %v4881 = vadd.f32 0.0, %v4880
      %v4882 = vpop.f32.mrb[0].mxu0
      %4883 = vmatprep.mubr.bf16.mxu0 0
      %4884 = vmatmul.mubr.bf16.gmra.mrb[0].mxu0 %v4830
      %v4885 = vpop.f32.mrb[0].mxu0
      %v4886 = vadd.f32 0.0, %v4885
      %v4887 = vpop.f32.mrb[0].mxu0
      %v4888 = vpop.f32.mrb[0].mxu0
      %v4889 = vadd.f32 0.0, %v4888
      %v4890 = vpop.f32.mrb[0].mxu0
      %4891 = vmatprep.mubr.bf16.mxu0 0
      %4892 = vmatmul.mubr.bf16.gmra.mrb[0].mxu0 %v4833
      %v4893 = vpop.f32.mrb[0].mxu0
      %v4894 = vadd.f32 0.0, %v4893
      %v4895 = vpop.f32.mrb[0].mxu0
      %v4896 = vpop.f32.mrb[0].mxu0
      %v4897 = vadd.f32 0.0, %v4896
      %v4898 = vpop.f32.mrb[0].mxu0
      %4899 = vdwg.mxu0
      %v4900 = vadd.f32 %v4778, %v4870
      %v4901 = vadd.f32 %v4779, %v4873
      %v4902 = vadd.f32 %v4780, %v4878
      %v4903 = vadd.f32 %v4781, %v4881
      %v4904 = vadd.f32 %v4782, %v4886
      %v4905 = vadd.f32 %v4783, %v4889
      %v4906 = vadd.f32 %v4784, %v4894
      %v4907 = vadd.f32 %v4785, %v4897
      %v4908 = vld [vmem:[%s1125] sm:$0xf]
      %v4909 = vld [vmem:[%s1125 + $0x4] sm:$0x1]
      %v4910 = vld [vmem:[%s1125 + $0x8] sm:$0xf]
      %v4911 = vld [vmem:[%s1125 + $0xc] sm:$0x1]
      %v4912 = vld [vmem:[%s1125 + $0x10] sm:$0xf]
      %v4913 = vld [vmem:[%s1125 + $0x14] sm:$0x1]
      %v4914 = vld [vmem:[%s1125 + $0x18] sm:$0xf]
      %v4915 = vld [vmem:[%s1125 + $0x1c] sm:$0x1]
      %v4916 = vld [vmem:[%s1125 + $0x20] sm:$0xf]
      %v4917 = vld [vmem:[%s1125 + $0x24] sm:$0x1]
      %v4918 = vld [vmem:[%s1125 + $0x28] sm:$0xf]
      %v4919 = vld [vmem:[%s1125 + $0x2c] sm:$0x1]
      %v4920 = vld [vmem:[%s1125 + $0x30] sm:$0xf]
      %v4921 = vld [vmem:[%s1125 + $0x34] sm:$0x1]
      %v4922 = vld [vmem:[%s1125 + $0x38] sm:$0xf]
      %v4923 = vld [vmem:[%s1125 + $0x3c] sm:$0x1]
      %v4925 = vshrl.u32 %v4908, 16
      %v4927 = vrot.slane %v4925, 4
      %v4928 = vshll.u32 %v4908, 16
      %v4930 = vrot.slane %v4928, 5
      %v4931 = vor.u32 %v4927, %v4930
      %v4932 = vrot.slane %v4931, 4
      %v4934 = vshll.u32 %v4909, 16
      %v4936 = vrot.slane %v4934, 5
      %v4937 = vsel %vm1194, %v4932, %v4936
      %v4939 = vshrl.u32 %v4910, 16
      %v4941 = vrot.slane %v4939, 4
      %v4942 = vshll.u32 %v4910, 16
      %v4944 = vrot.slane %v4942, 5
      %v4945 = vor.u32 %v4941, %v4944
      %v4946 = vrot.slane %v4945, 4
      %v4948 = vshll.u32 %v4911, 16
      %v4950 = vrot.slane %v4948, 5
      %v4951 = vsel %vm1194, %v4946, %v4950
      %v4953 = vshrl.u32 %v4912, 16
      %v4955 = vrot.slane %v4953, 4
      %v4956 = vshll.u32 %v4912, 16
      %v4958 = vrot.slane %v4956, 5
      %v4959 = vor.u32 %v4955, %v4958
      %v4960 = vrot.slane %v4959, 4
      %v4962 = vshll.u32 %v4913, 16
      %v4964 = vrot.slane %v4962, 5
      %v4965 = vsel %vm1194, %v4960, %v4964
      %v4967 = vshrl.u32 %v4914, 16
      %v4969 = vrot.slane %v4967, 4
      %v4970 = vshll.u32 %v4914, 16
      %v4972 = vrot.slane %v4970, 5
      %v4973 = vor.u32 %v4969, %v4972
      %v4974 = vrot.slane %v4973, 4
      %v4976 = vshll.u32 %v4915, 16
      %v4978 = vrot.slane %v4976, 5
      %v4979 = vsel %vm1194, %v4974, %v4978
      %v4981 = vshrl.u32 %v4916, 16
      %v4983 = vrot.slane %v4981, 4
      %v4984 = vshll.u32 %v4916, 16
      %v4986 = vrot.slane %v4984, 5
      %v4987 = vor.u32 %v4983, %v4986
      %v4988 = vrot.slane %v4987, 4
      %v4990 = vshll.u32 %v4917, 16
      %v4992 = vrot.slane %v4990, 5
      %v4993 = vsel %vm1194, %v4988, %v4992
      %v4995 = vshrl.u32 %v4918, 16
      %v4997 = vrot.slane %v4995, 4
      %v4998 = vshll.u32 %v4918, 16
      %v5000 = vrot.slane %v4998, 5
      %v5001 = vor.u32 %v4997, %v5000
      %v5002 = vrot.slane %v5001, 4
      %v5004 = vshll.u32 %v4919, 16
      %v5006 = vrot.slane %v5004, 5
      %v5007 = vsel %vm1194, %v5002, %v5006
      %v5009 = vshrl.u32 %v4920, 16
      %v5011 = vrot.slane %v5009, 4
      %v5012 = vshll.u32 %v4920, 16
      %v5014 = vrot.slane %v5012, 5
      %v5015 = vor.u32 %v5011, %v5014
      %v5016 = vrot.slane %v5015, 4
      %v5018 = vshll.u32 %v4921, 16
      %v5020 = vrot.slane %v5018, 5
      %v5021 = vsel %vm1194, %v5016, %v5020
      %v5023 = vshrl.u32 %v4922, 16
      %v5025 = vrot.slane %v5023, 4
      %v5026 = vshll.u32 %v4922, 16
      %v5028 = vrot.slane %v5026, 5
      %v5029 = vor.u32 %v5025, %v5028
      %v5030 = vrot.slane %v5029, 4
      %v5032 = vshll.u32 %v4923, 16
      %v5034 = vrot.slane %v5032, 5
      %v5035 = vsel %vm1194, %v5030, %v5034
      %s5036 = scalar_lea.vmem %s1, 176
      %v5037 = vld [vmem:[%s5036] sm:$0xf]
      %v5038 = vld [vmem:[%s5036 + $0x4] sm:$0xf]
      %v5039 = vunpack.c.l.b16 %v4937
      %v5040 = vunpack.c.l.b16 %v4951
      %v5041 = vunpack.c.l.b16 %v4965
      %v5042 = vunpack.c.l.b16 %v4979
      %v5043 = vunpack.c.l.b16 %v4993
      %v5044 = vunpack.c.l.b16 %v5007
      %v5045 = vunpack.c.l.b16 %v5021
      %v5046 = vunpack.c.l.b16 %v5035
      %v5047 = vpack.c.b16 %v5040, %v5039
      %v5048 = vpack.c.b16 %v5042, %v5041
      %v5049 = vpack.c.b16 %v5044, %v5043
      %v5050 = vpack.c.b16 %v5046, %v5045
      %v5053 = vunpack.c.l.b16 %v5037
      %v5054 = vunpack.c.l.b16 %v5038
      %v5055 = vpack.c.b16 %v5054, %v5053
      %v5058 = vsel %vm1328, %v5047, 0
      %v5061 = vsel %vm1328, %v5048, 0
      %v5064 = vsel %vm1328, %v5049, 0
      %v5067 = vsel %vm1328, %v5050, 0
      %5069 = vmatprep.subr.bf16.mxu0 0
      %5070 = vmatpush1.bf16.msra.mxu0 %v5055
      %5071 = vmatprep.subr.bf16.mxu0 0
      %5072 = vmatpush1.bf16.msra.mxu0 0
      %5073 = vmatprep.subr.bf16.mxu0 0
      %5074 = vmatpush1.bf16.msra.mxu0 0
      %5075 = vmatprep.subr.bf16.mxu0 0
      %5076 = vmatpush1.bf16.msra.mxu0 0
      %5077 = vmatprep.subr.bf16.mxu0 0
      %5078 = vmatpush1.bf16.msra.mxu0 0
      %5079 = vmatprep.subr.bf16.mxu0 0
      %5080 = vmatpush1.bf16.msra.mxu0 0
      %5081 = vmatprep.subr.bf16.mxu0 0
      %5082 = vmatpush1.bf16.msra.mxu0 0
      %5083 = vmatprep.subr.bf16.mxu0 0
      %5084 = vmatpush1.bf16.msra.mxu0 0
      %5085 = vmatprep.subr.bf16.mxu0 0
      %5086 = vmatpush1.bf16.msra.mxu0 0
      %5087 = vmatprep.subr.bf16.mxu0 0
      %5088 = vmatpush1.bf16.msra.mxu0 0
      %5089 = vmatprep.subr.bf16.mxu0 0
      %5090 = vmatpush1.bf16.msra.mxu0 0
      %5091 = vmatprep.subr.bf16.mxu0 0
      %5092 = vmatpush1.bf16.msra.mxu0 0
      %5093 = vmatprep.subr.bf16.mxu0 0
      %5094 = vmatpush1.bf16.msra.mxu0 0
      %5095 = vmatprep.subr.bf16.mxu0 0
      %5096 = vmatpush1.bf16.msra.mxu0 0
      %5097 = vmatprep.subr.bf16.mxu0 0
      %5098 = vmatpush1.bf16.msra.mxu0 0
      %5099 = vmatprep.subr.bf16.mxu0 0
      %5100 = vmatpush1.bf16.msra.mxu0 0
      %5101 = vmatprep.mubr.bf16.mxu0 0
      %5102 = vmatmul.mubr.bf16.gmra.mrb[0].mxu0 %v5058
      %v5103 = vpop.f32.mrb[0].mxu0
      %v5104 = vadd.f32 0.0, %v5103
      %v5105 = vpop.f32.mrb[0].mxu0
      %v5106 = vpop.f32.mrb[0].mxu0
      %v5107 = vadd.f32 0.0, %v5106
      %v5108 = vpop.f32.mrb[0].mxu0
      %5109 = vmatprep.mubr.bf16.mxu0 0
      %5110 = vmatmul.mubr.bf16.gmra.mrb[0].mxu0 %v5061
      %v5111 = vpop.f32.mrb[0].mxu0
      %v5112 = vadd.f32 0.0, %v5111
      %v5113 = vpop.f32.mrb[0].mxu0
      %v5114 = vpop.f32.mrb[0].mxu0
      %v5115 = vadd.f32 0.0, %v5114
      %v5116 = vpop.f32.mrb[0].mxu0
      %5117 = vmatprep.mubr.bf16.mxu0 0
      %5118 = vmatmul.mubr.bf16.gmra.mrb[0].mxu0 %v5064
      %v5119 = vpop.f32.mrb[0].mxu0
      %v5120 = vadd.f32 0.0, %v5119
      %v5121 = vpop.f32.mrb[0].mxu0
      %v5122 = vpop.f32.mrb[0].mxu0
      %v5123 = vadd.f32 0.0, %v5122
      %v5124 = vpop.f32.mrb[0].mxu0
      %5125 = vmatprep.mubr.bf16.mxu0 0
      %5126 = vmatmul.mubr.bf16.gmra.mrb[0].mxu0 %v5067
      %v5127 = vpop.f32.mrb[0].mxu0
      %v5128 = vadd.f32 0.0, %v5127
      %v5129 = vpop.f32.mrb[0].mxu0
      %v5130 = vpop.f32.mrb[0].mxu0
      %v5131 = vadd.f32 0.0, %v5130
      %v5132 = vpop.f32.mrb[0].mxu0
      %5133 = vdwg.mxu0
      %v5134 = vadd.f32 %v4900, %v5104
      %v5135 = vadd.f32 %v4901, %v5107
      %v5136 = vadd.f32 %v4902, %v5112
      %v5137 = vadd.f32 %v4903, %v5115
      %v5138 = vadd.f32 %v4904, %v5120
      %v5139 = vadd.f32 %v4905, %v5123
      %v5140 = vadd.f32 %v4906, %v5128
      %v5141 = vadd.f32 %v4907, %v5131
      %v5142 = vld [vmem:[%s1125] sm:$0xe]
      %v5143 = vld [vmem:[%s1125 + $0x8] sm:$0xe]
      %v5144 = vld [vmem:[%s1125 + $0x10] sm:$0xe]
      %v5145 = vld [vmem:[%s1125 + $0x18] sm:$0xe]
      %v5146 = vld [vmem:[%s1125 + $0x20] sm:$0xe]
      %v5147 = vld [vmem:[%s1125 + $0x28] sm:$0xe]
      %v5148 = vld [vmem:[%s1125 + $0x30] sm:$0xe]
      %v5149 = vld [vmem:[%s1125 + $0x38] sm:$0xe]
      %v5166 = vrot.slane %v5142, 5
      %v5167 = vrot.slane %v5166, 4
      %v5168 = vrot.slane %v4909, 5
      %v5169 = vsel %vm1535, %v5167, %v5168
      %v5170 = vrot.slane %v5143, 5
      %v5171 = vrot.slane %v5170, 4
      %v5172 = vrot.slane %v4911, 5
      %v5173 = vsel %vm1535, %v5171, %v5172
      %v5174 = vrot.slane %v5144, 5
      %v5175 = vrot.slane %v5174, 4
      %v5176 = vrot.slane %v4913, 5
      %v5177 = vsel %vm1535, %v5175, %v5176
      %v5178 = vrot.slane %v5145, 5
      %v5179 = vrot.slane %v5178, 4
      %v5180 = vrot.slane %v4915, 5
      %v5181 = vsel %vm1535, %v5179, %v5180
      %v5182 = vrot.slane %v5146, 5
      %v5183 = vrot.slane %v5182, 4
      %v5184 = vrot.slane %v4917, 5
      %v5185 = vsel %vm1535, %v5183, %v5184
      %v5186 = vrot.slane %v5147, 5
      %v5187 = vrot.slane %v5186, 4
      %v5188 = vrot.slane %v4919, 5
      %v5189 = vsel %vm1535, %v5187, %v5188
      %v5190 = vrot.slane %v5148, 5
      %v5191 = vrot.slane %v5190, 4
      %v5192 = vrot.slane %v4921, 5
      %v5193 = vsel %vm1535, %v5191, %v5192
      %v5194 = vrot.slane %v5149, 5
      %v5195 = vrot.slane %v5194, 4
      %v5196 = vrot.slane %v4923, 5
      %v5197 = vsel %vm1535, %v5195, %v5196
      %s5198 = scalar_lea.vmem %s1, 184
      %v5199 = vld [vmem:[%s5198] sm:$0xf]
      %v5200 = vld [vmem:[%s5198 + $0x4] sm:$0xf]
      %v5201 = vunpack.c.l.b16 %v5169
      %v5202 = vunpack.c.l.b16 %v5173
      %v5203 = vunpack.c.l.b16 %v5177
      %v5204 = vunpack.c.l.b16 %v5181
      %v5205 = vunpack.c.l.b16 %v5185
      %v5206 = vunpack.c.l.b16 %v5189
      %v5207 = vunpack.c.l.b16 %v5193
      %v5208 = vunpack.c.l.b16 %v5197
      %v5209 = vpack.c.b16 %v5202, %v5201
      %v5210 = vpack.c.b16 %v5204, %v5203
      %v5211 = vpack.c.b16 %v5206, %v5205
      %v5212 = vpack.c.b16 %v5208, %v5207
      %v5215 = vunpack.c.l.b16 %v5199
      %v5216 = vunpack.c.l.b16 %v5200
      %v5217 = vpack.c.b16 %v5216, %v5215
      %v5220 = vsel %vm1328, %v5209, 0
      %v5223 = vsel %vm1328, %v5210, 0
      %v5226 = vsel %vm1328, %v5211, 0
      %v5229 = vsel %vm1328, %v5212, 0
      %5231 = vmatprep.subr.bf16.mxu0 0
      %5232 = vmatpush1.bf16.msra.mxu0 %v5217
      %5233 = vmatprep.subr.bf16.mxu0 0
      %5234 = vmatpush1.bf16.msra.mxu0 0
      %5235 = vmatprep.subr.bf16.mxu0 0
      %5236 = vmatpush1.bf16.msra.mxu0 0
      %5237 = vmatprep.subr.bf16.mxu0 0
      %5238 = vmatpush1.bf16.msra.mxu0 0
      %5239 = vmatprep.subr.bf16.mxu0 0
      %5240 = vmatpush1.bf16.msra.mxu0 0
      %5241 = vmatprep.subr.bf16.mxu0 0
      %5242 = vmatpush1.bf16.msra.mxu0 0
      %5243 = vmatprep.subr.bf16.mxu0 0
      %5244 = vmatpush1.bf16.msra.mxu0 0
      %5245 = vmatprep.subr.bf16.mxu0 0
      %5246 = vmatpush1.bf16.msra.mxu0 0
      %5247 = vmatprep.subr.bf16.mxu0 0
      %5248 = vmatpush1.bf16.msra.mxu0 0
      %5249 = vmatprep.subr.bf16.mxu0 0
      %5250 = vmatpush1.bf16.msra.mxu0 0
      %5251 = vmatprep.subr.bf16.mxu0 0
      %5252 = vmatpush1.bf16.msra.mxu0 0
      %5253 = vmatprep.subr.bf16.mxu0 0
      %5254 = vmatpush1.bf16.msra.mxu0 0
      %5255 = vmatprep.subr.bf16.mxu0 0
      %5256 = vmatpush1.bf16.msra.mxu0 0
      %5257 = vmatprep.subr.bf16.mxu0 0
      %5258 = vmatpush1.bf16.msra.mxu0 0
      %5259 = vmatprep.subr.bf16.mxu0 0
      %5260 = vmatpush1.bf16.msra.mxu0 0
      %5261 = vmatprep.subr.bf16.mxu0 0
      %5262 = vmatpush1.bf16.msra.mxu0 0
      %5263 = vmatprep.mubr.bf16.mxu0 0
      %5264 = vmatmul.mubr.bf16.gmra.mrb[0].mxu0 %v5220
      %v5265 = vpop.f32.mrb[0].mxu0
      %v5266 = vadd.f32 0.0, %v5265
      %v5267 = vpop.f32.mrb[0].mxu0
      %v5268 = vpop.f32.mrb[0].mxu0
      %v5269 = vadd.f32 0.0, %v5268
      %v5270 = vpop.f32.mrb[0].mxu0
      %5271 = vmatprep.mubr.bf16.mxu0 0
      %5272 = vmatmul.mubr.bf16.gmra.mrb[0].mxu0 %v5223
      %v5273 = vpop.f32.mrb[0].mxu0
      %v5274 = vadd.f32 0.0, %v5273
      %v5275 = vpop.f32.mrb[0].mxu0
      %v5276 = vpop.f32.mrb[0].mxu0
      %v5277 = vadd.f32 0.0, %v5276
      %v5278 = vpop.f32.mrb[0].mxu0
      %5279 = vmatprep.mubr.bf16.mxu0 0
      %5280 = vmatmul.mubr.bf16.gmra.mrb[0].mxu0 %v5226
      %v5281 = vpop.f32.mrb[0].mxu0
      %v5282 = vadd.f32 0.0, %v5281
      %v5283 = vpop.f32.mrb[0].mxu0
      %v5284 = vpop.f32.mrb[0].mxu0
      %v5285 = vadd.f32 0.0, %v5284
      %v5286 = vpop.f32.mrb[0].mxu0
      %5287 = vmatprep.mubr.bf16.mxu0 0
      %5288 = vmatmul.mubr.bf16.gmra.mrb[0].mxu0 %v5229
      %v5289 = vpop.f32.mrb[0].mxu0
      %v5290 = vadd.f32 0.0, %v5289
      %v5291 = vpop.f32.mrb[0].mxu0
      %v5292 = vpop.f32.mrb[0].mxu0
      %v5293 = vadd.f32 0.0, %v5292
      %v5294 = vpop.f32.mrb[0].mxu0
      %5295 = vdwg.mxu0
      %v5296 = vadd.f32 %v5134, %v5266
      %v5297 = vadd.f32 %v5135, %v5269
      %v5298 = vadd.f32 %v5136, %v5274
      %v5299 = vadd.f32 %v5137, %v5277
      %v5300 = vadd.f32 %v5138, %v5282
      %v5301 = vadd.f32 %v5139, %v5285
      %v5302 = vadd.f32 %v5140, %v5290
      %v5303 = vadd.f32 %v5141, %v5293
      %s5304 = scalar_lea.vmem [#allocation2], 176
      %v5305 = vld [vmem:[%s5304] sm:$0xf]
      %v5306 = vld [vmem:[%s5304 + $0x8] sm:$0xf]
      %v5307 = vld [vmem:[%s5304 + $0x10] sm:$0xf]
      %v5308 = vld [vmem:[%s5304 + $0x18] sm:$0xf]
      %v5309 = vld [vmem:[%s5304 + $0x20] sm:$0xf]
      %v5310 = vld [vmem:[%s5304 + $0x28] sm:$0xf]
      %v5311 = vld [vmem:[%s5304 + $0x30] sm:$0xf]
      %v5312 = vld [vmem:[%s5304 + $0x38] sm:$0xf]
      %s5313 = scalar_lea.vmem %s1, 192
      %v5314 = vld [vmem:[%s5313] sm:$0xf]
      %v5315 = vld [vmem:[%s5313 + $0x4] sm:$0xf]
      %v5324 = vunpack.c.l.b16 %v5305
      %v5325 = vunpack.c.l.b16 %v5306
      %v5326 = vunpack.c.l.b16 %v5307
      %v5327 = vunpack.c.l.b16 %v5308
      %v5328 = vunpack.c.l.b16 %v5309
      %v5329 = vunpack.c.l.b16 %v5310
      %v5330 = vunpack.c.l.b16 %v5311
      %v5331 = vunpack.c.l.b16 %v5312
      %v5332 = vpack.c.b16 %v5325, %v5324
      %v5333 = vpack.c.b16 %v5327, %v5326
      %v5334 = vpack.c.b16 %v5329, %v5328
      %v5335 = vpack.c.b16 %v5331, %v5330
      %v5338 = vunpack.c.l.b16 %v5314
      %v5339 = vunpack.c.l.b16 %v5315
      %v5340 = vpack.c.b16 %v5339, %v5338
      %v5343 = vsel %vm1328, %v5332, 0
      %v5346 = vsel %vm1328, %v5333, 0
      %v5349 = vsel %vm1328, %v5334, 0
      %v5352 = vsel %vm1328, %v5335, 0
      %5354 = vmatprep.subr.bf16.mxu0 0
      %5355 = vmatpush1.bf16.msra.mxu0 %v5340
      %5356 = vmatprep.subr.bf16.mxu0 0
      %5357 = vmatpush1.bf16.msra.mxu0 0
      %5358 = vmatprep.subr.bf16.mxu0 0
      %5359 = vmatpush1.bf16.msra.mxu0 0
      %5360 = vmatprep.subr.bf16.mxu0 0
      %5361 = vmatpush1.bf16.msra.mxu0 0
      %5362 = vmatprep.subr.bf16.mxu0 0
      %5363 = vmatpush1.bf16.msra.mxu0 0
      %5364 = vmatprep.subr.bf16.mxu0 0
      %5365 = vmatpush1.bf16.msra.mxu0 0
      %5366 = vmatprep.subr.bf16.mxu0 0
      %5367 = vmatpush1.bf16.msra.mxu0 0
      %5368 = vmatprep.subr.bf16.mxu0 0
      %5369 = vmatpush1.bf16.msra.mxu0 0
      %5370 = vmatprep.subr.bf16.mxu0 0
      %5371 = vmatpush1.bf16.msra.mxu0 0
      %5372 = vmatprep.subr.bf16.mxu0 0
      %5373 = vmatpush1.bf16.msra.mxu0 0
      %5374 = vmatprep.subr.bf16.mxu0 0
      %5375 = vmatpush1.bf16.msra.mxu0 0
      %5376 = vmatprep.subr.bf16.mxu0 0
      %5377 = vmatpush1.bf16.msra.mxu0 0
      %5378 = vmatprep.subr.bf16.mxu0 0
      %5379 = vmatpush1.bf16.msra.mxu0 0
      %5380 = vmatprep.subr.bf16.mxu0 0
      %5381 = vmatpush1.bf16.msra.mxu0 0
      %5382 = vmatprep.subr.bf16.mxu0 0
      %5383 = vmatpush1.bf16.msra.mxu0 0
      %5384 = vmatprep.subr.bf16.mxu0 0
      %5385 = vmatpush1.bf16.msra.mxu0 0
      %5386 = vmatprep.mubr.bf16.mxu0 0
      %5387 = vmatmul.mubr.bf16.gmra.mrb[0].mxu0 %v5343
      %v5388 = vpop.f32.mrb[0].mxu0
      %v5389 = vadd.f32 0.0, %v5388
      %v5390 = vpop.f32.mrb[0].mxu0
      %v5391 = vpop.f32.mrb[0].mxu0
      %v5392 = vadd.f32 0.0, %v5391
      %v5393 = vpop.f32.mrb[0].mxu0
      %5394 = vmatprep.mubr.bf16.mxu0 0
      %5395 = vmatmul.mubr.bf16.gmra.mrb[0].mxu0 %v5346
      %v5396 = vpop.f32.mrb[0].mxu0
      %v5397 = vadd.f32 0.0, %v5396
      %v5398 = vpop.f32.mrb[0].mxu0
      %v5399 = vpop.f32.mrb[0].mxu0
      %v5400 = vadd.f32 0.0, %v5399
      %v5401 = vpop.f32.mrb[0].mxu0
      %5402 = vmatprep.mubr.bf16.mxu0 0
      %5403 = vmatmul.mubr.bf16.gmra.mrb[0].mxu0 %v5349
      %v5404 = vpop.f32.mrb[0].mxu0
      %v5405 = vadd.f32 0.0, %v5404
      %v5406 = vpop.f32.mrb[0].mxu0
      %v5407 = vpop.f32.mrb[0].mxu0
      %v5408 = vadd.f32 0.0, %v5407
      %v5409 = vpop.f32.mrb[0].mxu0
      %5410 = vmatprep.mubr.bf16.mxu0 0
      %5411 = vmatmul.mubr.bf16.gmra.mrb[0].mxu0 %v5352
      %v5412 = vpop.f32.mrb[0].mxu0
      %v5413 = vadd.f32 0.0, %v5412
      %v5414 = vpop.f32.mrb[0].mxu0
      %v5415 = vpop.f32.mrb[0].mxu0
      %v5416 = vadd.f32 0.0, %v5415
      %v5417 = vpop.f32.mrb[0].mxu0
      %5418 = vdwg.mxu0
      %v5419 = vadd.f32 %v5296, %v5389
      %v5420 = vadd.f32 %v5297, %v5392
      %v5421 = vadd.f32 %v5298, %v5397
      %v5422 = vadd.f32 %v5299, %v5400
      %v5423 = vadd.f32 %v5300, %v5405
      %v5424 = vadd.f32 %v5301, %v5408
      %v5425 = vadd.f32 %v5302, %v5413
      %v5426 = vadd.f32 %v5303, %v5416
      %v5427 = vld [vmem:[%s5304] sm:$0xf]
      %v5428 = vld [vmem:[%s5304 + $0x4] sm:$0x1]
      %v5429 = vld [vmem:[%s5304 + $0x8] sm:$0xf]
      %v5430 = vld [vmem:[%s5304 + $0xc] sm:$0x1]
      %v5431 = vld [vmem:[%s5304 + $0x10] sm:$0xf]
      %v5432 = vld [vmem:[%s5304 + $0x14] sm:$0x1]
      %v5433 = vld [vmem:[%s5304 + $0x18] sm:$0xf]
      %v5434 = vld [vmem:[%s5304 + $0x1c] sm:$0x1]
      %v5435 = vld [vmem:[%s5304 + $0x20] sm:$0xf]
      %v5436 = vld [vmem:[%s5304 + $0x24] sm:$0x1]
      %v5437 = vld [vmem:[%s5304 + $0x28] sm:$0xf]
      %v5438 = vld [vmem:[%s5304 + $0x2c] sm:$0x1]
      %v5439 = vld [vmem:[%s5304 + $0x30] sm:$0xf]
      %v5440 = vld [vmem:[%s5304 + $0x34] sm:$0x1]
      %v5441 = vld [vmem:[%s5304 + $0x38] sm:$0xf]
      %v5442 = vld [vmem:[%s5304 + $0x3c] sm:$0x1]
      %v5444 = vshrl.u32 %v5427, 16
      %v5446 = vrot.slane %v5444, 4
      %v5447 = vshll.u32 %v5427, 16
      %v5449 = vrot.slane %v5447, 5
      %v5450 = vor.u32 %v5446, %v5449
      %v5451 = vrot.slane %v5450, 4
      %v5453 = vshll.u32 %v5428, 16
      %v5455 = vrot.slane %v5453, 5
      %v5456 = vsel %vm1194, %v5451, %v5455
      %v5458 = vshrl.u32 %v5429, 16
      %v5460 = vrot.slane %v5458, 4
      %v5461 = vshll.u32 %v5429, 16
      %v5463 = vrot.slane %v5461, 5
      %v5464 = vor.u32 %v5460, %v5463
      %v5465 = vrot.slane %v5464, 4
      %v5467 = vshll.u32 %v5430, 16
      %v5469 = vrot.slane %v5467, 5
      %v5470 = vsel %vm1194, %v5465, %v5469
      %v5472 = vshrl.u32 %v5431, 16
      %v5474 = vrot.slane %v5472, 4
      %v5475 = vshll.u32 %v5431, 16
      %v5477 = vrot.slane %v5475, 5
      %v5478 = vor.u32 %v5474, %v5477
      %v5479 = vrot.slane %v5478, 4
      %v5481 = vshll.u32 %v5432, 16
      %v5483 = vrot.slane %v5481, 5
      %v5484 = vsel %vm1194, %v5479, %v5483
      %v5486 = vshrl.u32 %v5433, 16
      %v5488 = vrot.slane %v5486, 4
      %v5489 = vshll.u32 %v5433, 16
      %v5491 = vrot.slane %v5489, 5
      %v5492 = vor.u32 %v5488, %v5491
      %v5493 = vrot.slane %v5492, 4
      %v5495 = vshll.u32 %v5434, 16
      %v5497 = vrot.slane %v5495, 5
      %v5498 = vsel %vm1194, %v5493, %v5497
      %v5500 = vshrl.u32 %v5435, 16
      %v5502 = vrot.slane %v5500, 4
      %v5503 = vshll.u32 %v5435, 16
      %v5505 = vrot.slane %v5503, 5
      %v5506 = vor.u32 %v5502, %v5505
      %v5507 = vrot.slane %v5506, 4
      %v5509 = vshll.u32 %v5436, 16
      %v5511 = vrot.slane %v5509, 5
      %v5512 = vsel %vm1194, %v5507, %v5511
      %v5514 = vshrl.u32 %v5437, 16
      %v5516 = vrot.slane %v5514, 4
      %v5517 = vshll.u32 %v5437, 16
      %v5519 = vrot.slane %v5517, 5
      %v5520 = vor.u32 %v5516, %v5519
      %v5521 = vrot.slane %v5520, 4
      %v5523 = vshll.u32 %v5438, 16
      %v5525 = vrot.slane %v5523, 5
      %v5526 = vsel %vm1194, %v5521, %v5525
      %v5528 = vshrl.u32 %v5439, 16
      %v5530 = vrot.slane %v5528, 4
      %v5531 = vshll.u32 %v5439, 16
      %v5533 = vrot.slane %v5531, 5
      %v5534 = vor.u32 %v5530, %v5533
      %v5535 = vrot.slane %v5534, 4
      %v5537 = vshll.u32 %v5440, 16
      %v5539 = vrot.slane %v5537, 5
      %v5540 = vsel %vm1194, %v5535, %v5539
      %v5542 = vshrl.u32 %v5441, 16
      %v5544 = vrot.slane %v5542, 4
      %v5545 = vshll.u32 %v5441, 16
      %v5547 = vrot.slane %v5545, 5
      %v5548 = vor.u32 %v5544, %v5547
      %v5549 = vrot.slane %v5548, 4
      %v5551 = vshll.u32 %v5442, 16
      %v5553 = vrot.slane %v5551, 5
      %v5554 = vsel %vm1194, %v5549, %v5553
      %s5555 = scalar_lea.vmem %s1, 200
      %v5556 = vld [vmem:[%s5555] sm:$0xf]
      %v5557 = vld [vmem:[%s5555 + $0x4] sm:$0xf]
      %v5558 = vunpack.c.l.b16 %v5456
      %v5559 = vunpack.c.l.b16 %v5470
      %v5560 = vunpack.c.l.b16 %v5484
      %v5561 = vunpack.c.l.b16 %v5498
      %v5562 = vunpack.c.l.b16 %v5512
      %v5563 = vunpack.c.l.b16 %v5526
      %v5564 = vunpack.c.l.b16 %v5540
      %v5565 = vunpack.c.l.b16 %v5554
      %v5566 = vpack.c.b16 %v5559, %v5558
      %v5567 = vpack.c.b16 %v5561, %v5560
      %v5568 = vpack.c.b16 %v5563, %v5562
      %v5569 = vpack.c.b16 %v5565, %v5564
      %v5572 = vunpack.c.l.b16 %v5556
      %v5573 = vunpack.c.l.b16 %v5557
      %v5574 = vpack.c.b16 %v5573, %v5572
      %v5577 = vsel %vm1328, %v5566, 0
      %v5580 = vsel %vm1328, %v5567, 0
      %v5583 = vsel %vm1328, %v5568, 0
      %v5586 = vsel %vm1328, %v5569, 0
      %5588 = vmatprep.subr.bf16.mxu0 0
      %5589 = vmatpush1.bf16.msra.mxu0 %v5574
      %5590 = vmatprep.subr.bf16.mxu0 0
      %5591 = vmatpush1.bf16.msra.mxu0 0
      %5592 = vmatprep.subr.bf16.mxu0 0
      %5593 = vmatpush1.bf16.msra.mxu0 0
      %5594 = vmatprep.subr.bf16.mxu0 0
      %5595 = vmatpush1.bf16.msra.mxu0 0
      %5596 = vmatprep.subr.bf16.mxu0 0
      %5597 = vmatpush1.bf16.msra.mxu0 0
      %5598 = vmatprep.subr.bf16.mxu0 0
      %5599 = vmatpush1.bf16.msra.mxu0 0
      %5600 = vmatprep.subr.bf16.mxu0 0
      %5601 = vmatpush1.bf16.msra.mxu0 0
      %5602 = vmatprep.subr.bf16.mxu0 0
      %5603 = vmatpush1.bf16.msra.mxu0 0
      %5604 = vmatprep.subr.bf16.mxu0 0
      %5605 = vmatpush1.bf16.msra.mxu0 0
      %5606 = vmatprep.subr.bf16.mxu0 0
      %5607 = vmatpush1.bf16.msra.mxu0 0
      %5608 = vmatprep.subr.bf16.mxu0 0
      %5609 = vmatpush1.bf16.msra.mxu0 0
      %5610 = vmatprep.subr.bf16.mxu0 0
      %5611 = vmatpush1.bf16.msra.mxu0 0
      %5612 = vmatprep.subr.bf16.mxu0 0
      %5613 = vmatpush1.bf16.msra.mxu0 0
      %5614 = vmatprep.subr.bf16.mxu0 0
      %5615 = vmatpush1.bf16.msra.mxu0 0
      %5616 = vmatprep.subr.bf16.mxu0 0
      %5617 = vmatpush1.bf16.msra.mxu0 0
      %5618 = vmatprep.subr.bf16.mxu0 0
      %5619 = vmatpush1.bf16.msra.mxu0 0
      %5620 = vmatprep.mubr.bf16.mxu0 0
      %5621 = vmatmul.mubr.bf16.gmra.mrb[0].mxu0 %v5577
      %v5622 = vpop.f32.mrb[0].mxu0
      %v5623 = vadd.f32 0.0, %v5622
      %v5624 = vpop.f32.mrb[0].mxu0
      %v5625 = vpop.f32.mrb[0].mxu0
      %v5626 = vadd.f32 0.0, %v5625
      %v5627 = vpop.f32.mrb[0].mxu0
      %5628 = vmatprep.mubr.bf16.mxu0 0
      %5629 = vmatmul.mubr.bf16.gmra.mrb[0].mxu0 %v5580
      %v5630 = vpop.f32.mrb[0].mxu0
      %v5631 = vadd.f32 0.0, %v5630
      %v5632 = vpop.f32.mrb[0].mxu0
      %v5633 = vpop.f32.mrb[0].mxu0
      %v5634 = vadd.f32 0.0, %v5633
      %v5635 = vpop.f32.mrb[0].mxu0
      %5636 = vmatprep.mubr.bf16.mxu0 0
      %5637 = vmatmul.mubr.bf16.gmra.mrb[0].mxu0 %v5583
      %v5638 = vpop.f32.mrb[0].mxu0
      %v5639 = vadd.f32 0.0, %v5638
      %v5640 = vpop.f32.mrb[0].mxu0
      %v5641 = vpop.f32.mrb[0].mxu0
      %v5642 = vadd.f32 0.0, %v5641
      %v5643 = vpop.f32.mrb[0].mxu0
      %5644 = vmatprep.mubr.bf16.mxu0 0
      %5645 = vmatmul.mubr.bf16.gmra.mrb[0].mxu0 %v5586
      %v5646 = vpop.f32.mrb[0].mxu0
      %v5647 = vadd.f32 0.0, %v5646
      %v5648 = vpop.f32.mrb[0].mxu0
      %v5649 = vpop.f32.mrb[0].mxu0
      %v5650 = vadd.f32 0.0, %v5649
      %v5651 = vpop.f32.mrb[0].mxu0
      %5652 = vdwg.mxu0
      %v5653 = vadd.f32 %v5419, %v5623
      %v5654 = vadd.f32 %v5420, %v5626
      %v5655 = vadd.f32 %v5421, %v5631
      %v5656 = vadd.f32 %v5422, %v5634
      %v5657 = vadd.f32 %v5423, %v5639
      %v5658 = vadd.f32 %v5424, %v5642
      %v5659 = vadd.f32 %v5425, %v5647
      %v5660 = vadd.f32 %v5426, %v5650
      %v5661 = vld [vmem:[%s5304] sm:$0xe]
      %v5662 = vld [vmem:[%s5304 + $0x8] sm:$0xe]
      %v5663 = vld [vmem:[%s5304 + $0x10] sm:$0xe]
      %v5664 = vld [vmem:[%s5304 + $0x18] sm:$0xe]
      %v5665 = vld [vmem:[%s5304 + $0x20] sm:$0xe]
      %v5666 = vld [vmem:[%s5304 + $0x28] sm:$0xe]
      %v5667 = vld [vmem:[%s5304 + $0x30] sm:$0xe]
      %v5668 = vld [vmem:[%s5304 + $0x38] sm:$0xe]
      %v5685 = vrot.slane %v5661, 5
      %v5686 = vrot.slane %v5685, 4
      %v5687 = vrot.slane %v5428, 5
      %v5688 = vsel %vm1535, %v5686, %v5687
      %v5689 = vrot.slane %v5662, 5
      %v5690 = vrot.slane %v5689, 4
      %v5691 = vrot.slane %v5430, 5
      %v5692 = vsel %vm1535, %v5690, %v5691
      %v5693 = vrot.slane %v5663, 5
      %v5694 = vrot.slane %v5693, 4
      %v5695 = vrot.slane %v5432, 5
      %v5696 = vsel %vm1535, %v5694, %v5695
      %v5697 = vrot.slane %v5664, 5
      %v5698 = vrot.slane %v5697, 4
      %v5699 = vrot.slane %v5434, 5
      %v5700 = vsel %vm1535, %v5698, %v5699
      %v5701 = vrot.slane %v5665, 5
      %v5702 = vrot.slane %v5701, 4
      %v5703 = vrot.slane %v5436, 5
      %v5704 = vsel %vm1535, %v5702, %v5703
      %v5705 = vrot.slane %v5666, 5
      %v5706 = vrot.slane %v5705, 4
      %v5707 = vrot.slane %v5438, 5
      %v5708 = vsel %vm1535, %v5706, %v5707
      %v5709 = vrot.slane %v5667, 5
      %v5710 = vrot.slane %v5709, 4
      %v5711 = vrot.slane %v5440, 5
      %v5712 = vsel %vm1535, %v5710, %v5711
      %v5713 = vrot.slane %v5668, 5
      %v5714 = vrot.slane %v5713, 4
      %v5715 = vrot.slane %v5442, 5
      %v5716 = vsel %vm1535, %v5714, %v5715
      %s5717 = scalar_lea.vmem %s1, 208
      %v5718 = vld [vmem:[%s5717] sm:$0xf]
      %v5719 = vld [vmem:[%s5717 + $0x4] sm:$0xf]
      %v5720 = vunpack.c.l.b16 %v5688
      %v5721 = vunpack.c.l.b16 %v5692
      %v5722 = vunpack.c.l.b16 %v5696
      %v5723 = vunpack.c.l.b16 %v5700
      %v5724 = vunpack.c.l.b16 %v5704
      %v5725 = vunpack.c.l.b16 %v5708
      %v5726 = vunpack.c.l.b16 %v5712
      %v5727 = vunpack.c.l.b16 %v5716
      %v5728 = vpack.c.b16 %v5721, %v5720
      %v5729 = vpack.c.b16 %v5723, %v5722
      %v5730 = vpack.c.b16 %v5725, %v5724
      %v5731 = vpack.c.b16 %v5727, %v5726
      %v5734 = vunpack.c.l.b16 %v5718
      %v5735 = vunpack.c.l.b16 %v5719
      %v5736 = vpack.c.b16 %v5735, %v5734
      %v5739 = vsel %vm1328, %v5728, 0
      %v5742 = vsel %vm1328, %v5729, 0
      %v5745 = vsel %vm1328, %v5730, 0
      %v5748 = vsel %vm1328, %v5731, 0
      %5750 = vmatprep.subr.bf16.mxu0 0
      %5751 = vmatpush1.bf16.msra.mxu0 %v5736
      %5752 = vmatprep.subr.bf16.mxu0 0
      %5753 = vmatpush1.bf16.msra.mxu0 0
      %5754 = vmatprep.subr.bf16.mxu0 0
      %5755 = vmatpush1.bf16.msra.mxu0 0
      %5756 = vmatprep.subr.bf16.mxu0 0
      %5757 = vmatpush1.bf16.msra.mxu0 0
      %5758 = vmatprep.subr.bf16.mxu0 0
      %5759 = vmatpush1.bf16.msra.mxu0 0
      %5760 = vmatprep.subr.bf16.mxu0 0
      %5761 = vmatpush1.bf16.msra.mxu0 0
      %5762 = vmatprep.subr.bf16.mxu0 0
      %5763 = vmatpush1.bf16.msra.mxu0 0
      %5764 = vmatprep.subr.bf16.mxu0 0
      %5765 = vmatpush1.bf16.msra.mxu0 0
      %5766 = vmatprep.subr.bf16.mxu0 0
      %5767 = vmatpush1.bf16.msra.mxu0 0
      %5768 = vmatprep.subr.bf16.mxu0 0
      %5769 = vmatpush1.bf16.msra.mxu0 0
      %5770 = vmatprep.subr.bf16.mxu0 0
      %5771 = vmatpush1.bf16.msra.mxu0 0
      %5772 = vmatprep.subr.bf16.mxu0 0
      %5773 = vmatpush1.bf16.msra.mxu0 0
      %5774 = vmatprep.subr.bf16.mxu0 0
      %5775 = vmatpush1.bf16.msra.mxu0 0
      %5776 = vmatprep.subr.bf16.mxu0 0
      %5777 = vmatpush1.bf16.msra.mxu0 0
      %5778 = vmatprep.subr.bf16.mxu0 0
      %5779 = vmatpush1.bf16.msra.mxu0 0
      %5780 = vmatprep.subr.bf16.mxu0 0
      %5781 = vmatpush1.bf16.msra.mxu0 0
      %5782 = vmatprep.mubr.bf16.mxu0 0
      %5783 = vmatmul.mubr.bf16.gmra.mrb[0].mxu0 %v5739
      %v5784 = vpop.f32.mrb[0].mxu0
      %v5785 = vadd.f32 0.0, %v5784
      %v5786 = vpop.f32.mrb[0].mxu0
      %v5787 = vpop.f32.mrb[0].mxu0
      %v5788 = vadd.f32 0.0, %v5787
      %v5789 = vpop.f32.mrb[0].mxu0
      %5790 = vmatprep.mubr.bf16.mxu0 0
      %5791 = vmatmul.mubr.bf16.gmra.mrb[0].mxu0 %v5742
      %v5792 = vpop.f32.mrb[0].mxu0
      %v5793 = vadd.f32 0.0, %v5792
      %v5794 = vpop.f32.mrb[0].mxu0
      %v5795 = vpop.f32.mrb[0].mxu0
      %v5796 = vadd.f32 0.0, %v5795
      %v5797 = vpop.f32.mrb[0].mxu0
      %5798 = vmatprep.mubr.bf16.mxu0 0
      %5799 = vmatmul.mubr.bf16.gmra.mrb[0].mxu0 %v5745
      %v5800 = vpop.f32.mrb[0].mxu0
      %v5801 = vadd.f32 0.0, %v5800
      %v5802 = vpop.f32.mrb[0].mxu0
      %v5803 = vpop.f32.mrb[0].mxu0
      %v5804 = vadd.f32 0.0, %v5803
      %v5805 = vpop.f32.mrb[0].mxu0
      %5806 = vmatprep.mubr.bf16.mxu0 0
      %5807 = vmatmul.mubr.bf16.gmra.mrb[0].mxu0 %v5748
      %v5808 = vpop.f32.mrb[0].mxu0
      %v5809 = vadd.f32 0.0, %v5808
      %v5810 = vpop.f32.mrb[0].mxu0
      %v5811 = vpop.f32.mrb[0].mxu0
      %v5812 = vadd.f32 0.0, %v5811
      %v5813 = vpop.f32.mrb[0].mxu0
      %5814 = vdwg.mxu0
      %v5815 = vadd.f32 %v5653, %v5785
      %v5816 = vadd.f32 %v5654, %v5788
      %v5817 = vadd.f32 %v5655, %v5793
      %v5818 = vadd.f32 %v5656, %v5796
      %v5819 = vadd.f32 %v5657, %v5801
      %v5820 = vadd.f32 %v5658, %v5804
      %v5821 = vadd.f32 %v5659, %v5809
      %v5822 = vadd.f32 %v5660, %v5812
      %v5823 = vld [vmem:[%s2] sm:$0x1]
      %v5825 = vlaneseq
      %v5826 = vshrl.u32 %v5825, 7
      %v5827 = vsub.s32 0, %v5826
      %v5828 = vrot.slane %v5823, %v5827
      %v5830 = vadd.f32 %v5815, %v5828
      %v5831 = vadd.f32 %v5816, %v5828
      %v5832 = vadd.f32 %v5817, %v5828
      %v5833 = vadd.f32 %v5818, %v5828
      %v5834 = vadd.f32 %v5819, %v5828
      %v5835 = vadd.f32 %v5820, %v5828
      %v5836 = vadd.f32 %v5821, %v5828
      %v5837 = vadd.f32 %v5822, %v5828
      %v5838 = vpack.c.bf16 %v5830, %v5830
      %v5839 = vpack.c.bf16 %v5831, %v5831
      %v5840 = vpack.c.bf16 %v5832, %v5832
      %v5841 = vpack.c.bf16 %v5833, %v5833
      %v5842 = vpack.c.bf16 %v5834, %v5834
      %v5843 = vpack.c.bf16 %v5835, %v5835
      %v5844 = vpack.c.bf16 %v5836, %v5836
      %v5845 = vpack.c.bf16 %v5837, %v5837
      %5846 = vst.msk [vmem:[%s350] sm:$0xf] %vm369, %v5838
      %5847 = vst.msk [vmem:[%s350 + $0x4] sm:$0xf] %vm369, %v5839
      %5848 = vst.msk [vmem:[%s350 + $0x8] sm:$0xf] %vm369, %v5840
      %5849 = vst.msk [vmem:[%s350 + $0xc] sm:$0xf] %vm369, %v5841
      %5850 = vst.msk [vmem:[%s350 + $0x10] sm:$0xf] %vm369, %v5842
      %5851 = vst.msk [vmem:[%s350 + $0x14] sm:$0xf] %vm369, %v5843
      %5852 = vst.msk [vmem:[%s350 + $0x18] sm:$0xf] %vm369, %v5844
      %5853 = vst.msk [vmem:[%s350 + $0x1c] sm:$0xf] %vm369, %v5845
      %v5854 = vsel %vm1328, %v5830, 0.0
      %v5855 = vsel %vm1328, %v5831, 0.0
      %v5856 = vadd.f32 %v5854, %v5855
      %v5857 = vsel %vm1328, %v5832, 0.0
      %v5858 = vadd.f32 %v5856, %v5857
      %v5859 = vsel %vm1328, %v5833, 0.0
      %v5860 = vadd.f32 %v5858, %v5859
      %v5861 = vsel %vm1328, %v5834, 0.0
      %v5862 = vadd.f32 %v5860, %v5861
      %v5863 = vsel %vm1328, %v5835, 0.0
      %v5864 = vadd.f32 %v5862, %v5863
      %v5865 = vsel %vm1328, %v5836, 0.0
      %v5866 = vadd.f32 %v5864, %v5865
      %v5867 = vsel %vm1328, %v5837, 0.0
      %v5868 = vadd.f32 %v5866, %v5867
      %v5869 = vrot.slane %v5868, 4
      %v5870 = vadd.f32 %v5868, %v5869
      %v5871 = vrot.slane %v5870, 2
      %v5872 = vadd.f32 %v5870, %v5871
      %v5873 = vrot.slane %v5872, 1
      %v5874 = vadd.f32 %v5872, %v5873
      %5875 = vst.msk [vmem:[%s355] sm:$0x1] %vm371, %v5874
      %v5876 = vmul.f32 %v5830, %v5830
      %v5877 = vmul.f32 %v5831, %v5831
      %v5878 = vmul.f32 %v5832, %v5832
      %v5879 = vmul.f32 %v5833, %v5833
      %v5880 = vmul.f32 %v5834, %v5834
      %v5881 = vmul.f32 %v5835, %v5835
      %v5882 = vmul.f32 %v5836, %v5836
      %v5883 = vmul.f32 %v5837, %v5837
      %v5884 = vsel %vm1328, %v5876, 0.0
      %v5885 = vsel %vm1328, %v5877, 0.0
      %v5886 = vadd.f32 %v5884, %v5885
      %v5887 = vsel %vm1328, %v5878, 0.0
      %v5888 = vadd.f32 %v5886, %v5887
      %v5889 = vsel %vm1328, %v5879, 0.0
      %v5890 = vadd.f32 %v5888, %v5889
      %v5891 = vsel %vm1328, %v5880, 0.0
      %v5892 = vadd.f32 %v5890, %v5891
      %v5893 = vsel %vm1328, %v5881, 0.0
      %v5894 = vadd.f32 %v5892, %v5893
      %v5895 = vsel %vm1328, %v5882, 0.0
      %v5896 = vadd.f32 %v5894, %v5895
      %v5897 = vsel %vm1328, %v5883, 0.0
      %v5898 = vadd.f32 %v5896, %v5897
      %v5899 = vrot.slane %v5898, 4
      %v5900 = vadd.f32 %v5898, %v5899
      %v5901 = vrot.slane %v5900, 2
      %v5902 = vadd.f32 %v5900, %v5901
      %v5903 = vrot.slane %v5902, 1
      %v5904 = vadd.f32 %v5902, %v5903
      %5905 = vst.msk [vmem:[%s362] sm:$0x1] %vm371, %v5904
      %p5906 = scmp.lt.s32.totalorder %s24, 1
      %s5907 = scalar_select %p5906, %s24, 1
      %p5908 = scmp.lt.s32.totalorder %s25, 7
      %s5909 = scalar_select %p5908, %s25, 7
      %s5910 = smul.addr %s5909, 8
      %s5911 = smul.addr %s5907, 64
      %s5912 = sadd.s32 %s5910, %s5911
      %s5913 = smul.addr %s5912, 4
      %s5914 = scalar_lea.vmem %s6, %s5913
      %s5915 = smul.u32 %s24, 8
      %s5916 = sadd.s32 %s5915, %s25
      %p5917 = scmp.lt.s32.totalorder %s5916, 15
      %s5918 = scalar_select %p5917, %s5916, 15
      %s5919 = scalar_lea.vmem %s7, %s5918
      %s5920 = smul.u32 %s24, 8
      %s5921 = sadd.s32 %s5920, %s25
      %p5922 = scmp.lt.s32.totalorder %s5921, 15
      %s5923 = scalar_select %p5922, %s5921, 15
      %s5924 = scalar_lea.vmem %s8, %s5923
      // Predicated region
      $region45: #{net_just_up_block_forward.5} parent=43 // pred_check
        %p5925 = pneg %p183
      $region46: #{net_just_up_block_forward.5} parent=43 // pred_check_branch
        %5927 = sbr.rel (%p5925) target = $region48
      $region47: #{net_just_up_block_forward.5} parent=43 // pred_region
        _
      $region48: #{net_just_up_block_forward.5} parent=43 // pred_fallthru
        _
      // Predicated region
      $region49: #{net_just_up_block_forward.5} parent=43 // pred_check
        %p5928 = pneg %p213
      $region50: #{net_just_up_block_forward.5} parent=43 // pred_check_branch
        %5930 = sbr.rel (%p5928) target = $region52
      $region51: #{net_just_up_block_forward.5} parent=43 // pred_region
        %s5931 = smul.u32 %s24, 8
        %s5932 = sadd.s32 %s5931, %s25
      $region52: #{net_just_up_block_forward.5} parent=43 // pred_fallthru
        _
      // Predicated region
      $region53: #{net_just_up_block_forward.5} parent=43 // pred_check
        %p5933 = pneg %p243
      $region54: #{net_just_up_block_forward.5} parent=43 // pred_check_branch
        %5935 = sbr.rel (%p5933) target = $region56
      $region55: #{net_just_up_block_forward.5} parent=43 // pred_region
        %s5936 = smul.u32 %s24, 8
        %s5937 = sadd.s32 %s5936, %s25
      $region56: #{net_just_up_block_forward.5} parent=43 // pred_fallthru
        _
    $region44: #{net_just_up_block_forward.5} parent=5 // pred_fallthru
      _
    %p5938 = scmp.le.s32.totalorder 2, %s15
    // Predicated region
    $region57: #{net_just_up_block_forward.5} parent=5 // pred_check
      %p5939 = pneg %p5938
    $region58: #{net_just_up_block_forward.5} parent=5 // pred_check_branch
      %5941 = sbr.rel (%p5939) target = $region60
    $region59: #{net_just_up_block_forward.5} parent=5 // pred_region
      %s5942 = ssub.s32 %s15, 2
      // Predicated region
      $region61: #{net_just_up_block_forward.5} parent=59 // pred_check
        %p5943 = pneg %p189
      $region62: #{net_just_up_block_forward.5} parent=59 // pred_check_branch
        %5945 = sbr.rel (%p5943) target = $region64
      $region63: #{net_just_up_block_forward.5} parent=59 // pred_region
        %p5946 = scmp.lt.s32.totalorder %s26, 1
        %s5947 = scalar_select %p5946, %s26, 1
        %p5948 = scmp.lt.s32.totalorder %s27, 7
        %s5949 = scalar_select %p5948, %s27, 7
        %s5950 = smul.addr %s5949, 8
        %s5951 = smul.addr %s5947, 64
        %s5952 = sadd.s32 %s5950, %s5951
        %s5953 = smul.addr %s5952, 4
        %s5954 = scalar_lea.vmem %s6, %s5953
      $region64: #{net_just_up_block_forward.5} parent=59 // pred_fallthru
        _
      // Predicated region
      $region65: #{net_just_up_block_forward.5} parent=59 // pred_check
        %p5955 = pneg %p219
      $region66: #{net_just_up_block_forward.5} parent=59 // pred_check_branch
        %5957 = sbr.rel (%p5955) target = $region68
      $region67: #{net_just_up_block_forward.5} parent=59 // pred_region
        %s5958 = smul.u32 %s26, 8
        %s5959 = sadd.s32 %s5958, %s27
        %p5960 = scmp.lt.s32.totalorder %s5959, 15
        %s5961 = scalar_select %p5960, %s5959, 15
        %s5962 = scalar_lea.vmem %s7, %s5961
      $region68: #{net_just_up_block_forward.5} parent=59 // pred_fallthru
        _
      // Predicated region
      $region69: #{net_just_up_block_forward.5} parent=59 // pred_check
        %p5963 = pneg %p249
      $region70: #{net_just_up_block_forward.5} parent=59 // pred_check_branch
        %5965 = sbr.rel (%p5963) target = $region72
      $region71: #{net_just_up_block_forward.5} parent=59 // pred_region
        %s5966 = smul.u32 %s26, 8
        %s5967 = sadd.s32 %s5966, %s27
        %p5968 = scmp.lt.s32.totalorder %s5967, 15
        %s5969 = scalar_select %p5968, %s5967, 15
        %s5970 = scalar_lea.vmem %s8, %s5969
      $region72: #{net_just_up_block_forward.5} parent=59 // pred_fallthru
        _
    $region60: #{net_just_up_block_forward.5} parent=5 // pred_fallthru
      _
  $region6: #{net_just_up_block_forward.5} parent=0 // loop_footer
    %s19 = sadd.s32 1, %s15
  $region7: #{net_just_up_block_forward.5} parent=0 // loop_footer_branch
    %14 = sbr.rel target = $region3
  $region8: #{net_just_up_block_forward.5} parent=0 // loop_exit
    _

</llo_original>
